<compile_context>
chip_gen: v7x
topology: tpu7x:2x2x1
jax: 0.10.0
libtpu: 0.0.40
codegen_flags: <defaults>
</compile_context>

<pallas_src>
import functools

import jax
import jax.numpy as jnp
from jax.experimental import pallas as pl
from jax.experimental.pallas import tpu as pltpu


# ----------------------------------------------------------------------------- Pallas kernels

def _matmul_bn_act_kernel(x_ref, w_ref, s_ref, b_ref, o_ref, *, relu):
    """One (tm, K) row tile: Y = relu?(X @ W * bn_scale + bn_bias)."""
    acc = jnp.dot(x_ref[...], w_ref[...], preferred_element_type=jnp.float32)
    acc = acc * s_ref[...] + b_ref[...]
    if relu:
        acc = jnp.maximum(acc, 0.0)
    o_ref[...] = acc.astype(o_ref.dtype)


def _conv3x3_bn_res_kernel(x_ref, w_ref, s_ref, b_ref, r_ref, o_ref, *, H, W, relu):
    """3x3 stride-1 conv + folded BN (+optional ReLU) + residual add, one image per step.

    x_ref: (1, H+2, W+2, Cin) bf16 (spatially padded input)
    w_ref: (9, Cin, Cout)     bf16 (tap-major weights)
    s/b:   (1, Cout)          f32  (folded BN)
    r_ref: (H*W, Cout)        bf16 (residual = detail5 rows for this image)
    o_ref: (H*W, Cout)
    In-kernel im2col: nine shifted-window matmuls accumulated in f32 on the MXU.
    """
    cin = x_ref.shape[3]
    cout = o_ref.shape[1]
    acc = jnp.zeros((H * W, cout), jnp.float32)
    for t in range(9):
        ky, kx = divmod(t, 3)
        tap = x_ref[0, ky:ky + H, kx:kx + W, :].reshape(H * W, cin)
        acc = acc + jnp.dot(tap, w_ref[t], preferred_element_type=jnp.float32)
    y = acc * s_ref[...] + b_ref[...]
    if relu:
        y = jnp.maximum(y, 0.0)
    y = y + r_ref[...].astype(jnp.float32)          # fused `ppm + detail5`
    o_ref[...] = y.astype(o_ref.dtype)


def _merged_head_kernel(x_ref, w3_ref, s_ref, b_ref, w1_ref, b1_ref, o_ref, *, H, W):
    """Merged classification+regression head: 3x3 conv + BN + ReLU, then 1x1 conv + bias.

    x_ref:  (1, H+2, W+2, Cin) bf16
    w3_ref: (9, Cin, Cmid)     bf16   (classifier|regressor conv weights concatenated)
    s/b:    (1, Cmid)          f32
    w1_ref: (Cmid, Cout)       f32    (block-diagonal merged 1x1 weights)
    b1_ref: (1, Cout)          f32
    o_ref:  (H*W, Cout)        f32
    """
    cin = x_ref.shape[3]
    cmid = w3_ref.shape[2]
    acc = jnp.zeros((H * W, cmid), jnp.float32)
    for t in range(9):
        ky, kx = divmod(t, 3)
        tap = x_ref[0, ky:ky + H, kx:kx + W, :].reshape(H * W, cin)
        acc = acc + jnp.dot(tap, w3_ref[t], preferred_element_type=jnp.float32)
    h = jnp.maximum(acc * s_ref[...] + b_ref[...], 0.0)
    out = jnp.dot(h, w1_ref[...], preferred_element_type=jnp.float32) + b1_ref[...]
    o_ref[...] = out.astype(o_ref.dtype)


# ----------------------------------------------------------------------------- kernel wrappers

def _pick_tm(M, cap=512):
    """Largest row tile <= cap that divides M (so no M padding / trimming is needed)."""
    if M <= cap:
        return M
    for tm in range(cap, 7, -1):
        if M % tm == 0 and tm % 8 == 0:
            return tm
    return cap  # fallback: caller pads (never hit for the shapes in this network)


def fused_matmul(x, w, scale, bias, *, relu, out_dtype=jnp.bfloat16, tm_cap=512):
    """Y[M,N] = relu?(X @ W * scale + bias), row-tiled over M. X/W bf16, accumulate f32."""
    M, K = x.shape
    _, N = w.shape
    tm = _pick_tm(M, tm_cap)
    pad = (-M) % tm
    if pad:  # correctness fallback only
        x = jnp.pad(x, ((0, pad), (0, 0)))
    Mp = M + pad
    out = pl.pallas_call(
        functools.partial(_matmul_bn_act_kernel, relu=relu),
        out_shape=jax.ShapeDtypeStruct((Mp, N), out_dtype),
        grid=(Mp // tm,),
        in_specs=[
            pl.BlockSpec((tm, K), lambda i: (i, 0)),
            pl.BlockSpec((K, N), lambda i: (0, 0)),
            pl.BlockSpec((1, N), lambda i: (0, 0)),
            pl.BlockSpec((1, N), lambda i: (0, 0)),
        ],
        out_specs=pl.BlockSpec((tm, N), lambda i: (i, 0)),
        compiler_params=pltpu.CompilerParams(dimension_semantics=("parallel",)),
    )(x, w, scale, bias)
    return out[:M] if pad else out


def s2d_conv(x_nhwc, p, *, relu):
    """Stride-2 2x2 conv + folded BN (+ReLU) as space-to-depth + one fused Pallas matmul."""
    N, H, W, C = x_nhwc.shape
    x = x_nhwc.reshape(N, H // 2, 2, W // 2, 2, C)
    x = jnp.transpose(x, (0, 1, 3, 2, 4, 5)).reshape(N * (H // 2) * (W // 2), 4 * C)
    out = fused_matmul(x, p["w"], p["scale"], p["bias"], relu=relu)
    return out, H // 2, W // 2                       # flat (N*Ho*Wo, Cout)


def conv3x3_residual(x_nhwc, residual_flat, p, *, relu):
    """3x3 stride-1 conv + BN (+ReLU) with the `+ detail5` add fused into the same kernel."""
    N, H, W, Cin = x_nhwc.shape
    Cout = p["w"].shape[2]
    xp = jnp.pad(x_nhwc, ((0, 0), (1, 1), (1, 1), (0, 0)))   # conv halo only
    return pl.pallas_call(
        functools.partial(_conv3x3_bn_res_kernel, H=H, W=W, relu=relu),
        out_shape=jax.ShapeDtypeStruct((N * H * W, Cout), jnp.bfloat16),
        grid=(N,),
        in_specs=[
            pl.BlockSpec((1, H + 2, W + 2, Cin), lambda n: (n, 0, 0, 0)),
            pl.BlockSpec((9, Cin, Cout), lambda n: (0, 0, 0)),
            pl.BlockSpec((1, Cout), lambda n: (0, 0)),
            pl.BlockSpec((1, Cout), lambda n: (0, 0)),
            pl.BlockSpec((H * W, Cout), lambda n: (n, 0)),
        ],
        out_specs=pl.BlockSpec((H * W, Cout), lambda n: (n, 0)),
        compiler_params=pltpu.CompilerParams(dimension_semantics=("parallel",)),
    )(xp, p["w"], p["scale"], p["bias"], residual_flat)


def merged_head(feat_nhwc, p):
    """Single Pallas kernel for classifier + regressor: 3x3+BN+ReLU then merged 1x1+bias."""
    N, H, W, Cin = feat_nhwc.shape
    Cmid = p["w3"].shape[2]
    Cout = p["w1"].shape[1]
    xp = jnp.pad(feat_nhwc, ((0, 0), (1, 1), (1, 1), (0, 0)))
    return pl.pallas_call(
        functools.partial(_merged_head_kernel, H=H, W=W),
        out_shape=jax.ShapeDtypeStruct((N * H * W, Cout), jnp.float32),
        grid=(N,),
        in_specs=[
            pl.BlockSpec((1, H + 2, W + 2, Cin), lambda n: (n, 0, 0, 0)),
            pl.BlockSpec((9, Cin, Cmid), lambda n: (0, 0, 0)),
            pl.BlockSpec((1, Cmid), lambda n: (0, 0)),
            pl.BlockSpec((1, Cmid), lambda n: (0, 0)),
            pl.BlockSpec((Cmid, Cout), lambda n: (0, 0)),
            pl.BlockSpec((1, Cout), lambda n: (0, 0)),
        ],
        out_specs=pl.BlockSpec((H * W, Cout), lambda n: (n, 0)),
        compiler_params=pltpu.CompilerParams(dimension_semantics=("parallel",)),
    )(xp, p["w3"], p["scale"], p["bias"], p["w1"], p["b1"])


# ----------------------------------------------------------------------------- forward pass

def network_forward(params, x_nchw):
    x = jnp.transpose(x_nchw, (0, 2, 3, 1)).astype(jnp.bfloat16)        # NCHW -> NHWC, bf16
    N = x.shape[0]

    # --- backbone (representative DDRNet-style placeholder: stride-2 stem + dual 1/8 branch)
    h1, H1, W1 = s2d_conv(x, params["conv1"], relu=True)                # 1/2
    h2, H2, W2 = s2d_conv(h1.reshape(N, H1, W1, -1), params["conv2"], relu=True)   # 1/4
    h2 = h2.reshape(N, H2, W2, -1)
    detail5, H3, W3 = s2d_conv(h2, params["detail"], relu=True)         # 1/8 detail branch (flat)
    ctx, _, _ = s2d_conv(h2, params["context"], relu=True)              # 1/8 context branch
    ctx = ctx.reshape(N, H3, W3, -1)

    # ppm conv with the `ppm + detail5` add fused into the kernel epilogue
    feat = conv3x3_residual(ctx, detail5, params["ppm"], relu=False)    # (N*H3*W3, C) bf16
    feat = feat.reshape(N, H3, W3, -1)

    # --- merged classification + regression heads (one fused kernel)
    out = merged_head(feat, params["heads"]).reshape(N, H3, W3, -1)     # (..., 5+2) f32
    ncls = params["num_classes"]
    cls = jnp.transpose(out[..., :ncls], (0, 3, 1, 2))                  # NHWC -> NCHW
    reg = jnp.transpose(out[..., ncls:], (0, 3, 1, 2))
    return cls, reg


# ----------------------------------------------------------------------------- parameters

def _conv_bn_params(key, cin, cout, k):
    """PyTorch-layout conv weight + folded BatchNorm (identity running stats)."""
    std = (2.0 / (cin * k * k)) ** 0.5
    w = jax.random.normal(key, (cout, cin, k, k), jnp.float32) * std
    eps = 1e-5
    gamma = jnp.ones((cout,), jnp.float32)
    beta = jnp.zeros((cout,), jnp.float32)
    mean = jnp.zeros((cout,), jnp.float32)
    var = jnp.ones((cout,), jnp.float32)
    scale = gamma / jnp.sqrt(var + eps)
    bias = beta - mean * scale
    return {"weight": w, "bn_scale": scale, "bn_bias": bias}


def make_params(key, in_ch=3, planes=32, head_channels=64,
                classification_classes=5, regression_channels=2):
    """Raw, PyTorch-layout parameters (as a reference checkpoint would provide)."""
    out_ch = planes * 4                                                  # backbone.out_channels[0]
    keys = jax.random.split(key, 11)
    return {
        "conv1": _conv_bn_params(keys[0], in_ch, planes, 2),
        "conv2": _conv_bn_params(keys[1], planes, planes * 2, 2),
        "detail": _conv_bn_params(keys[2], planes * 2, out_ch, 2),
        "context": _conv_bn_params(keys[3], planes * 2, out_ch, 2),
        "ppm": _conv_bn_params(keys[4], out_ch, out_ch, 3),
        "cls_conv": _conv_bn_params(keys[5], out_ch, head_channels, 3),
        "reg_conv": _conv_bn_params(keys[6], out_ch, head_channels, 3),
        "cls_out_w": jax.random.normal(keys[7], (classification_classes, head_channels, 1, 1),
                                       jnp.float32) * (2.0 / head_channels) ** 0.5,
        "cls_out_b": jnp.zeros((classification_classes,), jnp.float32),
        "reg_out_w": jax.random.normal(keys[8], (regression_channels, head_channels, 1, 1),
                                       jnp.float32) * (2.0 / head_channels) ** 0.5,
        "reg_out_b": jnp.zeros((regression_channels,), jnp.float32),
    }


def prepare_params(raw):
    """One-time weight transform: fold BN, reorder to matmul/tap layouts, cast to bf16,
    and merge the two heads — nothing layout-related is left inside network_forward."""
    def as_matmul(p):               # k x k conv -> (k*k*Cin, Cout) bf16, K-order (ky, kx, cin)
        w = p["weight"]
        cout, cin, k, _ = w.shape
        wm = jnp.transpose(w, (2, 3, 1, 0)).reshape(k * k * cin, cout).astype(jnp.bfloat16)
        return {"w": wm, "scale": p["bn_scale"].reshape(1, cout),
                "bias": p["bn_bias"].reshape(1, cout)}

    def as_taps(p):                 # 3x3 conv -> (9, Cin, Cout) bf16
        w = p["weight"]
        cout, cin, k, _ = w.shape
        wm = jnp.transpose(w, (2, 3, 1, 0)).reshape(k * k, cin, cout).astype(jnp.bfloat16)
        return wm, p["bn_scale"].reshape(1, cout), p["bn_bias"].reshape(1, cout)

    # merged head: concat 3x3 conv weights over Cout, block-diagonal merged 1x1 weights
    w3c, sc, bc = as_taps(raw["cls_conv"])
    w3r, sr, br = as_taps(raw["reg_conv"])
    ncls, hc = raw["cls_out_w"].shape[0], raw["cls_out_w"].shape[1]
    nreg = raw["reg_out_w"].shape[0]
    w1 = jnp.zeros((2 * hc, ncls + nreg), jnp.float32)
    w1 = w1.at[:hc, :ncls].set(raw["cls_out_w"].reshape(ncls, hc).T)
    w1 = w1.at[hc:, ncls:].set(raw["reg_out_w"].reshape(nreg, hc).T)
    b1 = jnp.concatenate([raw["cls_out_b"], raw["reg_out_b"]]).reshape(1, ncls + nreg)

    ppm_w, ppm_s, ppm_b = as_taps(raw["ppm"])
    return {
        "conv1": as_matmul(raw["conv1"]),
        "conv2": as_matmul(raw["conv2"]),
        "detail": as_matmul(raw["detail"]),
        "context": as_matmul(raw["context"]),
        "ppm": {"w": ppm_w, "scale": ppm_s, "bias": ppm_b},
        "heads": {"w3": jnp.concatenate([w3c, w3r], axis=-1),
                  "scale": jnp.concatenate([sc, sr], axis=-1),
                  "bias": jnp.concatenate([bc, br], axis=-1),
                  "w1": w1, "b1": b1},
        "num_classes": ncls,          # python int (params are closure constants under jit)
    }


# ----------------------------------------------------------------------------- demo

if __name__ == "__main__":
    key = jax.random.PRNGKey(0)
    pkey, xkey = jax.random.split(key)
    params = prepare_params(make_params(pkey))
    x = jax.random.normal(xkey, (2, 3, 64, 64), jnp.float32)            # NCHW, like PyTorch

    fwd = jax.jit(functools.partial(network_forward, params))
    cls_out, reg_out = fwd(x)
    jax.block_until_ready((cls_out, reg_out))

    assert cls_out.shape == (2, 5, 8, 8), cls_out.shape                 # (N, classes, H/8, W/8)
    assert reg_out.shape == (2, 2, 8, 8), reg_out.shape                 # (N, 2,       H/8, W/8)
    assert bool(jnp.all(jnp.isfinite(cls_out))) and bool(jnp.all(jnp.isfinite(reg_out)))
    print("KERNEL_OK")
</pallas_src>

<mosaic_0001>
module attributes {stable_mosaic.version = 11 : i64} {
  func.func @_matmul_bn_act_kernel(%arg0: i32, %arg1: memref<512x12xbf16, #tpu.memory_space<vmem>>, %arg2: memref<12x32xbf16, #tpu.memory_space<vmem>>, %arg3: memref<1x32xf32, #tpu.memory_space<vmem>>, %arg4: memref<1x32xf32, #tpu.memory_space<vmem>>, %arg5: memref<512x32xbf16, #tpu.memory_space<vmem>>) attributes {dimension_semantics = [#tpu.dimension_semantics<parallel>], iteration_bounds = array<i64: 4>, scalar_prefetch = 0 : i64, scratch_operands = 0 : i64, tpu.core_type = #tpu.core_type<tc>, window_params = [{transform_indices = @transform_0, window_bounds = array<i64: 512, 12>}, {pipeline_mode = #tpu.pipeline_mode<synchronous>, transform_indices = @transform_1, window_bounds = array<i64: 12, 32>}, {pipeline_mode = #tpu.pipeline_mode<synchronous>, transform_indices = @transform_2, window_bounds = array<i64: 1, 32>}, {pipeline_mode = #tpu.pipeline_mode<synchronous>, transform_indices = @transform_3, window_bounds = array<i64: 1, 32>}, {transform_indices = @transform_4, window_bounds = array<i64: 512, 32>}]} {
    %c0 = arith.constant 0 : index
    %c0_0 = arith.constant 0 : index
    %0 = vector.load %arg1[%c0, %c0_0] : memref<512x12xbf16, #tpu.memory_space<vmem>>, vector<512x12xbf16>
    %c0_1 = arith.constant 0 : index
    %c0_2 = arith.constant 0 : index
    %1 = vector.load %arg2[%c0_1, %c0_2] : memref<12x32xbf16, #tpu.memory_space<vmem>>, vector<12x32xbf16>
    %cst = arith.constant dense<0.000000e+00> : vector<512x32xf32>
    %2 = tpu.matmul %0, %1, %cst {dimension_numbers = #tpu.dot_dimension_numbers<[1], [0], [0], [1], [0, 0, 1, 1], [], []>} : vector<512x12xbf16>, vector<12x32xbf16>, vector<512x32xf32> -> vector<512x32xf32>
    %c0_3 = arith.constant 0 : index
    %c0_4 = arith.constant 0 : index
    %3 = vector.load %arg3[%c0_3, %c0_4] : memref<1x32xf32, #tpu.memory_space<vmem>>, vector<1x32xf32>
    %4 = vector.broadcast %3 : vector<1x32xf32> to vector<512x32xf32>
    %5 = arith.mulf %2, %4 : vector<512x32xf32>
    %c0_5 = arith.constant 0 : index
    %c0_6 = arith.constant 0 : index
    %6 = vector.load %arg4[%c0_5, %c0_6] : memref<1x32xf32, #tpu.memory_space<vmem>>, vector<1x32xf32>
    %7 = vector.broadcast %6 : vector<1x32xf32> to vector<512x32xf32>
    %8 = arith.addf %5, %7 : vector<512x32xf32>
    %cst_7 = arith.constant 0.000000e+00 : f32
    %9 = vector.broadcast %cst_7 : f32 to vector<512x32xf32>
    %10 = arith.maximumf %8, %9 : vector<512x32xf32>
    %11 = arith.truncf %10 : vector<512x32xf32> to vector<512x32xbf16>
    %c0_8 = arith.constant 0 : index
    %c0_9 = arith.constant 0 : index
    %12 = vector.load %arg5[%c0_8, %c0_9] : memref<512x32xbf16, #tpu.memory_space<vmem>>, vector<512x32xbf16>
    tpu.vector_store %arg5[%c0_8, %c0_9], %11 {strides = array<i32>} : memref<512x32xbf16, #tpu.memory_space<vmem>>, vector<512x32xbf16>,
    return
  }
  func.func @transform_0(%arg0: i32) -> (i32, i32) {
    %c0_i32 = arith.constant 0 : i32
    %c0_i32_0 = arith.constant 0 : i32
    return %arg0, %c0_i32 : i32, i32
  }
  func.func @transform_1(%arg0: i32) -> (i32, i32) {
    %c0_i32 = arith.constant 0 : i32
    %c0_i32_0 = arith.constant 0 : i32
    %c0_i32_1 = arith.constant 0 : i32
    return %c0_i32, %c0_i32_0 : i32, i32
  }
  func.func @transform_2(%arg0: i32) -> (i32, i32) {
    %c0_i32 = arith.constant 0 : i32
    %c0_i32_0 = arith.constant 0 : i32
    %c0_i32_1 = arith.constant 0 : i32
    return %c0_i32, %c0_i32_0 : i32, i32
  }
  func.func @transform_3(%arg0: i32) -> (i32, i32) {
    %c0_i32 = arith.constant 0 : i32
    %c0_i32_0 = arith.constant 0 : i32
    %c0_i32_1 = arith.constant 0 : i32
    return %c0_i32, %c0_i32_0 : i32, i32
  }
  func.func @transform_4(%arg0: i32) -> (i32, i32) {
    %c0_i32 = arith.constant 0 : i32
    %c0_i32_0 = arith.constant 0 : i32
    return %arg0, %c0_i32 : i32, i32
  }
}

module attributes {stable_mosaic.version = 11 : i64} {
  func.func @_matmul_bn_act_kernel(%arg0: i32, %arg1: memref<512x128xbf16, #tpu.memory_space<vmem>>, %arg2: memref<128x64xbf16, #tpu.memory_space<vmem>>, %arg3: memref<1x64xf32, #tpu.memory_space<vmem>>, %arg4: memref<1x64xf32, #tpu.memory_space<vmem>>, %arg5: memref<512x64xbf16, #tpu.memory_space<vmem>>) attributes {dimension_semantics = [#tpu.dimension_semantics<parallel>], iteration_bounds = array<i64: 1>, scalar_prefetch = 0 : i64, scratch_operands = 0 : i64, tpu.core_type = #tpu.core_type<tc>, window_params = [{transform_indices = @transform_0, window_bounds = array<i64: 512, 128>}, {pipeline_mode = #tpu.pipeline_mode<synchronous>, transform_indices = @transform_1, window_bounds = array<i64: 128, 64>}, {pipeline_mode = #tpu.pipeline_mode<synchronous>, transform_indices = @transform_2, window_bounds = array<i64: 1, 64>}, {pipeline_mode = #tpu.pipeline_mode<synchronous>, transform_indices = @transform_3, window_bounds = array<i64: 1, 64>}, {transform_indices = @transform_4, window_bounds = array<i64: 512, 64>}]} {
    %c0 = arith.constant 0 : index
    %c0_0 = arith.constant 0 : index
    %0 = vector.load %arg1[%c0, %c0_0] : memref<512x128xbf16, #tpu.memory_space<vmem>>, vector<512x128xbf16>
    %c0_1 = arith.constant 0 : index
    %c0_2 = arith.constant 0 : index
    %1 = vector.load %arg2[%c0_1, %c0_2] : memref<128x64xbf16, #tpu.memory_space<vmem>>, vector<128x64xbf16>
    %cst = arith.constant dense<0.000000e+00> : vector<512x64xf32>
    %2 = tpu.matmul %0, %1, %cst {dimension_numbers = #tpu.dot_dimension_numbers<[1], [0], [0], [1], [0, 0, 1, 1], [], []>} : vector<512x128xbf16>, vector<128x64xbf16>, vector<512x64xf32> -> vector<512x64xf32>
    %c0_3 = arith.constant 0 : index
    %c0_4 = arith.constant 0 : index
    %3 = vector.load %arg3[%c0_3, %c0_4] : memref<1x64xf32, #tpu.memory_space<vmem>>, vector<1x64xf32>
    %4 = vector.broadcast %3 : vector<1x64xf32> to vector<512x64xf32>
    %5 = arith.mulf %2, %4 : vector<512x64xf32>
    %c0_5 = arith.constant 0 : index
    %c0_6 = arith.constant 0 : index
    %6 = vector.load %arg4[%c0_5, %c0_6] : memref<1x64xf32, #tpu.memory_space<vmem>>, vector<1x64xf32>
    %7 = vector.broadcast %6 : vector<1x64xf32> to vector<512x64xf32>
    %8 = arith.addf %5, %7 : vector<512x64xf32>
    %cst_7 = arith.constant 0.000000e+00 : f32
    %9 = vector.broadcast %cst_7 : f32 to vector<512x64xf32>
    %10 = arith.maximumf %8, %9 : vector<512x64xf32>
    %11 = arith.truncf %10 : vector<512x64xf32> to vector<512x64xbf16>
    %c0_8 = arith.constant 0 : index
    %c0_9 = arith.constant 0 : index
    %12 = vector.load %arg5[%c0_8, %c0_9] : memref<512x64xbf16, #tpu.memory_space<vmem>>, vector<512x64xbf16>
    tpu.vector_store %arg5[%c0_8, %c0_9], %11 {strides = array<i32>} : memref<512x64xbf16, #tpu.memory_space<vmem>>, vector<512x64xbf16>,
    return
  }
  func.func @transform_0(%arg0: i32) -> (i32, i32) {
    %c0_i32 = arith.constant 0 : i32
    %c0_i32_0 = arith.constant 0 : i32
    return %arg0, %c0_i32 : i32, i32
  }
  func.func @transform_1(%arg0: i32) -> (i32, i32) {
    %c0_i32 = arith.constant 0 : i32
    %c0_i32_0 = arith.constant 0 : i32
    %c0_i32_1 = arith.constant 0 : i32
    return %c0_i32, %c0_i32_0 : i32, i32
  }
  func.func @transform_2(%arg0: i32) -> (i32, i32) {
    %c0_i32 = arith.constant 0 : i32
    %c0_i32_0 = arith.constant 0 : i32
    %c0_i32_1 = arith.constant 0 : i32
    return %c0_i32, %c0_i32_0 : i32, i32
  }
  func.func @transform_3(%arg0: i32) -> (i32, i32) {
    %c0_i32 = arith.constant 0 : i32
    %c0_i32_0 = arith.constant 0 : i32
    %c0_i32_1 = arith.constant 0 : i32
    return %c0_i32, %c0_i32_0 : i32, i32
  }
  func.func @transform_4(%arg0: i32) -> (i32, i32) {
    %c0_i32 = arith.constant 0 : i32
    %c0_i32_0 = arith.constant 0 : i32
    return %arg0, %c0_i32 : i32, i32
  }
}

module attributes {stable_mosaic.version = 11 : i64} {
  func.func @_matmul_bn_act_kernel(%arg0: i32, %arg1: memref<128x256xbf16, #tpu.memory_space<vmem>>, %arg2: memref<256x128xbf16, #tpu.memory_space<vmem>>, %arg3: memref<1x128xf32, #tpu.memory_space<vmem>>, %arg4: memref<1x128xf32, #tpu.memory_space<vmem>>, %arg5: memref<128x128xbf16, #tpu.memory_space<vmem>>) attributes {dimension_semantics = [#tpu.dimension_semantics<parallel>], iteration_bounds = array<i64: 1>, scalar_prefetch = 0 : i64, scratch_operands = 0 : i64, tpu.core_type = #tpu.core_type<tc>, window_params = [{transform_indices = @transform_0, window_bounds = array<i64: 128, 256>}, {pipeline_mode = #tpu.pipeline_mode<synchronous>, transform_indices = @transform_1, window_bounds = array<i64: 256, 128>}, {pipeline_mode = #tpu.pipeline_mode<synchronous>, transform_indices = @transform_2, window_bounds = array<i64: 1, 128>}, {pipeline_mode = #tpu.pipeline_mode<synchronous>, transform_indices = @transform_3, window_bounds = array<i64: 1, 128>}, {transform_indices = @transform_4, window_bounds = array<i64: 128, 128>}]} {
    %c0 = arith.constant 0 : index
    %c0_0 = arith.constant 0 : index
    %0 = vector.load %arg1[%c0, %c0_0] : memref<128x256xbf16, #tpu.memory_space<vmem>>, vector<128x256xbf16>
    %c0_1 = arith.constant 0 : index
    %c0_2 = arith.constant 0 : index
    %1 = vector.load %arg2[%c0_1, %c0_2] : memref<256x128xbf16, #tpu.memory_space<vmem>>, vector<256x128xbf16>
    %cst = arith.constant dense<0.000000e+00> : vector<128x128xf32>
    %2 = tpu.matmul %0, %1, %cst {dimension_numbers = #tpu.dot_dimension_numbers<[1], [0], [0], [1], [0, 0, 1, 1], [], []>} : vector<128x256xbf16>, vector<256x128xbf16>, vector<128x128xf32> -> vector<128x128xf32>
    %c0_3 = arith.constant 0 : index
    %c0_4 = arith.constant 0 : index
    %3 = vector.load %arg3[%c0_3, %c0_4] : memref<1x128xf32, #tpu.memory_space<vmem>>, vector<1x128xf32>
    %4 = vector.broadcast %3 : vector<1x128xf32> to vector<128x128xf32>
    %5 = arith.mulf %2, %4 : vector<128x128xf32>
    %c0_5 = arith.constant 0 : index
    %c0_6 = arith.constant 0 : index
    %6 = vector.load %arg4[%c0_5, %c0_6] : memref<1x128xf32, #tpu.memory_space<vmem>>, vector<1x128xf32>
    %7 = vector.broadcast %6 : vector<1x128xf32> to vector<128x128xf32>
    %8 = arith.addf %5, %7 : vector<128x128xf32>
    %cst_7 = arith.constant 0.000000e+00 : f32
    %9 = vector.broadcast %cst_7 : f32 to vector<128x128xf32>
    %10 = arith.maximumf %8, %9 : vector<128x128xf32>
    %11 = arith.truncf %10 : vector<128x128xf32> to vector<128x128xbf16>
    %c0_8 = arith.constant 0 : index
    %c0_9 = arith.constant 0 : index
    %12 = vector.load %arg5[%c0_8, %c0_9] : memref<128x128xbf16, #tpu.memory_space<vmem>>, vector<128x128xbf16>
    tpu.vector_store %arg5[%c0_8, %c0_9], %11 {strides = array<i32>} : memref<128x128xbf16, #tpu.memory_space<vmem>>, vector<128x128xbf16>,
    return
  }
  func.func @transform_0(%arg0: i32) -> (i32, i32) {
    %c0_i32 = arith.constant 0 : i32
    %c0_i32_0 = arith.constant 0 : i32
    return %arg0, %c0_i32 : i32, i32
  }
  func.func @transform_1(%arg0: i32) -> (i32, i32) {
    %c0_i32 = arith.constant 0 : i32
    %c0_i32_0 = arith.constant 0 : i32
    %c0_i32_1 = arith.constant 0 : i32
    return %c0_i32, %c0_i32_0 : i32, i32
  }
  func.func @transform_2(%arg0: i32) -> (i32, i32) {
    %c0_i32 = arith.constant 0 : i32
    %c0_i32_0 = arith.constant 0 : i32
    %c0_i32_1 = arith.constant 0 : i32
    return %c0_i32, %c0_i32_0 : i32, i32
  }
  func.func @transform_3(%arg0: i32) -> (i32, i32) {
    %c0_i32 = arith.constant 0 : i32
    %c0_i32_0 = arith.constant 0 : i32
    %c0_i32_1 = arith.constant 0 : i32
    return %c0_i32, %c0_i32_0 : i32, i32
  }
  func.func @transform_4(%arg0: i32) -> (i32, i32) {
    %c0_i32 = arith.constant 0 : i32
    %c0_i32_0 = arith.constant 0 : i32
    return %arg0, %c0_i32 : i32, i32
  }
}

module attributes {stable_mosaic.version = 11 : i64} {
  func.func @_conv3x3_bn_res_kernel(%arg0: i32, %arg1: memref<1x10x10x128xbf16, #tpu.memory_space<vmem>>, %arg2: memref<9x128x128xbf16, #tpu.memory_space<vmem>>, %arg3: memref<1x128xf32, #tpu.memory_space<vmem>>, %arg4: memref<1x128xf32, #tpu.memory_space<vmem>>, %arg5: memref<64x128xbf16, #tpu.memory_space<vmem>>, %arg6: memref<64x128xbf16, #tpu.memory_space<vmem>>) attributes {dimension_semantics = [#tpu.dimension_semantics<parallel>], iteration_bounds = array<i64: 2>, scalar_prefetch = 0 : i64, scratch_operands = 0 : i64, tpu.core_type = #tpu.core_type<tc>, window_params = [{transform_indices = @transform_0, window_bounds = array<i64: 1, 10, 10, 128>}, {pipeline_mode = #tpu.pipeline_mode<synchronous>, transform_indices = @transform_1, window_bounds = array<i64: 9, 128, 128>}, {pipeline_mode = #tpu.pipeline_mode<synchronous>, transform_indices = @transform_2, window_bounds = array<i64: 1, 128>}, {pipeline_mode = #tpu.pipeline_mode<synchronous>, transform_indices = @transform_3, window_bounds = array<i64: 1, 128>}, {transform_indices = @transform_4, window_bounds = array<i64: 64, 128>}, {transform_indices = @transform_5, window_bounds = array<i64: 64, 128>}]} {
    %cst = arith.constant 0.000000e+00 : f32
    %0 = vector.broadcast %cst : f32 to vector<64x128xf32>
    %c0 = arith.constant 0 : index
    %c0_0 = arith.constant 0 : index
    %c0_1 = arith.constant 0 : index
    %c0_2 = arith.constant 0 : index
    %1 = vector.load %arg1[%c0, %c0_0, %c0_1, %c0_2] : memref<1x10x10x128xbf16, #tpu.memory_space<vmem>>, vector<1x8x8x128xbf16>
    %2 = vector.shape_cast %1 : vector<1x8x8x128xbf16> to vector<8x8x128xbf16>
    %3 = vector.shape_cast %2 : vector<8x8x128xbf16> to vector<64x128xbf16>
    %c0_3 = arith.constant 0 : index
    %c0_4 = arith.constant 0 : index
    %c0_5 = arith.constant 0 : index
    %4 = vector.load %arg2[%c0_3, %c0_4, %c0_5] : memref<9x128x128xbf16, #tpu.memory_space<vmem>>, vector<1x128x128xbf16>
    %5 = vector.shape_cast %4 : vector<1x128x128xbf16> to vector<128x128xbf16>
    %cst_6 = arith.constant dense<0.000000e+00> : vector<64x128xf32>
    %6 = tpu.matmul %3, %5, %cst_6 {dimension_numbers = #tpu.dot_dimension_numbers<[1], [0], [0], [1], [0, 0, 1, 1], [], []>} : vector<64x128xbf16>, vector<128x128xbf16>, vector<64x128xf32> -> vector<64x128xf32>
    %7 = arith.addf %0, %6 : vector<64x128xf32>
    %c0_7 = arith.constant 0 : index
    %c0_8 = arith.constant 0 : index
    %c1 = arith.constant 1 : index
    %c0_9 = arith.constant 0 : index
    %8 = vector.load %arg1[%c0_7, %c0_8, %c1, %c0_9] : memref<1x10x10x128xbf16, #tpu.memory_space<vmem>>, vector<1x8x8x128xbf16>
    %9 = vector.shape_cast %8 : vector<1x8x8x128xbf16> to vector<8x8x128xbf16>
    %10 = vector.shape_cast %9 : vector<8x8x128xbf16> to vector<64x128xbf16>
    %c1_10 = arith.constant 1 : index
    %c0_11 = arith.constant 0 : index
    %c0_12 = arith.constant 0 : index
    %11 = vector.load %arg2[%c1_10, %c0_11, %c0_12] : memref<9x128x128xbf16, #tpu.memory_space<vmem>>, vector<1x128x128xbf16>
    %12 = vector.shape_cast %11 : vector<1x128x128xbf16> to vector<128x128xbf16>
    %cst_13 = arith.constant dense<0.000000e+00> : vector<64x128xf32>
    %13 = tpu.matmul %10, %12, %cst_13 {dimension_numbers = #tpu.dot_dimension_numbers<[1], [0], [0], [1], [0, 0, 1, 1], [], []>} : vector<64x128xbf16>, vector<128x128xbf16>, vector<64x128xf32> -> vector<64x128xf32>
    %14 = arith.addf %7, %13 : vector<64x128xf32>
    %c0_14 = arith.constant 0 : index
    %c0_15 = arith.constant 0 : index
    %c2 = arith.constant 2 : index
    %c0_16 = arith.constant 0 : index
    %15 = vector.load %arg1[%c0_14, %c0_15, %c2, %c0_16] : memref<1x10x10x128xbf16, #tpu.memory_space<vmem>>, vector<1x8x8x128xbf16>
    %16 = vector.shape_cast %15 : vector<1x8x8x128xbf16> to vector<8x8x128xbf16>
    %17 = vector.shape_cast %16 : vector<8x8x128xbf16> to vector<64x128xbf16>
    %c2_17 = arith.constant 2 : index
    %c0_18 = arith.constant 0 : index
    %c0_19 = arith.constant 0 : index
    %18 = vector.load %arg2[%c2_17, %c0_18, %c0_19] : memref<9x128x128xbf16, #tpu.memory_space<vmem>>, vector<1x128x128xbf16>
    %19 = vector.shape_cast %18 : vector<1x128x128xbf16> to vector<128x128xbf16>
    %cst_20 = arith.constant dense<0.000000e+00> : vector<64x128xf32>
    %20 = tpu.matmul %17, %19, %cst_20 {dimension_numbers = #tpu.dot_dimension_numbers<[1], [0], [0], [1], [0, 0, 1, 1], [], []>} : vector<64x128xbf16>, vector<128x128xbf16>, vector<64x128xf32> -> vector<64x128xf32>
    %21 = arith.addf %14, %20 : vector<64x128xf32>
    %c0_21 = arith.constant 0 : index
    %c1_22 = arith.constant 1 : index
    %c0_23 = arith.constant 0 : index
    %c0_24 = arith.constant 0 : index
    %22 = vector.load %arg1[%c0_21, %c1_22, %c0_23, %c0_24] : memref<1x10x10x128xbf16, #tpu.memory_space<vmem>>, vector<1x8x8x128xbf16>
    %23 = vector.shape_cast %22 : vector<1x8x8x128xbf16> to vector<8x8x128xbf16>
    %24 = vector.shape_cast %23 : vector<8x8x128xbf16> to vector<64x128xbf16>
    %c3 = arith.constant 3 : index
    %c0_25 = arith.constant 0 : index
    %c0_26 = arith.constant 0 : index
    %25 = vector.load %arg2[%c3, %c0_25, %c0_26] : memref<9x128x128xbf16, #tpu.memory_space<vmem>>, vector<1x128x128xbf16>
    %26 = vector.shape_cast %25 : vector<1x128x128xbf16> to vector<128x128xbf16>
    %cst_27 = arith.constant dense<0.000000e+00> : vector<64x128xf32>
    %27 = tpu.matmul %24, %26, %cst_27 {dimension_numbers = #tpu.dot_dimension_numbers<[1], [0], [0], [1], [0, 0, 1, 1], [], []>} : vector<64x128xbf16>, vector<128x128xbf16>, vector<64x128xf32> -> vector<64x128xf32>
    %28 = arith.addf %21, %27 : vector<64x128xf32>
    %c0_28 = arith.constant 0 : index
    %c1_29 = arith.constant 1 : index
    %c1_30 = arith.constant 1 : index
    %c0_31 = arith.constant 0 : index
    %29 = vector.load %arg1[%c0_28, %c1_29, %c1_30, %c0_31] : memref<1x10x10x128xbf16, #tpu.memory_space<vmem>>, vector<1x8x8x128xbf16>
    %30 = vector.shape_cast %29 : vector<1x8x8x128xbf16> to vector<8x8x128xbf16>
    %31 = vector.shape_cast %30 : vector<8x8x128xbf16> to vector<64x128xbf16>
    %c4 = arith.constant 4 : index
    %c0_32 = arith.constant 0 : index
    %c0_33 = arith.constant 0 : index
    %32 = vector.load %arg2[%c4, %c0_32, %c0_33] : memref<9x128x128xbf16, #tpu.memory_space<vmem>>, vector<1x128x128xbf16>
    %33 = vector.shape_cast %32 : vector<1x128x128xbf16> to vector<128x128xbf16>
    %cst_34 = arith.constant dense<0.000000e+00> : vector<64x128xf32>
    %34 = tpu.matmul %31, %33, %cst_34 {dimension_numbers = #tpu.dot_dimension_numbers<[1], [0], [0], [1], [0, 0, 1, 1], [], []>} : vector<64x128xbf16>, vector<128x128xbf16>, vector<64x128xf32> -> vector<64x128xf32>
    %35 = arith.addf %28, %34 : vector<64x128xf32>
    %c0_35 = arith.constant 0 : index
    %c1_36 = arith.constant 1 : index
    %c2_37 = arith.constant 2 : index
    %c0_38 = arith.constant 0 : index
    %36 = vector.load %arg1[%c0_35, %c1_36, %c2_37, %c0_38] : memref<1x10x10x128xbf16, #tpu.memory_space<vmem>>, vector<1x8x8x128xbf16>
    %37 = vector.shape_cast %36 : vector<1x8x8x128xbf16> to vector<8x8x128xbf16>
    %38 = vector.shape_cast %37 : vector<8x8x128xbf16> to vector<64x128xbf16>
    %c5 = arith.constant 5 : index
    %c0_39 = arith.constant 0 : index
    %c0_40 = arith.constant 0 : index
    %39 = vector.load %arg2[%c5, %c0_39, %c0_40] : memref<9x128x128xbf16, #tpu.memory_space<vmem>>, vector<1x128x128xbf16>
    %40 = vector.shape_cast %39 : vector<1x128x128xbf16> to vector<128x128xbf16>
    %cst_41 = arith.constant dense<0.000000e+00> : vector<64x128xf32>
    %41 = tpu.matmul %38, %40, %cst_41 {dimension_numbers = #tpu.dot_dimension_numbers<[1], [0], [0], [1], [0, 0, 1, 1], [], []>} : vector<64x128xbf16>, vector<128x128xbf16>, vector<64x128xf32> -> vector<64x128xf32>
    %42 = arith.addf %35, %41 : vector<64x128xf32>
    %c0_42 = arith.constant 0 : index
    %c2_43 = arith.constant 2 : index
    %c0_44 = arith.constant 0 : index
    %c0_45 = arith.constant 0 : index
    %43 = vector.load %arg1[%c0_42, %c2_43, %c0_44, %c0_45] : memref<1x10x10x128xbf16, #tpu.memory_space<vmem>>, vector<1x8x8x128xbf16>
    %44 = vector.shape_cast %43 : vector<1x8x8x128xbf16> to vector<8x8x128xbf16>
    %45 = vector.shape_cast %44 : vector<8x8x128xbf16> to vector<64x128xbf16>
    %c6 = arith.constant 6 : index
    %c0_46 = arith.constant 0 : index
    %c0_47 = arith.constant 0 : index
    %46 = vector.load %arg2[%c6, %c0_46, %c0_47] : memref<9x128x128xbf16, #tpu.memory_space<vmem>>, vector<1x128x128xbf16>
    %47 = vector.shape_cast %46 : vector<1x128x128xbf16> to vector<128x128xbf16>
    %cst_48 = arith.constant dense<0.000000e+00> : vector<64x128xf32>
    %48 = tpu.matmul %45, %47, %cst_48 {dimension_numbers = #tpu.dot_dimension_numbers<[1], [0], [0], [1], [0, 0, 1, 1], [], []>} : vector<64x128xbf16>, vector<128x128xbf16>, vector<64x128xf32> -> vector<64x128xf32>
    %49 = arith.addf %42, %48 : vector<64x128xf32>
    %c0_49 = arith.constant 0 : index
    %c2_50 = arith.constant 2 : index
    %c1_51 = arith.constant 1 : index
    %c0_52 = arith.constant 0 : index
    %50 = vector.load %arg1[%c0_49, %c2_50, %c1_51, %c0_52] : memref<1x10x10x128xbf16, #tpu.memory_space<vmem>>, vector<1x8x8x128xbf16>
    %51 = vector.shape_cast %50 : vector<1x8x8x128xbf16> to vector<8x8x128xbf16>
    %52 = vector.shape_cast %51 : vector<8x8x128xbf16> to vector<64x128xbf16>
    %c7 = arith.constant 7 : index
    %c0_53 = arith.constant 0 : index
    %c0_54 = arith.constant 0 : index
    %53 = vector.load %arg2[%c7, %c0_53, %c0_54] : memref<9x128x128xbf16, #tpu.memory_space<vmem>>, vector<1x128x128xbf16>
    %54 = vector.shape_cast %53 : vector<1x128x128xbf16> to vector<128x128xbf16>
    %cst_55 = arith.constant dense<0.000000e+00> : vector<64x128xf32>
    %55 = tpu.matmul %52, %54, %cst_55 {dimension_numbers = #tpu.dot_dimension_numbers<[1], [0], [0], [1], [0, 0, 1, 1], [], []>} : vector<64x128xbf16>, vector<128x128xbf16>, vector<64x128xf32> -> vector<64x128xf32>
    %56 = arith.addf %49, %55 : vector<64x128xf32>
    %c0_56 = arith.constant 0 : index
    %c2_57 = arith.constant 2 : index
    %c2_58 = arith.constant 2 : index
    %c0_59 = arith.constant 0 : index
    %57 = vector.load %arg1[%c0_56, %c2_57, %c2_58, %c0_59] : memref<1x10x10x128xbf16, #tpu.memory_space<vmem>>, vector<1x8x8x128xbf16>
    %58 = vector.shape_cast %57 : vector<1x8x8x128xbf16> to vector<8x8x128xbf16>
    %59 = vector.shape_cast %58 : vector<8x8x128xbf16> to vector<64x128xbf16>
    %c8 = arith.constant 8 : index
    %c0_60 = arith.constant 0 : index
    %c0_61 = arith.constant 0 : index
    %60 = vector.load %arg2[%c8, %c0_60, %c0_61] : memref<9x128x128xbf16, #tpu.memory_space<vmem>>, vector<1x128x128xbf16>
    %61 = vector.shape_cast %60 : vector<1x128x128xbf16> to vector<128x128xbf16>
    %cst_62 = arith.constant dense<0.000000e+00> : vector<64x128xf32>
    %62 = tpu.matmul %59, %61, %cst_62 {dimension_numbers = #tpu.dot_dimension_numbers<[1], [0], [0], [1], [0, 0, 1, 1], [], []>} : vector<64x128xbf16>, vector<128x128xbf16>, vector<64x128xf32> -> vector<64x128xf32>
    %63 = arith.addf %56, %62 : vector<64x128xf32>
    %c0_63 = arith.constant 0 : index
    %c0_64 = arith.constant 0 : index
    %64 = vector.load %arg3[%c0_63, %c0_64] : memref<1x128xf32, #tpu.memory_space<vmem>>, vector<1x128xf32>
    %65 = vector.broadcast %64 : vector<1x128xf32> to vector<64x128xf32>
    %66 = arith.mulf %63, %65 : vector<64x128xf32>
    %c0_65 = arith.constant 0 : index
    %c0_66 = arith.constant 0 : index
    %67 = vector.load %arg4[%c0_65, %c0_66] : memref<1x128xf32, #tpu.memory_space<vmem>>, vector<1x128xf32>
    %68 = vector.broadcast %67 : vector<1x128xf32> to vector<64x128xf32>
    %69 = arith.addf %66, %68 : vector<64x128xf32>
    %c0_67 = arith.constant 0 : index
    %c0_68 = arith.constant 0 : index
    %70 = vector.load %arg5[%c0_67, %c0_68] : memref<64x128xbf16, #tpu.memory_space<vmem>>, vector<64x128xbf16>
    %71 = arith.extf %70 : vector<64x128xbf16> to vector<64x128xf32>
    %72 = arith.addf %69, %71 : vector<64x128xf32>
    %73 = arith.truncf %72 : vector<64x128xf32> to vector<64x128xbf16>
    %c0_69 = arith.constant 0 : index
    %c0_70 = arith.constant 0 : index
    %74 = vector.load %arg6[%c0_69, %c0_70] : memref<64x128xbf16, #tpu.memory_space<vmem>>, vector<64x128xbf16>
    tpu.vector_store %arg6[%c0_69, %c0_70], %73 {strides = array<i32>} : memref<64x128xbf16, #tpu.memory_space<vmem>>, vector<64x128xbf16>,
    return
  }
  func.func @transform_0(%arg0: i32) -> (i32, i32, i32, i32) {
    %c0_i32 = arith.constant 0 : i32
    %c0_i32_0 = arith.constant 0 : i32
    %c0_i32_1 = arith.constant 0 : i32
    %c0_i32_2 = arith.constant 0 : i32
    return %arg0, %c0_i32, %c0_i32_0, %c0_i32_1 : i32, i32, i32, i32
  }
  func.func @transform_1(%arg0: i32) -> (i32, i32, i32) {
    %c0_i32 = arith.constant 0 : i32
    %c0_i32_0 = arith.constant 0 : i32
    %c0_i32_1 = arith.constant 0 : i32
    %c0_i32_2 = arith.constant 0 : i32
    return %c0_i32, %c0_i32_0, %c0_i32_1 : i32, i32, i32
  }
  func.func @transform_2(%arg0: i32) -> (i32, i32) {
    %c0_i32 = arith.constant 0 : i32
    %c0_i32_0 = arith.constant 0 : i32
    %c0_i32_1 = arith.constant 0 : i32
    return %c0_i32, %c0_i32_0 : i32, i32
  }
  func.func @transform_3(%arg0: i32) -> (i32, i32) {
    %c0_i32 = arith.constant 0 : i32
    %c0_i32_0 = arith.constant 0 : i32
    %c0_i32_1 = arith.constant 0 : i32
    return %c0_i32, %c0_i32_0 : i32, i32
  }
  func.func @transform_4(%arg0: i32) -> (i32, i32) {
    %c0_i32 = arith.constant 0 : i32
    %c0_i32_0 = arith.constant 0 : i32
    return %arg0, %c0_i32 : i32, i32
  }
  func.func @transform_5(%arg0: i32) -> (i32, i32) {
    %c0_i32 = arith.constant 0 : i32
    %c0_i32_0 = arith.constant 0 : i32
    return %arg0, %c0_i32 : i32, i32
  }
}

module attributes {stable_mosaic.version = 11 : i64} {
  func.func @_merged_head_kernel(%arg0: i32, %arg1: memref<1x10x10x128xbf16, #tpu.memory_space<vmem>>, %arg2: memref<9x128x128xbf16, #tpu.memory_space<vmem>>, %arg3: memref<1x128xf32, #tpu.memory_space<vmem>>, %arg4: memref<1x128xf32, #tpu.memory_space<vmem>>, %arg5: memref<128x7xf32, #tpu.memory_space<vmem>>, %arg6: memref<1x7xf32, #tpu.memory_space<vmem>>, %arg7: memref<64x7xf32, #tpu.memory_space<vmem>>) attributes {dimension_semantics = [#tpu.dimension_semantics<parallel>], iteration_bounds = array<i64: 2>, scalar_prefetch = 0 : i64, scratch_operands = 0 : i64, tpu.core_type = #tpu.core_type<tc>, window_params = [{transform_indices = @transform_0, window_bounds = array<i64: 1, 10, 10, 128>}, {pipeline_mode = #tpu.pipeline_mode<synchronous>, transform_indices = @transform_1, window_bounds = array<i64: 9, 128, 128>}, {pipeline_mode = #tpu.pipeline_mode<synchronous>, transform_indices = @transform_2, window_bounds = array<i64: 1, 128>}, {pipeline_mode = #tpu.pipeline_mode<synchronous>, transform_indices = @transform_3, window_bounds = array<i64: 1, 128>}, {pipeline_mode = #tpu.pipeline_mode<synchronous>, transform_indices = @transform_4, window_bounds = array<i64: 128, 7>}, {pipeline_mode = #tpu.pipeline_mode<synchronous>, transform_indices = @transform_5, window_bounds = array<i64: 1, 7>}, {transform_indices = @transform_6, window_bounds = array<i64: 64, 7>}]} {
    %cst = arith.constant 0.000000e+00 : f32
    %0 = vector.broadcast %cst : f32 to vector<64x128xf32>
    %c0 = arith.constant 0 : index
    %c0_0 = arith.constant 0 : index
    %c0_1 = arith.constant 0 : index
    %c0_2 = arith.constant 0 : index
    %1 = vector.load %arg1[%c0, %c0_0, %c0_1, %c0_2] : memref<1x10x10x128xbf16, #tpu.memory_space<vmem>>, vector<1x8x8x128xbf16>
    %2 = vector.shape_cast %1 : vector<1x8x8x128xbf16> to vector<8x8x128xbf16>
    %3 = vector.shape_cast %2 : vector<8x8x128xbf16> to vector<64x128xbf16>
    %c0_3 = arith.constant 0 : index
    %c0_4 = arith.constant 0 : index
    %c0_5 = arith.constant 0 : index
    %4 = vector.load %arg2[%c0_3, %c0_4, %c0_5] : memref<9x128x128xbf16, #tpu.memory_space<vmem>>, vector<1x128x128xbf16>
    %5 = vector.shape_cast %4 : vector<1x128x128xbf16> to vector<128x128xbf16>
    %cst_6 = arith.constant dense<0.000000e+00> : vector<64x128xf32>
    %6 = tpu.matmul %3, %5, %cst_6 {dimension_numbers = #tpu.dot_dimension_numbers<[1], [0], [0], [1], [0, 0, 1, 1], [], []>} : vector<64x128xbf16>, vector<128x128xbf16>, vector<64x128xf32> -> vector<64x128xf32>
    %7 = arith.addf %0, %6 : vector<64x128xf32>
    %c0_7 = arith.constant 0 : index
    %c0_8 = arith.constant 0 : index
    %c1 = arith.constant 1 : index
    %c0_9 = arith.constant 0 : index
    %8 = vector.load %arg1[%c0_7, %c0_8, %c1, %c0_9] : memref<1x10x10x128xbf16, #tpu.memory_space<vmem>>, vector<1x8x8x128xbf16>
    %9 = vector.shape_cast %8 : vector<1x8x8x128xbf16> to vector<8x8x128xbf16>
    %10 = vector.shape_cast %9 : vector<8x8x128xbf16> to vector<64x128xbf16>
    %c1_10 = arith.constant 1 : index
    %c0_11 = arith.constant 0 : index
    %c0_12 = arith.constant 0 : index
    %11 = vector.load %arg2[%c1_10, %c0_11, %c0_12] : memref<9x128x128xbf16, #tpu.memory_space<vmem>>, vector<1x128x128xbf16>
    %12 = vector.shape_cast %11 : vector<1x128x128xbf16> to vector<128x128xbf16>
    %cst_13 = arith.constant dense<0.000000e+00> : vector<64x128xf32>
    %13 = tpu.matmul %10, %12, %cst_13 {dimension_numbers = #tpu.dot_dimension_numbers<[1], [0], [0], [1], [0, 0, 1, 1], [], []>} : vector<64x128xbf16>, vector<128x128xbf16>, vector<64x128xf32> -> vector<64x128xf32>
    %14 = arith.addf %7, %13 : vector<64x128xf32>
    %c0_14 = arith.constant 0 : index
    %c0_15 = arith.constant 0 : index
    %c2 = arith.constant 2 : index
    %c0_16 = arith.constant 0 : index
    %15 = vector.load %arg1[%c0_14, %c0_15, %c2, %c0_16] : memref<1x10x10x128xbf16, #tpu.memory_space<vmem>>, vector<1x8x8x128xbf16>
    %16 = vector.shape_cast %15 : vector<1x8x8x128xbf16> to vector<8x8x128xbf16>
    %17 = vector.shape_cast %16 : vector<8x8x128xbf16> to vector<64x128xbf16>
    %c2_17 = arith.constant 2 : index
    %c0_18 = arith.constant 0 : index
    %c0_19 = arith.constant 0 : index
    %18 = vector.load %arg2[%c2_17, %c0_18, %c0_19] : memref<9x128x128xbf16, #tpu.memory_space<vmem>>, vector<1x128x128xbf16>
    %19 = vector.shape_cast %18 : vector<1x128x128xbf16> to vector<128x128xbf16>
    %cst_20 = arith.constant dense<0.000000e+00> : vector<64x128xf32>
    %20 = tpu.matmul %17, %19, %cst_20 {dimension_numbers = #tpu.dot_dimension_numbers<[1], [0], [0], [1], [0, 0, 1, 1], [], []>} : vector<64x128xbf16>, vector<128x128xbf16>, vector<64x128xf32> -> vector<64x128xf32>
    %21 = arith.addf %14, %20 : vector<64x128xf32>
    %c0_21 = arith.constant 0 : index
    %c1_22 = arith.constant 1 : index
    %c0_23 = arith.constant 0 : index
    %c0_24 = arith.constant 0 : index
    %22 = vector.load %arg1[%c0_21, %c1_22, %c0_23, %c0_24] : memref<1x10x10x128xbf16, #tpu.memory_space<vmem>>, vector<1x8x8x128xbf16>
    %23 = vector.shape_cast %22 : vector<1x8x8x128xbf16> to vector<8x8x128xbf16>
    %24 = vector.shape_cast %23 : vector<8x8x128xbf16> to vector<64x128xbf16>
    %c3 = arith.constant 3 : index
    %c0_25 = arith.constant 0 : index
    %c0_26 = arith.constant 0 : index
    %25 = vector.load %arg2[%c3, %c0_25, %c0_26] : memref<9x128x128xbf16, #tpu.memory_space<vmem>>, vector<1x128x128xbf16>
    %26 = vector.shape_cast %25 : vector<1x128x128xbf16> to vector<128x128xbf16>
    %cst_27 = arith.constant dense<0.000000e+00> : vector<64x128xf32>
    %27 = tpu.matmul %24, %26, %cst_27 {dimension_numbers = #tpu.dot_dimension_numbers<[1], [0], [0], [1], [0, 0, 1, 1], [], []>} : vector<64x128xbf16>, vector<128x128xbf16>, vector<64x128xf32> -> vector<64x128xf32>
    %28 = arith.addf %21, %27 : vector<64x128xf32>
    %c0_28 = arith.constant 0 : index
    %c1_29 = arith.constant 1 : index
    %c1_30 = arith.constant 1 : index
    %c0_31 = arith.constant 0 : index
    %29 = vector.load %arg1[%c0_28, %c1_29, %c1_30, %c0_31] : memref<1x10x10x128xbf16, #tpu.memory_space<vmem>>, vector<1x8x8x128xbf16>
    %30 = vector.shape_cast %29 : vector<1x8x8x128xbf16> to vector<8x8x128xbf16>
    %31 = vector.shape_cast %30 : vector<8x8x128xbf16> to vector<64x128xbf16>
    %c4 = arith.constant 4 : index
    %c0_32 = arith.constant 0 : index
    %c0_33 = arith.constant 0 : index
    %32 = vector.load %arg2[%c4, %c0_32, %c0_33] : memref<9x128x128xbf16, #tpu.memory_space<vmem>>, vector<1x128x128xbf16>
    %33 = vector.shape_cast %32 : vector<1x128x128xbf16> to vector<128x128xbf16>
    %cst_34 = arith.constant dense<0.000000e+00> : vector<64x128xf32>
    %34 = tpu.matmul %31, %33, %cst_34 {dimension_numbers = #tpu.dot_dimension_numbers<[1], [0], [0], [1], [0, 0, 1, 1], [], []>} : vector<64x128xbf16>, vector<128x128xbf16>, vector<64x128xf32> -> vector<64x128xf32>
    %35 = arith.addf %28, %34 : vector<64x128xf32>
    %c0_35 = arith.constant 0 : index
    %c1_36 = arith.constant 1 : index
    %c2_37 = arith.constant 2 : index
    %c0_38 = arith.constant 0 : index
    %36 = vector.load %arg1[%c0_35, %c1_36, %c2_37, %c0_38] : memref<1x10x10x128xbf16, #tpu.memory_space<vmem>>, vector<1x8x8x128xbf16>
    %37 = vector.shape_cast %36 : vector<1x8x8x128xbf16> to vector<8x8x128xbf16>
    %38 = vector.shape_cast %37 : vector<8x8x128xbf16> to vector<64x128xbf16>
    %c5 = arith.constant 5 : index
    %c0_39 = arith.constant 0 : index
    %c0_40 = arith.constant 0 : index
    %39 = vector.load %arg2[%c5, %c0_39, %c0_40] : memref<9x128x128xbf16, #tpu.memory_space<vmem>>, vector<1x128x128xbf16>
    %40 = vector.shape_cast %39 : vector<1x128x128xbf16> to vector<128x128xbf16>
    %cst_41 = arith.constant dense<0.000000e+00> : vector<64x128xf32>
    %41 = tpu.matmul %38, %40, %cst_41 {dimension_numbers = #tpu.dot_dimension_numbers<[1], [0], [0], [1], [0, 0, 1, 1], [], []>} : vector<64x128xbf16>, vector<128x128xbf16>, vector<64x128xf32> -> vector<64x128xf32>
    %42 = arith.addf %35, %41 : vector<64x128xf32>
    %c0_42 = arith.constant 0 : index
    %c2_43 = arith.constant 2 : index
    %c0_44 = arith.constant 0 : index
    %c0_45 = arith.constant 0 : index
    %43 = vector.load %arg1[%c0_42, %c2_43, %c0_44, %c0_45] : memref<1x10x10x128xbf16, #tpu.memory_space<vmem>>, vector<1x8x8x128xbf16>
    %44 = vector.shape_cast %43 : vector<1x8x8x128xbf16> to vector<8x8x128xbf16>
    %45 = vector.shape_cast %44 : vector<8x8x128xbf16> to vector<64x128xbf16>
    %c6 = arith.constant 6 : index
    %c0_46 = arith.constant 0 : index
    %c0_47 = arith.constant 0 : index
    %46 = vector.load %arg2[%c6, %c0_46, %c0_47] : memref<9x128x128xbf16, #tpu.memory_space<vmem>>, vector<1x128x128xbf16>
    %47 = vector.shape_cast %46 : vector<1x128x128xbf16> to vector<128x128xbf16>
    %cst_48 = arith.constant dense<0.000000e+00> : vector<64x128xf32>
    %48 = tpu.matmul %45, %47, %cst_48 {dimension_numbers = #tpu.dot_dimension_numbers<[1], [0], [0], [1], [0, 0, 1, 1], [], []>} : vector<64x128xbf16>, vector<128x128xbf16>, vector<64x128xf32> -> vector<64x128xf32>
    %49 = arith.addf %42, %48 : vector<64x128xf32>
    %c0_49 = arith.constant 0 : index
    %c2_50 = arith.constant 2 : index
    %c1_51 = arith.constant 1 : index
    %c0_52 = arith.constant 0 : index
    %50 = vector.load %arg1[%c0_49, %c2_50, %c1_51, %c0_52] : memref<1x10x10x128xbf16, #tpu.memory_space<vmem>>, vector<1x8x8x128xbf16>
    %51 = vector.shape_cast %50 : vector<1x8x8x128xbf16> to vector<8x8x128xbf16>
    %52 = vector.shape_cast %51 : vector<8x8x128xbf16> to vector<64x128xbf16>
    %c7 = arith.constant 7 : index
    %c0_53 = arith.constant 0 : index
    %c0_54 = arith.constant 0 : index
    %53 = vector.load %arg2[%c7, %c0_53, %c0_54] : memref<9x128x128xbf16, #tpu.memory_space<vmem>>, vector<1x128x128xbf16>
    %54 = vector.shape_cast %53 : vector<1x128x128xbf16> to vector<128x128xbf16>
    %cst_55 = arith.constant dense<0.000000e+00> : vector<64x128xf32>
    %55 = tpu.matmul %52, %54, %cst_55 {dimension_numbers = #tpu.dot_dimension_numbers<[1], [0], [0], [1], [0, 0, 1, 1], [], []>} : vector<64x128xbf16>, vector<128x128xbf16>, vector<64x128xf32> -> vector<64x128xf32>
    %56 = arith.addf %49, %55 : vector<64x128xf32>
    %c0_56 = arith.constant 0 : index
    %c2_57 = arith.constant 2 : index
    %c2_58 = arith.constant 2 : index
    %c0_59 = arith.constant 0 : index
    %57 = vector.load %arg1[%c0_56, %c2_57, %c2_58, %c0_59] : memref<1x10x10x128xbf16, #tpu.memory_space<vmem>>, vector<1x8x8x128xbf16>
    %58 = vector.shape_cast %57 : vector<1x8x8x128xbf16> to vector<8x8x128xbf16>
    %59 = vector.shape_cast %58 : vector<8x8x128xbf16> to vector<64x128xbf16>
    %c8 = arith.constant 8 : index
    %c0_60 = arith.constant 0 : index
    %c0_61 = arith.constant 0 : index
    %60 = vector.load %arg2[%c8, %c0_60, %c0_61] : memref<9x128x128xbf16, #tpu.memory_space<vmem>>, vector<1x128x128xbf16>
    %61 = vector.shape_cast %60 : vector<1x128x128xbf16> to vector<128x128xbf16>
    %cst_62 = arith.constant dense<0.000000e+00> : vector<64x128xf32>
    %62 = tpu.matmul %59, %61, %cst_62 {dimension_numbers = #tpu.dot_dimension_numbers<[1], [0], [0], [1], [0, 0, 1, 1], [], []>} : vector<64x128xbf16>, vector<128x128xbf16>, vector<64x128xf32> -> vector<64x128xf32>
    %63 = arith.addf %56, %62 : vector<64x128xf32>
    %c0_63 = arith.constant 0 : index
    %c0_64 = arith.constant 0 : index
    %64 = vector.load %arg3[%c0_63, %c0_64] : memref<1x128xf32, #tpu.memory_space<vmem>>, vector<1x128xf32>
    %65 = vector.broadcast %64 : vector<1x128xf32> to vector<64x128xf32>
    %66 = arith.mulf %63, %65 : vector<64x128xf32>
    %c0_65 = arith.constant 0 : index
    %c0_66 = arith.constant 0 : index
    %67 = vector.load %arg4[%c0_65, %c0_66] : memref<1x128xf32, #tpu.memory_space<vmem>>, vector<1x128xf32>
    %68 = vector.broadcast %67 : vector<1x128xf32> to vector<64x128xf32>
    %69 = arith.addf %66, %68 : vector<64x128xf32>
    %cst_67 = arith.constant 0.000000e+00 : f32
    %70 = vector.broadcast %cst_67 : f32 to vector<64x128xf32>
    %71 = arith.maximumf %69, %70 : vector<64x128xf32>
    %c0_68 = arith.constant 0 : index
    %c0_69 = arith.constant 0 : index
    %72 = vector.load %arg5[%c0_68, %c0_69] : memref<128x7xf32, #tpu.memory_space<vmem>>, vector<128x7xf32>
    %cst_70 = arith.constant dense<0.000000e+00> : vector<64x7xf32>
    %73 = tpu.matmul %71, %72, %cst_70 {dimension_numbers = #tpu.dot_dimension_numbers<[1], [0], [0], [1], [0, 0, 1, 1], [], []>} : vector<64x128xf32>, vector<128x7xf32>, vector<64x7xf32> -> vector<64x7xf32>
    %c0_71 = arith.constant 0 : index
    %c0_72 = arith.constant 0 : index
    %74 = vector.load %arg6[%c0_71, %c0_72] : memref<1x7xf32, #tpu.memory_space<vmem>>, vector<1x7xf32>
    %75 = vector.broadcast %74 : vector<1x7xf32> to vector<64x7xf32>
    %76 = arith.addf %73, %75 : vector<64x7xf32>
    %c0_73 = arith.constant 0 : index
    %c0_74 = arith.constant 0 : index
    %77 = vector.load %arg7[%c0_73, %c0_74] : memref<64x7xf32, #tpu.memory_space<vmem>>, vector<64x7xf32>
    tpu.vector_store %arg7[%c0_73, %c0_74], %76 {strides = array<i32>} : memref<64x7xf32, #tpu.memory_space<vmem>>, vector<64x7xf32>,
    return
  }
  func.func @transform_0(%arg0: i32) -> (i32, i32, i32, i32) {
    %c0_i32 = arith.constant 0 : i32
    %c0_i32_0 = arith.constant 0 : i32
    %c0_i32_1 = arith.constant 0 : i32
    %c0_i32_2 = arith.constant 0 : i32
    return %arg0, %c0_i32, %c0_i32_0, %c0_i32_1 : i32, i32, i32, i32
  }
  func.func @transform_1(%arg0: i32) -> (i32, i32, i32) {
    %c0_i32 = arith.constant 0 : i32
    %c0_i32_0 = arith.constant 0 : i32
    %c0_i32_1 = arith.constant 0 : i32
    %c0_i32_2 = arith.constant 0 : i32
    return %c0_i32, %c0_i32_0, %c0_i32_1 : i32, i32, i32
  }
  func.func @transform_2(%arg0: i32) -> (i32, i32) {
    %c0_i32 = arith.constant 0 : i32
    %c0_i32_0 = arith.constant 0 : i32
    %c0_i32_1 = arith.constant 0 : i32
    return %c0_i32, %c0_i32_0 : i32, i32
  }
  func.func @transform_3(%arg0: i32) -> (i32, i32) {
    %c0_i32 = arith.constant 0 : i32
    %c0_i32_0 = arith.constant 0 : i32
    %c0_i32_1 = arith.constant 0 : i32
    return %c0_i32, %c0_i32_0 : i32, i32
  }
  func.func @transform_4(%arg0: i32) -> (i32, i32) {
    %c0_i32 = arith.constant 0 : i32
    %c0_i32_0 = arith.constant 0 : i32
    %c0_i32_1 = arith.constant 0 : i32
    return %c0_i32, %c0_i32_0 : i32, i32
  }
  func.func @transform_5(%arg0: i32) -> (i32, i32) {
    %c0_i32 = arith.constant 0 : i32
    %c0_i32_0 = arith.constant 0 : i32
    %c0_i32_1 = arith.constant 0 : i32
    return %c0_i32, %c0_i32_0 : i32, i32
  }
  func.func @transform_6(%arg0: i32) -> (i32, i32) {
    %c0_i32 = arith.constant 0 : i32
    %c0_i32_0 = arith.constant 0 : i32
    return %arg0, %c0_i32 : i32, i32
  }
}

</mosaic_0001>

<llo_original>
// kernel: network_forward.6
$region0: #{network_forward.6}
  #allocation0 [shape = 'u32[]', space=smem, size = 0x4, offset = 0x4, fixed_abs, tag = 'smem constant byte address 0x4 - core index']
  #allocation1 [shape = 'u32[144,128]{1,0:T(1,128)}', space=vmem, size = 0x12000, scoped, tag = 'internal scratch']
  %s0 = inlined_call_operand.vmem [shape: bf16[2048,12], index: 0, kind: input, shape index: {}]
  %s1 = inlined_call_operand.vmem [shape: bf16[12,32], index: 1, kind: input, shape index: {}]
  %s2 = inlined_call_operand.vmem [shape: f32[1,32], index: 2, kind: input, shape index: {}]
  %s3 = inlined_call_operand.vmem [shape: f32[1,32], index: 3, kind: input, shape index: {}]
  %s4 = inlined_call_operand.vmem [shape: bf16[2048,32], index: 4, kind: output, shape index: {}]
  %s5 = sld [smem:[#allocation0]]
  $region49: #{network_forward.6} parent=0
    _
  %s7 = ssub.s32 1, %s5
  %s8 = scalar_select 0, %s7, %s5
  loop: start=0, step=1, limit=6
  $region2: #{network_forward.6} parent=0 // loop_pre_header
    _
  $region3: #{network_forward.6} parent=0 // loop_header
    %s10 = sphi 0, %s14
    %p11 = scmp.ge.s32.totalorder %s10, 6
    %s20 = sphi 0, %s22
    %s23 = sphi 0, %s20
    %s24 = sphi 0, %s23
    %s40 = sphi 0, %s24
    %s44 = sphi 0, %s44
    %s46 = sphi 0, %s44
    %s47 = sphi 0, %s46
    %s61 = sphi 0, %s47
    %s65 = sphi 0, %s65
    %s67 = sphi 0, %s65
    %s68 = sphi 0, %s67
    %s82 = sphi 0, %s68
    %s86 = sphi 0, %s86
    %s88 = sphi 0, %s86
    %s89 = sphi 0, %s88
    %s103 = sphi 0, %s89
    %s109 = sphi 0, %s111
    %s112 = sphi 0, %s109
    %s113 = sphi 0, %s112
    %s129 = sphi 0, %s113
  $region4: #{network_forward.6} parent=0 // loop_header_branch
    %13 = sbr.rel (%p11) target = $region8
  $region5: #{network_forward.6} parent=0 // loop_body
    %s15 = ssub.s32 %s10, 1
    %s16 = ssub.s32 %s10, 2
    %s17 = sadd.s32 %s10, 1
    %s18 = ssub.s32 %s10, %s17
    %p19 = scmp.eq.s32.totalorder %s18, 0
    %s21 = sadd.s32 %s20, 1
    %s22 = scalar_select %p19, %s20, %s21
    %p25 = pneg %p19
    %p26 = scmp.eq.s32.totalorder %s10, 3
    %p27 = por %p25, %p26
    %p28 = scmp.ne.s32.totalorder %s20, %s23
    %p29 = scmp.eq.s32.totalorder %s10, 0
    %p30 = por %p28, %p29
    %p31 = scmp.ne.s32.totalorder %s20, %s23
    %p32 = scmp.eq.s32.totalorder %s15, 3
    %p33 = por %p31, %p32
    %p34 = scmp.ne.s32.totalorder %s23, %s24
    %p35 = scmp.eq.s32.totalorder %s15, 0
    %p36 = por %p34, %p35
    %p37 = scmp.ne.s32.totalorder %s23, %s24
    %p38 = scmp.eq.s32.totalorder %s16, 3
    %p39 = por %p37, %p38
    %p41 = scmp.ne.s32.totalorder %s24, %s40
    %p42 = scmp.eq.s32.totalorder %s16, 0
    %p43 = por %p41, %p42
    %s45 = sadd.s32 %s44, 1
    %p48 = scmp.eq.s32.totalorder %s10, 3
    %p49 = scmp.ne.s32.totalorder %s44, %s46
    %p50 = scmp.eq.s32.totalorder %s10, 0
    %p51 = por %p49, %p50
    %p52 = scmp.ne.s32.totalorder %s44, %s46
    %p53 = scmp.eq.s32.totalorder %s15, 3
    %p54 = por %p52, %p53
    %p55 = scmp.ne.s32.totalorder %s46, %s47
    %p56 = scmp.eq.s32.totalorder %s15, 0
    %p57 = por %p55, %p56
    %p58 = scmp.ne.s32.totalorder %s46, %s47
    %p59 = scmp.eq.s32.totalorder %s16, 3
    %p60 = por %p58, %p59
    %p62 = scmp.ne.s32.totalorder %s47, %s61
    %p63 = scmp.eq.s32.totalorder %s16, 0
    %p64 = por %p62, %p63
    %s66 = sadd.s32 %s65, 1
    %p69 = scmp.eq.s32.totalorder %s10, 3
    %p70 = scmp.ne.s32.totalorder %s65, %s67
    %p71 = scmp.eq.s32.totalorder %s10, 0
    %p72 = por %p70, %p71
    %p73 = scmp.ne.s32.totalorder %s65, %s67
    %p74 = scmp.eq.s32.totalorder %s15, 3
    %p75 = por %p73, %p74
    %p76 = scmp.ne.s32.totalorder %s67, %s68
    %p77 = scmp.eq.s32.totalorder %s15, 0
    %p78 = por %p76, %p77
    %p79 = scmp.ne.s32.totalorder %s67, %s68
    %p80 = scmp.eq.s32.totalorder %s16, 3
    %p81 = por %p79, %p80
    %p83 = scmp.ne.s32.totalorder %s68, %s82
    %p84 = scmp.eq.s32.totalorder %s16, 0
    %p85 = por %p83, %p84
    %s87 = sadd.s32 %s86, 1
    %p90 = scmp.eq.s32.totalorder %s10, 3
    %p91 = scmp.ne.s32.totalorder %s86, %s88
    %p92 = scmp.eq.s32.totalorder %s10, 0
    %p93 = por %p91, %p92
    %p94 = scmp.ne.s32.totalorder %s86, %s88
    %p95 = scmp.eq.s32.totalorder %s15, 3
    %p96 = por %p94, %p95
    %p97 = scmp.ne.s32.totalorder %s88, %s89
    %p98 = scmp.eq.s32.totalorder %s15, 0
    %p99 = por %p97, %p98
    %p100 = scmp.ne.s32.totalorder %s88, %s89
    %p101 = scmp.eq.s32.totalorder %s16, 3
    %p102 = por %p100, %p101
    %p104 = scmp.ne.s32.totalorder %s89, %s103
    %p105 = scmp.eq.s32.totalorder %s16, 0
    %p106 = por %p104, %p105
    %s107 = ssub.s32 %s10, %s17
    %p108 = scmp.eq.s32.totalorder %s107, 0
    %s110 = sadd.s32 %s109, 1
    %s111 = scalar_select %p108, %s109, %s110
    %p114 = pneg %p108
    %p115 = scmp.eq.s32.totalorder %s10, 3
    %p116 = por %p114, %p115
    %p117 = scmp.ne.s32.totalorder %s109, %s112
    %p118 = scmp.eq.s32.totalorder %s10, 0
    %p119 = por %p117, %p118
    %p120 = scmp.ne.s32.totalorder %s109, %s112
    %p121 = scmp.eq.s32.totalorder %s15, 3
    %p122 = por %p120, %p121
    %p123 = scmp.ne.s32.totalorder %s112, %s113
    %p124 = scmp.eq.s32.totalorder %s15, 0
    %p125 = por %p123, %p124
    %p126 = scmp.ne.s32.totalorder %s112, %s113
    %p127 = scmp.eq.s32.totalorder %s16, 3
    %p128 = por %p126, %p127
    %p130 = scmp.ne.s32.totalorder %s113, %s129
    %p131 = scmp.eq.s32.totalorder %s16, 0
    %p132 = por %p130, %p131
    %p133 = scmp.le.s32.totalorder 1, %s10
    %p134 = scmp.lt.s32.totalorder %s10, 5
    %p135 = pnand %p133, %p134
    %p136 = pneg %p135
    // Predicated region
    $region9: #{network_forward.6} parent=5 // pred_check
      _
    $region10: #{network_forward.6} parent=5 // pred_check_branch
      %138 = sbr.rel (%p135) target = $region12
    $region11: #{network_forward.6} parent=5 // pred_region
      %s139 = ssub.s32 %s10, 1
      // Predicated region
      $region13: #{network_forward.6} parent=11 // pred_check
        %p140 = pneg %p57
      $region14: #{network_forward.6} parent=11 // pred_check_branch
        %142 = sbr.rel (%p140) target = $region16
      $region15: #{network_forward.6} parent=11 // pred_region
        _
      $region16: #{network_forward.6} parent=11 // pred_fallthru
        _
      // Predicated region
      $region17: #{network_forward.6} parent=11 // pred_check
        %p143 = pneg %p78
      $region18: #{network_forward.6} parent=11 // pred_check_branch
        %145 = sbr.rel (%p143) target = $region20
      $region19: #{network_forward.6} parent=11 // pred_region
        _
      $region20: #{network_forward.6} parent=11 // pred_fallthru
        _
      // Predicated region
      $region21: #{network_forward.6} parent=11 // pred_check
        %p146 = pneg %p99
      $region22: #{network_forward.6} parent=11 // pred_check_branch
        %148 = sbr.rel (%p146) target = $region24
      $region23: #{network_forward.6} parent=11 // pred_region
        _
      $region24: #{network_forward.6} parent=11 // pred_fallthru
        _
    $region12: #{network_forward.6} parent=5 // pred_fallthru
      _
    %p149 = scmp.lt.s32.totalorder %s10, 4
    // Predicated region
    $region25: #{network_forward.6} parent=5 // pred_check
      %p150 = pneg %p149
    $region26: #{network_forward.6} parent=5 // pred_check_branch
      %152 = sbr.rel (%p150) target = $region28
    $region27: #{network_forward.6} parent=5 // pred_region
      // Predicated region
      $region29: #{network_forward.6} parent=27 // pred_check
        %p153 = pneg %p30
      $region30: #{network_forward.6} parent=27 // pred_check_branch
        %155 = sbr.rel (%p153) target = $region32
      $region31: #{network_forward.6} parent=27 // pred_region
        %s156 = smul.u32 64, %s10
        %p157 = scmp.lt.s32.totalorder %s156, 255
        %s158 = scalar_select %p157, %s156, 255
        %s159 = smul.addr %s158, 4
        %s160 = scalar_lea.vmem %s0, %s159
        %s161 = smul.u32 64, %s10
      $region32: #{network_forward.6} parent=27 // pred_fallthru
        _
    $region28: #{network_forward.6} parent=5 // pred_fallthru
      _
    %p162 = scmp.le.s32.totalorder 1, %s10
    %p163 = scmp.lt.s32.totalorder %s10, 5
    %p164 = pnand %p162, %p163
    %p165 = pneg %p164
    // Predicated region
    $region33: #{network_forward.6} parent=5 // pred_check
      _
    $region34: #{network_forward.6} parent=5 // pred_check_branch
      %167 = sbr.rel (%p164) target = $region36
    $region35: #{network_forward.6} parent=5 // pred_region
      %s168 = ssub.s32 %s10, 1
      %s169 = smul.u32 64, %s15
      %p170 = scmp.lt.s32.totalorder %s169, 255
      %s171 = scalar_select %p170, %s169, 255
      %s172 = smul.addr %s171, 4
      %s173 = scalar_lea.vmem %s0, %s172
      %p174 = pneg %p36
      %p175 = pneg %p33
      %p176 = pneg %p57
      %p177 = pneg %p54
      %p178 = pneg %p78
      %p179 = pneg %p75
      %p180 = pneg %p99
      %p181 = pneg %p96
      %p182 = pneg %p125
      %p183 = pneg %p122
      %s184 = smul.u32 64, %s15
      %p185 = scmp.lt.s32.totalorder %s184, 255
      %s186 = scalar_select %p185, %s184, 255
      %s187 = smul.addr %s186, 4
      %s188 = scalar_lea.vmem %s4, %s187
      %s189 = smul.u32 64, %s15
      %p190 = scmp.lt.s32.totalorder %s189, 255
      %s191 = scalar_select %p190, %s189, 255
      %s192 = smul.addr %s191, 4
      %s193 = scalar_lea.vmem %s0, %s192
      %s194 = smul.u32 64, %s15
      %s195 = smul.u32 64, %s15
      %p196 = scmp.lt.s32.totalorder %s195, 255
      %s197 = scalar_select %p196, %s195, 255
      %s198 = smul.addr %s197, 4
      %s199 = scalar_lea.vmem %s4, %s198
      %s200 = smul.u32 64, %s15
      %v202 = vld [vmem:[%s193] sm:$0xf]
      %v203 = vld [vmem:[%s193 + $0x4] sm:$0xf]
      %v204 = vld [vmem:[%s193 + $0x8] sm:$0xf]
      %v205 = vld [vmem:[%s193 + $0xc] sm:$0xf]
      %v206 = vld [vmem:[%s193 + $0x10] sm:$0xf]
      %v207 = vld [vmem:[%s193 + $0x14] sm:$0xf]
      %v208 = vld [vmem:[%s193 + $0x18] sm:$0xf]
      %v209 = vld [vmem:[%s193 + $0x1c] sm:$0xf]
      %v210 = vld [vmem:[%s193 + $0x20] sm:$0xf]
      %v211 = vld [vmem:[%s193 + $0x24] sm:$0xf]
      %v212 = vld [vmem:[%s193 + $0x28] sm:$0xf]
      %v213 = vld [vmem:[%s193 + $0x2c] sm:$0xf]
      %v214 = vld [vmem:[%s193 + $0x30] sm:$0xf]
      %v215 = vld [vmem:[%s193 + $0x34] sm:$0xf]
      %v216 = vld [vmem:[%s193 + $0x38] sm:$0xf]
      %v217 = vld [vmem:[%s193 + $0x3c] sm:$0xf]
      %v218 = vld [vmem:[%s193 + $0x40] sm:$0xf]
      %v219 = vld [vmem:[%s193 + $0x44] sm:$0xf]
      %v220 = vld [vmem:[%s193 + $0x48] sm:$0xf]
      %v221 = vld [vmem:[%s193 + $0x4c] sm:$0xf]
      %v222 = vld [vmem:[%s193 + $0x50] sm:$0xf]
      %v223 = vld [vmem:[%s193 + $0x54] sm:$0xf]
      %v224 = vld [vmem:[%s193 + $0x58] sm:$0xf]
      %v225 = vld [vmem:[%s193 + $0x5c] sm:$0xf]
      %v226 = vld [vmem:[%s193 + $0x60] sm:$0xf]
      %v227 = vld [vmem:[%s193 + $0x64] sm:$0xf]
      %v228 = vld [vmem:[%s193 + $0x68] sm:$0xf]
      %v229 = vld [vmem:[%s193 + $0x6c] sm:$0xf]
      %v230 = vld [vmem:[%s193 + $0x70] sm:$0xf]
      %v231 = vld [vmem:[%s193 + $0x74] sm:$0xf]
      %v232 = vld [vmem:[%s193 + $0x78] sm:$0xf]
      %v233 = vld [vmem:[%s193 + $0x7c] sm:$0xf]
      %v234 = vld [vmem:[%s193 + $0x80] sm:$0xf]
      %v235 = vld [vmem:[%s193 + $0x84] sm:$0xf]
      %v236 = vld [vmem:[%s193 + $0x88] sm:$0xf]
      %v237 = vld [vmem:[%s193 + $0x8c] sm:$0xf]
      %v238 = vld [vmem:[%s193 + $0x90] sm:$0xf]
      %v239 = vld [vmem:[%s193 + $0x94] sm:$0xf]
      %v240 = vld [vmem:[%s193 + $0x98] sm:$0xf]
      %v241 = vld [vmem:[%s193 + $0x9c] sm:$0xf]
      %v242 = vld [vmem:[%s193 + $0xa0] sm:$0xf]
      %v243 = vld [vmem:[%s193 + $0xa4] sm:$0xf]
      %v244 = vld [vmem:[%s193 + $0xa8] sm:$0xf]
      %v245 = vld [vmem:[%s193 + $0xac] sm:$0xf]
      %v246 = vld [vmem:[%s193 + $0xb0] sm:$0xf]
      %v247 = vld [vmem:[%s193 + $0xb4] sm:$0xf]
      %v248 = vld [vmem:[%s193 + $0xb8] sm:$0xf]
      %v249 = vld [vmem:[%s193 + $0xbc] sm:$0xf]
      %v250 = vld [vmem:[%s193 + $0xc0] sm:$0xf]
      %v251 = vld [vmem:[%s193 + $0xc4] sm:$0xf]
      %v252 = vld [vmem:[%s193 + $0xc8] sm:$0xf]
      %v253 = vld [vmem:[%s193 + $0xcc] sm:$0xf]
      %v254 = vld [vmem:[%s193 + $0xd0] sm:$0xf]
      %v255 = vld [vmem:[%s193 + $0xd4] sm:$0xf]
      %v256 = vld [vmem:[%s193 + $0xd8] sm:$0xf]
      %v257 = vld [vmem:[%s193 + $0xdc] sm:$0xf]
      %v258 = vld [vmem:[%s193 + $0xe0] sm:$0xf]
      %v259 = vld [vmem:[%s193 + $0xe4] sm:$0xf]
      %v260 = vld [vmem:[%s193 + $0xe8] sm:$0xf]
      %v261 = vld [vmem:[%s193 + $0xec] sm:$0xf]
      %v262 = vld [vmem:[%s193 + $0xf0] sm:$0xf]
      %v263 = vld [vmem:[%s193 + $0xf4] sm:$0xf]
      %v264 = vld [vmem:[%s193 + $0xf8] sm:$0xf]
      %v265 = vld [vmem:[%s193 + $0xfc] sm:$0xf]
      %v266 = vld [vmem:[%s1] sm:$0xf]
      %v267 = vld [vmem:[%s1 + $0x4] sm:$0x3]
      %v332 = vunpack.c.l.b16 %v202
      %v333 = vunpack.c.l.b16 %v203
      %v334 = vunpack.c.l.b16 %v204
      %v335 = vunpack.c.l.b16 %v205
      %v336 = vunpack.c.l.b16 %v206
      %v337 = vunpack.c.l.b16 %v207
      %v338 = vunpack.c.l.b16 %v208
      %v339 = vunpack.c.l.b16 %v209
      %v340 = vunpack.c.l.b16 %v210
      %v341 = vunpack.c.l.b16 %v211
      %v342 = vunpack.c.l.b16 %v212
      %v343 = vunpack.c.l.b16 %v213
      %v344 = vunpack.c.l.b16 %v214
      %v345 = vunpack.c.l.b16 %v215
      %v346 = vunpack.c.l.b16 %v216
      %v347 = vunpack.c.l.b16 %v217
      %v348 = vunpack.c.l.b16 %v218
      %v349 = vunpack.c.l.b16 %v219
      %v350 = vunpack.c.l.b16 %v220
      %v351 = vunpack.c.l.b16 %v221
      %v352 = vunpack.c.l.b16 %v222
      %v353 = vunpack.c.l.b16 %v223
      %v354 = vunpack.c.l.b16 %v224
      %v355 = vunpack.c.l.b16 %v225
      %v356 = vunpack.c.l.b16 %v226
      %v357 = vunpack.c.l.b16 %v227
      %v358 = vunpack.c.l.b16 %v228
      %v359 = vunpack.c.l.b16 %v229
      %v360 = vunpack.c.l.b16 %v230
      %v361 = vunpack.c.l.b16 %v231
      %v362 = vunpack.c.l.b16 %v232
      %v363 = vunpack.c.l.b16 %v233
      %v364 = vunpack.c.l.b16 %v234
      %v365 = vunpack.c.l.b16 %v235
      %v366 = vunpack.c.l.b16 %v236
      %v367 = vunpack.c.l.b16 %v237
      %v368 = vunpack.c.l.b16 %v238
      %v369 = vunpack.c.l.b16 %v239
      %v370 = vunpack.c.l.b16 %v240
      %v371 = vunpack.c.l.b16 %v241
      %v372 = vunpack.c.l.b16 %v242
      %v373 = vunpack.c.l.b16 %v243
      %v374 = vunpack.c.l.b16 %v244
      %v375 = vunpack.c.l.b16 %v245
      %v376 = vunpack.c.l.b16 %v246
      %v377 = vunpack.c.l.b16 %v247
      %v378 = vunpack.c.l.b16 %v248
      %v379 = vunpack.c.l.b16 %v249
      %v380 = vunpack.c.l.b16 %v250
      %v381 = vunpack.c.l.b16 %v251
      %v382 = vunpack.c.l.b16 %v252
      %v383 = vunpack.c.l.b16 %v253
      %v384 = vunpack.c.l.b16 %v254
      %v385 = vunpack.c.l.b16 %v255
      %v386 = vunpack.c.l.b16 %v256
      %v387 = vunpack.c.l.b16 %v257
      %v388 = vunpack.c.l.b16 %v258
      %v389 = vunpack.c.l.b16 %v259
      %v390 = vunpack.c.l.b16 %v260
      %v391 = vunpack.c.l.b16 %v261
      %v392 = vunpack.c.l.b16 %v262
      %v393 = vunpack.c.l.b16 %v263
      %v394 = vunpack.c.l.b16 %v264
      %v395 = vunpack.c.l.b16 %v265
      %v396 = vpack.c.b16 %v333, %v332
      %v397 = vpack.c.b16 %v335, %v334
      %v398 = vpack.c.b16 %v337, %v336
      %v399 = vpack.c.b16 %v339, %v338
      %v400 = vpack.c.b16 %v341, %v340
      %v401 = vpack.c.b16 %v343, %v342
      %v402 = vpack.c.b16 %v345, %v344
      %v403 = vpack.c.b16 %v347, %v346
      %v404 = vpack.c.b16 %v349, %v348
      %v405 = vpack.c.b16 %v351, %v350
      %v406 = vpack.c.b16 %v353, %v352
      %v407 = vpack.c.b16 %v355, %v354
      %v408 = vpack.c.b16 %v357, %v356
      %v409 = vpack.c.b16 %v359, %v358
      %v410 = vpack.c.b16 %v361, %v360
      %v411 = vpack.c.b16 %v363, %v362
      %v412 = vpack.c.b16 %v365, %v364
      %v413 = vpack.c.b16 %v367, %v366
      %v414 = vpack.c.b16 %v369, %v368
      %v415 = vpack.c.b16 %v371, %v370
      %v416 = vpack.c.b16 %v373, %v372
      %v417 = vpack.c.b16 %v375, %v374
      %v418 = vpack.c.b16 %v377, %v376
      %v419 = vpack.c.b16 %v379, %v378
      %v420 = vpack.c.b16 %v381, %v380
      %v421 = vpack.c.b16 %v383, %v382
      %v422 = vpack.c.b16 %v385, %v384
      %v423 = vpack.c.b16 %v387, %v386
      %v424 = vpack.c.b16 %v389, %v388
      %v425 = vpack.c.b16 %v391, %v390
      %v426 = vpack.c.b16 %v393, %v392
      %v427 = vpack.c.b16 %v395, %v394
      %v430 = vunpack.c.l.b16 %v266
      %v431 = vunpack.c.l.b16 %v267
      %v432 = vpack.c.b16 %v431, %v430
      %vm433 = vcmask 97280
      %v435 = vsel %vm433, %v396, 0
      %v438 = vsel %vm433, %v397, 0
      %v441 = vsel %vm433, %v398, 0
      %v444 = vsel %vm433, %v399, 0
      %v447 = vsel %vm433, %v400, 0
      %v450 = vsel %vm433, %v401, 0
      %v453 = vsel %vm433, %v402, 0
      %v456 = vsel %vm433, %v403, 0
      %v459 = vsel %vm433, %v404, 0
      %v462 = vsel %vm433, %v405, 0
      %v465 = vsel %vm433, %v406, 0
      %v468 = vsel %vm433, %v407, 0
      %v471 = vsel %vm433, %v408, 0
      %v474 = vsel %vm433, %v409, 0
      %v477 = vsel %vm433, %v410, 0
      %v480 = vsel %vm433, %v411, 0
      %v483 = vsel %vm433, %v412, 0
      %v486 = vsel %vm433, %v413, 0
      %v489 = vsel %vm433, %v414, 0
      %v492 = vsel %vm433, %v415, 0
      %v495 = vsel %vm433, %v416, 0
      %v498 = vsel %vm433, %v417, 0
      %v501 = vsel %vm433, %v418, 0
      %v504 = vsel %vm433, %v419, 0
      %v507 = vsel %vm433, %v420, 0
      %v510 = vsel %vm433, %v421, 0
      %v513 = vsel %vm433, %v422, 0
      %v516 = vsel %vm433, %v423, 0
      %v519 = vsel %vm433, %v424, 0
      %v522 = vsel %vm433, %v425, 0
      %v525 = vsel %vm433, %v426, 0
      %v528 = vsel %vm433, %v427, 0
      %vm530 = vcmask 1045504
      %v532 = vsel %vm530, %v432, 0
      %534 = vmatprep.subr.bf16.mxu0 0
      %535 = vmatpush1.bf16.msra.mxu0 %v532
      %536 = vmatprep.subr.bf16.mxu0 0
      %537 = vmatpush1.bf16.msra.mxu0 0
      %538 = vmatprep.subr.bf16.mxu0 0
      %539 = vmatpush1.bf16.msra.mxu0 0
      %540 = vmatprep.subr.bf16.mxu0 0
      %541 = vmatpush1.bf16.msra.mxu0 0
      %542 = vmatprep.subr.bf16.mxu0 0
      %543 = vmatpush1.bf16.msra.mxu0 0
      %544 = vmatprep.subr.bf16.mxu0 0
      %545 = vmatpush1.bf16.msra.mxu0 0
      %546 = vmatprep.subr.bf16.mxu0 0
      %547 = vmatpush1.bf16.msra.mxu0 0
      %548 = vmatprep.subr.bf16.mxu0 0
      %549 = vmatpush1.bf16.msra.mxu0 0
      %550 = vmatprep.subr.bf16.mxu0 0
      %551 = vmatpush1.bf16.msra.mxu0 0
      %552 = vmatprep.subr.bf16.mxu0 0
      %553 = vmatpush1.bf16.msra.mxu0 0
      %554 = vmatprep.subr.bf16.mxu0 0
      %555 = vmatpush1.bf16.msra.mxu0 0
      %556 = vmatprep.subr.bf16.mxu0 0
      %557 = vmatpush1.bf16.msra.mxu0 0
      %558 = vmatprep.subr.bf16.mxu0 0
      %559 = vmatpush1.bf16.msra.mxu0 0
      %560 = vmatprep.subr.bf16.mxu0 0
      %561 = vmatpush1.bf16.msra.mxu0 0
      %562 = vmatprep.subr.bf16.mxu0 0
      %563 = vmatpush1.bf16.msra.mxu0 0
      %564 = vmatprep.subr.bf16.mxu0 0
      %565 = vmatpush1.bf16.msra.mxu0 0
      %566 = vmatprep.mubr.bf16.mxu0 0
      %567 = vmatmul.mubr.bf16.gmra.mrb[0].mxu0 %v435
      %v568 = vpop.f32.mrb[0].mxu0
      %v569 = vadd.f32 0.0, %v568
      %v570 = vpop.f32.mrb[0].mxu0
      %v571 = vpop.f32.mrb[0].mxu0
      %v572 = vadd.f32 0.0, %v571
      %v573 = vpop.f32.mrb[0].mxu0
      %574 = vmatprep.mubr.bf16.mxu0 0
      %575 = vmatmul.mubr.bf16.gmra.mrb[0].mxu0 %v438
      %v576 = vpop.f32.mrb[0].mxu0
      %v577 = vadd.f32 0.0, %v576
      %v578 = vpop.f32.mrb[0].mxu0
      %v579 = vpop.f32.mrb[0].mxu0
      %v580 = vadd.f32 0.0, %v579
      %v581 = vpop.f32.mrb[0].mxu0
      %582 = vmatprep.mubr.bf16.mxu0 0
      %583 = vmatmul.mubr.bf16.gmra.mrb[0].mxu0 %v441
      %v584 = vpop.f32.mrb[0].mxu0
      %v585 = vadd.f32 0.0, %v584
      %v586 = vpop.f32.mrb[0].mxu0
      %v587 = vpop.f32.mrb[0].mxu0
      %v588 = vadd.f32 0.0, %v587
      %v589 = vpop.f32.mrb[0].mxu0
      %590 = vmatprep.mubr.bf16.mxu0 0
      %591 = vmatmul.mubr.bf16.gmra.mrb[0].mxu0 %v444
      %v592 = vpop.f32.mrb[0].mxu0
      %v593 = vadd.f32 0.0, %v592
      %v594 = vpop.f32.mrb[0].mxu0
      %v595 = vpop.f32.mrb[0].mxu0
      %v596 = vadd.f32 0.0, %v595
      %v597 = vpop.f32.mrb[0].mxu0
      %598 = vmatprep.mubr.bf16.mxu0 0
      %599 = vmatmul.mubr.bf16.gmra.mrb[0].mxu0 %v447
      %v600 = vpop.f32.mrb[0].mxu0
      %v601 = vadd.f32 0.0, %v600
      %v602 = vpop.f32.mrb[0].mxu0
      %v603 = vpop.f32.mrb[0].mxu0
      %v604 = vadd.f32 0.0, %v603
      %v605 = vpop.f32.mrb[0].mxu0
      %606 = vmatprep.mubr.bf16.mxu0 0
      %607 = vmatmul.mubr.bf16.gmra.mrb[0].mxu0 %v450
      %v608 = vpop.f32.mrb[0].mxu0
      %v609 = vadd.f32 0.0, %v608
      %v610 = vpop.f32.mrb[0].mxu0
      %v611 = vpop.f32.mrb[0].mxu0
      %v612 = vadd.f32 0.0, %v611
      %v613 = vpop.f32.mrb[0].mxu0
      %614 = vmatprep.mubr.bf16.mxu0 0
      %615 = vmatmul.mubr.bf16.gmra.mrb[0].mxu0 %v453
      %v616 = vpop.f32.mrb[0].mxu0
      %v617 = vadd.f32 0.0, %v616
      %v618 = vpop.f32.mrb[0].mxu0
      %v619 = vpop.f32.mrb[0].mxu0
      %v620 = vadd.f32 0.0, %v619
      %v621 = vpop.f32.mrb[0].mxu0
      %622 = vmatprep.mubr.bf16.mxu0 0
      %623 = vmatmul.mubr.bf16.gmra.mrb[0].mxu0 %v456
      %v624 = vpop.f32.mrb[0].mxu0
      %v625 = vadd.f32 0.0, %v624
      %v626 = vpop.f32.mrb[0].mxu0
      %v627 = vpop.f32.mrb[0].mxu0
      %v628 = vadd.f32 0.0, %v627
      %v629 = vpop.f32.mrb[0].mxu0
      %630 = vmatprep.mubr.bf16.mxu0 0
      %631 = vmatmul.mubr.bf16.gmra.mrb[0].mxu0 %v459
      %v632 = vpop.f32.mrb[0].mxu0
      %v633 = vadd.f32 0.0, %v632
      %v634 = vpop.f32.mrb[0].mxu0
      %v635 = vpop.f32.mrb[0].mxu0
      %v636 = vadd.f32 0.0, %v635
      %v637 = vpop.f32.mrb[0].mxu0
      %638 = vmatprep.mubr.bf16.mxu0 0
      %639 = vmatmul.mubr.bf16.gmra.mrb[0].mxu0 %v462
      %v640 = vpop.f32.mrb[0].mxu0
      %v641 = vadd.f32 0.0, %v640
      %v642 = vpop.f32.mrb[0].mxu0
      %v643 = vpop.f32.mrb[0].mxu0
      %v644 = vadd.f32 0.0, %v643
      %v645 = vpop.f32.mrb[0].mxu0
      %646 = vmatprep.mubr.bf16.mxu0 0
      %647 = vmatmul.mubr.bf16.gmra.mrb[0].mxu0 %v465
      %v648 = vpop.f32.mrb[0].mxu0
      %v649 = vadd.f32 0.0, %v648
      %v650 = vpop.f32.mrb[0].mxu0
      %v651 = vpop.f32.mrb[0].mxu0
      %v652 = vadd.f32 0.0, %v651
      %v653 = vpop.f32.mrb[0].mxu0
      %654 = vmatprep.mubr.bf16.mxu0 0
      %655 = vmatmul.mubr.bf16.gmra.mrb[0].mxu0 %v468
      %v656 = vpop.f32.mrb[0].mxu0
      %v657 = vadd.f32 0.0, %v656
      %v658 = vpop.f32.mrb[0].mxu0
      %v659 = vpop.f32.mrb[0].mxu0
      %v660 = vadd.f32 0.0, %v659
      %v661 = vpop.f32.mrb[0].mxu0
      %662 = vmatprep.mubr.bf16.mxu0 0
      %663 = vmatmul.mubr.bf16.gmra.mrb[0].mxu0 %v471
      %v664 = vpop.f32.mrb[0].mxu0
      %v665 = vadd.f32 0.0, %v664
      %v666 = vpop.f32.mrb[0].mxu0
      %v667 = vpop.f32.mrb[0].mxu0
      %v668 = vadd.f32 0.0, %v667
      %v669 = vpop.f32.mrb[0].mxu0
      %670 = vmatprep.mubr.bf16.mxu0 0
      %671 = vmatmul.mubr.bf16.gmra.mrb[0].mxu0 %v474
      %v672 = vpop.f32.mrb[0].mxu0
      %v673 = vadd.f32 0.0, %v672
      %v674 = vpop.f32.mrb[0].mxu0
      %v675 = vpop.f32.mrb[0].mxu0
      %v676 = vadd.f32 0.0, %v675
      %v677 = vpop.f32.mrb[0].mxu0
      %678 = vmatprep.mubr.bf16.mxu0 0
      %679 = vmatmul.mubr.bf16.gmra.mrb[0].mxu0 %v477
      %v680 = vpop.f32.mrb[0].mxu0
      %v681 = vadd.f32 0.0, %v680
      %v682 = vpop.f32.mrb[0].mxu0
      %v683 = vpop.f32.mrb[0].mxu0
      %v684 = vadd.f32 0.0, %v683
      %v685 = vpop.f32.mrb[0].mxu0
      %686 = vmatprep.mubr.bf16.mxu0 0
      %687 = vmatmul.mubr.bf16.gmra.mrb[0].mxu0 %v480
      %v688 = vpop.f32.mrb[0].mxu0
      %v689 = vadd.f32 0.0, %v688
      %v690 = vpop.f32.mrb[0].mxu0
      %v691 = vpop.f32.mrb[0].mxu0
      %v692 = vadd.f32 0.0, %v691
      %v693 = vpop.f32.mrb[0].mxu0
      %694 = vmatprep.mubr.bf16.mxu0 0
      %695 = vmatmul.mubr.bf16.gmra.mrb[0].mxu0 %v483
      %v696 = vpop.f32.mrb[0].mxu0
      %v697 = vadd.f32 0.0, %v696
      %v698 = vpop.f32.mrb[0].mxu0
      %v699 = vpop.f32.mrb[0].mxu0
      %v700 = vadd.f32 0.0, %v699
      %v701 = vpop.f32.mrb[0].mxu0
      %702 = vmatprep.mubr.bf16.mxu0 0
      %703 = vmatmul.mubr.bf16.gmra.mrb[0].mxu0 %v486
      %v704 = vpop.f32.mrb[0].mxu0
      %v705 = vadd.f32 0.0, %v704
      %v706 = vpop.f32.mrb[0].mxu0
      %v707 = vpop.f32.mrb[0].mxu0
      %v708 = vadd.f32 0.0, %v707
      %v709 = vpop.f32.mrb[0].mxu0
      %710 = vmatprep.mubr.bf16.mxu0 0
      %711 = vmatmul.mubr.bf16.gmra.mrb[0].mxu0 %v489
      %v712 = vpop.f32.mrb[0].mxu0
      %v713 = vadd.f32 0.0, %v712
      %v714 = vpop.f32.mrb[0].mxu0
      %v715 = vpop.f32.mrb[0].mxu0
      %v716 = vadd.f32 0.0, %v715
      %v717 = vpop.f32.mrb[0].mxu0
      %718 = vmatprep.mubr.bf16.mxu0 0
      %719 = vmatmul.mubr.bf16.gmra.mrb[0].mxu0 %v492
      %v720 = vpop.f32.mrb[0].mxu0
      %v721 = vadd.f32 0.0, %v720
      %v722 = vpop.f32.mrb[0].mxu0
      %v723 = vpop.f32.mrb[0].mxu0
      %v724 = vadd.f32 0.0, %v723
      %v725 = vpop.f32.mrb[0].mxu0
      %726 = vmatprep.mubr.bf16.mxu0 0
      %727 = vmatmul.mubr.bf16.gmra.mrb[0].mxu0 %v495
      %v728 = vpop.f32.mrb[0].mxu0
      %v729 = vadd.f32 0.0, %v728
      %v730 = vpop.f32.mrb[0].mxu0
      %v731 = vpop.f32.mrb[0].mxu0
      %v732 = vadd.f32 0.0, %v731
      %v733 = vpop.f32.mrb[0].mxu0
      %734 = vmatprep.mubr.bf16.mxu0 0
      %735 = vmatmul.mubr.bf16.gmra.mrb[0].mxu0 %v498
      %v736 = vpop.f32.mrb[0].mxu0
      %v737 = vadd.f32 0.0, %v736
      %v738 = vpop.f32.mrb[0].mxu0
      %v739 = vpop.f32.mrb[0].mxu0
      %v740 = vadd.f32 0.0, %v739
      %v741 = vpop.f32.mrb[0].mxu0
      %742 = vmatprep.mubr.bf16.mxu0 0
      %743 = vmatmul.mubr.bf16.gmra.mrb[0].mxu0 %v501
      %v744 = vpop.f32.mrb[0].mxu0
      %v745 = vadd.f32 0.0, %v744
      %v746 = vpop.f32.mrb[0].mxu0
      %v747 = vpop.f32.mrb[0].mxu0
      %v748 = vadd.f32 0.0, %v747
      %v749 = vpop.f32.mrb[0].mxu0
      %750 = vmatprep.mubr.bf16.mxu0 0
      %751 = vmatmul.mubr.bf16.gmra.mrb[0].mxu0 %v504
      %v752 = vpop.f32.mrb[0].mxu0
      %v753 = vadd.f32 0.0, %v752
      %v754 = vpop.f32.mrb[0].mxu0
      %v755 = vpop.f32.mrb[0].mxu0
      %v756 = vadd.f32 0.0, %v755
      %v757 = vpop.f32.mrb[0].mxu0
      %758 = vmatprep.mubr.bf16.mxu0 0
      %759 = vmatmul.mubr.bf16.gmra.mrb[0].mxu0 %v507
      %v760 = vpop.f32.mrb[0].mxu0
      %v761 = vadd.f32 0.0, %v760
      %v762 = vpop.f32.mrb[0].mxu0
      %v763 = vpop.f32.mrb[0].mxu0
      %v764 = vadd.f32 0.0, %v763
      %v765 = vpop.f32.mrb[0].mxu0
      %766 = vmatprep.mubr.bf16.mxu0 0
      %767 = vmatmul.mubr.bf16.gmra.mrb[0].mxu0 %v510
      %v768 = vpop.f32.mrb[0].mxu0
      %v769 = vadd.f32 0.0, %v768
      %v770 = vpop.f32.mrb[0].mxu0
      %v771 = vpop.f32.mrb[0].mxu0
      %v772 = vadd.f32 0.0, %v771
      %v773 = vpop.f32.mrb[0].mxu0
      %774 = vmatprep.mubr.bf16.mxu0 0
      %775 = vmatmul.mubr.bf16.gmra.mrb[0].mxu0 %v513
      %v776 = vpop.f32.mrb[0].mxu0
      %v777 = vadd.f32 0.0, %v776
      %v778 = vpop.f32.mrb[0].mxu0
      %v779 = vpop.f32.mrb[0].mxu0
      %v780 = vadd.f32 0.0, %v779
      %v781 = vpop.f32.mrb[0].mxu0
      %782 = vmatprep.mubr.bf16.mxu0 0
      %783 = vmatmul.mubr.bf16.gmra.mrb[0].mxu0 %v516
      %v784 = vpop.f32.mrb[0].mxu0
      %v785 = vadd.f32 0.0, %v784
      %v786 = vpop.f32.mrb[0].mxu0
      %v787 = vpop.f32.mrb[0].mxu0
      %v788 = vadd.f32 0.0, %v787
      %v789 = vpop.f32.mrb[0].mxu0
      %790 = vmatprep.mubr.bf16.mxu0 0
      %791 = vmatmul.mubr.bf16.gmra.mrb[0].mxu0 %v519
      %v792 = vpop.f32.mrb[0].mxu0
      %v793 = vadd.f32 0.0, %v792
      %v794 = vpop.f32.mrb[0].mxu0
      %v795 = vpop.f32.mrb[0].mxu0
      %v796 = vadd.f32 0.0, %v795
      %v797 = vpop.f32.mrb[0].mxu0
      %798 = vmatprep.mubr.bf16.mxu0 0
      %799 = vmatmul.mubr.bf16.gmra.mrb[0].mxu0 %v522
      %v800 = vpop.f32.mrb[0].mxu0
      %v801 = vadd.f32 0.0, %v800
      %v802 = vpop.f32.mrb[0].mxu0
      %v803 = vpop.f32.mrb[0].mxu0
      %v804 = vadd.f32 0.0, %v803
      %v805 = vpop.f32.mrb[0].mxu0
      %806 = vmatprep.mubr.bf16.mxu0 0
      %807 = vmatmul.mubr.bf16.gmra.mrb[0].mxu0 %v525
      %v808 = vpop.f32.mrb[0].mxu0
      %v809 = vadd.f32 0.0, %v808
      %v810 = vpop.f32.mrb[0].mxu0
      %v811 = vpop.f32.mrb[0].mxu0
      %v812 = vadd.f32 0.0, %v811
      %v813 = vpop.f32.mrb[0].mxu0
      %814 = vmatprep.mubr.bf16.mxu0 0
      %815 = vmatmul.mubr.bf16.gmra.mrb[0].mxu0 %v528
      %v816 = vpop.f32.mrb[0].mxu0
      %v817 = vadd.f32 0.0, %v816
      %v818 = vpop.f32.mrb[0].mxu0
      %v819 = vpop.f32.mrb[0].mxu0
      %v820 = vadd.f32 0.0, %v819
      %v821 = vpop.f32.mrb[0].mxu0
      %822 = vdwg.mxu0
      %v823 = vld [vmem:[%s2] sm:$0x1]
      %v825 = vlaneseq
      %v826 = vshrl.u32 %v825, 7
      %v827 = vsub.s32 0, %v826
      %v828 = vrot.slane %v823, %v827
      %v830 = vmul.f32 %v569, %v828
      %v831 = vmul.f32 %v572, %v828
      %v832 = vmul.f32 %v577, %v828
      %v833 = vmul.f32 %v580, %v828
      %v834 = vmul.f32 %v585, %v828
      %v835 = vmul.f32 %v588, %v828
      %v836 = vmul.f32 %v593, %v828
      %v837 = vmul.f32 %v596, %v828
      %v838 = vmul.f32 %v601, %v828
      %v839 = vmul.f32 %v604, %v828
      %v840 = vmul.f32 %v609, %v828
      %v841 = vmul.f32 %v612, %v828
      %v842 = vmul.f32 %v617, %v828
      %v843 = vmul.f32 %v620, %v828
      %v844 = vmul.f32 %v625, %v828
      %v845 = vmul.f32 %v628, %v828
      %v846 = vmul.f32 %v633, %v828
      %v847 = vmul.f32 %v636, %v828
      %v848 = vmul.f32 %v641, %v828
      %v849 = vmul.f32 %v644, %v828
      %v850 = vmul.f32 %v649, %v828
      %v851 = vmul.f32 %v652, %v828
      %v852 = vmul.f32 %v657, %v828
      %v853 = vmul.f32 %v660, %v828
      %v854 = vmul.f32 %v665, %v828
      %v855 = vmul.f32 %v668, %v828
      %v856 = vmul.f32 %v673, %v828
      %v857 = vmul.f32 %v676, %v828
      %v858 = vmul.f32 %v681, %v828
      %v859 = vmul.f32 %v684, %v828
      %v860 = vmul.f32 %v689, %v828
      %v861 = vmul.f32 %v692, %v828
      %v862 = vmul.f32 %v697, %v828
      %v863 = vmul.f32 %v700, %v828
      %v864 = vmul.f32 %v705, %v828
      %v865 = vmul.f32 %v708, %v828
      %v866 = vmul.f32 %v713, %v828
      %v867 = vmul.f32 %v716, %v828
      %v868 = vmul.f32 %v721, %v828
      %v869 = vmul.f32 %v724, %v828
      %v870 = vmul.f32 %v729, %v828
      %v871 = vmul.f32 %v732, %v828
      %v872 = vmul.f32 %v737, %v828
      %v873 = vmul.f32 %v740, %v828
      %v874 = vmul.f32 %v745, %v828
      %v875 = vmul.f32 %v748, %v828
      %v876 = vmul.f32 %v753, %v828
      %v877 = vmul.f32 %v756, %v828
      %v878 = vmul.f32 %v761, %v828
      %v879 = vmul.f32 %v764, %v828
      %v880 = vmul.f32 %v769, %v828
      %v881 = vmul.f32 %v772, %v828
      %v882 = vmul.f32 %v777, %v828
      %v883 = vmul.f32 %v780, %v828
      %v884 = vmul.f32 %v785, %v828
      %v885 = vmul.f32 %v788, %v828
      %v886 = vmul.f32 %v793, %v828
      %v887 = vmul.f32 %v796, %v828
      %v888 = vmul.f32 %v801, %v828
      %v889 = vmul.f32 %v804, %v828
      %v890 = vmul.f32 %v809, %v828
      %v891 = vmul.f32 %v812, %v828
      %v892 = vmul.f32 %v817, %v828
      %v893 = vmul.f32 %v820, %v828
      %v894 = vld [vmem:[%s3] sm:$0x1]
      %v896 = vlaneseq
      %v897 = vshrl.u32 %v896, 7
      %v898 = vsub.s32 0, %v897
      %v899 = vrot.slane %v894, %v898
      %v901 = vadd.f32 %v830, %v899
      %v902 = vadd.f32 %v831, %v899
      %v903 = vadd.f32 %v832, %v899
      %v904 = vadd.f32 %v833, %v899
      %v905 = vadd.f32 %v834, %v899
      %v906 = vadd.f32 %v835, %v899
      %v907 = vadd.f32 %v836, %v899
      %v908 = vadd.f32 %v837, %v899
      %v909 = vadd.f32 %v838, %v899
      %v910 = vadd.f32 %v839, %v899
      %v911 = vadd.f32 %v840, %v899
      %v912 = vadd.f32 %v841, %v899
      %v913 = vadd.f32 %v842, %v899
      %v914 = vadd.f32 %v843, %v899
      %v915 = vadd.f32 %v844, %v899
      %v916 = vadd.f32 %v845, %v899
      %v917 = vadd.f32 %v846, %v899
      %v918 = vadd.f32 %v847, %v899
      %v919 = vadd.f32 %v848, %v899
      %v920 = vadd.f32 %v849, %v899
      %v921 = vadd.f32 %v850, %v899
      %v922 = vadd.f32 %v851, %v899
      %v923 = vadd.f32 %v852, %v899
      %v924 = vadd.f32 %v853, %v899
      %v925 = vadd.f32 %v854, %v899
      %v926 = vadd.f32 %v855, %v899
      %v927 = vadd.f32 %v856, %v899
      %v928 = vadd.f32 %v857, %v899
      %v929 = vadd.f32 %v858, %v899
      %v930 = vadd.f32 %v859, %v899
      %v931 = vadd.f32 %v860, %v899
      %v932 = vadd.f32 %v861, %v899
      %v933 = vadd.f32 %v862, %v899
      %v934 = vadd.f32 %v863, %v899
      %v935 = vadd.f32 %v864, %v899
      %v936 = vadd.f32 %v865, %v899
      %v937 = vadd.f32 %v866, %v899
      %v938 = vadd.f32 %v867, %v899
      %v939 = vadd.f32 %v868, %v899
      %v940 = vadd.f32 %v869, %v899
      %v941 = vadd.f32 %v870, %v899
      %v942 = vadd.f32 %v871, %v899
      %v943 = vadd.f32 %v872, %v899
      %v944 = vadd.f32 %v873, %v899
      %v945 = vadd.f32 %v874, %v899
      %v946 = vadd.f32 %v875, %v899
      %v947 = vadd.f32 %v876, %v899
      %v948 = vadd.f32 %v877, %v899
      %v949 = vadd.f32 %v878, %v899
      %v950 = vadd.f32 %v879, %v899
      %v951 = vadd.f32 %v880, %v899
      %v952 = vadd.f32 %v881, %v899
      %v953 = vadd.f32 %v882, %v899
      %v954 = vadd.f32 %v883, %v899
      %v955 = vadd.f32 %v884, %v899
      %v956 = vadd.f32 %v885, %v899
      %v957 = vadd.f32 %v886, %v899
      %v958 = vadd.f32 %v887, %v899
      %v959 = vadd.f32 %v888, %v899
      %v960 = vadd.f32 %v889, %v899
      %v961 = vadd.f32 %v890, %v899
      %v962 = vadd.f32 %v891, %v899
      %v963 = vadd.f32 %v892, %v899
      %v964 = vadd.f32 %v893, %v899
      %v965 = vmax.f32 %v901, 0.0
      %v966 = vmax.f32 %v902, 0.0
      %v967 = vmax.f32 %v903, 0.0
      %v968 = vmax.f32 %v904, 0.0
      %v969 = vmax.f32 %v905, 0.0
      %v970 = vmax.f32 %v906, 0.0
      %v971 = vmax.f32 %v907, 0.0
      %v972 = vmax.f32 %v908, 0.0
      %v973 = vmax.f32 %v909, 0.0
      %v974 = vmax.f32 %v910, 0.0
      %v975 = vmax.f32 %v911, 0.0
      %v976 = vmax.f32 %v912, 0.0
      %v977 = vmax.f32 %v913, 0.0
      %v978 = vmax.f32 %v914, 0.0
      %v979 = vmax.f32 %v915, 0.0
      %v980 = vmax.f32 %v916, 0.0
      %v981 = vmax.f32 %v917, 0.0
      %v982 = vmax.f32 %v918, 0.0
      %v983 = vmax.f32 %v919, 0.0
      %v984 = vmax.f32 %v920, 0.0
      %v985 = vmax.f32 %v921, 0.0
      %v986 = vmax.f32 %v922, 0.0
      %v987 = vmax.f32 %v923, 0.0
      %v988 = vmax.f32 %v924, 0.0
      %v989 = vmax.f32 %v925, 0.0
      %v990 = vmax.f32 %v926, 0.0
      %v991 = vmax.f32 %v927, 0.0
      %v992 = vmax.f32 %v928, 0.0
      %v993 = vmax.f32 %v929, 0.0
      %v994 = vmax.f32 %v930, 0.0
      %v995 = vmax.f32 %v931, 0.0
      %v996 = vmax.f32 %v932, 0.0
      %v997 = vmax.f32 %v933, 0.0
      %v998 = vmax.f32 %v934, 0.0
      %v999 = vmax.f32 %v935, 0.0
      %v1000 = vmax.f32 %v936, 0.0
      %v1001 = vmax.f32 %v937, 0.0
      %v1002 = vmax.f32 %v938, 0.0
      %v1003 = vmax.f32 %v939, 0.0
      %v1004 = vmax.f32 %v940, 0.0
      %v1005 = vmax.f32 %v941, 0.0
      %v1006 = vmax.f32 %v942, 0.0
      %v1007 = vmax.f32 %v943, 0.0
      %v1008 = vmax.f32 %v944, 0.0
      %v1009 = vmax.f32 %v945, 0.0
      %v1010 = vmax.f32 %v946, 0.0
      %v1011 = vmax.f32 %v947, 0.0
      %v1012 = vmax.f32 %v948, 0.0
      %v1013 = vmax.f32 %v949, 0.0
      %v1014 = vmax.f32 %v950, 0.0
      %v1015 = vmax.f32 %v951, 0.0
      %v1016 = vmax.f32 %v952, 0.0
      %v1017 = vmax.f32 %v953, 0.0
      %v1018 = vmax.f32 %v954, 0.0
      %v1019 = vmax.f32 %v955, 0.0
      %v1020 = vmax.f32 %v956, 0.0
      %v1021 = vmax.f32 %v957, 0.0
      %v1022 = vmax.f32 %v958, 0.0
      %v1023 = vmax.f32 %v959, 0.0
      %v1024 = vmax.f32 %v960, 0.0
      %v1025 = vmax.f32 %v961, 0.0
      %v1026 = vmax.f32 %v962, 0.0
      %v1027 = vmax.f32 %v963, 0.0
      %v1028 = vmax.f32 %v964, 0.0
      %v1029 = vpack.c.bf16 %v966, %v965
      %v1030 = vpack.c.bf16 %v968, %v967
      %v1031 = vpack.c.bf16 %v970, %v969
      %v1032 = vpack.c.bf16 %v972, %v971
      %v1033 = vpack.c.bf16 %v974, %v973
      %v1034 = vpack.c.bf16 %v976, %v975
      %v1035 = vpack.c.bf16 %v978, %v977
      %v1036 = vpack.c.bf16 %v980, %v979
      %v1037 = vpack.c.bf16 %v982, %v981
      %v1038 = vpack.c.bf16 %v984, %v983
      %v1039 = vpack.c.bf16 %v986, %v985
      %v1040 = vpack.c.bf16 %v988, %v987
      %v1041 = vpack.c.bf16 %v990, %v989
      %v1042 = vpack.c.bf16 %v992, %v991
      %v1043 = vpack.c.bf16 %v994, %v993
      %v1044 = vpack.c.bf16 %v996, %v995
      %v1045 = vpack.c.bf16 %v998, %v997
      %v1046 = vpack.c.bf16 %v1000, %v999
      %v1047 = vpack.c.bf16 %v1002, %v1001
      %v1048 = vpack.c.bf16 %v1004, %v1003
      %v1049 = vpack.c.bf16 %v1006, %v1005
      %v1050 = vpack.c.bf16 %v1008, %v1007
      %v1051 = vpack.c.bf16 %v1010, %v1009
      %v1052 = vpack.c.bf16 %v1012, %v1011
      %v1053 = vpack.c.bf16 %v1014, %v1013
      %v1054 = vpack.c.bf16 %v1016, %v1015
      %v1055 = vpack.c.bf16 %v1018, %v1017
      %v1056 = vpack.c.bf16 %v1020, %v1019
      %v1057 = vpack.c.bf16 %v1022, %v1021
      %v1058 = vpack.c.bf16 %v1024, %v1023
      %v1059 = vpack.c.bf16 %v1026, %v1025
      %v1060 = vpack.c.bf16 %v1028, %v1027
      %v1093 = vunpack.c.l.b16 %v1029
      %v1094 = vunpack.c.h.b16 %v1029
      %v1095 = vunpack.c.l.b16 %v1030
      %v1096 = vunpack.c.h.b16 %v1030
      %v1097 = vunpack.c.l.b16 %v1031
      %v1098 = vunpack.c.h.b16 %v1031
      %v1099 = vunpack.c.l.b16 %v1032
      %v1100 = vunpack.c.h.b16 %v1032
      %v1101 = vunpack.c.l.b16 %v1033
      %v1102 = vunpack.c.h.b16 %v1033
      %v1103 = vunpack.c.l.b16 %v1034
      %v1104 = vunpack.c.h.b16 %v1034
      %v1105 = vunpack.c.l.b16 %v1035
      %v1106 = vunpack.c.h.b16 %v1035
      %v1107 = vunpack.c.l.b16 %v1036
      %v1108 = vunpack.c.h.b16 %v1036
      %v1109 = vunpack.c.l.b16 %v1037
      %v1110 = vunpack.c.h.b16 %v1037
      %v1111 = vunpack.c.l.b16 %v1038
      %v1112 = vunpack.c.h.b16 %v1038
      %v1113 = vunpack.c.l.b16 %v1039
      %v1114 = vunpack.c.h.b16 %v1039
      %v1115 = vunpack.c.l.b16 %v1040
      %v1116 = vunpack.c.h.b16 %v1040
      %v1117 = vunpack.c.l.b16 %v1041
      %v1118 = vunpack.c.h.b16 %v1041
      %v1119 = vunpack.c.l.b16 %v1042
      %v1120 = vunpack.c.h.b16 %v1042
      %v1121 = vunpack.c.l.b16 %v1043
      %v1122 = vunpack.c.h.b16 %v1043
      %v1123 = vunpack.c.l.b16 %v1044
      %v1124 = vunpack.c.h.b16 %v1044
      %v1125 = vunpack.c.l.b16 %v1045
      %v1126 = vunpack.c.h.b16 %v1045
      %v1127 = vunpack.c.l.b16 %v1046
      %v1128 = vunpack.c.h.b16 %v1046
      %v1129 = vunpack.c.l.b16 %v1047
      %v1130 = vunpack.c.h.b16 %v1047
      %v1131 = vunpack.c.l.b16 %v1048
      %v1132 = vunpack.c.h.b16 %v1048
      %v1133 = vunpack.c.l.b16 %v1049
      %v1134 = vunpack.c.h.b16 %v1049
      %v1135 = vunpack.c.l.b16 %v1050
      %v1136 = vunpack.c.h.b16 %v1050
      %v1137 = vunpack.c.l.b16 %v1051
      %v1138 = vunpack.c.h.b16 %v1051
      %v1139 = vunpack.c.l.b16 %v1052
      %v1140 = vunpack.c.h.b16 %v1052
      %v1141 = vunpack.c.l.b16 %v1053
      %v1142 = vunpack.c.h.b16 %v1053
      %v1143 = vunpack.c.l.b16 %v1054
      %v1144 = vunpack.c.h.b16 %v1054
      %v1145 = vunpack.c.l.b16 %v1055
      %v1146 = vunpack.c.h.b16 %v1055
      %v1147 = vunpack.c.l.b16 %v1056
      %v1148 = vunpack.c.h.b16 %v1056
      %v1149 = vunpack.c.l.b16 %v1057
      %v1150 = vunpack.c.h.b16 %v1057
      %v1151 = vunpack.c.l.b16 %v1058
      %v1152 = vunpack.c.h.b16 %v1058
      %v1153 = vunpack.c.l.b16 %v1059
      %v1154 = vunpack.c.h.b16 %v1059
      %v1155 = vunpack.c.l.b16 %v1060
      %v1156 = vunpack.c.h.b16 %v1060
      %v1157 = vpack.c.b16 %v1093, %v1093
      %v1158 = vpack.c.b16 %v1094, %v1094
      %v1159 = vpack.c.b16 %v1095, %v1095
      %v1160 = vpack.c.b16 %v1096, %v1096
      %v1161 = vpack.c.b16 %v1097, %v1097
      %v1162 = vpack.c.b16 %v1098, %v1098
      %v1163 = vpack.c.b16 %v1099, %v1099
      %v1164 = vpack.c.b16 %v1100, %v1100
      %v1165 = vpack.c.b16 %v1101, %v1101
      %v1166 = vpack.c.b16 %v1102, %v1102
      %v1167 = vpack.c.b16 %v1103, %v1103
      %v1168 = vpack.c.b16 %v1104, %v1104
      %v1169 = vpack.c.b16 %v1105, %v1105
      %v1170 = vpack.c.b16 %v1106, %v1106
      %v1171 = vpack.c.b16 %v1107, %v1107
      %v1172 = vpack.c.b16 %v1108, %v1108
      %v1173 = vpack.c.b16 %v1109, %v1109
      %v1174 = vpack.c.b16 %v1110, %v1110
      %v1175 = vpack.c.b16 %v1111, %v1111
      %v1176 = vpack.c.b16 %v1112, %v1112
      %v1177 = vpack.c.b16 %v1113, %v1113
      %v1178 = vpack.c.b16 %v1114, %v1114
      %v1179 = vpack.c.b16 %v1115, %v1115
      %v1180 = vpack.c.b16 %v1116, %v1116
      %v1181 = vpack.c.b16 %v1117, %v1117
      %v1182 = vpack.c.b16 %v1118, %v1118
      %v1183 = vpack.c.b16 %v1119, %v1119
      %v1184 = vpack.c.b16 %v1120, %v1120
      %v1185 = vpack.c.b16 %v1121, %v1121
      %v1186 = vpack.c.b16 %v1122, %v1122
      %v1187 = vpack.c.b16 %v1123, %v1123
      %v1188 = vpack.c.b16 %v1124, %v1124
      %v1189 = vpack.c.b16 %v1125, %v1125
      %v1190 = vpack.c.b16 %v1126, %v1126
      %v1191 = vpack.c.b16 %v1127, %v1127
      %v1192 = vpack.c.b16 %v1128, %v1128
      %v1193 = vpack.c.b16 %v1129, %v1129
      %v1194 = vpack.c.b16 %v1130, %v1130
      %v1195 = vpack.c.b16 %v1131, %v1131
      %v1196 = vpack.c.b16 %v1132, %v1132
      %v1197 = vpack.c.b16 %v1133, %v1133
      %v1198 = vpack.c.b16 %v1134, %v1134
      %v1199 = vpack.c.b16 %v1135, %v1135
      %v1200 = vpack.c.b16 %v1136, %v1136
      %v1201 = vpack.c.b16 %v1137, %v1137
      %v1202 = vpack.c.b16 %v1138, %v1138
      %v1203 = vpack.c.b16 %v1139, %v1139
      %v1204 = vpack.c.b16 %v1140, %v1140
      %v1205 = vpack.c.b16 %v1141, %v1141
      %v1206 = vpack.c.b16 %v1142, %v1142
      %v1207 = vpack.c.b16 %v1143, %v1143
      %v1208 = vpack.c.b16 %v1144, %v1144
      %v1209 = vpack.c.b16 %v1145, %v1145
      %v1210 = vpack.c.b16 %v1146, %v1146
      %v1211 = vpack.c.b16 %v1147, %v1147
      %v1212 = vpack.c.b16 %v1148, %v1148
      %v1213 = vpack.c.b16 %v1149, %v1149
      %v1214 = vpack.c.b16 %v1150, %v1150
      %v1215 = vpack.c.b16 %v1151, %v1151
      %v1216 = vpack.c.b16 %v1152, %v1152
      %v1217 = vpack.c.b16 %v1153, %v1153
      %v1218 = vpack.c.b16 %v1154, %v1154
      %v1219 = vpack.c.b16 %v1155, %v1155
      %v1220 = vpack.c.b16 %v1156, %v1156
      %vm1285 = vcmask 257024
      %1286 = vst.msk [vmem:[%s199] sm:$0xf] %vm1285, %v1157
      %1287 = vst.msk [vmem:[%s199 + $0x4] sm:$0xf] %vm1285, %v1158
      %1288 = vst.msk [vmem:[%s199 + $0x8] sm:$0xf] %vm1285, %v1159
      %1289 = vst.msk [vmem:[%s199 + $0xc] sm:$0xf] %vm1285, %v1160
      %1290 = vst.msk [vmem:[%s199 + $0x10] sm:$0xf] %vm1285, %v1161
      %1291 = vst.msk [vmem:[%s199 + $0x14] sm:$0xf] %vm1285, %v1162
      %1292 = vst.msk [vmem:[%s199 + $0x18] sm:$0xf] %vm1285, %v1163
      %1293 = vst.msk [vmem:[%s199 + $0x1c] sm:$0xf] %vm1285, %v1164
      %1294 = vst.msk [vmem:[%s199 + $0x20] sm:$0xf] %vm1285, %v1165
      %1295 = vst.msk [vmem:[%s199 + $0x24] sm:$0xf] %vm1285, %v1166
      %1296 = vst.msk [vmem:[%s199 + $0x28] sm:$0xf] %vm1285, %v1167
      %1297 = vst.msk [vmem:[%s199 + $0x2c] sm:$0xf] %vm1285, %v1168
      %1298 = vst.msk [vmem:[%s199 + $0x30] sm:$0xf] %vm1285, %v1169
      %1299 = vst.msk [vmem:[%s199 + $0x34] sm:$0xf] %vm1285, %v1170
      %1300 = vst.msk [vmem:[%s199 + $0x38] sm:$0xf] %vm1285, %v1171
      %1301 = vst.msk [vmem:[%s199 + $0x3c] sm:$0xf] %vm1285, %v1172
      %1302 = vst.msk [vmem:[%s199 + $0x40] sm:$0xf] %vm1285, %v1173
      %1303 = vst.msk [vmem:[%s199 + $0x44] sm:$0xf] %vm1285, %v1174
      %1304 = vst.msk [vmem:[%s199 + $0x48] sm:$0xf] %vm1285, %v1175
      %1305 = vst.msk [vmem:[%s199 + $0x4c] sm:$0xf] %vm1285, %v1176
      %1306 = vst.msk [vmem:[%s199 + $0x50] sm:$0xf] %vm1285, %v1177
      %1307 = vst.msk [vmem:[%s199 + $0x54] sm:$0xf] %vm1285, %v1178
      %1308 = vst.msk [vmem:[%s199 + $0x58] sm:$0xf] %vm1285, %v1179
      %1309 = vst.msk [vmem:[%s199 + $0x5c] sm:$0xf] %vm1285, %v1180
      %1310 = vst.msk [vmem:[%s199 + $0x60] sm:$0xf] %vm1285, %v1181
      %1311 = vst.msk [vmem:[%s199 + $0x64] sm:$0xf] %vm1285, %v1182
      %1312 = vst.msk [vmem:[%s199 + $0x68] sm:$0xf] %vm1285, %v1183
      %1313 = vst.msk [vmem:[%s199 + $0x6c] sm:$0xf] %vm1285, %v1184
      %1314 = vst.msk [vmem:[%s199 + $0x70] sm:$0xf] %vm1285, %v1185
      %1315 = vst.msk [vmem:[%s199 + $0x74] sm:$0xf] %vm1285, %v1186
      %1316 = vst.msk [vmem:[%s199 + $0x78] sm:$0xf] %vm1285, %v1187
      %1317 = vst.msk [vmem:[%s199 + $0x7c] sm:$0xf] %vm1285, %v1188
      %1318 = vst.msk [vmem:[%s199 + $0x80] sm:$0xf] %vm1285, %v1189
      %1319 = vst.msk [vmem:[%s199 + $0x84] sm:$0xf] %vm1285, %v1190
      %1320 = vst.msk [vmem:[%s199 + $0x88] sm:$0xf] %vm1285, %v1191
      %1321 = vst.msk [vmem:[%s199 + $0x8c] sm:$0xf] %vm1285, %v1192
      %1322 = vst.msk [vmem:[%s199 + $0x90] sm:$0xf] %vm1285, %v1193
      %1323 = vst.msk [vmem:[%s199 + $0x94] sm:$0xf] %vm1285, %v1194
      %1324 = vst.msk [vmem:[%s199 + $0x98] sm:$0xf] %vm1285, %v1195
      %1325 = vst.msk [vmem:[%s199 + $0x9c] sm:$0xf] %vm1285, %v1196
      %1326 = vst.msk [vmem:[%s199 + $0xa0] sm:$0xf] %vm1285, %v1197
      %1327 = vst.msk [vmem:[%s199 + $0xa4] sm:$0xf] %vm1285, %v1198
      %1328 = vst.msk [vmem:[%s199 + $0xa8] sm:$0xf] %vm1285, %v1199
      %1329 = vst.msk [vmem:[%s199 + $0xac] sm:$0xf] %vm1285, %v1200
      %1330 = vst.msk [vmem:[%s199 + $0xb0] sm:$0xf] %vm1285, %v1201
      %1331 = vst.msk [vmem:[%s199 + $0xb4] sm:$0xf] %vm1285, %v1202
      %1332 = vst.msk [vmem:[%s199 + $0xb8] sm:$0xf] %vm1285, %v1203
      %1333 = vst.msk [vmem:[%s199 + $0xbc] sm:$0xf] %vm1285, %v1204
      %1334 = vst.msk [vmem:[%s199 + $0xc0] sm:$0xf] %vm1285, %v1205
      %1335 = vst.msk [vmem:[%s199 + $0xc4] sm:$0xf] %vm1285, %v1206
      %1336 = vst.msk [vmem:[%s199 + $0xc8] sm:$0xf] %vm1285, %v1207
      %1337 = vst.msk [vmem:[%s199 + $0xcc] sm:$0xf] %vm1285, %v1208
      %1338 = vst.msk [vmem:[%s199 + $0xd0] sm:$0xf] %vm1285, %v1209
      %1339 = vst.msk [vmem:[%s199 + $0xd4] sm:$0xf] %vm1285, %v1210
      %1340 = vst.msk [vmem:[%s199 + $0xd8] sm:$0xf] %vm1285, %v1211
      %1341 = vst.msk [vmem:[%s199 + $0xdc] sm:$0xf] %vm1285, %v1212
      %1342 = vst.msk [vmem:[%s199 + $0xe0] sm:$0xf] %vm1285, %v1213
      %1343 = vst.msk [vmem:[%s199 + $0xe4] sm:$0xf] %vm1285, %v1214
      %1344 = vst.msk [vmem:[%s199 + $0xe8] sm:$0xf] %vm1285, %v1215
      %1345 = vst.msk [vmem:[%s199 + $0xec] sm:$0xf] %vm1285, %v1216
      %1346 = vst.msk [vmem:[%s199 + $0xf0] sm:$0xf] %vm1285, %v1217
      %1347 = vst.msk [vmem:[%s199 + $0xf4] sm:$0xf] %vm1285, %v1218
      %1348 = vst.msk [vmem:[%s199 + $0xf8] sm:$0xf] %vm1285, %v1219
      %1349 = vst.msk [vmem:[%s199 + $0xfc] sm:$0xf] %vm1285, %v1220
      %s1350 = smul.u32 64, %s15
      %p1351 = scmp.lt.s32.totalorder %s1350, 255
      %s1352 = scalar_select %p1351, %s1350, 255
      %s1353 = smul.addr %s1352, 4
      %s1354 = scalar_lea.vmem %s4, %s1353
      // Predicated region
      $region37: #{network_forward.6} parent=35 // pred_check
        %p1355 = pneg %p122
      $region38: #{network_forward.6} parent=35 // pred_check_branch
        %1357 = sbr.rel (%p1355) target = $region40
      $region39: #{network_forward.6} parent=35 // pred_region
        %s1358 = smul.u32 64, %s15
      $region40: #{network_forward.6} parent=35 // pred_fallthru
        _
    $region36: #{network_forward.6} parent=5 // pred_fallthru
      _
    %p1359 = scmp.le.s32.totalorder 2, %s10
    // Predicated region
    $region41: #{network_forward.6} parent=5 // pred_check
      %p1360 = pneg %p1359
    $region42: #{network_forward.6} parent=5 // pred_check_branch
      %1362 = sbr.rel (%p1360) target = $region44
    $region43: #{network_forward.6} parent=5 // pred_region
      %s1363 = ssub.s32 %s10, 2
      // Predicated region
      $region45: #{network_forward.6} parent=43 // pred_check
        %p1364 = pneg %p128
      $region46: #{network_forward.6} parent=43 // pred_check_branch
        %1366 = sbr.rel (%p1364) target = $region48
      $region47: #{network_forward.6} parent=43 // pred_region
        %s1367 = smul.u32 64, %s16
        %p1368 = scmp.lt.s32.totalorder %s1367, 255
        %s1369 = scalar_select %p1368, %s1367, 255
        %s1370 = smul.addr %s1369, 4
        %s1371 = scalar_lea.vmem %s4, %s1370
      $region48: #{network_forward.6} parent=43 // pred_fallthru
        _
    $region44: #{network_forward.6} parent=5 // pred_fallthru
      _
  $region6: #{network_forward.6} parent=0 // loop_footer
    %s14 = sadd.s32 1, %s10
  $region7: #{network_forward.6} parent=0 // loop_footer_branch
    %9 = sbr.rel target = $region3
  $region8: #{network_forward.6} parent=0 // loop_exit
    _

// kernel: network_forward.7
$region0: #{network_forward.7}
  #allocation0 [shape = 'u32[]', space=smem, size = 0x4, offset = 0x4, fixed_abs, tag = 'smem constant byte address 0x4 - core index']
  #allocation1 [shape = 'u32[144,128]{1,0:T(1,128)}', space=vmem, size = 0x12000, scoped, tag = 'internal scratch']
  %s0 = inlined_call_operand.vmem [shape: bf16[512,128], index: 0, kind: input, shape index: {}]
  %s1 = inlined_call_operand.vmem [shape: bf16[128,64], index: 1, kind: input, shape index: {}]
  %s2 = inlined_call_operand.vmem [shape: f32[1,64], index: 2, kind: input, shape index: {}]
  %s3 = inlined_call_operand.vmem [shape: f32[1,64], index: 3, kind: input, shape index: {}]
  %s4 = inlined_call_operand.vmem [shape: bf16[512,64], index: 4, kind: output, shape index: {}]
  %s5 = sld [smem:[#allocation0]]
  $region26: #{network_forward.7} parent=0
    _
  %s7 = ssub.s32 1, %s5
  %s8 = scalar_select 0, %s7, %s5
  // Predicated region
  $region2: #{network_forward.7} parent=0 // pred_check
    _
  $region3: #{network_forward.7} parent=0 // pred_check_branch
    %10 = sbr.rel (0) target = $region5
  $region4: #{network_forward.7} parent=0 // pred_region
    _
  $region5: #{network_forward.7} parent=0 // pred_fallthru
    _
  // Predicated region
  $region6: #{network_forward.7} parent=0 // pred_check
    _
  $region7: #{network_forward.7} parent=0 // pred_check_branch
    %12 = sbr.rel (0) target = $region9
  $region8: #{network_forward.7} parent=0 // pred_region
    _
  $region9: #{network_forward.7} parent=0 // pred_fallthru
    _
  // Predicated region
  $region10: #{network_forward.7} parent=0 // pred_check
    _
  $region11: #{network_forward.7} parent=0 // pred_check_branch
    %14 = sbr.rel (0) target = $region13
  $region12: #{network_forward.7} parent=0 // pred_region
    _
  $region13: #{network_forward.7} parent=0 // pred_fallthru
    _
  // Predicated region
  $region14: #{network_forward.7} parent=0 // pred_check
    _
  $region15: #{network_forward.7} parent=0 // pred_check_branch
    %16 = sbr.rel (0) target = $region17
  $region16: #{network_forward.7} parent=0 // pred_region
    _
  $region17: #{network_forward.7} parent=0 // pred_fallthru
    _
  %v18 = vld [vmem:[%s0] sm:$0xf]
  %v19 = vld [vmem:[%s0 + $0x4] sm:$0xf]
  %v20 = vld [vmem:[%s0 + $0x8] sm:$0xf]
  %v21 = vld [vmem:[%s0 + $0xc] sm:$0xf]
  %v22 = vld [vmem:[%s0 + $0x10] sm:$0xf]
  %v23 = vld [vmem:[%s0 + $0x14] sm:$0xf]
  %v24 = vld [vmem:[%s0 + $0x18] sm:$0xf]
  %v25 = vld [vmem:[%s0 + $0x1c] sm:$0xf]
  %v26 = vld [vmem:[%s0 + $0x20] sm:$0xf]
  %v27 = vld [vmem:[%s0 + $0x24] sm:$0xf]
  %v28 = vld [vmem:[%s0 + $0x28] sm:$0xf]
  %v29 = vld [vmem:[%s0 + $0x2c] sm:$0xf]
  %v30 = vld [vmem:[%s0 + $0x30] sm:$0xf]
  %v31 = vld [vmem:[%s0 + $0x34] sm:$0xf]
  %v32 = vld [vmem:[%s0 + $0x38] sm:$0xf]
  %v33 = vld [vmem:[%s0 + $0x3c] sm:$0xf]
  %v34 = vld [vmem:[%s0 + $0x40] sm:$0xf]
  %v35 = vld [vmem:[%s0 + $0x44] sm:$0xf]
  %v36 = vld [vmem:[%s0 + $0x48] sm:$0xf]
  %v37 = vld [vmem:[%s0 + $0x4c] sm:$0xf]
  %v38 = vld [vmem:[%s0 + $0x50] sm:$0xf]
  %v39 = vld [vmem:[%s0 + $0x54] sm:$0xf]
  %v40 = vld [vmem:[%s0 + $0x58] sm:$0xf]
  %v41 = vld [vmem:[%s0 + $0x5c] sm:$0xf]
  %v42 = vld [vmem:[%s0 + $0x60] sm:$0xf]
  %v43 = vld [vmem:[%s0 + $0x64] sm:$0xf]
  %v44 = vld [vmem:[%s0 + $0x68] sm:$0xf]
  %v45 = vld [vmem:[%s0 + $0x6c] sm:$0xf]
  %v46 = vld [vmem:[%s0 + $0x70] sm:$0xf]
  %v47 = vld [vmem:[%s0 + $0x74] sm:$0xf]
  %v48 = vld [vmem:[%s0 + $0x78] sm:$0xf]
  %v49 = vld [vmem:[%s0 + $0x7c] sm:$0xf]
  %v50 = vld [vmem:[%s0 + $0x80] sm:$0xf]
  %v51 = vld [vmem:[%s0 + $0x84] sm:$0xf]
  %v52 = vld [vmem:[%s0 + $0x88] sm:$0xf]
  %v53 = vld [vmem:[%s0 + $0x8c] sm:$0xf]
  %v54 = vld [vmem:[%s0 + $0x90] sm:$0xf]
  %v55 = vld [vmem:[%s0 + $0x94] sm:$0xf]
  %v56 = vld [vmem:[%s0 + $0x98] sm:$0xf]
  %v57 = vld [vmem:[%s0 + $0x9c] sm:$0xf]
  %v58 = vld [vmem:[%s0 + $0xa0] sm:$0xf]
  %v59 = vld [vmem:[%s0 + $0xa4] sm:$0xf]
  %v60 = vld [vmem:[%s0 + $0xa8] sm:$0xf]
  %v61 = vld [vmem:[%s0 + $0xac] sm:$0xf]
  %v62 = vld [vmem:[%s0 + $0xb0] sm:$0xf]
  %v63 = vld [vmem:[%s0 + $0xb4] sm:$0xf]
  %v64 = vld [vmem:[%s0 + $0xb8] sm:$0xf]
  %v65 = vld [vmem:[%s0 + $0xbc] sm:$0xf]
  %v66 = vld [vmem:[%s0 + $0xc0] sm:$0xf]
  %v67 = vld [vmem:[%s0 + $0xc4] sm:$0xf]
  %v68 = vld [vmem:[%s0 + $0xc8] sm:$0xf]
  %v69 = vld [vmem:[%s0 + $0xcc] sm:$0xf]
  %v70 = vld [vmem:[%s0 + $0xd0] sm:$0xf]
  %v71 = vld [vmem:[%s0 + $0xd4] sm:$0xf]
  %v72 = vld [vmem:[%s0 + $0xd8] sm:$0xf]
  %v73 = vld [vmem:[%s0 + $0xdc] sm:$0xf]
  %v74 = vld [vmem:[%s0 + $0xe0] sm:$0xf]
  %v75 = vld [vmem:[%s0 + $0xe4] sm:$0xf]
  %v76 = vld [vmem:[%s0 + $0xe8] sm:$0xf]
  %v77 = vld [vmem:[%s0 + $0xec] sm:$0xf]
  %v78 = vld [vmem:[%s0 + $0xf0] sm:$0xf]
  %v79 = vld [vmem:[%s0 + $0xf4] sm:$0xf]
  %v80 = vld [vmem:[%s0 + $0xf8] sm:$0xf]
  %v81 = vld [vmem:[%s0 + $0xfc] sm:$0xf]
  %v82 = vld [vmem:[%s1] sm:$0xf]
  %v83 = vld [vmem:[%s1 + $0x4] sm:$0xf]
  %v84 = vld [vmem:[%s1 + $0x8] sm:$0xf]
  %v85 = vld [vmem:[%s1 + $0xc] sm:$0xf]
  %v86 = vld [vmem:[%s1 + $0x10] sm:$0xf]
  %v87 = vld [vmem:[%s1 + $0x14] sm:$0xf]
  %v88 = vld [vmem:[%s1 + $0x18] sm:$0xf]
  %v89 = vld [vmem:[%s1 + $0x1c] sm:$0xf]
  %v90 = vld [vmem:[%s1 + $0x20] sm:$0xf]
  %v91 = vld [vmem:[%s1 + $0x24] sm:$0xf]
  %v92 = vld [vmem:[%s1 + $0x28] sm:$0xf]
  %v93 = vld [vmem:[%s1 + $0x2c] sm:$0xf]
  %v94 = vld [vmem:[%s1 + $0x30] sm:$0xf]
  %v95 = vld [vmem:[%s1 + $0x34] sm:$0xf]
  %v96 = vld [vmem:[%s1 + $0x38] sm:$0xf]
  %v97 = vld [vmem:[%s1 + $0x3c] sm:$0xf]
  %v162 = vunpack.c.l.b16 %v18
  %v163 = vunpack.c.l.b16 %v19
  %v164 = vunpack.c.l.b16 %v20
  %v165 = vunpack.c.l.b16 %v21
  %v166 = vunpack.c.l.b16 %v22
  %v167 = vunpack.c.l.b16 %v23
  %v168 = vunpack.c.l.b16 %v24
  %v169 = vunpack.c.l.b16 %v25
  %v170 = vunpack.c.l.b16 %v26
  %v171 = vunpack.c.l.b16 %v27
  %v172 = vunpack.c.l.b16 %v28
  %v173 = vunpack.c.l.b16 %v29
  %v174 = vunpack.c.l.b16 %v30
  %v175 = vunpack.c.l.b16 %v31
  %v176 = vunpack.c.l.b16 %v32
  %v177 = vunpack.c.l.b16 %v33
  %v178 = vunpack.c.l.b16 %v34
  %v179 = vunpack.c.l.b16 %v35
  %v180 = vunpack.c.l.b16 %v36
  %v181 = vunpack.c.l.b16 %v37
  %v182 = vunpack.c.l.b16 %v38
  %v183 = vunpack.c.l.b16 %v39
  %v184 = vunpack.c.l.b16 %v40
  %v185 = vunpack.c.l.b16 %v41
  %v186 = vunpack.c.l.b16 %v42
  %v187 = vunpack.c.l.b16 %v43
  %v188 = vunpack.c.l.b16 %v44
  %v189 = vunpack.c.l.b16 %v45
  %v190 = vunpack.c.l.b16 %v46
  %v191 = vunpack.c.l.b16 %v47
  %v192 = vunpack.c.l.b16 %v48
  %v193 = vunpack.c.l.b16 %v49
  %v194 = vunpack.c.l.b16 %v50
  %v195 = vunpack.c.l.b16 %v51
  %v196 = vunpack.c.l.b16 %v52
  %v197 = vunpack.c.l.b16 %v53
  %v198 = vunpack.c.l.b16 %v54
  %v199 = vunpack.c.l.b16 %v55
  %v200 = vunpack.c.l.b16 %v56
  %v201 = vunpack.c.l.b16 %v57
  %v202 = vunpack.c.l.b16 %v58
  %v203 = vunpack.c.l.b16 %v59
  %v204 = vunpack.c.l.b16 %v60
  %v205 = vunpack.c.l.b16 %v61
  %v206 = vunpack.c.l.b16 %v62
  %v207 = vunpack.c.l.b16 %v63
  %v208 = vunpack.c.l.b16 %v64
  %v209 = vunpack.c.l.b16 %v65
  %v210 = vunpack.c.l.b16 %v66
  %v211 = vunpack.c.l.b16 %v67
  %v212 = vunpack.c.l.b16 %v68
  %v213 = vunpack.c.l.b16 %v69
  %v214 = vunpack.c.l.b16 %v70
  %v215 = vunpack.c.l.b16 %v71
  %v216 = vunpack.c.l.b16 %v72
  %v217 = vunpack.c.l.b16 %v73
  %v218 = vunpack.c.l.b16 %v74
  %v219 = vunpack.c.l.b16 %v75
  %v220 = vunpack.c.l.b16 %v76
  %v221 = vunpack.c.l.b16 %v77
  %v222 = vunpack.c.l.b16 %v78
  %v223 = vunpack.c.l.b16 %v79
  %v224 = vunpack.c.l.b16 %v80
  %v225 = vunpack.c.l.b16 %v81
  %v226 = vpack.c.b16 %v163, %v162
  %v227 = vpack.c.b16 %v165, %v164
  %v228 = vpack.c.b16 %v167, %v166
  %v229 = vpack.c.b16 %v169, %v168
  %v230 = vpack.c.b16 %v171, %v170
  %v231 = vpack.c.b16 %v173, %v172
  %v232 = vpack.c.b16 %v175, %v174
  %v233 = vpack.c.b16 %v177, %v176
  %v234 = vpack.c.b16 %v179, %v178
  %v235 = vpack.c.b16 %v181, %v180
  %v236 = vpack.c.b16 %v183, %v182
  %v237 = vpack.c.b16 %v185, %v184
  %v238 = vpack.c.b16 %v187, %v186
  %v239 = vpack.c.b16 %v189, %v188
  %v240 = vpack.c.b16 %v191, %v190
  %v241 = vpack.c.b16 %v193, %v192
  %v242 = vpack.c.b16 %v195, %v194
  %v243 = vpack.c.b16 %v197, %v196
  %v244 = vpack.c.b16 %v199, %v198
  %v245 = vpack.c.b16 %v201, %v200
  %v246 = vpack.c.b16 %v203, %v202
  %v247 = vpack.c.b16 %v205, %v204
  %v248 = vpack.c.b16 %v207, %v206
  %v249 = vpack.c.b16 %v209, %v208
  %v250 = vpack.c.b16 %v211, %v210
  %v251 = vpack.c.b16 %v213, %v212
  %v252 = vpack.c.b16 %v215, %v214
  %v253 = vpack.c.b16 %v217, %v216
  %v254 = vpack.c.b16 %v219, %v218
  %v255 = vpack.c.b16 %v221, %v220
  %v256 = vpack.c.b16 %v223, %v222
  %v257 = vpack.c.b16 %v225, %v224
  %v306 = vunpack.c.l.b16 %v82
  %v307 = vunpack.c.l.b16 %v83
  %v308 = vunpack.c.l.b16 %v84
  %v309 = vunpack.c.l.b16 %v85
  %v310 = vunpack.c.l.b16 %v86
  %v311 = vunpack.c.l.b16 %v87
  %v312 = vunpack.c.l.b16 %v88
  %v313 = vunpack.c.l.b16 %v89
  %v314 = vunpack.c.l.b16 %v90
  %v315 = vunpack.c.l.b16 %v91
  %v316 = vunpack.c.l.b16 %v92
  %v317 = vunpack.c.l.b16 %v93
  %v318 = vunpack.c.l.b16 %v94
  %v319 = vunpack.c.l.b16 %v95
  %v320 = vunpack.c.l.b16 %v96
  %v321 = vunpack.c.l.b16 %v97
  %v322 = vpack.c.b16 %v307, %v306
  %v323 = vpack.c.b16 %v309, %v308
  %v324 = vpack.c.b16 %v311, %v310
  %v325 = vpack.c.b16 %v313, %v312
  %v326 = vpack.c.b16 %v315, %v314
  %v327 = vpack.c.b16 %v317, %v316
  %v328 = vpack.c.b16 %v319, %v318
  %v329 = vpack.c.b16 %v321, %v320
  %338 = vmatprep.subr.bf16.mxu0 0
  %339 = vmatpush1.bf16.msra.mxu0 %v322
  %340 = vmatprep.subr.bf16.mxu0 0
  %341 = vmatpush1.bf16.msra.mxu0 %v323
  %342 = vmatprep.subr.bf16.mxu0 0
  %343 = vmatpush1.bf16.msra.mxu0 %v324
  %344 = vmatprep.subr.bf16.mxu0 0
  %345 = vmatpush1.bf16.msra.mxu0 %v325
  %346 = vmatprep.subr.bf16.mxu0 0
  %347 = vmatpush1.bf16.msra.mxu0 %v326
  %348 = vmatprep.subr.bf16.mxu0 0
  %349 = vmatpush1.bf16.msra.mxu0 %v327
  %350 = vmatprep.subr.bf16.mxu0 0
  %351 = vmatpush1.bf16.msra.mxu0 %v328
  %352 = vmatprep.subr.bf16.mxu0 0
  %353 = vmatpush1.bf16.msra.mxu0 %v329
  %354 = vmatprep.subr.bf16.mxu0 0
  %355 = vmatpush1.bf16.msra.mxu0 0
  %356 = vmatprep.subr.bf16.mxu0 0
  %357 = vmatpush1.bf16.msra.mxu0 0
  %358 = vmatprep.subr.bf16.mxu0 0
  %359 = vmatpush1.bf16.msra.mxu0 0
  %360 = vmatprep.subr.bf16.mxu0 0
  %361 = vmatpush1.bf16.msra.mxu0 0
  %362 = vmatprep.subr.bf16.mxu0 0
  %363 = vmatpush1.bf16.msra.mxu0 0
  %364 = vmatprep.subr.bf16.mxu0 0
  %365 = vmatpush1.bf16.msra.mxu0 0
  %366 = vmatprep.subr.bf16.mxu0 0
  %367 = vmatpush1.bf16.msra.mxu0 0
  %368 = vmatprep.subr.bf16.mxu0 0
  %369 = vmatpush1.bf16.msra.mxu0 0
  %370 = vmatprep.mubr.bf16.mxu0 0
  %371 = vmatmul.mubr.bf16.gmra.mrb[0].mxu0 %v226
  %v372 = vpop.f32.mrb[0].mxu0
  %v373 = vadd.f32 0.0, %v372
  %v374 = vpop.f32.mrb[0].mxu0
  %v375 = vpop.f32.mrb[0].mxu0
  %v376 = vadd.f32 0.0, %v375
  %v377 = vpop.f32.mrb[0].mxu0
  %378 = vmatprep.mubr.bf16.mxu0 0
  %379 = vmatmul.mubr.bf16.gmra.mrb[0].mxu0 %v227
  %v380 = vpop.f32.mrb[0].mxu0
  %v381 = vadd.f32 0.0, %v380
  %v382 = vpop.f32.mrb[0].mxu0
  %v383 = vpop.f32.mrb[0].mxu0
  %v384 = vadd.f32 0.0, %v383
  %v385 = vpop.f32.mrb[0].mxu0
  %386 = vmatprep.mubr.bf16.mxu0 0
  %387 = vmatmul.mubr.bf16.gmra.mrb[0].mxu0 %v228
  %v388 = vpop.f32.mrb[0].mxu0
  %v389 = vadd.f32 0.0, %v388
  %v390 = vpop.f32.mrb[0].mxu0
  %v391 = vpop.f32.mrb[0].mxu0
  %v392 = vadd.f32 0.0, %v391
  %v393 = vpop.f32.mrb[0].mxu0
  %394 = vmatprep.mubr.bf16.mxu0 0
  %395 = vmatmul.mubr.bf16.gmra.mrb[0].mxu0 %v229
  %v396 = vpop.f32.mrb[0].mxu0
  %v397 = vadd.f32 0.0, %v396
  %v398 = vpop.f32.mrb[0].mxu0
  %v399 = vpop.f32.mrb[0].mxu0
  %v400 = vadd.f32 0.0, %v399
  %v401 = vpop.f32.mrb[0].mxu0
  %402 = vmatprep.mubr.bf16.mxu0 0
  %403 = vmatmul.mubr.bf16.gmra.mrb[0].mxu0 %v230
  %v404 = vpop.f32.mrb[0].mxu0
  %v405 = vadd.f32 0.0, %v404
  %v406 = vpop.f32.mrb[0].mxu0
  %v407 = vpop.f32.mrb[0].mxu0
  %v408 = vadd.f32 0.0, %v407
  %v409 = vpop.f32.mrb[0].mxu0
  %410 = vmatprep.mubr.bf16.mxu0 0
  %411 = vmatmul.mubr.bf16.gmra.mrb[0].mxu0 %v231
  %v412 = vpop.f32.mrb[0].mxu0
  %v413 = vadd.f32 0.0, %v412
  %v414 = vpop.f32.mrb[0].mxu0
  %v415 = vpop.f32.mrb[0].mxu0
  %v416 = vadd.f32 0.0, %v415
  %v417 = vpop.f32.mrb[0].mxu0
  %418 = vmatprep.mubr.bf16.mxu0 0
  %419 = vmatmul.mubr.bf16.gmra.mrb[0].mxu0 %v232
  %v420 = vpop.f32.mrb[0].mxu0
  %v421 = vadd.f32 0.0, %v420
  %v422 = vpop.f32.mrb[0].mxu0
  %v423 = vpop.f32.mrb[0].mxu0
  %v424 = vadd.f32 0.0, %v423
  %v425 = vpop.f32.mrb[0].mxu0
  %426 = vmatprep.mubr.bf16.mxu0 0
  %427 = vmatmul.mubr.bf16.gmra.mrb[0].mxu0 %v233
  %v428 = vpop.f32.mrb[0].mxu0
  %v429 = vadd.f32 0.0, %v428
  %v430 = vpop.f32.mrb[0].mxu0
  %v431 = vpop.f32.mrb[0].mxu0
  %v432 = vadd.f32 0.0, %v431
  %v433 = vpop.f32.mrb[0].mxu0
  %434 = vmatprep.mubr.bf16.mxu0 0
  %435 = vmatmul.mubr.bf16.gmra.mrb[0].mxu0 %v234
  %v436 = vpop.f32.mrb[0].mxu0
  %v437 = vadd.f32 0.0, %v436
  %v438 = vpop.f32.mrb[0].mxu0
  %v439 = vpop.f32.mrb[0].mxu0
  %v440 = vadd.f32 0.0, %v439
  %v441 = vpop.f32.mrb[0].mxu0
  %442 = vmatprep.mubr.bf16.mxu0 0
  %443 = vmatmul.mubr.bf16.gmra.mrb[0].mxu0 %v235
  %v444 = vpop.f32.mrb[0].mxu0
  %v445 = vadd.f32 0.0, %v444
  %v446 = vpop.f32.mrb[0].mxu0
  %v447 = vpop.f32.mrb[0].mxu0
  %v448 = vadd.f32 0.0, %v447
  %v449 = vpop.f32.mrb[0].mxu0
  %450 = vmatprep.mubr.bf16.mxu0 0
  %451 = vmatmul.mubr.bf16.gmra.mrb[0].mxu0 %v236
  %v452 = vpop.f32.mrb[0].mxu0
  %v453 = vadd.f32 0.0, %v452
  %v454 = vpop.f32.mrb[0].mxu0
  %v455 = vpop.f32.mrb[0].mxu0
  %v456 = vadd.f32 0.0, %v455
  %v457 = vpop.f32.mrb[0].mxu0
  %458 = vmatprep.mubr.bf16.mxu0 0
  %459 = vmatmul.mubr.bf16.gmra.mrb[0].mxu0 %v237
  %v460 = vpop.f32.mrb[0].mxu0
  %v461 = vadd.f32 0.0, %v460
  %v462 = vpop.f32.mrb[0].mxu0
  %v463 = vpop.f32.mrb[0].mxu0
  %v464 = vadd.f32 0.0, %v463
  %v465 = vpop.f32.mrb[0].mxu0
  %466 = vmatprep.mubr.bf16.mxu0 0
  %467 = vmatmul.mubr.bf16.gmra.mrb[0].mxu0 %v238
  %v468 = vpop.f32.mrb[0].mxu0
  %v469 = vadd.f32 0.0, %v468
  %v470 = vpop.f32.mrb[0].mxu0
  %v471 = vpop.f32.mrb[0].mxu0
  %v472 = vadd.f32 0.0, %v471
  %v473 = vpop.f32.mrb[0].mxu0
  %474 = vmatprep.mubr.bf16.mxu0 0
  %475 = vmatmul.mubr.bf16.gmra.mrb[0].mxu0 %v239
  %v476 = vpop.f32.mrb[0].mxu0
  %v477 = vadd.f32 0.0, %v476
  %v478 = vpop.f32.mrb[0].mxu0
  %v479 = vpop.f32.mrb[0].mxu0
  %v480 = vadd.f32 0.0, %v479
  %v481 = vpop.f32.mrb[0].mxu0
  %482 = vmatprep.mubr.bf16.mxu0 0
  %483 = vmatmul.mubr.bf16.gmra.mrb[0].mxu0 %v240
  %v484 = vpop.f32.mrb[0].mxu0
  %v485 = vadd.f32 0.0, %v484
  %v486 = vpop.f32.mrb[0].mxu0
  %v487 = vpop.f32.mrb[0].mxu0
  %v488 = vadd.f32 0.0, %v487
  %v489 = vpop.f32.mrb[0].mxu0
  %490 = vmatprep.mubr.bf16.mxu0 0
  %491 = vmatmul.mubr.bf16.gmra.mrb[0].mxu0 %v241
  %v492 = vpop.f32.mrb[0].mxu0
  %v493 = vadd.f32 0.0, %v492
  %v494 = vpop.f32.mrb[0].mxu0
  %v495 = vpop.f32.mrb[0].mxu0
  %v496 = vadd.f32 0.0, %v495
  %v497 = vpop.f32.mrb[0].mxu0
  %498 = vmatprep.mubr.bf16.mxu0 0
  %499 = vmatmul.mubr.bf16.gmra.mrb[0].mxu0 %v242
  %v500 = vpop.f32.mrb[0].mxu0
  %v501 = vadd.f32 0.0, %v500
  %v502 = vpop.f32.mrb[0].mxu0
  %v503 = vpop.f32.mrb[0].mxu0
  %v504 = vadd.f32 0.0, %v503
  %v505 = vpop.f32.mrb[0].mxu0
  %506 = vmatprep.mubr.bf16.mxu0 0
  %507 = vmatmul.mubr.bf16.gmra.mrb[0].mxu0 %v243
  %v508 = vpop.f32.mrb[0].mxu0
  %v509 = vadd.f32 0.0, %v508
  %v510 = vpop.f32.mrb[0].mxu0
  %v511 = vpop.f32.mrb[0].mxu0
  %v512 = vadd.f32 0.0, %v511
  %v513 = vpop.f32.mrb[0].mxu0
  %514 = vmatprep.mubr.bf16.mxu0 0
  %515 = vmatmul.mubr.bf16.gmra.mrb[0].mxu0 %v244
  %v516 = vpop.f32.mrb[0].mxu0
  %v517 = vadd.f32 0.0, %v516
  %v518 = vpop.f32.mrb[0].mxu0
  %v519 = vpop.f32.mrb[0].mxu0
  %v520 = vadd.f32 0.0, %v519
  %v521 = vpop.f32.mrb[0].mxu0
  %522 = vmatprep.mubr.bf16.mxu0 0
  %523 = vmatmul.mubr.bf16.gmra.mrb[0].mxu0 %v245
  %v524 = vpop.f32.mrb[0].mxu0
  %v525 = vadd.f32 0.0, %v524
  %v526 = vpop.f32.mrb[0].mxu0
  %v527 = vpop.f32.mrb[0].mxu0
  %v528 = vadd.f32 0.0, %v527
  %v529 = vpop.f32.mrb[0].mxu0
  %530 = vmatprep.mubr.bf16.mxu0 0
  %531 = vmatmul.mubr.bf16.gmra.mrb[0].mxu0 %v246
  %v532 = vpop.f32.mrb[0].mxu0
  %v533 = vadd.f32 0.0, %v532
  %v534 = vpop.f32.mrb[0].mxu0
  %v535 = vpop.f32.mrb[0].mxu0
  %v536 = vadd.f32 0.0, %v535
  %v537 = vpop.f32.mrb[0].mxu0
  %538 = vmatprep.mubr.bf16.mxu0 0
  %539 = vmatmul.mubr.bf16.gmra.mrb[0].mxu0 %v247
  %v540 = vpop.f32.mrb[0].mxu0
  %v541 = vadd.f32 0.0, %v540
  %v542 = vpop.f32.mrb[0].mxu0
  %v543 = vpop.f32.mrb[0].mxu0
  %v544 = vadd.f32 0.0, %v543
  %v545 = vpop.f32.mrb[0].mxu0
  %546 = vmatprep.mubr.bf16.mxu0 0
  %547 = vmatmul.mubr.bf16.gmra.mrb[0].mxu0 %v248
  %v548 = vpop.f32.mrb[0].mxu0
  %v549 = vadd.f32 0.0, %v548
  %v550 = vpop.f32.mrb[0].mxu0
  %v551 = vpop.f32.mrb[0].mxu0
  %v552 = vadd.f32 0.0, %v551
  %v553 = vpop.f32.mrb[0].mxu0
  %554 = vmatprep.mubr.bf16.mxu0 0
  %555 = vmatmul.mubr.bf16.gmra.mrb[0].mxu0 %v249
  %v556 = vpop.f32.mrb[0].mxu0
  %v557 = vadd.f32 0.0, %v556
  %v558 = vpop.f32.mrb[0].mxu0
  %v559 = vpop.f32.mrb[0].mxu0
  %v560 = vadd.f32 0.0, %v559
  %v561 = vpop.f32.mrb[0].mxu0
  %562 = vmatprep.mubr.bf16.mxu0 0
  %563 = vmatmul.mubr.bf16.gmra.mrb[0].mxu0 %v250
  %v564 = vpop.f32.mrb[0].mxu0
  %v565 = vadd.f32 0.0, %v564
  %v566 = vpop.f32.mrb[0].mxu0
  %v567 = vpop.f32.mrb[0].mxu0
  %v568 = vadd.f32 0.0, %v567
  %v569 = vpop.f32.mrb[0].mxu0
  %570 = vmatprep.mubr.bf16.mxu0 0
  %571 = vmatmul.mubr.bf16.gmra.mrb[0].mxu0 %v251
  %v572 = vpop.f32.mrb[0].mxu0
  %v573 = vadd.f32 0.0, %v572
  %v574 = vpop.f32.mrb[0].mxu0
  %v575 = vpop.f32.mrb[0].mxu0
  %v576 = vadd.f32 0.0, %v575
  %v577 = vpop.f32.mrb[0].mxu0
  %578 = vmatprep.mubr.bf16.mxu0 0
  %579 = vmatmul.mubr.bf16.gmra.mrb[0].mxu0 %v252
  %v580 = vpop.f32.mrb[0].mxu0
  %v581 = vadd.f32 0.0, %v580
  %v582 = vpop.f32.mrb[0].mxu0
  %v583 = vpop.f32.mrb[0].mxu0
  %v584 = vadd.f32 0.0, %v583
  %v585 = vpop.f32.mrb[0].mxu0
  %586 = vmatprep.mubr.bf16.mxu0 0
  %587 = vmatmul.mubr.bf16.gmra.mrb[0].mxu0 %v253
  %v588 = vpop.f32.mrb[0].mxu0
  %v589 = vadd.f32 0.0, %v588
  %v590 = vpop.f32.mrb[0].mxu0
  %v591 = vpop.f32.mrb[0].mxu0
  %v592 = vadd.f32 0.0, %v591
  %v593 = vpop.f32.mrb[0].mxu0
  %594 = vmatprep.mubr.bf16.mxu0 0
  %595 = vmatmul.mubr.bf16.gmra.mrb[0].mxu0 %v254
  %v596 = vpop.f32.mrb[0].mxu0
  %v597 = vadd.f32 0.0, %v596
  %v598 = vpop.f32.mrb[0].mxu0
  %v599 = vpop.f32.mrb[0].mxu0
  %v600 = vadd.f32 0.0, %v599
  %v601 = vpop.f32.mrb[0].mxu0
  %602 = vmatprep.mubr.bf16.mxu0 0
  %603 = vmatmul.mubr.bf16.gmra.mrb[0].mxu0 %v255
  %v604 = vpop.f32.mrb[0].mxu0
  %v605 = vadd.f32 0.0, %v604
  %v606 = vpop.f32.mrb[0].mxu0
  %v607 = vpop.f32.mrb[0].mxu0
  %v608 = vadd.f32 0.0, %v607
  %v609 = vpop.f32.mrb[0].mxu0
  %610 = vmatprep.mubr.bf16.mxu0 0
  %611 = vmatmul.mubr.bf16.gmra.mrb[0].mxu0 %v256
  %v612 = vpop.f32.mrb[0].mxu0
  %v613 = vadd.f32 0.0, %v612
  %v614 = vpop.f32.mrb[0].mxu0
  %v615 = vpop.f32.mrb[0].mxu0
  %v616 = vadd.f32 0.0, %v615
  %v617 = vpop.f32.mrb[0].mxu0
  %618 = vmatprep.mubr.bf16.mxu0 0
  %619 = vmatmul.mubr.bf16.gmra.mrb[0].mxu0 %v257
  %v620 = vpop.f32.mrb[0].mxu0
  %v621 = vadd.f32 0.0, %v620
  %v622 = vpop.f32.mrb[0].mxu0
  %v623 = vpop.f32.mrb[0].mxu0
  %v624 = vadd.f32 0.0, %v623
  %v625 = vpop.f32.mrb[0].mxu0
  %626 = vdwg.mxu0
  %v627 = vld [vmem:[%s2] sm:$0x1]
  %v629 = vlaneseq
  %v630 = vshrl.u32 %v629, 7
  %v631 = vsub.s32 0, %v630
  %v632 = vrot.slane %v627, %v631
  %v634 = vmul.f32 %v373, %v632
  %v635 = vmul.f32 %v376, %v632
  %v636 = vmul.f32 %v381, %v632
  %v637 = vmul.f32 %v384, %v632
  %v638 = vmul.f32 %v389, %v632
  %v639 = vmul.f32 %v392, %v632
  %v640 = vmul.f32 %v397, %v632
  %v641 = vmul.f32 %v400, %v632
  %v642 = vmul.f32 %v405, %v632
  %v643 = vmul.f32 %v408, %v632
  %v644 = vmul.f32 %v413, %v632
  %v645 = vmul.f32 %v416, %v632
  %v646 = vmul.f32 %v421, %v632
  %v647 = vmul.f32 %v424, %v632
  %v648 = vmul.f32 %v429, %v632
  %v649 = vmul.f32 %v432, %v632
  %v650 = vmul.f32 %v437, %v632
  %v651 = vmul.f32 %v440, %v632
  %v652 = vmul.f32 %v445, %v632
  %v653 = vmul.f32 %v448, %v632
  %v654 = vmul.f32 %v453, %v632
  %v655 = vmul.f32 %v456, %v632
  %v656 = vmul.f32 %v461, %v632
  %v657 = vmul.f32 %v464, %v632
  %v658 = vmul.f32 %v469, %v632
  %v659 = vmul.f32 %v472, %v632
  %v660 = vmul.f32 %v477, %v632
  %v661 = vmul.f32 %v480, %v632
  %v662 = vmul.f32 %v485, %v632
  %v663 = vmul.f32 %v488, %v632
  %v664 = vmul.f32 %v493, %v632
  %v665 = vmul.f32 %v496, %v632
  %v666 = vmul.f32 %v501, %v632
  %v667 = vmul.f32 %v504, %v632
  %v668 = vmul.f32 %v509, %v632
  %v669 = vmul.f32 %v512, %v632
  %v670 = vmul.f32 %v517, %v632
  %v671 = vmul.f32 %v520, %v632
  %v672 = vmul.f32 %v525, %v632
  %v673 = vmul.f32 %v528, %v632
  %v674 = vmul.f32 %v533, %v632
  %v675 = vmul.f32 %v536, %v632
  %v676 = vmul.f32 %v541, %v632
  %v677 = vmul.f32 %v544, %v632
  %v678 = vmul.f32 %v549, %v632
  %v679 = vmul.f32 %v552, %v632
  %v680 = vmul.f32 %v557, %v632
  %v681 = vmul.f32 %v560, %v632
  %v682 = vmul.f32 %v565, %v632
  %v683 = vmul.f32 %v568, %v632
  %v684 = vmul.f32 %v573, %v632
  %v685 = vmul.f32 %v576, %v632
  %v686 = vmul.f32 %v581, %v632
  %v687 = vmul.f32 %v584, %v632
  %v688 = vmul.f32 %v589, %v632
  %v689 = vmul.f32 %v592, %v632
  %v690 = vmul.f32 %v597, %v632
  %v691 = vmul.f32 %v600, %v632
  %v692 = vmul.f32 %v605, %v632
  %v693 = vmul.f32 %v608, %v632
  %v694 = vmul.f32 %v613, %v632
  %v695 = vmul.f32 %v616, %v632
  %v696 = vmul.f32 %v621, %v632
  %v697 = vmul.f32 %v624, %v632
  %v698 = vld [vmem:[%s3] sm:$0x1]
  %v700 = vlaneseq
  %v701 = vshrl.u32 %v700, 7
  %v702 = vsub.s32 0, %v701
  %v703 = vrot.slane %v698, %v702
  %v705 = vadd.f32 %v634, %v703
  %v706 = vadd.f32 %v635, %v703
  %v707 = vadd.f32 %v636, %v703
  %v708 = vadd.f32 %v637, %v703
  %v709 = vadd.f32 %v638, %v703
  %v710 = vadd.f32 %v639, %v703
  %v711 = vadd.f32 %v640, %v703
  %v712 = vadd.f32 %v641, %v703
  %v713 = vadd.f32 %v642, %v703
  %v714 = vadd.f32 %v643, %v703
  %v715 = vadd.f32 %v644, %v703
  %v716 = vadd.f32 %v645, %v703
  %v717 = vadd.f32 %v646, %v703
  %v718 = vadd.f32 %v647, %v703
  %v719 = vadd.f32 %v648, %v703
  %v720 = vadd.f32 %v649, %v703
  %v721 = vadd.f32 %v650, %v703
  %v722 = vadd.f32 %v651, %v703
  %v723 = vadd.f32 %v652, %v703
  %v724 = vadd.f32 %v653, %v703
  %v725 = vadd.f32 %v654, %v703
  %v726 = vadd.f32 %v655, %v703
  %v727 = vadd.f32 %v656, %v703
  %v728 = vadd.f32 %v657, %v703
  %v729 = vadd.f32 %v658, %v703
  %v730 = vadd.f32 %v659, %v703
  %v731 = vadd.f32 %v660, %v703
  %v732 = vadd.f32 %v661, %v703
  %v733 = vadd.f32 %v662, %v703
  %v734 = vadd.f32 %v663, %v703
  %v735 = vadd.f32 %v664, %v703
  %v736 = vadd.f32 %v665, %v703
  %v737 = vadd.f32 %v666, %v703
  %v738 = vadd.f32 %v667, %v703
  %v739 = vadd.f32 %v668, %v703
  %v740 = vadd.f32 %v669, %v703
  %v741 = vadd.f32 %v670, %v703
  %v742 = vadd.f32 %v671, %v703
  %v743 = vadd.f32 %v672, %v703
  %v744 = vadd.f32 %v673, %v703
  %v745 = vadd.f32 %v674, %v703
  %v746 = vadd.f32 %v675, %v703
  %v747 = vadd.f32 %v676, %v703
  %v748 = vadd.f32 %v677, %v703
  %v749 = vadd.f32 %v678, %v703
  %v750 = vadd.f32 %v679, %v703
  %v751 = vadd.f32 %v680, %v703
  %v752 = vadd.f32 %v681, %v703
  %v753 = vadd.f32 %v682, %v703
  %v754 = vadd.f32 %v683, %v703
  %v755 = vadd.f32 %v684, %v703
  %v756 = vadd.f32 %v685, %v703
  %v757 = vadd.f32 %v686, %v703
  %v758 = vadd.f32 %v687, %v703
  %v759 = vadd.f32 %v688, %v703
  %v760 = vadd.f32 %v689, %v703
  %v761 = vadd.f32 %v690, %v703
  %v762 = vadd.f32 %v691, %v703
  %v763 = vadd.f32 %v692, %v703
  %v764 = vadd.f32 %v693, %v703
  %v765 = vadd.f32 %v694, %v703
  %v766 = vadd.f32 %v695, %v703
  %v767 = vadd.f32 %v696, %v703
  %v768 = vadd.f32 %v697, %v703
  %v769 = vmax.f32 %v705, 0.0
  %v770 = vmax.f32 %v706, 0.0
  %v771 = vmax.f32 %v707, 0.0
  %v772 = vmax.f32 %v708, 0.0
  %v773 = vmax.f32 %v709, 0.0
  %v774 = vmax.f32 %v710, 0.0
  %v775 = vmax.f32 %v711, 0.0
  %v776 = vmax.f32 %v712, 0.0
  %v777 = vmax.f32 %v713, 0.0
  %v778 = vmax.f32 %v714, 0.0
  %v779 = vmax.f32 %v715, 0.0
  %v780 = vmax.f32 %v716, 0.0
  %v781 = vmax.f32 %v717, 0.0
  %v782 = vmax.f32 %v718, 0.0
  %v783 = vmax.f32 %v719, 0.0
  %v784 = vmax.f32 %v720, 0.0
  %v785 = vmax.f32 %v721, 0.0
  %v786 = vmax.f32 %v722, 0.0
  %v787 = vmax.f32 %v723, 0.0
  %v788 = vmax.f32 %v724, 0.0
  %v789 = vmax.f32 %v725, 0.0
  %v790 = vmax.f32 %v726, 0.0
  %v791 = vmax.f32 %v727, 0.0
  %v792 = vmax.f32 %v728, 0.0
  %v793 = vmax.f32 %v729, 0.0
  %v794 = vmax.f32 %v730, 0.0
  %v795 = vmax.f32 %v731, 0.0
  %v796 = vmax.f32 %v732, 0.0
  %v797 = vmax.f32 %v733, 0.0
  %v798 = vmax.f32 %v734, 0.0
  %v799 = vmax.f32 %v735, 0.0
  %v800 = vmax.f32 %v736, 0.0
  %v801 = vmax.f32 %v737, 0.0
  %v802 = vmax.f32 %v738, 0.0
  %v803 = vmax.f32 %v739, 0.0
  %v804 = vmax.f32 %v740, 0.0
  %v805 = vmax.f32 %v741, 0.0
  %v806 = vmax.f32 %v742, 0.0
  %v807 = vmax.f32 %v743, 0.0
  %v808 = vmax.f32 %v744, 0.0
  %v809 = vmax.f32 %v745, 0.0
  %v810 = vmax.f32 %v746, 0.0
  %v811 = vmax.f32 %v747, 0.0
  %v812 = vmax.f32 %v748, 0.0
  %v813 = vmax.f32 %v749, 0.0
  %v814 = vmax.f32 %v750, 0.0
  %v815 = vmax.f32 %v751, 0.0
  %v816 = vmax.f32 %v752, 0.0
  %v817 = vmax.f32 %v753, 0.0
  %v818 = vmax.f32 %v754, 0.0
  %v819 = vmax.f32 %v755, 0.0
  %v820 = vmax.f32 %v756, 0.0
  %v821 = vmax.f32 %v757, 0.0
  %v822 = vmax.f32 %v758, 0.0
  %v823 = vmax.f32 %v759, 0.0
  %v824 = vmax.f32 %v760, 0.0
  %v825 = vmax.f32 %v761, 0.0
  %v826 = vmax.f32 %v762, 0.0
  %v827 = vmax.f32 %v763, 0.0
  %v828 = vmax.f32 %v764, 0.0
  %v829 = vmax.f32 %v765, 0.0
  %v830 = vmax.f32 %v766, 0.0
  %v831 = vmax.f32 %v767, 0.0
  %v832 = vmax.f32 %v768, 0.0
  %v833 = vpack.c.bf16 %v770, %v769
  %v834 = vpack.c.bf16 %v772, %v771
  %v835 = vpack.c.bf16 %v774, %v773
  %v836 = vpack.c.bf16 %v776, %v775
  %v837 = vpack.c.bf16 %v778, %v777
  %v838 = vpack.c.bf16 %v780, %v779
  %v839 = vpack.c.bf16 %v782, %v781
  %v840 = vpack.c.bf16 %v784, %v783
  %v841 = vpack.c.bf16 %v786, %v785
  %v842 = vpack.c.bf16 %v788, %v787
  %v843 = vpack.c.bf16 %v790, %v789
  %v844 = vpack.c.bf16 %v792, %v791
  %v845 = vpack.c.bf16 %v794, %v793
  %v846 = vpack.c.bf16 %v796, %v795
  %v847 = vpack.c.bf16 %v798, %v797
  %v848 = vpack.c.bf16 %v800, %v799
  %v849 = vpack.c.bf16 %v802, %v801
  %v850 = vpack.c.bf16 %v804, %v803
  %v851 = vpack.c.bf16 %v806, %v805
  %v852 = vpack.c.bf16 %v808, %v807
  %v853 = vpack.c.bf16 %v810, %v809
  %v854 = vpack.c.bf16 %v812, %v811
  %v855 = vpack.c.bf16 %v814, %v813
  %v856 = vpack.c.bf16 %v816, %v815
  %v857 = vpack.c.bf16 %v818, %v817
  %v858 = vpack.c.bf16 %v820, %v819
  %v859 = vpack.c.bf16 %v822, %v821
  %v860 = vpack.c.bf16 %v824, %v823
  %v861 = vpack.c.bf16 %v826, %v825
  %v862 = vpack.c.bf16 %v828, %v827
  %v863 = vpack.c.bf16 %v830, %v829
  %v864 = vpack.c.bf16 %v832, %v831
  %v897 = vunpack.c.l.b16 %v833
  %v898 = vunpack.c.h.b16 %v833
  %v899 = vunpack.c.l.b16 %v834
  %v900 = vunpack.c.h.b16 %v834
  %v901 = vunpack.c.l.b16 %v835
  %v902 = vunpack.c.h.b16 %v835
  %v903 = vunpack.c.l.b16 %v836
  %v904 = vunpack.c.h.b16 %v836
  %v905 = vunpack.c.l.b16 %v837
  %v906 = vunpack.c.h.b16 %v837
  %v907 = vunpack.c.l.b16 %v838
  %v908 = vunpack.c.h.b16 %v838
  %v909 = vunpack.c.l.b16 %v839
  %v910 = vunpack.c.h.b16 %v839
  %v911 = vunpack.c.l.b16 %v840
  %v912 = vunpack.c.h.b16 %v840
  %v913 = vunpack.c.l.b16 %v841
  %v914 = vunpack.c.h.b16 %v841
  %v915 = vunpack.c.l.b16 %v842
  %v916 = vunpack.c.h.b16 %v842
  %v917 = vunpack.c.l.b16 %v843
  %v918 = vunpack.c.h.b16 %v843
  %v919 = vunpack.c.l.b16 %v844
  %v920 = vunpack.c.h.b16 %v844
  %v921 = vunpack.c.l.b16 %v845
  %v922 = vunpack.c.h.b16 %v845
  %v923 = vunpack.c.l.b16 %v846
  %v924 = vunpack.c.h.b16 %v846
  %v925 = vunpack.c.l.b16 %v847
  %v926 = vunpack.c.h.b16 %v847
  %v927 = vunpack.c.l.b16 %v848
  %v928 = vunpack.c.h.b16 %v848
  %v929 = vunpack.c.l.b16 %v849
  %v930 = vunpack.c.h.b16 %v849
  %v931 = vunpack.c.l.b16 %v850
  %v932 = vunpack.c.h.b16 %v850
  %v933 = vunpack.c.l.b16 %v851
  %v934 = vunpack.c.h.b16 %v851
  %v935 = vunpack.c.l.b16 %v852
  %v936 = vunpack.c.h.b16 %v852
  %v937 = vunpack.c.l.b16 %v853
  %v938 = vunpack.c.h.b16 %v853
  %v939 = vunpack.c.l.b16 %v854
  %v940 = vunpack.c.h.b16 %v854
  %v941 = vunpack.c.l.b16 %v855
  %v942 = vunpack.c.h.b16 %v855
  %v943 = vunpack.c.l.b16 %v856
  %v944 = vunpack.c.h.b16 %v856
  %v945 = vunpack.c.l.b16 %v857
  %v946 = vunpack.c.h.b16 %v857
  %v947 = vunpack.c.l.b16 %v858
  %v948 = vunpack.c.h.b16 %v858
  %v949 = vunpack.c.l.b16 %v859
  %v950 = vunpack.c.h.b16 %v859
  %v951 = vunpack.c.l.b16 %v860
  %v952 = vunpack.c.h.b16 %v860
  %v953 = vunpack.c.l.b16 %v861
  %v954 = vunpack.c.h.b16 %v861
  %v955 = vunpack.c.l.b16 %v862
  %v956 = vunpack.c.h.b16 %v862
  %v957 = vunpack.c.l.b16 %v863
  %v958 = vunpack.c.h.b16 %v863
  %v959 = vunpack.c.l.b16 %v864
  %v960 = vunpack.c.h.b16 %v864
  %v961 = vpack.c.b16 %v897, %v897
  %v962 = vpack.c.b16 %v898, %v898
  %v963 = vpack.c.b16 %v899, %v899
  %v964 = vpack.c.b16 %v900, %v900
  %v965 = vpack.c.b16 %v901, %v901
  %v966 = vpack.c.b16 %v902, %v902
  %v967 = vpack.c.b16 %v903, %v903
  %v968 = vpack.c.b16 %v904, %v904
  %v969 = vpack.c.b16 %v905, %v905
  %v970 = vpack.c.b16 %v906, %v906
  %v971 = vpack.c.b16 %v907, %v907
  %v972 = vpack.c.b16 %v908, %v908
  %v973 = vpack.c.b16 %v909, %v909
  %v974 = vpack.c.b16 %v910, %v910
  %v975 = vpack.c.b16 %v911, %v911
  %v976 = vpack.c.b16 %v912, %v912
  %v977 = vpack.c.b16 %v913, %v913
  %v978 = vpack.c.b16 %v914, %v914
  %v979 = vpack.c.b16 %v915, %v915
  %v980 = vpack.c.b16 %v916, %v916
  %v981 = vpack.c.b16 %v917, %v917
  %v982 = vpack.c.b16 %v918, %v918
  %v983 = vpack.c.b16 %v919, %v919
  %v984 = vpack.c.b16 %v920, %v920
  %v985 = vpack.c.b16 %v921, %v921
  %v986 = vpack.c.b16 %v922, %v922
  %v987 = vpack.c.b16 %v923, %v923
  %v988 = vpack.c.b16 %v924, %v924
  %v989 = vpack.c.b16 %v925, %v925
  %v990 = vpack.c.b16 %v926, %v926
  %v991 = vpack.c.b16 %v927, %v927
  %v992 = vpack.c.b16 %v928, %v928
  %v993 = vpack.c.b16 %v929, %v929
  %v994 = vpack.c.b16 %v930, %v930
  %v995 = vpack.c.b16 %v931, %v931
  %v996 = vpack.c.b16 %v932, %v932
  %v997 = vpack.c.b16 %v933, %v933
  %v998 = vpack.c.b16 %v934, %v934
  %v999 = vpack.c.b16 %v935, %v935
  %v1000 = vpack.c.b16 %v936, %v936
  %v1001 = vpack.c.b16 %v937, %v937
  %v1002 = vpack.c.b16 %v938, %v938
  %v1003 = vpack.c.b16 %v939, %v939
  %v1004 = vpack.c.b16 %v940, %v940
  %v1005 = vpack.c.b16 %v941, %v941
  %v1006 = vpack.c.b16 %v942, %v942
  %v1007 = vpack.c.b16 %v943, %v943
  %v1008 = vpack.c.b16 %v944, %v944
  %v1009 = vpack.c.b16 %v945, %v945
  %v1010 = vpack.c.b16 %v946, %v946
  %v1011 = vpack.c.b16 %v947, %v947
  %v1012 = vpack.c.b16 %v948, %v948
  %v1013 = vpack.c.b16 %v949, %v949
  %v1014 = vpack.c.b16 %v950, %v950
  %v1015 = vpack.c.b16 %v951, %v951
  %v1016 = vpack.c.b16 %v952, %v952
  %v1017 = vpack.c.b16 %v953, %v953
  %v1018 = vpack.c.b16 %v954, %v954
  %v1019 = vpack.c.b16 %v955, %v955
  %v1020 = vpack.c.b16 %v956, %v956
  %v1021 = vpack.c.b16 %v957, %v957
  %v1022 = vpack.c.b16 %v958, %v958
  %v1023 = vpack.c.b16 %v959, %v959
  %v1024 = vpack.c.b16 %v960, %v960
  %vm1089 = vcmask 519168
  %1090 = vst.msk [vmem:[%s4] sm:$0xf] %vm1089, %v961
  %1091 = vst.msk [vmem:[%s4 + $0x4] sm:$0xf] %vm1089, %v962
  %1092 = vst.msk [vmem:[%s4 + $0x8] sm:$0xf] %vm1089, %v963
  %1093 = vst.msk [vmem:[%s4 + $0xc] sm:$0xf] %vm1089, %v964
  %1094 = vst.msk [vmem:[%s4 + $0x10] sm:$0xf] %vm1089, %v965
  %1095 = vst.msk [vmem:[%s4 + $0x14] sm:$0xf] %vm1089, %v966
  %1096 = vst.msk [vmem:[%s4 + $0x18] sm:$0xf] %vm1089, %v967
  %1097 = vst.msk [vmem:[%s4 + $0x1c] sm:$0xf] %vm1089, %v968
  %1098 = vst.msk [vmem:[%s4 + $0x20] sm:$0xf] %vm1089, %v969
  %1099 = vst.msk [vmem:[%s4 + $0x24] sm:$0xf] %vm1089, %v970
  %1100 = vst.msk [vmem:[%s4 + $0x28] sm:$0xf] %vm1089, %v971
  %1101 = vst.msk [vmem:[%s4 + $0x2c] sm:$0xf] %vm1089, %v972
  %1102 = vst.msk [vmem:[%s4 + $0x30] sm:$0xf] %vm1089, %v973
  %1103 = vst.msk [vmem:[%s4 + $0x34] sm:$0xf] %vm1089, %v974
  %1104 = vst.msk [vmem:[%s4 + $0x38] sm:$0xf] %vm1089, %v975
  %1105 = vst.msk [vmem:[%s4 + $0x3c] sm:$0xf] %vm1089, %v976
  %1106 = vst.msk [vmem:[%s4 + $0x40] sm:$0xf] %vm1089, %v977
  %1107 = vst.msk [vmem:[%s4 + $0x44] sm:$0xf] %vm1089, %v978
  %1108 = vst.msk [vmem:[%s4 + $0x48] sm:$0xf] %vm1089, %v979
  %1109 = vst.msk [vmem:[%s4 + $0x4c] sm:$0xf] %vm1089, %v980
  %1110 = vst.msk [vmem:[%s4 + $0x50] sm:$0xf] %vm1089, %v981
  %1111 = vst.msk [vmem:[%s4 + $0x54] sm:$0xf] %vm1089, %v982
  %1112 = vst.msk [vmem:[%s4 + $0x58] sm:$0xf] %vm1089, %v983
  %1113 = vst.msk [vmem:[%s4 + $0x5c] sm:$0xf] %vm1089, %v984
  %1114 = vst.msk [vmem:[%s4 + $0x60] sm:$0xf] %vm1089, %v985
  %1115 = vst.msk [vmem:[%s4 + $0x64] sm:$0xf] %vm1089, %v986
  %1116 = vst.msk [vmem:[%s4 + $0x68] sm:$0xf] %vm1089, %v987
  %1117 = vst.msk [vmem:[%s4 + $0x6c] sm:$0xf] %vm1089, %v988
  %1118 = vst.msk [vmem:[%s4 + $0x70] sm:$0xf] %vm1089, %v989
  %1119 = vst.msk [vmem:[%s4 + $0x74] sm:$0xf] %vm1089, %v990
  %1120 = vst.msk [vmem:[%s4 + $0x78] sm:$0xf] %vm1089, %v991
  %1121 = vst.msk [vmem:[%s4 + $0x7c] sm:$0xf] %vm1089, %v992
  %1122 = vst.msk [vmem:[%s4 + $0x80] sm:$0xf] %vm1089, %v993
  %1123 = vst.msk [vmem:[%s4 + $0x84] sm:$0xf] %vm1089, %v994
  %1124 = vst.msk [vmem:[%s4 + $0x88] sm:$0xf] %vm1089, %v995
  %1125 = vst.msk [vmem:[%s4 + $0x8c] sm:$0xf] %vm1089, %v996
  %1126 = vst.msk [vmem:[%s4 + $0x90] sm:$0xf] %vm1089, %v997
  %1127 = vst.msk [vmem:[%s4 + $0x94] sm:$0xf] %vm1089, %v998
  %1128 = vst.msk [vmem:[%s4 + $0x98] sm:$0xf] %vm1089, %v999
  %1129 = vst.msk [vmem:[%s4 + $0x9c] sm:$0xf] %vm1089, %v1000
  %1130 = vst.msk [vmem:[%s4 + $0xa0] sm:$0xf] %vm1089, %v1001
  %1131 = vst.msk [vmem:[%s4 + $0xa4] sm:$0xf] %vm1089, %v1002
  %1132 = vst.msk [vmem:[%s4 + $0xa8] sm:$0xf] %vm1089, %v1003
  %1133 = vst.msk [vmem:[%s4 + $0xac] sm:$0xf] %vm1089, %v1004
  %1134 = vst.msk [vmem:[%s4 + $0xb0] sm:$0xf] %vm1089, %v1005
  %1135 = vst.msk [vmem:[%s4 + $0xb4] sm:$0xf] %vm1089, %v1006
  %1136 = vst.msk [vmem:[%s4 + $0xb8] sm:$0xf] %vm1089, %v1007
  %1137 = vst.msk [vmem:[%s4 + $0xbc] sm:$0xf] %vm1089, %v1008
  %1138 = vst.msk [vmem:[%s4 + $0xc0] sm:$0xf] %vm1089, %v1009
  %1139 = vst.msk [vmem:[%s4 + $0xc4] sm:$0xf] %vm1089, %v1010
  %1140 = vst.msk [vmem:[%s4 + $0xc8] sm:$0xf] %vm1089, %v1011
  %1141 = vst.msk [vmem:[%s4 + $0xcc] sm:$0xf] %vm1089, %v1012
  %1142 = vst.msk [vmem:[%s4 + $0xd0] sm:$0xf] %vm1089, %v1013
  %1143 = vst.msk [vmem:[%s4 + $0xd4] sm:$0xf] %vm1089, %v1014
  %1144 = vst.msk [vmem:[%s4 + $0xd8] sm:$0xf] %vm1089, %v1015
  %1145 = vst.msk [vmem:[%s4 + $0xdc] sm:$0xf] %vm1089, %v1016
  %1146 = vst.msk [vmem:[%s4 + $0xe0] sm:$0xf] %vm1089, %v1017
  %1147 = vst.msk [vmem:[%s4 + $0xe4] sm:$0xf] %vm1089, %v1018
  %1148 = vst.msk [vmem:[%s4 + $0xe8] sm:$0xf] %vm1089, %v1019
  %1149 = vst.msk [vmem:[%s4 + $0xec] sm:$0xf] %vm1089, %v1020
  %1150 = vst.msk [vmem:[%s4 + $0xf0] sm:$0xf] %vm1089, %v1021
  %1151 = vst.msk [vmem:[%s4 + $0xf4] sm:$0xf] %vm1089, %v1022
  %1152 = vst.msk [vmem:[%s4 + $0xf8] sm:$0xf] %vm1089, %v1023
  %1153 = vst.msk [vmem:[%s4 + $0xfc] sm:$0xf] %vm1089, %v1024
  // Predicated region
  $region18: #{network_forward.7} parent=0 // pred_check
    _
  $region19: #{network_forward.7} parent=0 // pred_check_branch
    %1155 = sbr.rel (0) target = $region21
  $region20: #{network_forward.7} parent=0 // pred_region
    _
  $region21: #{network_forward.7} parent=0 // pred_fallthru
    _
  // Predicated region
  $region22: #{network_forward.7} parent=0 // pred_check
    _
  $region23: #{network_forward.7} parent=0 // pred_check_branch
    %1157 = sbr.rel (0) target = $region25
  $region24: #{network_forward.7} parent=0 // pred_region
    _
  $region25: #{network_forward.7} parent=0 // pred_fallthru
    _

// kernel: network_forward.9
$region0: #{network_forward.9}
  #allocation0 [shape = 'u32[]', space=smem, size = 0x4, offset = 0x4, fixed_abs, tag = 'smem constant byte address 0x4 - core index']
  #allocation1 [shape = 'u32[144,128]{1,0:T(1,128)}', space=vmem, size = 0x12000, scoped, tag = 'internal scratch']
  %s0 = inlined_call_operand.vmem [shape: bf16[128,256], index: 0, kind: input, shape index: {}]
  %s1 = inlined_call_operand.vmem [shape: bf16[256,128], index: 1, kind: input, shape index: {}]
  %s2 = inlined_call_operand.vmem [shape: f32[1,128], index: 2, kind: input, shape index: {}]
  %s3 = inlined_call_operand.vmem [shape: f32[1,128], index: 3, kind: input, shape index: {}]
  %s4 = inlined_call_operand.vmem [shape: bf16[128,128], index: 4, kind: output, shape index: {}]
  %s5 = sld [smem:[#allocation0]]
  $region26: #{network_forward.9} parent=0
    _
  %s7 = ssub.s32 1, %s5
  %s8 = scalar_select 0, %s7, %s5
  // Predicated region
  $region2: #{network_forward.9} parent=0 // pred_check
    _
  $region3: #{network_forward.9} parent=0 // pred_check_branch
    %10 = sbr.rel (0) target = $region5
  $region4: #{network_forward.9} parent=0 // pred_region
    _
  $region5: #{network_forward.9} parent=0 // pred_fallthru
    _
  // Predicated region
  $region6: #{network_forward.9} parent=0 // pred_check
    _
  $region7: #{network_forward.9} parent=0 // pred_check_branch
    %12 = sbr.rel (0) target = $region9
  $region8: #{network_forward.9} parent=0 // pred_region
    _
  $region9: #{network_forward.9} parent=0 // pred_fallthru
    _
  // Predicated region
  $region10: #{network_forward.9} parent=0 // pred_check
    _
  $region11: #{network_forward.9} parent=0 // pred_check_branch
    %14 = sbr.rel (0) target = $region13
  $region12: #{network_forward.9} parent=0 // pred_region
    _
  $region13: #{network_forward.9} parent=0 // pred_fallthru
    _
  // Predicated region
  $region14: #{network_forward.9} parent=0 // pred_check
    _
  $region15: #{network_forward.9} parent=0 // pred_check_branch
    %16 = sbr.rel (0) target = $region17
  $region16: #{network_forward.9} parent=0 // pred_region
    _
  $region17: #{network_forward.9} parent=0 // pred_fallthru
    _
  %v18 = vld [vmem:[%s0] sm:$0xff]
  %v19 = vld [vmem:[%s0 + $0x8] sm:$0xff]
  %v20 = vld [vmem:[%s0 + $0x10] sm:$0xff]
  %v21 = vld [vmem:[%s0 + $0x18] sm:$0xff]
  %v22 = vld [vmem:[%s0 + $0x20] sm:$0xff]
  %v23 = vld [vmem:[%s0 + $0x28] sm:$0xff]
  %v24 = vld [vmem:[%s0 + $0x30] sm:$0xff]
  %v25 = vld [vmem:[%s0 + $0x38] sm:$0xff]
  %v26 = vld [vmem:[%s0 + $0x40] sm:$0xff]
  %v27 = vld [vmem:[%s0 + $0x48] sm:$0xff]
  %v28 = vld [vmem:[%s0 + $0x50] sm:$0xff]
  %v29 = vld [vmem:[%s0 + $0x58] sm:$0xff]
  %v30 = vld [vmem:[%s0 + $0x60] sm:$0xff]
  %v31 = vld [vmem:[%s0 + $0x68] sm:$0xff]
  %v32 = vld [vmem:[%s0 + $0x70] sm:$0xff]
  %v33 = vld [vmem:[%s0 + $0x78] sm:$0xff]
  %v34 = vld [vmem:[%s1] sm:$0xf]
  %v35 = vld [vmem:[%s1 + $0x4] sm:$0xf]
  %v36 = vld [vmem:[%s1 + $0x8] sm:$0xf]
  %v37 = vld [vmem:[%s1 + $0xc] sm:$0xf]
  %v38 = vld [vmem:[%s1 + $0x10] sm:$0xf]
  %v39 = vld [vmem:[%s1 + $0x14] sm:$0xf]
  %v40 = vld [vmem:[%s1 + $0x18] sm:$0xf]
  %v41 = vld [vmem:[%s1 + $0x1c] sm:$0xf]
  %v42 = vld [vmem:[%s1 + $0x20] sm:$0xf]
  %v43 = vld [vmem:[%s1 + $0x24] sm:$0xf]
  %v44 = vld [vmem:[%s1 + $0x28] sm:$0xf]
  %v45 = vld [vmem:[%s1 + $0x2c] sm:$0xf]
  %v46 = vld [vmem:[%s1 + $0x30] sm:$0xf]
  %v47 = vld [vmem:[%s1 + $0x34] sm:$0xf]
  %v48 = vld [vmem:[%s1 + $0x38] sm:$0xf]
  %v49 = vld [vmem:[%s1 + $0x3c] sm:$0xf]
  %v50 = vld [vmem:[%s1 + $0x40] sm:$0xf]
  %v51 = vld [vmem:[%s1 + $0x44] sm:$0xf]
  %v52 = vld [vmem:[%s1 + $0x48] sm:$0xf]
  %v53 = vld [vmem:[%s1 + $0x4c] sm:$0xf]
  %v54 = vld [vmem:[%s1 + $0x50] sm:$0xf]
  %v55 = vld [vmem:[%s1 + $0x54] sm:$0xf]
  %v56 = vld [vmem:[%s1 + $0x58] sm:$0xf]
  %v57 = vld [vmem:[%s1 + $0x5c] sm:$0xf]
  %v58 = vld [vmem:[%s1 + $0x60] sm:$0xf]
  %v59 = vld [vmem:[%s1 + $0x64] sm:$0xf]
  %v60 = vld [vmem:[%s1 + $0x68] sm:$0xf]
  %v61 = vld [vmem:[%s1 + $0x6c] sm:$0xf]
  %v62 = vld [vmem:[%s1 + $0x70] sm:$0xf]
  %v63 = vld [vmem:[%s1 + $0x74] sm:$0xf]
  %v64 = vld [vmem:[%s1 + $0x78] sm:$0xf]
  %v65 = vld [vmem:[%s1 + $0x7c] sm:$0xf]
  %v82 = vunpack.c.l.b16 %v18
  %v83 = vunpack.c.h.b16 %v18
  %v84 = vunpack.c.l.b16 %v19
  %v85 = vunpack.c.h.b16 %v19
  %v86 = vunpack.c.l.b16 %v20
  %v87 = vunpack.c.h.b16 %v20
  %v88 = vunpack.c.l.b16 %v21
  %v89 = vunpack.c.h.b16 %v21
  %v90 = vunpack.c.l.b16 %v22
  %v91 = vunpack.c.h.b16 %v22
  %v92 = vunpack.c.l.b16 %v23
  %v93 = vunpack.c.h.b16 %v23
  %v94 = vunpack.c.l.b16 %v24
  %v95 = vunpack.c.h.b16 %v24
  %v96 = vunpack.c.l.b16 %v25
  %v97 = vunpack.c.h.b16 %v25
  %v98 = vunpack.c.l.b16 %v26
  %v99 = vunpack.c.h.b16 %v26
  %v100 = vunpack.c.l.b16 %v27
  %v101 = vunpack.c.h.b16 %v27
  %v102 = vunpack.c.l.b16 %v28
  %v103 = vunpack.c.h.b16 %v28
  %v104 = vunpack.c.l.b16 %v29
  %v105 = vunpack.c.h.b16 %v29
  %v106 = vunpack.c.l.b16 %v30
  %v107 = vunpack.c.h.b16 %v30
  %v108 = vunpack.c.l.b16 %v31
  %v109 = vunpack.c.h.b16 %v31
  %v110 = vunpack.c.l.b16 %v32
  %v111 = vunpack.c.h.b16 %v32
  %v112 = vunpack.c.l.b16 %v33
  %v113 = vunpack.c.h.b16 %v33
  %v114 = vpack.c.b16 %v84, %v82
  %v115 = vpack.c.b16 %v85, %v83
  %v116 = vpack.c.b16 %v88, %v86
  %v117 = vpack.c.b16 %v89, %v87
  %v118 = vpack.c.b16 %v92, %v90
  %v119 = vpack.c.b16 %v93, %v91
  %v120 = vpack.c.b16 %v96, %v94
  %v121 = vpack.c.b16 %v97, %v95
  %v122 = vpack.c.b16 %v100, %v98
  %v123 = vpack.c.b16 %v101, %v99
  %v124 = vpack.c.b16 %v104, %v102
  %v125 = vpack.c.b16 %v105, %v103
  %v126 = vpack.c.b16 %v108, %v106
  %v127 = vpack.c.b16 %v109, %v107
  %v128 = vpack.c.b16 %v112, %v110
  %v129 = vpack.c.b16 %v113, %v111
  %v178 = vunpack.c.l.b16 %v34
  %v179 = vunpack.c.l.b16 %v35
  %v180 = vunpack.c.l.b16 %v36
  %v181 = vunpack.c.l.b16 %v37
  %v182 = vunpack.c.l.b16 %v38
  %v183 = vunpack.c.l.b16 %v39
  %v184 = vunpack.c.l.b16 %v40
  %v185 = vunpack.c.l.b16 %v41
  %v186 = vunpack.c.l.b16 %v42
  %v187 = vunpack.c.l.b16 %v43
  %v188 = vunpack.c.l.b16 %v44
  %v189 = vunpack.c.l.b16 %v45
  %v190 = vunpack.c.l.b16 %v46
  %v191 = vunpack.c.l.b16 %v47
  %v192 = vunpack.c.l.b16 %v48
  %v193 = vunpack.c.l.b16 %v49
  %v194 = vunpack.c.l.b16 %v50
  %v195 = vunpack.c.l.b16 %v51
  %v196 = vunpack.c.l.b16 %v52
  %v197 = vunpack.c.l.b16 %v53
  %v198 = vunpack.c.l.b16 %v54
  %v199 = vunpack.c.l.b16 %v55
  %v200 = vunpack.c.l.b16 %v56
  %v201 = vunpack.c.l.b16 %v57
  %v202 = vunpack.c.l.b16 %v58
  %v203 = vunpack.c.l.b16 %v59
  %v204 = vunpack.c.l.b16 %v60
  %v205 = vunpack.c.l.b16 %v61
  %v206 = vunpack.c.l.b16 %v62
  %v207 = vunpack.c.l.b16 %v63
  %v208 = vunpack.c.l.b16 %v64
  %v209 = vunpack.c.l.b16 %v65
  %v210 = vpack.c.b16 %v179, %v178
  %v211 = vpack.c.b16 %v181, %v180
  %v212 = vpack.c.b16 %v183, %v182
  %v213 = vpack.c.b16 %v185, %v184
  %v214 = vpack.c.b16 %v187, %v186
  %v215 = vpack.c.b16 %v189, %v188
  %v216 = vpack.c.b16 %v191, %v190
  %v217 = vpack.c.b16 %v193, %v192
  %v218 = vpack.c.b16 %v195, %v194
  %v219 = vpack.c.b16 %v197, %v196
  %v220 = vpack.c.b16 %v199, %v198
  %v221 = vpack.c.b16 %v201, %v200
  %v222 = vpack.c.b16 %v203, %v202
  %v223 = vpack.c.b16 %v205, %v204
  %v224 = vpack.c.b16 %v207, %v206
  %v225 = vpack.c.b16 %v209, %v208
  %242 = vmatprep.subr.bf16.mxu0 0
  %243 = vmatpush1.bf16.msra.mxu0 %v210
  %244 = vmatprep.subr.bf16.mxu0 0
  %245 = vmatpush1.bf16.msra.mxu0 %v211
  %246 = vmatprep.subr.bf16.mxu0 0
  %247 = vmatpush1.bf16.msra.mxu0 %v212
  %248 = vmatprep.subr.bf16.mxu0 0
  %249 = vmatpush1.bf16.msra.mxu0 %v213
  %250 = vmatprep.subr.bf16.mxu0 0
  %251 = vmatpush1.bf16.msra.mxu0 %v214
  %252 = vmatprep.subr.bf16.mxu0 0
  %253 = vmatpush1.bf16.msra.mxu0 %v215
  %254 = vmatprep.subr.bf16.mxu0 0
  %255 = vmatpush1.bf16.msra.mxu0 %v216
  %256 = vmatprep.subr.bf16.mxu0 0
  %257 = vmatpush1.bf16.msra.mxu0 %v217
  %258 = vmatprep.subr.bf16.mxu0 0
  %259 = vmatpush1.bf16.msra.mxu0 %v218
  %260 = vmatprep.subr.bf16.mxu0 0
  %261 = vmatpush1.bf16.msra.mxu0 %v219
  %262 = vmatprep.subr.bf16.mxu0 0
  %263 = vmatpush1.bf16.msra.mxu0 %v220
  %264 = vmatprep.subr.bf16.mxu0 0
  %265 = vmatpush1.bf16.msra.mxu0 %v221
  %266 = vmatprep.subr.bf16.mxu0 0
  %267 = vmatpush1.bf16.msra.mxu0 %v222
  %268 = vmatprep.subr.bf16.mxu0 0
  %269 = vmatpush1.bf16.msra.mxu0 %v223
  %270 = vmatprep.subr.bf16.mxu0 0
  %271 = vmatpush1.bf16.msra.mxu0 %v224
  %272 = vmatprep.subr.bf16.mxu0 0
  %273 = vmatpush1.bf16.msra.mxu0 %v225
  %274 = vmatprep.mubr.bf16.mxu0 %v115
  %275 = vmatmul.mubr.bf16.gmra.mrb[0].mxu0 %v114
  %v276 = vpop.f32.mrb[0].mxu0
  %v277 = vadd.f32 0.0, %v276
  %v278 = vpop.f32.mrb[0].mxu0
  %v279 = vpop.f32.mrb[0].mxu0
  %v280 = vadd.f32 0.0, %v279
  %v281 = vpop.f32.mrb[0].mxu0
  %282 = vmatprep.mubr.bf16.mxu0 %v117
  %283 = vmatmul.mubr.bf16.gmra.mrb[0].mxu0 %v116
  %v284 = vpop.f32.mrb[0].mxu0
  %v285 = vadd.f32 0.0, %v284
  %v286 = vpop.f32.mrb[0].mxu0
  %v287 = vpop.f32.mrb[0].mxu0
  %v288 = vadd.f32 0.0, %v287
  %v289 = vpop.f32.mrb[0].mxu0
  %290 = vmatprep.mubr.bf16.mxu0 %v119
  %291 = vmatmul.mubr.bf16.gmra.mrb[0].mxu0 %v118
  %v292 = vpop.f32.mrb[0].mxu0
  %v293 = vadd.f32 0.0, %v292
  %v294 = vpop.f32.mrb[0].mxu0
  %v295 = vpop.f32.mrb[0].mxu0
  %v296 = vadd.f32 0.0, %v295
  %v297 = vpop.f32.mrb[0].mxu0
  %298 = vmatprep.mubr.bf16.mxu0 %v121
  %299 = vmatmul.mubr.bf16.gmra.mrb[0].mxu0 %v120
  %v300 = vpop.f32.mrb[0].mxu0
  %v301 = vadd.f32 0.0, %v300
  %v302 = vpop.f32.mrb[0].mxu0
  %v303 = vpop.f32.mrb[0].mxu0
  %v304 = vadd.f32 0.0, %v303
  %v305 = vpop.f32.mrb[0].mxu0
  %306 = vmatprep.mubr.bf16.mxu0 %v123
  %307 = vmatmul.mubr.bf16.gmra.mrb[0].mxu0 %v122
  %v308 = vpop.f32.mrb[0].mxu0
  %v309 = vadd.f32 0.0, %v308
  %v310 = vpop.f32.mrb[0].mxu0
  %v311 = vpop.f32.mrb[0].mxu0
  %v312 = vadd.f32 0.0, %v311
  %v313 = vpop.f32.mrb[0].mxu0
  %314 = vmatprep.mubr.bf16.mxu0 %v125
  %315 = vmatmul.mubr.bf16.gmra.mrb[0].mxu0 %v124
  %v316 = vpop.f32.mrb[0].mxu0
  %v317 = vadd.f32 0.0, %v316
  %v318 = vpop.f32.mrb[0].mxu0
  %v319 = vpop.f32.mrb[0].mxu0
  %v320 = vadd.f32 0.0, %v319
  %v321 = vpop.f32.mrb[0].mxu0
  %322 = vmatprep.mubr.bf16.mxu0 %v127
  %323 = vmatmul.mubr.bf16.gmra.mrb[0].mxu0 %v126
  %v324 = vpop.f32.mrb[0].mxu0
  %v325 = vadd.f32 0.0, %v324
  %v326 = vpop.f32.mrb[0].mxu0
  %v327 = vpop.f32.mrb[0].mxu0
  %v328 = vadd.f32 0.0, %v327
  %v329 = vpop.f32.mrb[0].mxu0
  %330 = vmatprep.mubr.bf16.mxu0 %v129
  %331 = vmatmul.mubr.bf16.gmra.mrb[0].mxu0 %v128
  %v332 = vpop.f32.mrb[0].mxu0
  %v333 = vadd.f32 0.0, %v332
  %v334 = vpop.f32.mrb[0].mxu0
  %v335 = vpop.f32.mrb[0].mxu0
  %v336 = vadd.f32 0.0, %v335
  %v337 = vpop.f32.mrb[0].mxu0
  %338 = vdwg.mxu0
  %v339 = vld [vmem:[%s2] sm:$0x1]
  %v341 = vlaneseq
  %v342 = vshrl.u32 %v341, 7
  %v343 = vsub.s32 0, %v342
  %v344 = vrot.slane %v339, %v343
  %v346 = vmul.f32 %v277, %v344
  %v347 = vmul.f32 %v280, %v344
  %v348 = vmul.f32 %v285, %v344
  %v349 = vmul.f32 %v288, %v344
  %v350 = vmul.f32 %v293, %v344
  %v351 = vmul.f32 %v296, %v344
  %v352 = vmul.f32 %v301, %v344
  %v353 = vmul.f32 %v304, %v344
  %v354 = vmul.f32 %v309, %v344
  %v355 = vmul.f32 %v312, %v344
  %v356 = vmul.f32 %v317, %v344
  %v357 = vmul.f32 %v320, %v344
  %v358 = vmul.f32 %v325, %v344
  %v359 = vmul.f32 %v328, %v344
  %v360 = vmul.f32 %v333, %v344
  %v361 = vmul.f32 %v336, %v344
  %v362 = vld [vmem:[%s3] sm:$0x1]
  %v364 = vlaneseq
  %v365 = vshrl.u32 %v364, 7
  %v366 = vsub.s32 0, %v365
  %v367 = vrot.slane %v362, %v366
  %v369 = vadd.f32 %v346, %v367
  %v370 = vadd.f32 %v347, %v367
  %v371 = vadd.f32 %v348, %v367
  %v372 = vadd.f32 %v349, %v367
  %v373 = vadd.f32 %v350, %v367
  %v374 = vadd.f32 %v351, %v367
  %v375 = vadd.f32 %v352, %v367
  %v376 = vadd.f32 %v353, %v367
  %v377 = vadd.f32 %v354, %v367
  %v378 = vadd.f32 %v355, %v367
  %v379 = vadd.f32 %v356, %v367
  %v380 = vadd.f32 %v357, %v367
  %v381 = vadd.f32 %v358, %v367
  %v382 = vadd.f32 %v359, %v367
  %v383 = vadd.f32 %v360, %v367
  %v384 = vadd.f32 %v361, %v367
  %v385 = vmax.f32 %v369, 0.0
  %v386 = vmax.f32 %v370, 0.0
  %v387 = vmax.f32 %v371, 0.0
  %v388 = vmax.f32 %v372, 0.0
  %v389 = vmax.f32 %v373, 0.0
  %v390 = vmax.f32 %v374, 0.0
  %v391 = vmax.f32 %v375, 0.0
  %v392 = vmax.f32 %v376, 0.0
  %v393 = vmax.f32 %v377, 0.0
  %v394 = vmax.f32 %v378, 0.0
  %v395 = vmax.f32 %v379, 0.0
  %v396 = vmax.f32 %v380, 0.0
  %v397 = vmax.f32 %v381, 0.0
  %v398 = vmax.f32 %v382, 0.0
  %v399 = vmax.f32 %v383, 0.0
  %v400 = vmax.f32 %v384, 0.0
  %v401 = vpack.c.bf16 %v386, %v385
  %v402 = vpack.c.bf16 %v388, %v387
  %v403 = vpack.c.bf16 %v390, %v389
  %v404 = vpack.c.bf16 %v392, %v391
  %v405 = vpack.c.bf16 %v394, %v393
  %v406 = vpack.c.bf16 %v396, %v395
  %v407 = vpack.c.bf16 %v398, %v397
  %v408 = vpack.c.bf16 %v400, %v399
  %v417 = vunpack.c.l.b16 %v401
  %v418 = vunpack.c.h.b16 %v401
  %v419 = vunpack.c.l.b16 %v402
  %v420 = vunpack.c.h.b16 %v402
  %v421 = vunpack.c.l.b16 %v403
  %v422 = vunpack.c.h.b16 %v403
  %v423 = vunpack.c.l.b16 %v404
  %v424 = vunpack.c.h.b16 %v404
  %v425 = vunpack.c.l.b16 %v405
  %v426 = vunpack.c.h.b16 %v405
  %v427 = vunpack.c.l.b16 %v406
  %v428 = vunpack.c.h.b16 %v406
  %v429 = vunpack.c.l.b16 %v407
  %v430 = vunpack.c.h.b16 %v407
  %v431 = vunpack.c.l.b16 %v408
  %v432 = vunpack.c.h.b16 %v408
  %v433 = vpack.c.b16 %v417, %v417
  %v434 = vpack.c.b16 %v418, %v418
  %v435 = vpack.c.b16 %v419, %v419
  %v436 = vpack.c.b16 %v420, %v420
  %v437 = vpack.c.b16 %v421, %v421
  %v438 = vpack.c.b16 %v422, %v422
  %v439 = vpack.c.b16 %v423, %v423
  %v440 = vpack.c.b16 %v424, %v424
  %v441 = vpack.c.b16 %v425, %v425
  %v442 = vpack.c.b16 %v426, %v426
  %v443 = vpack.c.b16 %v427, %v427
  %v444 = vpack.c.b16 %v428, %v428
  %v445 = vpack.c.b16 %v429, %v429
  %v446 = vpack.c.b16 %v430, %v430
  %v447 = vpack.c.b16 %v431, %v431
  %v448 = vpack.c.b16 %v432, %v432
  %465 = vst [vmem:[%s4] sm:$0xf] %v433
  %466 = vst [vmem:[%s4 + $0x4] sm:$0xf] %v434
  %467 = vst [vmem:[%s4 + $0x8] sm:$0xf] %v435
  %468 = vst [vmem:[%s4 + $0xc] sm:$0xf] %v436
  %469 = vst [vmem:[%s4 + $0x10] sm:$0xf] %v437
  %470 = vst [vmem:[%s4 + $0x14] sm:$0xf] %v438
  %471 = vst [vmem:[%s4 + $0x18] sm:$0xf] %v439
  %472 = vst [vmem:[%s4 + $0x1c] sm:$0xf] %v440
  %473 = vst [vmem:[%s4 + $0x20] sm:$0xf] %v441
  %474 = vst [vmem:[%s4 + $0x24] sm:$0xf] %v442
  %475 = vst [vmem:[%s4 + $0x28] sm:$0xf] %v443
  %476 = vst [vmem:[%s4 + $0x2c] sm:$0xf] %v444
  %477 = vst [vmem:[%s4 + $0x30] sm:$0xf] %v445
  %478 = vst [vmem:[%s4 + $0x34] sm:$0xf] %v446
  %479 = vst [vmem:[%s4 + $0x38] sm:$0xf] %v447
  %480 = vst [vmem:[%s4 + $0x3c] sm:$0xf] %v448
  // Predicated region
  $region18: #{network_forward.9} parent=0 // pred_check
    _
  $region19: #{network_forward.9} parent=0 // pred_check_branch
    %482 = sbr.rel (0) target = $region21
  $region20: #{network_forward.9} parent=0 // pred_region
    _
  $region21: #{network_forward.9} parent=0 // pred_fallthru
    _
  // Predicated region
  $region22: #{network_forward.9} parent=0 // pred_check
    _
  $region23: #{network_forward.9} parent=0 // pred_check_branch
    %484 = sbr.rel (0) target = $region25
  $region24: #{network_forward.9} parent=0 // pred_region
    _
  $region25: #{network_forward.9} parent=0 // pred_fallthru
    _

// kernel: network_forward.10
$region0: #{network_forward.10}
  #allocation0 [shape = 'u32[]', space=smem, size = 0x4, offset = 0x4, fixed_abs, tag = 'smem constant byte address 0x4 - core index']
  #allocation1 [shape = 'u32[144,128]{1,0:T(1,128)}', space=vmem, size = 0x12000, scoped, tag = 'internal scratch']
  %s0 = inlined_call_operand.vmem [shape: bf16[2,10,10,128], index: 0, kind: input, shape index: {}]
  %s1 = inlined_call_operand.vmem [shape: bf16[9,128,128], index: 1, kind: input, shape index: {}]
  %s2 = inlined_call_operand.vmem [shape: f32[1,128], index: 2, kind: input, shape index: {}]
  %s3 = inlined_call_operand.vmem [shape: f32[1,128], index: 3, kind: input, shape index: {}]
  %s4 = inlined_call_operand.vmem [shape: bf16[128,128], index: 4, kind: input, shape index: {}]
  %s5 = inlined_call_operand.vmem [shape: bf16[128,128], index: 5, kind: output, shape index: {}]
  %s6 = sld [smem:[#allocation0]]
  $region53: #{network_forward.10} parent=0
    _
  %s8 = ssub.s32 1, %s6
  %s9 = scalar_select 0, %s8, %s6
  loop: start=0, step=1, limit=4
  $region2: #{network_forward.10} parent=0 // loop_pre_header
    _
  $region3: #{network_forward.10} parent=0 // loop_header
    %s11 = sphi 0, %s15
    %p12 = scmp.ge.s32.totalorder %s11, 4
    %s21 = sphi 0, %s23
    %s24 = sphi 0, %s21
    %s25 = sphi 0, %s24
    %s41 = sphi 0, %s25
    %s45 = sphi 0, %s45
    %s47 = sphi 0, %s45
    %s48 = sphi 0, %s47
    %s62 = sphi 0, %s48
    %s66 = sphi 0, %s66
    %s68 = sphi 0, %s66
    %s69 = sphi 0, %s68
    %s83 = sphi 0, %s69
    %s87 = sphi 0, %s87
    %s89 = sphi 0, %s87
    %s90 = sphi 0, %s89
    %s104 = sphi 0, %s90
    %s110 = sphi 0, %s112
    %s113 = sphi 0, %s110
    %s114 = sphi 0, %s113
    %s130 = sphi 0, %s114
    %s136 = sphi 0, %s138
    %s139 = sphi 0, %s136
    %s140 = sphi 0, %s139
    %s156 = sphi 0, %s140
  $region4: #{network_forward.10} parent=0 // loop_header_branch
    %14 = sbr.rel (%p12) target = $region8
  $region5: #{network_forward.10} parent=0 // loop_body
    %s16 = ssub.s32 %s11, 1
    %s17 = ssub.s32 %s11, 2
    %s18 = sadd.s32 %s11, 1
    %s19 = ssub.s32 %s11, %s18
    %p20 = scmp.eq.s32.totalorder %s19, 0
    %s22 = sadd.s32 %s21, 1
    %s23 = scalar_select %p20, %s21, %s22
    %p26 = pneg %p20
    %p27 = scmp.eq.s32.totalorder %s11, 1
    %p28 = por %p26, %p27
    %p29 = scmp.ne.s32.totalorder %s21, %s24
    %p30 = scmp.eq.s32.totalorder %s11, 0
    %p31 = por %p29, %p30
    %p32 = scmp.ne.s32.totalorder %s21, %s24
    %p33 = scmp.eq.s32.totalorder %s16, 1
    %p34 = por %p32, %p33
    %p35 = scmp.ne.s32.totalorder %s24, %s25
    %p36 = scmp.eq.s32.totalorder %s16, 0
    %p37 = por %p35, %p36
    %p38 = scmp.ne.s32.totalorder %s24, %s25
    %p39 = scmp.eq.s32.totalorder %s17, 1
    %p40 = por %p38, %p39
    %p42 = scmp.ne.s32.totalorder %s25, %s41
    %p43 = scmp.eq.s32.totalorder %s17, 0
    %p44 = por %p42, %p43
    %s46 = sadd.s32 %s45, 1
    %p49 = scmp.eq.s32.totalorder %s11, 1
    %p50 = scmp.ne.s32.totalorder %s45, %s47
    %p51 = scmp.eq.s32.totalorder %s11, 0
    %p52 = por %p50, %p51
    %p53 = scmp.ne.s32.totalorder %s45, %s47
    %p54 = scmp.eq.s32.totalorder %s16, 1
    %p55 = por %p53, %p54
    %p56 = scmp.ne.s32.totalorder %s47, %s48
    %p57 = scmp.eq.s32.totalorder %s16, 0
    %p58 = por %p56, %p57
    %p59 = scmp.ne.s32.totalorder %s47, %s48
    %p60 = scmp.eq.s32.totalorder %s17, 1
    %p61 = por %p59, %p60
    %p63 = scmp.ne.s32.totalorder %s48, %s62
    %p64 = scmp.eq.s32.totalorder %s17, 0
    %p65 = por %p63, %p64
    %s67 = sadd.s32 %s66, 1
    %p70 = scmp.eq.s32.totalorder %s11, 1
    %p71 = scmp.ne.s32.totalorder %s66, %s68
    %p72 = scmp.eq.s32.totalorder %s11, 0
    %p73 = por %p71, %p72
    %p74 = scmp.ne.s32.totalorder %s66, %s68
    %p75 = scmp.eq.s32.totalorder %s16, 1
    %p76 = por %p74, %p75
    %p77 = scmp.ne.s32.totalorder %s68, %s69
    %p78 = scmp.eq.s32.totalorder %s16, 0
    %p79 = por %p77, %p78
    %p80 = scmp.ne.s32.totalorder %s68, %s69
    %p81 = scmp.eq.s32.totalorder %s17, 1
    %p82 = por %p80, %p81
    %p84 = scmp.ne.s32.totalorder %s69, %s83
    %p85 = scmp.eq.s32.totalorder %s17, 0
    %p86 = por %p84, %p85
    %s88 = sadd.s32 %s87, 1
    %p91 = scmp.eq.s32.totalorder %s11, 1
    %p92 = scmp.ne.s32.totalorder %s87, %s89
    %p93 = scmp.eq.s32.totalorder %s11, 0
    %p94 = por %p92, %p93
    %p95 = scmp.ne.s32.totalorder %s87, %s89
    %p96 = scmp.eq.s32.totalorder %s16, 1
    %p97 = por %p95, %p96
    %p98 = scmp.ne.s32.totalorder %s89, %s90
    %p99 = scmp.eq.s32.totalorder %s16, 0
    %p100 = por %p98, %p99
    %p101 = scmp.ne.s32.totalorder %s89, %s90
    %p102 = scmp.eq.s32.totalorder %s17, 1
    %p103 = por %p101, %p102
    %p105 = scmp.ne.s32.totalorder %s90, %s104
    %p106 = scmp.eq.s32.totalorder %s17, 0
    %p107 = por %p105, %p106
    %s108 = ssub.s32 %s11, %s18
    %p109 = scmp.eq.s32.totalorder %s108, 0
    %s111 = sadd.s32 %s110, 1
    %s112 = scalar_select %p109, %s110, %s111
    %p115 = pneg %p109
    %p116 = scmp.eq.s32.totalorder %s11, 1
    %p117 = por %p115, %p116
    %p118 = scmp.ne.s32.totalorder %s110, %s113
    %p119 = scmp.eq.s32.totalorder %s11, 0
    %p120 = por %p118, %p119
    %p121 = scmp.ne.s32.totalorder %s110, %s113
    %p122 = scmp.eq.s32.totalorder %s16, 1
    %p123 = por %p121, %p122
    %p124 = scmp.ne.s32.totalorder %s113, %s114
    %p125 = scmp.eq.s32.totalorder %s16, 0
    %p126 = por %p124, %p125
    %p127 = scmp.ne.s32.totalorder %s113, %s114
    %p128 = scmp.eq.s32.totalorder %s17, 1
    %p129 = por %p127, %p128
    %p131 = scmp.ne.s32.totalorder %s114, %s130
    %p132 = scmp.eq.s32.totalorder %s17, 0
    %p133 = por %p131, %p132
    %s134 = ssub.s32 %s11, %s18
    %p135 = scmp.eq.s32.totalorder %s134, 0
    %s137 = sadd.s32 %s136, 1
    %s138 = scalar_select %p135, %s136, %s137
    %p141 = pneg %p135
    %p142 = scmp.eq.s32.totalorder %s11, 1
    %p143 = por %p141, %p142
    %p144 = scmp.ne.s32.totalorder %s136, %s139
    %p145 = scmp.eq.s32.totalorder %s11, 0
    %p146 = por %p144, %p145
    %p147 = scmp.ne.s32.totalorder %s136, %s139
    %p148 = scmp.eq.s32.totalorder %s16, 1
    %p149 = por %p147, %p148
    %p150 = scmp.ne.s32.totalorder %s139, %s140
    %p151 = scmp.eq.s32.totalorder %s16, 0
    %p152 = por %p150, %p151
    %p153 = scmp.ne.s32.totalorder %s139, %s140
    %p154 = scmp.eq.s32.totalorder %s17, 1
    %p155 = por %p153, %p154
    %p157 = scmp.ne.s32.totalorder %s140, %s156
    %p158 = scmp.eq.s32.totalorder %s17, 0
    %p159 = por %p157, %p158
    %p160 = scmp.le.s32.totalorder 1, %s11
    %p161 = scmp.lt.s32.totalorder %s11, 3
    %p162 = pnand %p160, %p161
    %p163 = pneg %p162
    // Predicated region
    $region9: #{network_forward.10} parent=5 // pred_check
      _
    $region10: #{network_forward.10} parent=5 // pred_check_branch
      %165 = sbr.rel (%p162) target = $region12
    $region11: #{network_forward.10} parent=5 // pred_region
      %s166 = ssub.s32 %s11, 1
      // Predicated region
      $region13: #{network_forward.10} parent=11 // pred_check
        %p167 = pneg %p58
      $region14: #{network_forward.10} parent=11 // pred_check_branch
        %169 = sbr.rel (%p167) target = $region16
      $region15: #{network_forward.10} parent=11 // pred_region
        _
      $region16: #{network_forward.10} parent=11 // pred_fallthru
        _
      // Predicated region
      $region17: #{network_forward.10} parent=11 // pred_check
        %p170 = pneg %p79
      $region18: #{network_forward.10} parent=11 // pred_check_branch
        %172 = sbr.rel (%p170) target = $region20
      $region19: #{network_forward.10} parent=11 // pred_region
        _
      $region20: #{network_forward.10} parent=11 // pred_fallthru
        _
      // Predicated region
      $region21: #{network_forward.10} parent=11 // pred_check
        %p173 = pneg %p100
      $region22: #{network_forward.10} parent=11 // pred_check_branch
        %175 = sbr.rel (%p173) target = $region24
      $region23: #{network_forward.10} parent=11 // pred_region
        _
      $region24: #{network_forward.10} parent=11 // pred_fallthru
        _
    $region12: #{network_forward.10} parent=5 // pred_fallthru
      _
    %p176 = scmp.lt.s32.totalorder %s11, 2
    // Predicated region
    $region25: #{network_forward.10} parent=5 // pred_check
      %p177 = pneg %p176
    $region26: #{network_forward.10} parent=5 // pred_check_branch
      %179 = sbr.rel (%p177) target = $region28
    $region27: #{network_forward.10} parent=5 // pred_region
      // Predicated region
      $region29: #{network_forward.10} parent=27 // pred_check
        %p180 = pneg %p31
      $region30: #{network_forward.10} parent=27 // pred_check_branch
        %182 = sbr.rel (%p180) target = $region32
      $region31: #{network_forward.10} parent=27 // pred_region
        %p183 = scmp.lt.s32.totalorder %s11, 1
        %s184 = scalar_select %p183, %s11, 1
        %s185 = smul.addr %s184, 20
        %s186 = smul.addr %s185, 4
        %s187 = scalar_lea.vmem %s0, %s186
      $region32: #{network_forward.10} parent=27 // pred_fallthru
        _
      // Predicated region
      $region33: #{network_forward.10} parent=27 // pred_check
        %p188 = pneg %p120
      $region34: #{network_forward.10} parent=27 // pred_check_branch
        %190 = sbr.rel (%p188) target = $region36
      $region35: #{network_forward.10} parent=27 // pred_region
        %s191 = smul.u32 8, %s11
        %p192 = scmp.lt.s32.totalorder %s191, 15
        %s193 = scalar_select %p192, %s191, 15
        %s194 = smul.addr %s193, 4
        %s195 = scalar_lea.vmem %s4, %s194
        %s196 = smul.u32 8, %s11
      $region36: #{network_forward.10} parent=27 // pred_fallthru
        _
    $region28: #{network_forward.10} parent=5 // pred_fallthru
      _
    %p197 = scmp.le.s32.totalorder 1, %s11
    %p198 = scmp.lt.s32.totalorder %s11, 3
    %p199 = pnand %p197, %p198
    %p200 = pneg %p199
    // Predicated region
    $region37: #{network_forward.10} parent=5 // pred_check
      _
    $region38: #{network_forward.10} parent=5 // pred_check_branch
      %202 = sbr.rel (%p199) target = $region40
    $region39: #{network_forward.10} parent=5 // pred_region
      %s203 = ssub.s32 %s11, 1
      %p204 = scmp.lt.s32.totalorder %s16, 1
      %s205 = scalar_select %p204, %s16, 1
      %s206 = smul.addr %s205, 20
      %s207 = smul.addr %s206, 4
      %s208 = scalar_lea.vmem %s0, %s207
      %p209 = pneg %p37
      %p210 = pneg %p34
      %p211 = pneg %p58
      %p212 = pneg %p55
      %p213 = pneg %p79
      %p214 = pneg %p76
      %p215 = pneg %p100
      %p216 = pneg %p97
      %s217 = smul.u32 8, %s16
      %p218 = scmp.lt.s32.totalorder %s217, 15
      %s219 = scalar_select %p218, %s217, 15
      %s220 = smul.addr %s219, 4
      %s221 = scalar_lea.vmem %s4, %s220
      %p222 = pneg %p126
      %p223 = pneg %p123
      %p224 = pneg %p152
      %p225 = pneg %p149
      %s226 = smul.u32 8, %s16
      %p227 = scmp.lt.s32.totalorder %s226, 15
      %s228 = scalar_select %p227, %s226, 15
      %s229 = smul.addr %s228, 4
      %s230 = scalar_lea.vmem %s5, %s229
      %p231 = scmp.lt.s32.totalorder %s16, 1
      %s232 = scalar_select %p231, %s16, 1
      %s233 = smul.addr %s232, 20
      %s234 = smul.addr %s233, 4
      %s235 = scalar_lea.vmem %s0, %s234
      %s236 = smul.u32 8, %s16
      %p237 = scmp.lt.s32.totalorder %s236, 15
      %s238 = scalar_select %p237, %s236, 15
      %s239 = smul.addr %s238, 4
      %s240 = scalar_lea.vmem %s4, %s239
      %s241 = smul.u32 8, %s16
      %s242 = smul.u32 8, %s16
      %p243 = scmp.lt.s32.totalorder %s242, 15
      %s244 = scalar_select %p243, %s242, 15
      %s245 = smul.addr %s244, 4
      %s246 = scalar_lea.vmem %s5, %s245
      %s247 = smul.u32 8, %s16
      %v249 = vld [vmem:[%s235] sm:$0xf]
      %v250 = vld [vmem:[%s235 + $0x8] sm:$0xf]
      %v251 = vld [vmem:[%s235 + $0x10] sm:$0xf]
      %v252 = vld [vmem:[%s235 + $0x18] sm:$0xf]
      %v253 = vld [vmem:[%s235 + $0x20] sm:$0xf]
      %v254 = vld [vmem:[%s235 + $0x28] sm:$0xf]
      %v255 = vld [vmem:[%s235 + $0x30] sm:$0xf]
      %v256 = vld [vmem:[%s235 + $0x38] sm:$0xf]
      %v257 = vld [vmem:[%s1] sm:$0xf]
      %v258 = vld [vmem:[%s1 + $0x4] sm:$0xf]
      %v259 = vld [vmem:[%s1 + $0x8] sm:$0xf]
      %v260 = vld [vmem:[%s1 + $0xc] sm:$0xf]
      %v261 = vld [vmem:[%s1 + $0x10] sm:$0xf]
      %v262 = vld [vmem:[%s1 + $0x14] sm:$0xf]
      %v263 = vld [vmem:[%s1 + $0x18] sm:$0xf]
      %v264 = vld [vmem:[%s1 + $0x1c] sm:$0xf]
      %v265 = vld [vmem:[%s1 + $0x20] sm:$0xf]
      %v266 = vld [vmem:[%s1 + $0x24] sm:$0xf]
      %v267 = vld [vmem:[%s1 + $0x28] sm:$0xf]
      %v268 = vld [vmem:[%s1 + $0x2c] sm:$0xf]
      %v269 = vld [vmem:[%s1 + $0x30] sm:$0xf]
      %v270 = vld [vmem:[%s1 + $0x34] sm:$0xf]
      %v271 = vld [vmem:[%s1 + $0x38] sm:$0xf]
      %v272 = vld [vmem:[%s1 + $0x3c] sm:$0xf]
      %v273 = vld [vmem:[%s235 + $0x4] sm:$0x1]
      %v274 = vld [vmem:[%s235 + $0xc] sm:$0x1]
      %v275 = vld [vmem:[%s235 + $0x14] sm:$0x1]
      %v276 = vld [vmem:[%s235 + $0x1c] sm:$0x1]
      %v277 = vld [vmem:[%s235 + $0x24] sm:$0x1]
      %v278 = vld [vmem:[%s235 + $0x2c] sm:$0x1]
      %v279 = vld [vmem:[%s235 + $0x34] sm:$0x1]
      %v280 = vld [vmem:[%s235 + $0x3c] sm:$0x1]
      %vm281 = vsmask.f32 3328
      %vm282 = vsmask.f32 7440
      %vm283 = vmor %vm281, %vm282
      %v285 = vshrl.u32 %v249, 16
      %v287 = vrot.slane %v285, 4
      %v288 = vshll.u32 %v249, 16
      %v290 = vrot.slane %v288, 5
      %v291 = vor.u32 %v287, %v290
      %v292 = vrot.slane %v291, 4
      %v294 = vshll.u32 %v273, 16
      %v296 = vrot.slane %v294, 5
      %v297 = vsel %vm283, %v292, %v296
      %v299 = vshrl.u32 %v250, 16
      %v301 = vrot.slane %v299, 4
      %v302 = vshll.u32 %v250, 16
      %v304 = vrot.slane %v302, 5
      %v305 = vor.u32 %v301, %v304
      %v306 = vrot.slane %v305, 4
      %v308 = vshll.u32 %v274, 16
      %v310 = vrot.slane %v308, 5
      %v311 = vsel %vm283, %v306, %v310
      %v313 = vshrl.u32 %v251, 16
      %v315 = vrot.slane %v313, 4
      %v316 = vshll.u32 %v251, 16
      %v318 = vrot.slane %v316, 5
      %v319 = vor.u32 %v315, %v318
      %v320 = vrot.slane %v319, 4
      %v322 = vshll.u32 %v275, 16
      %v324 = vrot.slane %v322, 5
      %v325 = vsel %vm283, %v320, %v324
      %v327 = vshrl.u32 %v252, 16
      %v329 = vrot.slane %v327, 4
      %v330 = vshll.u32 %v252, 16
      %v332 = vrot.slane %v330, 5
      %v333 = vor.u32 %v329, %v332
      %v334 = vrot.slane %v333, 4
      %v336 = vshll.u32 %v276, 16
      %v338 = vrot.slane %v336, 5
      %v339 = vsel %vm283, %v334, %v338
      %v341 = vshrl.u32 %v253, 16
      %v343 = vrot.slane %v341, 4
      %v344 = vshll.u32 %v253, 16
      %v346 = vrot.slane %v344, 5
      %v347 = vor.u32 %v343, %v346
      %v348 = vrot.slane %v347, 4
      %v350 = vshll.u32 %v277, 16
      %v352 = vrot.slane %v350, 5
      %v353 = vsel %vm283, %v348, %v352
      %v355 = vshrl.u32 %v254, 16
      %v357 = vrot.slane %v355, 4
      %v358 = vshll.u32 %v254, 16
      %v360 = vrot.slane %v358, 5
      %v361 = vor.u32 %v357, %v360
      %v362 = vrot.slane %v361, 4
      %v364 = vshll.u32 %v278, 16
      %v366 = vrot.slane %v364, 5
      %v367 = vsel %vm283, %v362, %v366
      %v369 = vshrl.u32 %v255, 16
      %v371 = vrot.slane %v369, 4
      %v372 = vshll.u32 %v255, 16
      %v374 = vrot.slane %v372, 5
      %v375 = vor.u32 %v371, %v374
      %v376 = vrot.slane %v375, 4
      %v378 = vshll.u32 %v279, 16
      %v380 = vrot.slane %v378, 5
      %v381 = vsel %vm283, %v376, %v380
      %v383 = vshrl.u32 %v256, 16
      %v385 = vrot.slane %v383, 4
      %v386 = vshll.u32 %v256, 16
      %v388 = vrot.slane %v386, 5
      %v389 = vor.u32 %v385, %v388
      %v390 = vrot.slane %v389, 4
      %v392 = vshll.u32 %v280, 16
      %v394 = vrot.slane %v392, 5
      %v395 = vsel %vm283, %v390, %v394
      %s396 = scalar_lea.vmem %s1, 64
      %v397 = vld [vmem:[%s396] sm:$0xf]
      %v398 = vld [vmem:[%s396 + $0x4] sm:$0xf]
      %v399 = vld [vmem:[%s396 + $0x8] sm:$0xf]
      %v400 = vld [vmem:[%s396 + $0xc] sm:$0xf]
      %v401 = vld [vmem:[%s396 + $0x10] sm:$0xf]
      %v402 = vld [vmem:[%s396 + $0x14] sm:$0xf]
      %v403 = vld [vmem:[%s396 + $0x18] sm:$0xf]
      %v404 = vld [vmem:[%s396 + $0x1c] sm:$0xf]
      %v405 = vld [vmem:[%s396 + $0x20] sm:$0xf]
      %v406 = vld [vmem:[%s396 + $0x24] sm:$0xf]
      %v407 = vld [vmem:[%s396 + $0x28] sm:$0xf]
      %v408 = vld [vmem:[%s396 + $0x2c] sm:$0xf]
      %v409 = vld [vmem:[%s396 + $0x30] sm:$0xf]
      %v410 = vld [vmem:[%s396 + $0x34] sm:$0xf]
      %v411 = vld [vmem:[%s396 + $0x38] sm:$0xf]
      %v412 = vld [vmem:[%s396 + $0x3c] sm:$0xf]
      %v413 = vunpack.c.l.b16 %v297
      %v414 = vunpack.c.l.b16 %v311
      %v415 = vunpack.c.l.b16 %v325
      %v416 = vunpack.c.l.b16 %v339
      %v417 = vunpack.c.l.b16 %v353
      %v418 = vunpack.c.l.b16 %v367
      %v419 = vunpack.c.l.b16 %v381
      %v420 = vunpack.c.l.b16 %v395
      %v421 = vpack.c.b16 %v414, %v413
      %v422 = vpack.c.b16 %v416, %v415
      %v423 = vpack.c.b16 %v418, %v417
      %v424 = vpack.c.b16 %v420, %v419
      %v445 = vunpack.c.l.b16 %v397
      %v446 = vunpack.c.l.b16 %v398
      %v447 = vunpack.c.l.b16 %v399
      %v448 = vunpack.c.l.b16 %v400
      %v449 = vunpack.c.l.b16 %v401
      %v450 = vunpack.c.l.b16 %v402
      %v451 = vunpack.c.l.b16 %v403
      %v452 = vunpack.c.l.b16 %v404
      %v453 = vunpack.c.l.b16 %v405
      %v454 = vunpack.c.l.b16 %v406
      %v455 = vunpack.c.l.b16 %v407
      %v456 = vunpack.c.l.b16 %v408
      %v457 = vunpack.c.l.b16 %v409
      %v458 = vunpack.c.l.b16 %v410
      %v459 = vunpack.c.l.b16 %v411
      %v460 = vunpack.c.l.b16 %v412
      %v461 = vpack.c.b16 %v446, %v445
      %v462 = vpack.c.b16 %v448, %v447
      %v463 = vpack.c.b16 %v450, %v449
      %v464 = vpack.c.b16 %v452, %v451
      %v465 = vpack.c.b16 %v454, %v453
      %v466 = vpack.c.b16 %v456, %v455
      %v467 = vpack.c.b16 %v458, %v457
      %v468 = vpack.c.b16 %v460, %v459
      %477 = vmatprep.subr.bf16.mxu0 0
      %478 = vmatpush1.bf16.msra.mxu0 %v461
      %479 = vmatprep.subr.bf16.mxu0 0
      %480 = vmatpush1.bf16.msra.mxu0 %v462
      %481 = vmatprep.subr.bf16.mxu0 0
      %482 = vmatpush1.bf16.msra.mxu0 %v463
      %483 = vmatprep.subr.bf16.mxu0 0
      %484 = vmatpush1.bf16.msra.mxu0 %v464
      %485 = vmatprep.subr.bf16.mxu0 0
      %486 = vmatpush1.bf16.msra.mxu0 %v465
      %487 = vmatprep.subr.bf16.mxu0 0
      %488 = vmatpush1.bf16.msra.mxu0 %v466
      %489 = vmatprep.subr.bf16.mxu0 0
      %490 = vmatpush1.bf16.msra.mxu0 %v467
      %491 = vmatprep.subr.bf16.mxu0 0
      %492 = vmatpush1.bf16.msra.mxu0 %v468
      %493 = vmatprep.subr.bf16.mxu0 0
      %494 = vmatpush1.bf16.msra.mxu0 0
      %495 = vmatprep.subr.bf16.mxu0 0
      %496 = vmatpush1.bf16.msra.mxu0 0
      %497 = vmatprep.subr.bf16.mxu0 0
      %498 = vmatpush1.bf16.msra.mxu0 0
      %499 = vmatprep.subr.bf16.mxu0 0
      %500 = vmatpush1.bf16.msra.mxu0 0
      %501 = vmatprep.subr.bf16.mxu0 0
      %502 = vmatpush1.bf16.msra.mxu0 0
      %503 = vmatprep.subr.bf16.mxu0 0
      %504 = vmatpush1.bf16.msra.mxu0 0
      %505 = vmatprep.subr.bf16.mxu0 0
      %506 = vmatpush1.bf16.msra.mxu0 0
      %507 = vmatprep.subr.bf16.mxu0 0
      %508 = vmatpush1.bf16.msra.mxu0 0
      %509 = vmatprep.mubr.bf16.mxu0 0
      %510 = vmatmul.mubr.bf16.gmra.mrb[0].mxu0 %v421
      %v511 = vpop.f32.mrb[0].mxu0
      %v512 = vadd.f32 0.0, %v511
      %v513 = vpop.f32.mrb[0].mxu0
      %v514 = vpop.f32.mrb[0].mxu0
      %v515 = vadd.f32 0.0, %v514
      %v516 = vpop.f32.mrb[0].mxu0
      %517 = vmatprep.mubr.bf16.mxu0 0
      %518 = vmatmul.mubr.bf16.gmra.mrb[0].mxu0 %v422
      %v519 = vpop.f32.mrb[0].mxu0
      %v520 = vadd.f32 0.0, %v519
      %v521 = vpop.f32.mrb[0].mxu0
      %v522 = vpop.f32.mrb[0].mxu0
      %v523 = vadd.f32 0.0, %v522
      %v524 = vpop.f32.mrb[0].mxu0
      %525 = vmatprep.mubr.bf16.mxu0 0
      %526 = vmatmul.mubr.bf16.gmra.mrb[0].mxu0 %v423
      %v527 = vpop.f32.mrb[0].mxu0
      %v528 = vadd.f32 0.0, %v527
      %v529 = vpop.f32.mrb[0].mxu0
      %v530 = vpop.f32.mrb[0].mxu0
      %v531 = vadd.f32 0.0, %v530
      %v532 = vpop.f32.mrb[0].mxu0
      %533 = vmatprep.mubr.bf16.mxu0 0
      %534 = vmatmul.mubr.bf16.gmra.mrb[0].mxu0 %v424
      %v535 = vpop.f32.mrb[0].mxu0
      %v536 = vadd.f32 0.0, %v535
      %v537 = vpop.f32.mrb[0].mxu0
      %v538 = vpop.f32.mrb[0].mxu0
      %v539 = vadd.f32 0.0, %v538
      %v540 = vpop.f32.mrb[0].mxu0
      %541 = vdwg.mxu0
      %v550 = vunpack.c.l.b16 %v249
      %v551 = vunpack.c.l.b16 %v250
      %v552 = vunpack.c.l.b16 %v251
      %v553 = vunpack.c.l.b16 %v252
      %v554 = vunpack.c.l.b16 %v253
      %v555 = vunpack.c.l.b16 %v254
      %v556 = vunpack.c.l.b16 %v255
      %v557 = vunpack.c.l.b16 %v256
      %v558 = vpack.c.b16 %v551, %v550
      %v559 = vpack.c.b16 %v553, %v552
      %v560 = vpack.c.b16 %v555, %v554
      %v561 = vpack.c.b16 %v557, %v556
      %v582 = vunpack.c.l.b16 %v257
      %v583 = vunpack.c.l.b16 %v258
      %v584 = vunpack.c.l.b16 %v259
      %v585 = vunpack.c.l.b16 %v260
      %v586 = vunpack.c.l.b16 %v261
      %v587 = vunpack.c.l.b16 %v262
      %v588 = vunpack.c.l.b16 %v263
      %v589 = vunpack.c.l.b16 %v264
      %v590 = vunpack.c.l.b16 %v265
      %v591 = vunpack.c.l.b16 %v266
      %v592 = vunpack.c.l.b16 %v267
      %v593 = vunpack.c.l.b16 %v268
      %v594 = vunpack.c.l.b16 %v269
      %v595 = vunpack.c.l.b16 %v270
      %v596 = vunpack.c.l.b16 %v271
      %v597 = vunpack.c.l.b16 %v272
      %v598 = vpack.c.b16 %v583, %v582
      %v599 = vpack.c.b16 %v585, %v584
      %v600 = vpack.c.b16 %v587, %v586
      %v601 = vpack.c.b16 %v589, %v588
      %v602 = vpack.c.b16 %v591, %v590
      %v603 = vpack.c.b16 %v593, %v592
      %v604 = vpack.c.b16 %v595, %v594
      %v605 = vpack.c.b16 %v597, %v596
      %614 = vmatprep.subr.bf16.mxu0 0
      %615 = vmatpush1.bf16.msra.mxu0 %v598
      %616 = vmatprep.subr.bf16.mxu0 0
      %617 = vmatpush1.bf16.msra.mxu0 %v599
      %618 = vmatprep.subr.bf16.mxu0 0
      %619 = vmatpush1.bf16.msra.mxu0 %v600
      %620 = vmatprep.subr.bf16.mxu0 0
      %621 = vmatpush1.bf16.msra.mxu0 %v601
      %622 = vmatprep.subr.bf16.mxu0 0
      %623 = vmatpush1.bf16.msra.mxu0 %v602
      %624 = vmatprep.subr.bf16.mxu0 0
      %625 = vmatpush1.bf16.msra.mxu0 %v603
      %626 = vmatprep.subr.bf16.mxu0 0
      %627 = vmatpush1.bf16.msra.mxu0 %v604
      %628 = vmatprep.subr.bf16.mxu0 0
      %629 = vmatpush1.bf16.msra.mxu0 %v605
      %630 = vmatprep.subr.bf16.mxu0 0
      %631 = vmatpush1.bf16.msra.mxu0 0
      %632 = vmatprep.subr.bf16.mxu0 0
      %633 = vmatpush1.bf16.msra.mxu0 0
      %634 = vmatprep.subr.bf16.mxu0 0
      %635 = vmatpush1.bf16.msra.mxu0 0
      %636 = vmatprep.subr.bf16.mxu0 0
      %637 = vmatpush1.bf16.msra.mxu0 0
      %638 = vmatprep.subr.bf16.mxu0 0
      %639 = vmatpush1.bf16.msra.mxu0 0
      %640 = vmatprep.subr.bf16.mxu0 0
      %641 = vmatpush1.bf16.msra.mxu0 0
      %642 = vmatprep.subr.bf16.mxu0 0
      %643 = vmatpush1.bf16.msra.mxu0 0
      %644 = vmatprep.subr.bf16.mxu0 0
      %645 = vmatpush1.bf16.msra.mxu0 0
      %646 = vmatprep.mubr.bf16.mxu0 0
      %647 = vmatmul.mubr.bf16.gmra.mrb[0].mxu0 %v558
      %v648 = vpop.f32.mrb[0].mxu0
      %v649 = vadd.f32 %v512, %v648
      %v650 = vpop.f32.mrb[0].mxu0
      %v651 = vpop.f32.mrb[0].mxu0
      %v652 = vadd.f32 %v515, %v651
      %v653 = vpop.f32.mrb[0].mxu0
      %654 = vmatprep.mubr.bf16.mxu0 0
      %655 = vmatmul.mubr.bf16.gmra.mrb[0].mxu0 %v559
      %v656 = vpop.f32.mrb[0].mxu0
      %v657 = vadd.f32 %v520, %v656
      %v658 = vpop.f32.mrb[0].mxu0
      %v659 = vpop.f32.mrb[0].mxu0
      %v660 = vadd.f32 %v523, %v659
      %v661 = vpop.f32.mrb[0].mxu0
      %662 = vmatprep.mubr.bf16.mxu0 0
      %663 = vmatmul.mubr.bf16.gmra.mrb[0].mxu0 %v560
      %v664 = vpop.f32.mrb[0].mxu0
      %v665 = vadd.f32 %v528, %v664
      %v666 = vpop.f32.mrb[0].mxu0
      %v667 = vpop.f32.mrb[0].mxu0
      %v668 = vadd.f32 %v531, %v667
      %v669 = vpop.f32.mrb[0].mxu0
      %670 = vmatprep.mubr.bf16.mxu0 0
      %671 = vmatmul.mubr.bf16.gmra.mrb[0].mxu0 %v561
      %v672 = vpop.f32.mrb[0].mxu0
      %v673 = vadd.f32 %v536, %v672
      %v674 = vpop.f32.mrb[0].mxu0
      %v675 = vpop.f32.mrb[0].mxu0
      %v676 = vadd.f32 %v539, %v675
      %v677 = vpop.f32.mrb[0].mxu0
      %678 = vdwg.mxu0
      %v679 = vld [vmem:[%s235] sm:$0xe]
      %v680 = vld [vmem:[%s235 + $0x8] sm:$0xe]
      %v681 = vld [vmem:[%s235 + $0x10] sm:$0xe]
      %v682 = vld [vmem:[%s235 + $0x18] sm:$0xe]
      %v683 = vld [vmem:[%s235 + $0x20] sm:$0xe]
      %v684 = vld [vmem:[%s235 + $0x28] sm:$0xe]
      %v685 = vld [vmem:[%s235 + $0x30] sm:$0xe]
      %v686 = vld [vmem:[%s235 + $0x38] sm:$0xe]
      %vm703 = vcmask 1042432
      %vm704 = vcmask 1046532
      %vm705 = vmor %vm703, %vm704
      %v706 = vrot.slane %v679, 5
      %v707 = vrot.slane %v706, 4
      %v708 = vrot.slane %v273, 5
      %v709 = vsel %vm705, %v707, %v708
      %v710 = vrot.slane %v680, 5
      %v711 = vrot.slane %v710, 4
      %v712 = vrot.slane %v274, 5
      %v713 = vsel %vm705, %v711, %v712
      %v714 = vrot.slane %v681, 5
      %v715 = vrot.slane %v714, 4
      %v716 = vrot.slane %v275, 5
      %v717 = vsel %vm705, %v715, %v716
      %v718 = vrot.slane %v682, 5
      %v719 = vrot.slane %v718, 4
      %v720 = vrot.slane %v276, 5
      %v721 = vsel %vm705, %v719, %v720
      %v722 = vrot.slane %v683, 5
      %v723 = vrot.slane %v722, 4
      %v724 = vrot.slane %v277, 5
      %v725 = vsel %vm705, %v723, %v724
      %v726 = vrot.slane %v684, 5
      %v727 = vrot.slane %v726, 4
      %v728 = vrot.slane %v278, 5
      %v729 = vsel %vm705, %v727, %v728
      %v730 = vrot.slane %v685, 5
      %v731 = vrot.slane %v730, 4
      %v732 = vrot.slane %v279, 5
      %v733 = vsel %vm705, %v731, %v732
      %v734 = vrot.slane %v686, 5
      %v735 = vrot.slane %v734, 4
      %v736 = vrot.slane %v280, 5
      %v737 = vsel %vm705, %v735, %v736
      %s738 = scalar_lea.vmem %s1, 128
      %v739 = vld [vmem:[%s738] sm:$0xf]
      %v740 = vld [vmem:[%s738 + $0x4] sm:$0xf]
      %v741 = vld [vmem:[%s738 + $0x8] sm:$0xf]
      %v742 = vld [vmem:[%s738 + $0xc] sm:$0xf]
      %v743 = vld [vmem:[%s738 + $0x10] sm:$0xf]
      %v744 = vld [vmem:[%s738 + $0x14] sm:$0xf]
      %v745 = vld [vmem:[%s738 + $0x18] sm:$0xf]
      %v746 = vld [vmem:[%s738 + $0x1c] sm:$0xf]
      %v747 = vld [vmem:[%s738 + $0x20] sm:$0xf]
      %v748 = vld [vmem:[%s738 + $0x24] sm:$0xf]
      %v749 = vld [vmem:[%s738 + $0x28] sm:$0xf]
      %v750 = vld [vmem:[%s738 + $0x2c] sm:$0xf]
      %v751 = vld [vmem:[%s738 + $0x30] sm:$0xf]
      %v752 = vld [vmem:[%s738 + $0x34] sm:$0xf]
      %v753 = vld [vmem:[%s738 + $0x38] sm:$0xf]
      %v754 = vld [vmem:[%s738 + $0x3c] sm:$0xf]
      %v755 = vunpack.c.l.b16 %v709
      %v756 = vunpack.c.l.b16 %v713
      %v757 = vunpack.c.l.b16 %v717
      %v758 = vunpack.c.l.b16 %v721
      %v759 = vunpack.c.l.b16 %v725
      %v760 = vunpack.c.l.b16 %v729
      %v761 = vunpack.c.l.b16 %v733
      %v762 = vunpack.c.l.b16 %v737
      %v763 = vpack.c.b16 %v756, %v755
      %v764 = vpack.c.b16 %v758, %v757
      %v765 = vpack.c.b16 %v760, %v759
      %v766 = vpack.c.b16 %v762, %v761
      %v787 = vunpack.c.l.b16 %v739
      %v788 = vunpack.c.l.b16 %v740
      %v789 = vunpack.c.l.b16 %v741
      %v790 = vunpack.c.l.b16 %v742
      %v791 = vunpack.c.l.b16 %v743
      %v792 = vunpack.c.l.b16 %v744
      %v793 = vunpack.c.l.b16 %v745
      %v794 = vunpack.c.l.b16 %v746
      %v795 = vunpack.c.l.b16 %v747
      %v796 = vunpack.c.l.b16 %v748
      %v797 = vunpack.c.l.b16 %v749
      %v798 = vunpack.c.l.b16 %v750
      %v799 = vunpack.c.l.b16 %v751
      %v800 = vunpack.c.l.b16 %v752
      %v801 = vunpack.c.l.b16 %v753
      %v802 = vunpack.c.l.b16 %v754
      %v803 = vpack.c.b16 %v788, %v787
      %v804 = vpack.c.b16 %v790, %v789
      %v805 = vpack.c.b16 %v792, %v791
      %v806 = vpack.c.b16 %v794, %v793
      %v807 = vpack.c.b16 %v796, %v795
      %v808 = vpack.c.b16 %v798, %v797
      %v809 = vpack.c.b16 %v800, %v799
      %v810 = vpack.c.b16 %v802, %v801
      %819 = vmatprep.subr.bf16.mxu0 0
      %820 = vmatpush1.bf16.msra.mxu0 %v803
      %821 = vmatprep.subr.bf16.mxu0 0
      %822 = vmatpush1.bf16.msra.mxu0 %v804
      %823 = vmatprep.subr.bf16.mxu0 0
      %824 = vmatpush1.bf16.msra.mxu0 %v805
      %825 = vmatprep.subr.bf16.mxu0 0
      %826 = vmatpush1.bf16.msra.mxu0 %v806
      %827 = vmatprep.subr.bf16.mxu0 0
      %828 = vmatpush1.bf16.msra.mxu0 %v807
      %829 = vmatprep.subr.bf16.mxu0 0
      %830 = vmatpush1.bf16.msra.mxu0 %v808
      %831 = vmatprep.subr.bf16.mxu0 0
      %832 = vmatpush1.bf16.msra.mxu0 %v809
      %833 = vmatprep.subr.bf16.mxu0 0
      %834 = vmatpush1.bf16.msra.mxu0 %v810
      %835 = vmatprep.subr.bf16.mxu0 0
      %836 = vmatpush1.bf16.msra.mxu0 0
      %837 = vmatprep.subr.bf16.mxu0 0
      %838 = vmatpush1.bf16.msra.mxu0 0
      %839 = vmatprep.subr.bf16.mxu0 0
      %840 = vmatpush1.bf16.msra.mxu0 0
      %841 = vmatprep.subr.bf16.mxu0 0
      %842 = vmatpush1.bf16.msra.mxu0 0
      %843 = vmatprep.subr.bf16.mxu0 0
      %844 = vmatpush1.bf16.msra.mxu0 0
      %845 = vmatprep.subr.bf16.mxu0 0
      %846 = vmatpush1.bf16.msra.mxu0 0
      %847 = vmatprep.subr.bf16.mxu0 0
      %848 = vmatpush1.bf16.msra.mxu0 0
      %849 = vmatprep.subr.bf16.mxu0 0
      %850 = vmatpush1.bf16.msra.mxu0 0
      %851 = vmatprep.mubr.bf16.mxu0 0
      %852 = vmatmul.mubr.bf16.gmra.mrb[0].mxu0 %v763
      %v853 = vpop.f32.mrb[0].mxu0
      %v854 = vadd.f32 0.0, %v853
      %v855 = vpop.f32.mrb[0].mxu0
      %v856 = vpop.f32.mrb[0].mxu0
      %v857 = vadd.f32 0.0, %v856
      %v858 = vpop.f32.mrb[0].mxu0
      %859 = vmatprep.mubr.bf16.mxu0 0
      %860 = vmatmul.mubr.bf16.gmra.mrb[0].mxu0 %v764
      %v861 = vpop.f32.mrb[0].mxu0
      %v862 = vadd.f32 0.0, %v861
      %v863 = vpop.f32.mrb[0].mxu0
      %v864 = vpop.f32.mrb[0].mxu0
      %v865 = vadd.f32 0.0, %v864
      %v866 = vpop.f32.mrb[0].mxu0
      %867 = vmatprep.mubr.bf16.mxu0 0
      %868 = vmatmul.mubr.bf16.gmra.mrb[0].mxu0 %v765
      %v869 = vpop.f32.mrb[0].mxu0
      %v870 = vadd.f32 0.0, %v869
      %v871 = vpop.f32.mrb[0].mxu0
      %v872 = vpop.f32.mrb[0].mxu0
      %v873 = vadd.f32 0.0, %v872
      %v874 = vpop.f32.mrb[0].mxu0
      %875 = vmatprep.mubr.bf16.mxu0 0
      %876 = vmatmul.mubr.bf16.gmra.mrb[0].mxu0 %v766
      %v877 = vpop.f32.mrb[0].mxu0
      %v878 = vadd.f32 0.0, %v877
      %v879 = vpop.f32.mrb[0].mxu0
      %v880 = vpop.f32.mrb[0].mxu0
      %v881 = vadd.f32 0.0, %v880
      %v882 = vpop.f32.mrb[0].mxu0
      %883 = vdwg.mxu0
      %v884 = vadd.f32 %v649, %v854
      %v885 = vadd.f32 %v652, %v857
      %v886 = vadd.f32 %v657, %v862
      %v887 = vadd.f32 %v660, %v865
      %v888 = vadd.f32 %v665, %v870
      %v889 = vadd.f32 %v668, %v873
      %v890 = vadd.f32 %v673, %v878
      %v891 = vadd.f32 %v676, %v881
      %s892 = scalar_lea.vmem %s235, 8
      %v893 = vld [vmem:[%s892] sm:$0xf]
      %v894 = vld [vmem:[%s892 + $0x8] sm:$0xf]
      %v895 = vld [vmem:[%s892 + $0x10] sm:$0xf]
      %v896 = vld [vmem:[%s892 + $0x18] sm:$0xf]
      %v897 = vld [vmem:[%s892 + $0x20] sm:$0xf]
      %v898 = vld [vmem:[%s892 + $0x28] sm:$0xf]
      %v899 = vld [vmem:[%s892 + $0x30] sm:$0xf]
      %v900 = vld [vmem:[%s892 + $0x38] sm:$0xf]
      %s901 = scalar_lea.vmem %s1, 192
      %v902 = vld [vmem:[%s901] sm:$0xf]
      %v903 = vld [vmem:[%s901 + $0x4] sm:$0xf]
      %v904 = vld [vmem:[%s901 + $0x8] sm:$0xf]
      %v905 = vld [vmem:[%s901 + $0xc] sm:$0xf]
      %v906 = vld [vmem:[%s901 + $0x10] sm:$0xf]
      %v907 = vld [vmem:[%s901 + $0x14] sm:$0xf]
      %v908 = vld [vmem:[%s901 + $0x18] sm:$0xf]
      %v909 = vld [vmem:[%s901 + $0x1c] sm:$0xf]
      %v910 = vld [vmem:[%s901 + $0x20] sm:$0xf]
      %v911 = vld [vmem:[%s901 + $0x24] sm:$0xf]
      %v912 = vld [vmem:[%s901 + $0x28] sm:$0xf]
      %v913 = vld [vmem:[%s901 + $0x2c] sm:$0xf]
      %v914 = vld [vmem:[%s901 + $0x30] sm:$0xf]
      %v915 = vld [vmem:[%s901 + $0x34] sm:$0xf]
      %v916 = vld [vmem:[%s901 + $0x38] sm:$0xf]
      %v917 = vld [vmem:[%s901 + $0x3c] sm:$0xf]
      %v926 = vunpack.c.l.b16 %v893
      %v927 = vunpack.c.l.b16 %v894
      %v928 = vunpack.c.l.b16 %v895
      %v929 = vunpack.c.l.b16 %v896
      %v930 = vunpack.c.l.b16 %v897
      %v931 = vunpack.c.l.b16 %v898
      %v932 = vunpack.c.l.b16 %v899
      %v933 = vunpack.c.l.b16 %v900
      %v934 = vpack.c.b16 %v927, %v926
      %v935 = vpack.c.b16 %v929, %v928
      %v936 = vpack.c.b16 %v931, %v930
      %v937 = vpack.c.b16 %v933, %v932
      %v958 = vunpack.c.l.b16 %v902
      %v959 = vunpack.c.l.b16 %v903
      %v960 = vunpack.c.l.b16 %v904
      %v961 = vunpack.c.l.b16 %v905
      %v962 = vunpack.c.l.b16 %v906
      %v963 = vunpack.c.l.b16 %v907
      %v964 = vunpack.c.l.b16 %v908
      %v965 = vunpack.c.l.b16 %v909
      %v966 = vunpack.c.l.b16 %v910
      %v967 = vunpack.c.l.b16 %v911
      %v968 = vunpack.c.l.b16 %v912
      %v969 = vunpack.c.l.b16 %v913
      %v970 = vunpack.c.l.b16 %v914
      %v971 = vunpack.c.l.b16 %v915
      %v972 = vunpack.c.l.b16 %v916
      %v973 = vunpack.c.l.b16 %v917
      %v974 = vpack.c.b16 %v959, %v958
      %v975 = vpack.c.b16 %v961, %v960
      %v976 = vpack.c.b16 %v963, %v962
      %v977 = vpack.c.b16 %v965, %v964
      %v978 = vpack.c.b16 %v967, %v966
      %v979 = vpack.c.b16 %v969, %v968
      %v980 = vpack.c.b16 %v971, %v970
      %v981 = vpack.c.b16 %v973, %v972
      %990 = vmatprep.subr.bf16.mxu0 0
      %991 = vmatpush1.bf16.msra.mxu0 %v974
      %992 = vmatprep.subr.bf16.mxu0 0
      %993 = vmatpush1.bf16.msra.mxu0 %v975
      %994 = vmatprep.subr.bf16.mxu0 0
      %995 = vmatpush1.bf16.msra.mxu0 %v976
      %996 = vmatprep.subr.bf16.mxu0 0
      %997 = vmatpush1.bf16.msra.mxu0 %v977
      %998 = vmatprep.subr.bf16.mxu0 0
      %999 = vmatpush1.bf16.msra.mxu0 %v978
      %1000 = vmatprep.subr.bf16.mxu0 0
      %1001 = vmatpush1.bf16.msra.mxu0 %v979
      %1002 = vmatprep.subr.bf16.mxu0 0
      %1003 = vmatpush1.bf16.msra.mxu0 %v980
      %1004 = vmatprep.subr.bf16.mxu0 0
      %1005 = vmatpush1.bf16.msra.mxu0 %v981
      %1006 = vmatprep.subr.bf16.mxu0 0
      %1007 = vmatpush1.bf16.msra.mxu0 0
      %1008 = vmatprep.subr.bf16.mxu0 0
      %1009 = vmatpush1.bf16.msra.mxu0 0
      %1010 = vmatprep.subr.bf16.mxu0 0
      %1011 = vmatpush1.bf16.msra.mxu0 0
      %1012 = vmatprep.subr.bf16.mxu0 0
      %1013 = vmatpush1.bf16.msra.mxu0 0
      %1014 = vmatprep.subr.bf16.mxu0 0
      %1015 = vmatpush1.bf16.msra.mxu0 0
      %1016 = vmatprep.subr.bf16.mxu0 0
      %1017 = vmatpush1.bf16.msra.mxu0 0
      %1018 = vmatprep.subr.bf16.mxu0 0
      %1019 = vmatpush1.bf16.msra.mxu0 0
      %1020 = vmatprep.subr.bf16.mxu0 0
      %1021 = vmatpush1.bf16.msra.mxu0 0
      %1022 = vmatprep.mubr.bf16.mxu0 0
      %1023 = vmatmul.mubr.bf16.gmra.mrb[0].mxu0 %v934
      %v1024 = vpop.f32.mrb[0].mxu0
      %v1025 = vadd.f32 0.0, %v1024
      %v1026 = vpop.f32.mrb[0].mxu0
      %v1027 = vpop.f32.mrb[0].mxu0
      %v1028 = vadd.f32 0.0, %v1027
      %v1029 = vpop.f32.mrb[0].mxu0
      %1030 = vmatprep.mubr.bf16.mxu0 0
      %1031 = vmatmul.mubr.bf16.gmra.mrb[0].mxu0 %v935
      %v1032 = vpop.f32.mrb[0].mxu0
      %v1033 = vadd.f32 0.0, %v1032
      %v1034 = vpop.f32.mrb[0].mxu0
      %v1035 = vpop.f32.mrb[0].mxu0
      %v1036 = vadd.f32 0.0, %v1035
      %v1037 = vpop.f32.mrb[0].mxu0
      %1038 = vmatprep.mubr.bf16.mxu0 0
      %1039 = vmatmul.mubr.bf16.gmra.mrb[0].mxu0 %v936
      %v1040 = vpop.f32.mrb[0].mxu0
      %v1041 = vadd.f32 0.0, %v1040
      %v1042 = vpop.f32.mrb[0].mxu0
      %v1043 = vpop.f32.mrb[0].mxu0
      %v1044 = vadd.f32 0.0, %v1043
      %v1045 = vpop.f32.mrb[0].mxu0
      %1046 = vmatprep.mubr.bf16.mxu0 0
      %1047 = vmatmul.mubr.bf16.gmra.mrb[0].mxu0 %v937
      %v1048 = vpop.f32.mrb[0].mxu0
      %v1049 = vadd.f32 0.0, %v1048
      %v1050 = vpop.f32.mrb[0].mxu0
      %v1051 = vpop.f32.mrb[0].mxu0
      %v1052 = vadd.f32 0.0, %v1051
      %v1053 = vpop.f32.mrb[0].mxu0
      %1054 = vdwg.mxu0
      %v1055 = vadd.f32 %v884, %v1025
      %v1056 = vadd.f32 %v885, %v1028
      %v1057 = vadd.f32 %v886, %v1033
      %v1058 = vadd.f32 %v887, %v1036
      %v1059 = vadd.f32 %v888, %v1041
      %v1060 = vadd.f32 %v889, %v1044
      %v1061 = vadd.f32 %v890, %v1049
      %v1062 = vadd.f32 %v891, %v1052
      %v1063 = vld [vmem:[%s892] sm:$0xf]
      %v1064 = vld [vmem:[%s892 + $0x4] sm:$0x1]
      %v1065 = vld [vmem:[%s892 + $0x8] sm:$0xf]
      %v1066 = vld [vmem:[%s892 + $0xc] sm:$0x1]
      %v1067 = vld [vmem:[%s892 + $0x10] sm:$0xf]
      %v1068 = vld [vmem:[%s892 + $0x14] sm:$0x1]
      %v1069 = vld [vmem:[%s892 + $0x18] sm:$0xf]
      %v1070 = vld [vmem:[%s892 + $0x1c] sm:$0x1]
      %v1071 = vld [vmem:[%s892 + $0x20] sm:$0xf]
      %v1072 = vld [vmem:[%s892 + $0x24] sm:$0x1]
      %v1073 = vld [vmem:[%s892 + $0x28] sm:$0xf]
      %v1074 = vld [vmem:[%s892 + $0x2c] sm:$0x1]
      %v1075 = vld [vmem:[%s892 + $0x30] sm:$0xf]
      %v1076 = vld [vmem:[%s892 + $0x34] sm:$0x1]
      %v1077 = vld [vmem:[%s892 + $0x38] sm:$0xf]
      %v1078 = vld [vmem:[%s892 + $0x3c] sm:$0x1]
      %v1080 = vshrl.u32 %v1063, 16
      %v1082 = vrot.slane %v1080, 4
      %v1083 = vshll.u32 %v1063, 16
      %v1085 = vrot.slane %v1083, 5
      %v1086 = vor.u32 %v1082, %v1085
      %v1087 = vrot.slane %v1086, 4
      %v1089 = vshll.u32 %v1064, 16
      %v1091 = vrot.slane %v1089, 5
      %v1092 = vsel %vm283, %v1087, %v1091
      %v1094 = vshrl.u32 %v1065, 16
      %v1096 = vrot.slane %v1094, 4
      %v1097 = vshll.u32 %v1065, 16
      %v1099 = vrot.slane %v1097, 5
      %v1100 = vor.u32 %v1096, %v1099
      %v1101 = vrot.slane %v1100, 4
      %v1103 = vshll.u32 %v1066, 16
      %v1105 = vrot.slane %v1103, 5
      %v1106 = vsel %vm283, %v1101, %v1105
      %v1108 = vshrl.u32 %v1067, 16
      %v1110 = vrot.slane %v1108, 4
      %v1111 = vshll.u32 %v1067, 16
      %v1113 = vrot.slane %v1111, 5
      %v1114 = vor.u32 %v1110, %v1113
      %v1115 = vrot.slane %v1114, 4
      %v1117 = vshll.u32 %v1068, 16
      %v1119 = vrot.slane %v1117, 5
      %v1120 = vsel %vm283, %v1115, %v1119
      %v1122 = vshrl.u32 %v1069, 16
      %v1124 = vrot.slane %v1122, 4
      %v1125 = vshll.u32 %v1069, 16
      %v1127 = vrot.slane %v1125, 5
      %v1128 = vor.u32 %v1124, %v1127
      %v1129 = vrot.slane %v1128, 4
      %v1131 = vshll.u32 %v1070, 16
      %v1133 = vrot.slane %v1131, 5
      %v1134 = vsel %vm283, %v1129, %v1133
      %v1136 = vshrl.u32 %v1071, 16
      %v1138 = vrot.slane %v1136, 4
      %v1139 = vshll.u32 %v1071, 16
      %v1141 = vrot.slane %v1139, 5
      %v1142 = vor.u32 %v1138, %v1141
      %v1143 = vrot.slane %v1142, 4
      %v1145 = vshll.u32 %v1072, 16
      %v1147 = vrot.slane %v1145, 5
      %v1148 = vsel %vm283, %v1143, %v1147
      %v1150 = vshrl.u32 %v1073, 16
      %v1152 = vrot.slane %v1150, 4
      %v1153 = vshll.u32 %v1073, 16
      %v1155 = vrot.slane %v1153, 5
      %v1156 = vor.u32 %v1152, %v1155
      %v1157 = vrot.slane %v1156, 4
      %v1159 = vshll.u32 %v1074, 16
      %v1161 = vrot.slane %v1159, 5
      %v1162 = vsel %vm283, %v1157, %v1161
      %v1164 = vshrl.u32 %v1075, 16
      %v1166 = vrot.slane %v1164, 4
      %v1167 = vshll.u32 %v1075, 16
      %v1169 = vrot.slane %v1167, 5
      %v1170 = vor.u32 %v1166, %v1169
      %v1171 = vrot.slane %v1170, 4
      %v1173 = vshll.u32 %v1076, 16
      %v1175 = vrot.slane %v1173, 5
      %v1176 = vsel %vm283, %v1171, %v1175
      %v1178 = vshrl.u32 %v1077, 16
      %v1180 = vrot.slane %v1178, 4
      %v1181 = vshll.u32 %v1077, 16
      %v1183 = vrot.slane %v1181, 5
      %v1184 = vor.u32 %v1180, %v1183
      %v1185 = vrot.slane %v1184, 4
      %v1187 = vshll.u32 %v1078, 16
      %v1189 = vrot.slane %v1187, 5
      %v1190 = vsel %vm283, %v1185, %v1189
      %s1191 = scalar_lea.vmem %s1, 256
      %v1192 = vld [vmem:[%s1191] sm:$0xf]
      %v1193 = vld [vmem:[%s1191 + $0x4] sm:$0xf]
      %v1194 = vld [vmem:[%s1191 + $0x8] sm:$0xf]
      %v1195 = vld [vmem:[%s1191 + $0xc] sm:$0xf]
      %v1196 = vld [vmem:[%s1191 + $0x10] sm:$0xf]
      %v1197 = vld [vmem:[%s1191 + $0x14] sm:$0xf]
      %v1198 = vld [vmem:[%s1191 + $0x18] sm:$0xf]
      %v1199 = vld [vmem:[%s1191 + $0x1c] sm:$0xf]
      %v1200 = vld [vmem:[%s1191 + $0x20] sm:$0xf]
      %v1201 = vld [vmem:[%s1191 + $0x24] sm:$0xf]
      %v1202 = vld [vmem:[%s1191 + $0x28] sm:$0xf]
      %v1203 = vld [vmem:[%s1191 + $0x2c] sm:$0xf]
      %v1204 = vld [vmem:[%s1191 + $0x30] sm:$0xf]
      %v1205 = vld [vmem:[%s1191 + $0x34] sm:$0xf]
      %v1206 = vld [vmem:[%s1191 + $0x38] sm:$0xf]
      %v1207 = vld [vmem:[%s1191 + $0x3c] sm:$0xf]
      %v1208 = vunpack.c.l.b16 %v1092
      %v1209 = vunpack.c.l.b16 %v1106
      %v1210 = vunpack.c.l.b16 %v1120
      %v1211 = vunpack.c.l.b16 %v1134
      %v1212 = vunpack.c.l.b16 %v1148
      %v1213 = vunpack.c.l.b16 %v1162
      %v1214 = vunpack.c.l.b16 %v1176
      %v1215 = vunpack.c.l.b16 %v1190
      %v1216 = vpack.c.b16 %v1209, %v1208
      %v1217 = vpack.c.b16 %v1211, %v1210
      %v1218 = vpack.c.b16 %v1213, %v1212
      %v1219 = vpack.c.b16 %v1215, %v1214
      %v1240 = vunpack.c.l.b16 %v1192
      %v1241 = vunpack.c.l.b16 %v1193
      %v1242 = vunpack.c.l.b16 %v1194
      %v1243 = vunpack.c.l.b16 %v1195
      %v1244 = vunpack.c.l.b16 %v1196
      %v1245 = vunpack.c.l.b16 %v1197
      %v1246 = vunpack.c.l.b16 %v1198
      %v1247 = vunpack.c.l.b16 %v1199
      %v1248 = vunpack.c.l.b16 %v1200
      %v1249 = vunpack.c.l.b16 %v1201
      %v1250 = vunpack.c.l.b16 %v1202
      %v1251 = vunpack.c.l.b16 %v1203
      %v1252 = vunpack.c.l.b16 %v1204
      %v1253 = vunpack.c.l.b16 %v1205
      %v1254 = vunpack.c.l.b16 %v1206
      %v1255 = vunpack.c.l.b16 %v1207
      %v1256 = vpack.c.b16 %v1241, %v1240
      %v1257 = vpack.c.b16 %v1243, %v1242
      %v1258 = vpack.c.b16 %v1245, %v1244
      %v1259 = vpack.c.b16 %v1247, %v1246
      %v1260 = vpack.c.b16 %v1249, %v1248
      %v1261 = vpack.c.b16 %v1251, %v1250
      %v1262 = vpack.c.b16 %v1253, %v1252
      %v1263 = vpack.c.b16 %v1255, %v1254
      %1272 = vmatprep.subr.bf16.mxu0 0
      %1273 = vmatpush1.bf16.msra.mxu0 %v1256
      %1274 = vmatprep.subr.bf16.mxu0 0
      %1275 = vmatpush1.bf16.msra.mxu0 %v1257
      %1276 = vmatprep.subr.bf16.mxu0 0
      %1277 = vmatpush1.bf16.msra.mxu0 %v1258
      %1278 = vmatprep.subr.bf16.mxu0 0
      %1279 = vmatpush1.bf16.msra.mxu0 %v1259
      %1280 = vmatprep.subr.bf16.mxu0 0
      %1281 = vmatpush1.bf16.msra.mxu0 %v1260
      %1282 = vmatprep.subr.bf16.mxu0 0
      %1283 = vmatpush1.bf16.msra.mxu0 %v1261
      %1284 = vmatprep.subr.bf16.mxu0 0
      %1285 = vmatpush1.bf16.msra.mxu0 %v1262
      %1286 = vmatprep.subr.bf16.mxu0 0
      %1287 = vmatpush1.bf16.msra.mxu0 %v1263
      %1288 = vmatprep.subr.bf16.mxu0 0
      %1289 = vmatpush1.bf16.msra.mxu0 0
      %1290 = vmatprep.subr.bf16.mxu0 0
      %1291 = vmatpush1.bf16.msra.mxu0 0
      %1292 = vmatprep.subr.bf16.mxu0 0
      %1293 = vmatpush1.bf16.msra.mxu0 0
      %1294 = vmatprep.subr.bf16.mxu0 0
      %1295 = vmatpush1.bf16.msra.mxu0 0
      %1296 = vmatprep.subr.bf16.mxu0 0
      %1297 = vmatpush1.bf16.msra.mxu0 0
      %1298 = vmatprep.subr.bf16.mxu0 0
      %1299 = vmatpush1.bf16.msra.mxu0 0
      %1300 = vmatprep.subr.bf16.mxu0 0
      %1301 = vmatpush1.bf16.msra.mxu0 0
      %1302 = vmatprep.subr.bf16.mxu0 0
      %1303 = vmatpush1.bf16.msra.mxu0 0
      %1304 = vmatprep.mubr.bf16.mxu0 0
      %1305 = vmatmul.mubr.bf16.gmra.mrb[0].mxu0 %v1216
      %v1306 = vpop.f32.mrb[0].mxu0
      %v1307 = vadd.f32 0.0, %v1306
      %v1308 = vpop.f32.mrb[0].mxu0
      %v1309 = vpop.f32.mrb[0].mxu0
      %v1310 = vadd.f32 0.0, %v1309
      %v1311 = vpop.f32.mrb[0].mxu0
      %1312 = vmatprep.mubr.bf16.mxu0 0
      %1313 = vmatmul.mubr.bf16.gmra.mrb[0].mxu0 %v1217
      %v1314 = vpop.f32.mrb[0].mxu0
      %v1315 = vadd.f32 0.0, %v1314
      %v1316 = vpop.f32.mrb[0].mxu0
      %v1317 = vpop.f32.mrb[0].mxu0
      %v1318 = vadd.f32 0.0, %v1317
      %v1319 = vpop.f32.mrb[0].mxu0
      %1320 = vmatprep.mubr.bf16.mxu0 0
      %1321 = vmatmul.mubr.bf16.gmra.mrb[0].mxu0 %v1218
      %v1322 = vpop.f32.mrb[0].mxu0
      %v1323 = vadd.f32 0.0, %v1322
      %v1324 = vpop.f32.mrb[0].mxu0
      %v1325 = vpop.f32.mrb[0].mxu0
      %v1326 = vadd.f32 0.0, %v1325
      %v1327 = vpop.f32.mrb[0].mxu0
      %1328 = vmatprep.mubr.bf16.mxu0 0
      %1329 = vmatmul.mubr.bf16.gmra.mrb[0].mxu0 %v1219
      %v1330 = vpop.f32.mrb[0].mxu0
      %v1331 = vadd.f32 0.0, %v1330
      %v1332 = vpop.f32.mrb[0].mxu0
      %v1333 = vpop.f32.mrb[0].mxu0
      %v1334 = vadd.f32 0.0, %v1333
      %v1335 = vpop.f32.mrb[0].mxu0
      %1336 = vdwg.mxu0
      %v1337 = vadd.f32 %v1055, %v1307
      %v1338 = vadd.f32 %v1056, %v1310
      %v1339 = vadd.f32 %v1057, %v1315
      %v1340 = vadd.f32 %v1058, %v1318
      %v1341 = vadd.f32 %v1059, %v1323
      %v1342 = vadd.f32 %v1060, %v1326
      %v1343 = vadd.f32 %v1061, %v1331
      %v1344 = vadd.f32 %v1062, %v1334
      %v1345 = vld [vmem:[%s892] sm:$0xe]
      %v1346 = vld [vmem:[%s892 + $0x8] sm:$0xe]
      %v1347 = vld [vmem:[%s892 + $0x10] sm:$0xe]
      %v1348 = vld [vmem:[%s892 + $0x18] sm:$0xe]
      %v1349 = vld [vmem:[%s892 + $0x20] sm:$0xe]
      %v1350 = vld [vmem:[%s892 + $0x28] sm:$0xe]
      %v1351 = vld [vmem:[%s892 + $0x30] sm:$0xe]
      %v1352 = vld [vmem:[%s892 + $0x38] sm:$0xe]
      %v1369 = vrot.slane %v1345, 5
      %v1370 = vrot.slane %v1369, 4
      %v1371 = vrot.slane %v1064, 5
      %v1372 = vsel %vm705, %v1370, %v1371
      %v1373 = vrot.slane %v1346, 5
      %v1374 = vrot.slane %v1373, 4
      %v1375 = vrot.slane %v1066, 5
      %v1376 = vsel %vm705, %v1374, %v1375
      %v1377 = vrot.slane %v1347, 5
      %v1378 = vrot.slane %v1377, 4
      %v1379 = vrot.slane %v1068, 5
      %v1380 = vsel %vm705, %v1378, %v1379
      %v1381 = vrot.slane %v1348, 5
      %v1382 = vrot.slane %v1381, 4
      %v1383 = vrot.slane %v1070, 5
      %v1384 = vsel %vm705, %v1382, %v1383
      %v1385 = vrot.slane %v1349, 5
      %v1386 = vrot.slane %v1385, 4
      %v1387 = vrot.slane %v1072, 5
      %v1388 = vsel %vm705, %v1386, %v1387
      %v1389 = vrot.slane %v1350, 5
      %v1390 = vrot.slane %v1389, 4
      %v1391 = vrot.slane %v1074, 5
      %v1392 = vsel %vm705, %v1390, %v1391
      %v1393 = vrot.slane %v1351, 5
      %v1394 = vrot.slane %v1393, 4
      %v1395 = vrot.slane %v1076, 5
      %v1396 = vsel %vm705, %v1394, %v1395
      %v1397 = vrot.slane %v1352, 5
      %v1398 = vrot.slane %v1397, 4
      %v1399 = vrot.slane %v1078, 5
      %v1400 = vsel %vm705, %v1398, %v1399
      %s1401 = scalar_lea.vmem %s1, 320
      %v1402 = vld [vmem:[%s1401] sm:$0xf]
      %v1403 = vld [vmem:[%s1401 + $0x4] sm:$0xf]
      %v1404 = vld [vmem:[%s1401 + $0x8] sm:$0xf]
      %v1405 = vld [vmem:[%s1401 + $0xc] sm:$0xf]
      %v1406 = vld [vmem:[%s1401 + $0x10] sm:$0xf]
      %v1407 = vld [vmem:[%s1401 + $0x14] sm:$0xf]
      %v1408 = vld [vmem:[%s1401 + $0x18] sm:$0xf]
      %v1409 = vld [vmem:[%s1401 + $0x1c] sm:$0xf]
      %v1410 = vld [vmem:[%s1401 + $0x20] sm:$0xf]
      %v1411 = vld [vmem:[%s1401 + $0x24] sm:$0xf]
      %v1412 = vld [vmem:[%s1401 + $0x28] sm:$0xf]
      %v1413 = vld [vmem:[%s1401 + $0x2c] sm:$0xf]
      %v1414 = vld [vmem:[%s1401 + $0x30] sm:$0xf]
      %v1415 = vld [vmem:[%s1401 + $0x34] sm:$0xf]
      %v1416 = vld [vmem:[%s1401 + $0x38] sm:$0xf]
      %v1417 = vld [vmem:[%s1401 + $0x3c] sm:$0xf]
      %v1418 = vunpack.c.l.b16 %v1372
      %v1419 = vunpack.c.l.b16 %v1376
      %v1420 = vunpack.c.l.b16 %v1380
      %v1421 = vunpack.c.l.b16 %v1384
      %v1422 = vunpack.c.l.b16 %v1388
      %v1423 = vunpack.c.l.b16 %v1392
      %v1424 = vunpack.c.l.b16 %v1396
      %v1425 = vunpack.c.l.b16 %v1400
      %v1426 = vpack.c.b16 %v1419, %v1418
      %v1427 = vpack.c.b16 %v1421, %v1420
      %v1428 = vpack.c.b16 %v1423, %v1422
      %v1429 = vpack.c.b16 %v1425, %v1424
      %v1450 = vunpack.c.l.b16 %v1402
      %v1451 = vunpack.c.l.b16 %v1403
      %v1452 = vunpack.c.l.b16 %v1404
      %v1453 = vunpack.c.l.b16 %v1405
      %v1454 = vunpack.c.l.b16 %v1406
      %v1455 = vunpack.c.l.b16 %v1407
      %v1456 = vunpack.c.l.b16 %v1408
      %v1457 = vunpack.c.l.b16 %v1409
      %v1458 = vunpack.c.l.b16 %v1410
      %v1459 = vunpack.c.l.b16 %v1411
      %v1460 = vunpack.c.l.b16 %v1412
      %v1461 = vunpack.c.l.b16 %v1413
      %v1462 = vunpack.c.l.b16 %v1414
      %v1463 = vunpack.c.l.b16 %v1415
      %v1464 = vunpack.c.l.b16 %v1416
      %v1465 = vunpack.c.l.b16 %v1417
      %v1466 = vpack.c.b16 %v1451, %v1450
      %v1467 = vpack.c.b16 %v1453, %v1452
      %v1468 = vpack.c.b16 %v1455, %v1454
      %v1469 = vpack.c.b16 %v1457, %v1456
      %v1470 = vpack.c.b16 %v1459, %v1458
      %v1471 = vpack.c.b16 %v1461, %v1460
      %v1472 = vpack.c.b16 %v1463, %v1462
      %v1473 = vpack.c.b16 %v1465, %v1464
      %1482 = vmatprep.subr.bf16.mxu0 0
      %1483 = vmatpush1.bf16.msra.mxu0 %v1466
      %1484 = vmatprep.subr.bf16.mxu0 0
      %1485 = vmatpush1.bf16.msra.mxu0 %v1467
      %1486 = vmatprep.subr.bf16.mxu0 0
      %1487 = vmatpush1.bf16.msra.mxu0 %v1468
      %1488 = vmatprep.subr.bf16.mxu0 0
      %1489 = vmatpush1.bf16.msra.mxu0 %v1469
      %1490 = vmatprep.subr.bf16.mxu0 0
      %1491 = vmatpush1.bf16.msra.mxu0 %v1470
      %1492 = vmatprep.subr.bf16.mxu0 0
      %1493 = vmatpush1.bf16.msra.mxu0 %v1471
      %1494 = vmatprep.subr.bf16.mxu0 0
      %1495 = vmatpush1.bf16.msra.mxu0 %v1472
      %1496 = vmatprep.subr.bf16.mxu0 0
      %1497 = vmatpush1.bf16.msra.mxu0 %v1473
      %1498 = vmatprep.subr.bf16.mxu0 0
      %1499 = vmatpush1.bf16.msra.mxu0 0
      %1500 = vmatprep.subr.bf16.mxu0 0
      %1501 = vmatpush1.bf16.msra.mxu0 0
      %1502 = vmatprep.subr.bf16.mxu0 0
      %1503 = vmatpush1.bf16.msra.mxu0 0
      %1504 = vmatprep.subr.bf16.mxu0 0
      %1505 = vmatpush1.bf16.msra.mxu0 0
      %1506 = vmatprep.subr.bf16.mxu0 0
      %1507 = vmatpush1.bf16.msra.mxu0 0
      %1508 = vmatprep.subr.bf16.mxu0 0
      %1509 = vmatpush1.bf16.msra.mxu0 0
      %1510 = vmatprep.subr.bf16.mxu0 0
      %1511 = vmatpush1.bf16.msra.mxu0 0
      %1512 = vmatprep.subr.bf16.mxu0 0
      %1513 = vmatpush1.bf16.msra.mxu0 0
      %1514 = vmatprep.mubr.bf16.mxu0 0
      %1515 = vmatmul.mubr.bf16.gmra.mrb[0].mxu0 %v1426
      %v1516 = vpop.f32.mrb[0].mxu0
      %v1517 = vadd.f32 0.0, %v1516
      %v1518 = vpop.f32.mrb[0].mxu0
      %v1519 = vpop.f32.mrb[0].mxu0
      %v1520 = vadd.f32 0.0, %v1519
      %v1521 = vpop.f32.mrb[0].mxu0
      %1522 = vmatprep.mubr.bf16.mxu0 0
      %1523 = vmatmul.mubr.bf16.gmra.mrb[0].mxu0 %v1427
      %v1524 = vpop.f32.mrb[0].mxu0
      %v1525 = vadd.f32 0.0, %v1524
      %v1526 = vpop.f32.mrb[0].mxu0
      %v1527 = vpop.f32.mrb[0].mxu0
      %v1528 = vadd.f32 0.0, %v1527
      %v1529 = vpop.f32.mrb[0].mxu0
      %1530 = vmatprep.mubr.bf16.mxu0 0
      %1531 = vmatmul.mubr.bf16.gmra.mrb[0].mxu0 %v1428
      %v1532 = vpop.f32.mrb[0].mxu0
      %v1533 = vadd.f32 0.0, %v1532
      %v1534 = vpop.f32.mrb[0].mxu0
      %v1535 = vpop.f32.mrb[0].mxu0
      %v1536 = vadd.f32 0.0, %v1535
      %v1537 = vpop.f32.mrb[0].mxu0
      %1538 = vmatprep.mubr.bf16.mxu0 0
      %1539 = vmatmul.mubr.bf16.gmra.mrb[0].mxu0 %v1429
      %v1540 = vpop.f32.mrb[0].mxu0
      %v1541 = vadd.f32 0.0, %v1540
      %v1542 = vpop.f32.mrb[0].mxu0
      %v1543 = vpop.f32.mrb[0].mxu0
      %v1544 = vadd.f32 0.0, %v1543
      %v1545 = vpop.f32.mrb[0].mxu0
      %1546 = vdwg.mxu0
      %v1547 = vadd.f32 %v1337, %v1517
      %v1548 = vadd.f32 %v1338, %v1520
      %v1549 = vadd.f32 %v1339, %v1525
      %v1550 = vadd.f32 %v1340, %v1528
      %v1551 = vadd.f32 %v1341, %v1533
      %v1552 = vadd.f32 %v1342, %v1536
      %v1553 = vadd.f32 %v1343, %v1541
      %v1554 = vadd.f32 %v1344, %v1544
      %s1555 = scalar_lea.vmem %s235, 16
      %v1556 = vld [vmem:[%s1555] sm:$0xf]
      %v1557 = vld [vmem:[%s1555 + $0x8] sm:$0xf]
      %v1558 = vld [vmem:[%s1555 + $0x10] sm:$0xf]
      %v1559 = vld [vmem:[%s1555 + $0x18] sm:$0xf]
      %v1560 = vld [vmem:[%s1555 + $0x20] sm:$0xf]
      %v1561 = vld [vmem:[%s1555 + $0x28] sm:$0xf]
      %v1562 = vld [vmem:[%s1555 + $0x30] sm:$0xf]
      %v1563 = vld [vmem:[%s1555 + $0x38] sm:$0xf]
      %s1564 = scalar_lea.vmem %s1, 384
      %v1565 = vld [vmem:[%s1564] sm:$0xf]
      %v1566 = vld [vmem:[%s1564 + $0x4] sm:$0xf]
      %v1567 = vld [vmem:[%s1564 + $0x8] sm:$0xf]
      %v1568 = vld [vmem:[%s1564 + $0xc] sm:$0xf]
      %v1569 = vld [vmem:[%s1564 + $0x10] sm:$0xf]
      %v1570 = vld [vmem:[%s1564 + $0x14] sm:$0xf]
      %v1571 = vld [vmem:[%s1564 + $0x18] sm:$0xf]
      %v1572 = vld [vmem:[%s1564 + $0x1c] sm:$0xf]
      %v1573 = vld [vmem:[%s1564 + $0x20] sm:$0xf]
      %v1574 = vld [vmem:[%s1564 + $0x24] sm:$0xf]
      %v1575 = vld [vmem:[%s1564 + $0x28] sm:$0xf]
      %v1576 = vld [vmem:[%s1564 + $0x2c] sm:$0xf]
      %v1577 = vld [vmem:[%s1564 + $0x30] sm:$0xf]
      %v1578 = vld [vmem:[%s1564 + $0x34] sm:$0xf]
      %v1579 = vld [vmem:[%s1564 + $0x38] sm:$0xf]
      %v1580 = vld [vmem:[%s1564 + $0x3c] sm:$0xf]
      %v1589 = vunpack.c.l.b16 %v1556
      %v1590 = vunpack.c.l.b16 %v1557
      %v1591 = vunpack.c.l.b16 %v1558
      %v1592 = vunpack.c.l.b16 %v1559
      %v1593 = vunpack.c.l.b16 %v1560
      %v1594 = vunpack.c.l.b16 %v1561
      %v1595 = vunpack.c.l.b16 %v1562
      %v1596 = vunpack.c.l.b16 %v1563
      %v1597 = vpack.c.b16 %v1590, %v1589
      %v1598 = vpack.c.b16 %v1592, %v1591
      %v1599 = vpack.c.b16 %v1594, %v1593
      %v1600 = vpack.c.b16 %v1596, %v1595
      %v1621 = vunpack.c.l.b16 %v1565
      %v1622 = vunpack.c.l.b16 %v1566
      %v1623 = vunpack.c.l.b16 %v1567
      %v1624 = vunpack.c.l.b16 %v1568
      %v1625 = vunpack.c.l.b16 %v1569
      %v1626 = vunpack.c.l.b16 %v1570
      %v1627 = vunpack.c.l.b16 %v1571
      %v1628 = vunpack.c.l.b16 %v1572
      %v1629 = vunpack.c.l.b16 %v1573
      %v1630 = vunpack.c.l.b16 %v1574
      %v1631 = vunpack.c.l.b16 %v1575
      %v1632 = vunpack.c.l.b16 %v1576
      %v1633 = vunpack.c.l.b16 %v1577
      %v1634 = vunpack.c.l.b16 %v1578
      %v1635 = vunpack.c.l.b16 %v1579
      %v1636 = vunpack.c.l.b16 %v1580
      %v1637 = vpack.c.b16 %v1622, %v1621
      %v1638 = vpack.c.b16 %v1624, %v1623
      %v1639 = vpack.c.b16 %v1626, %v1625
      %v1640 = vpack.c.b16 %v1628, %v1627
      %v1641 = vpack.c.b16 %v1630, %v1629
      %v1642 = vpack.c.b16 %v1632, %v1631
      %v1643 = vpack.c.b16 %v1634, %v1633
      %v1644 = vpack.c.b16 %v1636, %v1635
      %1653 = vmatprep.subr.bf16.mxu0 0
      %1654 = vmatpush1.bf16.msra.mxu0 %v1637
      %1655 = vmatprep.subr.bf16.mxu0 0
      %1656 = vmatpush1.bf16.msra.mxu0 %v1638
      %1657 = vmatprep.subr.bf16.mxu0 0
      %1658 = vmatpush1.bf16.msra.mxu0 %v1639
      %1659 = vmatprep.subr.bf16.mxu0 0
      %1660 = vmatpush1.bf16.msra.mxu0 %v1640
      %1661 = vmatprep.subr.bf16.mxu0 0
      %1662 = vmatpush1.bf16.msra.mxu0 %v1641
      %1663 = vmatprep.subr.bf16.mxu0 0
      %1664 = vmatpush1.bf16.msra.mxu0 %v1642
      %1665 = vmatprep.subr.bf16.mxu0 0
      %1666 = vmatpush1.bf16.msra.mxu0 %v1643
      %1667 = vmatprep.subr.bf16.mxu0 0
      %1668 = vmatpush1.bf16.msra.mxu0 %v1644
      %1669 = vmatprep.subr.bf16.mxu0 0
      %1670 = vmatpush1.bf16.msra.mxu0 0
      %1671 = vmatprep.subr.bf16.mxu0 0
      %1672 = vmatpush1.bf16.msra.mxu0 0
      %1673 = vmatprep.subr.bf16.mxu0 0
      %1674 = vmatpush1.bf16.msra.mxu0 0
      %1675 = vmatprep.subr.bf16.mxu0 0
      %1676 = vmatpush1.bf16.msra.mxu0 0
      %1677 = vmatprep.subr.bf16.mxu0 0
      %1678 = vmatpush1.bf16.msra.mxu0 0
      %1679 = vmatprep.subr.bf16.mxu0 0
      %1680 = vmatpush1.bf16.msra.mxu0 0
      %1681 = vmatprep.subr.bf16.mxu0 0
      %1682 = vmatpush1.bf16.msra.mxu0 0
      %1683 = vmatprep.subr.bf16.mxu0 0
      %1684 = vmatpush1.bf16.msra.mxu0 0
      %1685 = vmatprep.mubr.bf16.mxu0 0
      %1686 = vmatmul.mubr.bf16.gmra.mrb[0].mxu0 %v1597
      %v1687 = vpop.f32.mrb[0].mxu0
      %v1688 = vadd.f32 0.0, %v1687
      %v1689 = vpop.f32.mrb[0].mxu0
      %v1690 = vpop.f32.mrb[0].mxu0
      %v1691 = vadd.f32 0.0, %v1690
      %v1692 = vpop.f32.mrb[0].mxu0
      %1693 = vmatprep.mubr.bf16.mxu0 0
      %1694 = vmatmul.mubr.bf16.gmra.mrb[0].mxu0 %v1598
      %v1695 = vpop.f32.mrb[0].mxu0
      %v1696 = vadd.f32 0.0, %v1695
      %v1697 = vpop.f32.mrb[0].mxu0
      %v1698 = vpop.f32.mrb[0].mxu0
      %v1699 = vadd.f32 0.0, %v1698
      %v1700 = vpop.f32.mrb[0].mxu0
      %1701 = vmatprep.mubr.bf16.mxu0 0
      %1702 = vmatmul.mubr.bf16.gmra.mrb[0].mxu0 %v1599
      %v1703 = vpop.f32.mrb[0].mxu0
      %v1704 = vadd.f32 0.0, %v1703
      %v1705 = vpop.f32.mrb[0].mxu0
      %v1706 = vpop.f32.mrb[0].mxu0
      %v1707 = vadd.f32 0.0, %v1706
      %v1708 = vpop.f32.mrb[0].mxu0
      %1709 = vmatprep.mubr.bf16.mxu0 0
      %1710 = vmatmul.mubr.bf16.gmra.mrb[0].mxu0 %v1600
      %v1711 = vpop.f32.mrb[0].mxu0
      %v1712 = vadd.f32 0.0, %v1711
      %v1713 = vpop.f32.mrb[0].mxu0
      %v1714 = vpop.f32.mrb[0].mxu0
      %v1715 = vadd.f32 0.0, %v1714
      %v1716 = vpop.f32.mrb[0].mxu0
      %1717 = vdwg.mxu0
      %v1718 = vadd.f32 %v1547, %v1688
      %v1719 = vadd.f32 %v1548, %v1691
      %v1720 = vadd.f32 %v1549, %v1696
      %v1721 = vadd.f32 %v1550, %v1699
      %v1722 = vadd.f32 %v1551, %v1704
      %v1723 = vadd.f32 %v1552, %v1707
      %v1724 = vadd.f32 %v1553, %v1712
      %v1725 = vadd.f32 %v1554, %v1715
      %v1726 = vld [vmem:[%s1555] sm:$0xf]
      %v1727 = vld [vmem:[%s1555 + $0x4] sm:$0x1]
      %v1728 = vld [vmem:[%s1555 + $0x8] sm:$0xf]
      %v1729 = vld [vmem:[%s1555 + $0xc] sm:$0x1]
      %v1730 = vld [vmem:[%s1555 + $0x10] sm:$0xf]
      %v1731 = vld [vmem:[%s1555 + $0x14] sm:$0x1]
      %v1732 = vld [vmem:[%s1555 + $0x18] sm:$0xf]
      %v1733 = vld [vmem:[%s1555 + $0x1c] sm:$0x1]
      %v1734 = vld [vmem:[%s1555 + $0x20] sm:$0xf]
      %v1735 = vld [vmem:[%s1555 + $0x24] sm:$0x1]
      %v1736 = vld [vmem:[%s1555 + $0x28] sm:$0xf]
      %v1737 = vld [vmem:[%s1555 + $0x2c] sm:$0x1]
      %v1738 = vld [vmem:[%s1555 + $0x30] sm:$0xf]
      %v1739 = vld [vmem:[%s1555 + $0x34] sm:$0x1]
      %v1740 = vld [vmem:[%s1555 + $0x38] sm:$0xf]
      %v1741 = vld [vmem:[%s1555 + $0x3c] sm:$0x1]
      %v1743 = vshrl.u32 %v1726, 16
      %v1745 = vrot.slane %v1743, 4
      %v1746 = vshll.u32 %v1726, 16
      %v1748 = vrot.slane %v1746, 5
      %v1749 = vor.u32 %v1745, %v1748
      %v1750 = vrot.slane %v1749, 4
      %v1752 = vshll.u32 %v1727, 16
      %v1754 = vrot.slane %v1752, 5
      %v1755 = vsel %vm283, %v1750, %v1754
      %v1757 = vshrl.u32 %v1728, 16
      %v1759 = vrot.slane %v1757, 4
      %v1760 = vshll.u32 %v1728, 16
      %v1762 = vrot.slane %v1760, 5
      %v1763 = vor.u32 %v1759, %v1762
      %v1764 = vrot.slane %v1763, 4
      %v1766 = vshll.u32 %v1729, 16
      %v1768 = vrot.slane %v1766, 5
      %v1769 = vsel %vm283, %v1764, %v1768
      %v1771 = vshrl.u32 %v1730, 16
      %v1773 = vrot.slane %v1771, 4
      %v1774 = vshll.u32 %v1730, 16
      %v1776 = vrot.slane %v1774, 5
      %v1777 = vor.u32 %v1773, %v1776
      %v1778 = vrot.slane %v1777, 4
      %v1780 = vshll.u32 %v1731, 16
      %v1782 = vrot.slane %v1780, 5
      %v1783 = vsel %vm283, %v1778, %v1782
      %v1785 = vshrl.u32 %v1732, 16
      %v1787 = vrot.slane %v1785, 4
      %v1788 = vshll.u32 %v1732, 16
      %v1790 = vrot.slane %v1788, 5
      %v1791 = vor.u32 %v1787, %v1790
      %v1792 = vrot.slane %v1791, 4
      %v1794 = vshll.u32 %v1733, 16
      %v1796 = vrot.slane %v1794, 5
      %v1797 = vsel %vm283, %v1792, %v1796
      %v1799 = vshrl.u32 %v1734, 16
      %v1801 = vrot.slane %v1799, 4
      %v1802 = vshll.u32 %v1734, 16
      %v1804 = vrot.slane %v1802, 5
      %v1805 = vor.u32 %v1801, %v1804
      %v1806 = vrot.slane %v1805, 4
      %v1808 = vshll.u32 %v1735, 16
      %v1810 = vrot.slane %v1808, 5
      %v1811 = vsel %vm283, %v1806, %v1810
      %v1813 = vshrl.u32 %v1736, 16
      %v1815 = vrot.slane %v1813, 4
      %v1816 = vshll.u32 %v1736, 16
      %v1818 = vrot.slane %v1816, 5
      %v1819 = vor.u32 %v1815, %v1818
      %v1820 = vrot.slane %v1819, 4
      %v1822 = vshll.u32 %v1737, 16
      %v1824 = vrot.slane %v1822, 5
      %v1825 = vsel %vm283, %v1820, %v1824
      %v1827 = vshrl.u32 %v1738, 16
      %v1829 = vrot.slane %v1827, 4
      %v1830 = vshll.u32 %v1738, 16
      %v1832 = vrot.slane %v1830, 5
      %v1833 = vor.u32 %v1829, %v1832
      %v1834 = vrot.slane %v1833, 4
      %v1836 = vshll.u32 %v1739, 16
      %v1838 = vrot.slane %v1836, 5
      %v1839 = vsel %vm283, %v1834, %v1838
      %v1841 = vshrl.u32 %v1740, 16
      %v1843 = vrot.slane %v1841, 4
      %v1844 = vshll.u32 %v1740, 16
      %v1846 = vrot.slane %v1844, 5
      %v1847 = vor.u32 %v1843, %v1846
      %v1848 = vrot.slane %v1847, 4
      %v1850 = vshll.u32 %v1741, 16
      %v1852 = vrot.slane %v1850, 5
      %v1853 = vsel %vm283, %v1848, %v1852
      %s1854 = scalar_lea.vmem %s1, 448
      %v1855 = vld [vmem:[%s1854] sm:$0xf]
      %v1856 = vld [vmem:[%s1854 + $0x4] sm:$0xf]
      %v1857 = vld [vmem:[%s1854 + $0x8] sm:$0xf]
      %v1858 = vld [vmem:[%s1854 + $0xc] sm:$0xf]
      %v1859 = vld [vmem:[%s1854 + $0x10] sm:$0xf]
      %v1860 = vld [vmem:[%s1854 + $0x14] sm:$0xf]
      %v1861 = vld [vmem:[%s1854 + $0x18] sm:$0xf]
      %v1862 = vld [vmem:[%s1854 + $0x1c] sm:$0xf]
      %v1863 = vld [vmem:[%s1854 + $0x20] sm:$0xf]
      %v1864 = vld [vmem:[%s1854 + $0x24] sm:$0xf]
      %v1865 = vld [vmem:[%s1854 + $0x28] sm:$0xf]
      %v1866 = vld [vmem:[%s1854 + $0x2c] sm:$0xf]
      %v1867 = vld [vmem:[%s1854 + $0x30] sm:$0xf]
      %v1868 = vld [vmem:[%s1854 + $0x34] sm:$0xf]
      %v1869 = vld [vmem:[%s1854 + $0x38] sm:$0xf]
      %v1870 = vld [vmem:[%s1854 + $0x3c] sm:$0xf]
      %v1871 = vunpack.c.l.b16 %v1755
      %v1872 = vunpack.c.l.b16 %v1769
      %v1873 = vunpack.c.l.b16 %v1783
      %v1874 = vunpack.c.l.b16 %v1797
      %v1875 = vunpack.c.l.b16 %v1811
      %v1876 = vunpack.c.l.b16 %v1825
      %v1877 = vunpack.c.l.b16 %v1839
      %v1878 = vunpack.c.l.b16 %v1853
      %v1879 = vpack.c.b16 %v1872, %v1871
      %v1880 = vpack.c.b16 %v1874, %v1873
      %v1881 = vpack.c.b16 %v1876, %v1875
      %v1882 = vpack.c.b16 %v1878, %v1877
      %v1903 = vunpack.c.l.b16 %v1855
      %v1904 = vunpack.c.l.b16 %v1856
      %v1905 = vunpack.c.l.b16 %v1857
      %v1906 = vunpack.c.l.b16 %v1858
      %v1907 = vunpack.c.l.b16 %v1859
      %v1908 = vunpack.c.l.b16 %v1860
      %v1909 = vunpack.c.l.b16 %v1861
      %v1910 = vunpack.c.l.b16 %v1862
      %v1911 = vunpack.c.l.b16 %v1863
      %v1912 = vunpack.c.l.b16 %v1864
      %v1913 = vunpack.c.l.b16 %v1865
      %v1914 = vunpack.c.l.b16 %v1866
      %v1915 = vunpack.c.l.b16 %v1867
      %v1916 = vunpack.c.l.b16 %v1868
      %v1917 = vunpack.c.l.b16 %v1869
      %v1918 = vunpack.c.l.b16 %v1870
      %v1919 = vpack.c.b16 %v1904, %v1903
      %v1920 = vpack.c.b16 %v1906, %v1905
      %v1921 = vpack.c.b16 %v1908, %v1907
      %v1922 = vpack.c.b16 %v1910, %v1909
      %v1923 = vpack.c.b16 %v1912, %v1911
      %v1924 = vpack.c.b16 %v1914, %v1913
      %v1925 = vpack.c.b16 %v1916, %v1915
      %v1926 = vpack.c.b16 %v1918, %v1917
      %1935 = vmatprep.subr.bf16.mxu0 0
      %1936 = vmatpush1.bf16.msra.mxu0 %v1919
      %1937 = vmatprep.subr.bf16.mxu0 0
      %1938 = vmatpush1.bf16.msra.mxu0 %v1920
      %1939 = vmatprep.subr.bf16.mxu0 0
      %1940 = vmatpush1.bf16.msra.mxu0 %v1921
      %1941 = vmatprep.subr.bf16.mxu0 0
      %1942 = vmatpush1.bf16.msra.mxu0 %v1922
      %1943 = vmatprep.subr.bf16.mxu0 0
      %1944 = vmatpush1.bf16.msra.mxu0 %v1923
      %1945 = vmatprep.subr.bf16.mxu0 0
      %1946 = vmatpush1.bf16.msra.mxu0 %v1924
      %1947 = vmatprep.subr.bf16.mxu0 0
      %1948 = vmatpush1.bf16.msra.mxu0 %v1925
      %1949 = vmatprep.subr.bf16.mxu0 0
      %1950 = vmatpush1.bf16.msra.mxu0 %v1926
      %1951 = vmatprep.subr.bf16.mxu0 0
      %1952 = vmatpush1.bf16.msra.mxu0 0
      %1953 = vmatprep.subr.bf16.mxu0 0
      %1954 = vmatpush1.bf16.msra.mxu0 0
      %1955 = vmatprep.subr.bf16.mxu0 0
      %1956 = vmatpush1.bf16.msra.mxu0 0
      %1957 = vmatprep.subr.bf16.mxu0 0
      %1958 = vmatpush1.bf16.msra.mxu0 0
      %1959 = vmatprep.subr.bf16.mxu0 0
      %1960 = vmatpush1.bf16.msra.mxu0 0
      %1961 = vmatprep.subr.bf16.mxu0 0
      %1962 = vmatpush1.bf16.msra.mxu0 0
      %1963 = vmatprep.subr.bf16.mxu0 0
      %1964 = vmatpush1.bf16.msra.mxu0 0
      %1965 = vmatprep.subr.bf16.mxu0 0
      %1966 = vmatpush1.bf16.msra.mxu0 0
      %1967 = vmatprep.mubr.bf16.mxu0 0
      %1968 = vmatmul.mubr.bf16.gmra.mrb[0].mxu0 %v1879
      %v1969 = vpop.f32.mrb[0].mxu0
      %v1970 = vadd.f32 0.0, %v1969
      %v1971 = vpop.f32.mrb[0].mxu0
      %v1972 = vpop.f32.mrb[0].mxu0
      %v1973 = vadd.f32 0.0, %v1972
      %v1974 = vpop.f32.mrb[0].mxu0
      %1975 = vmatprep.mubr.bf16.mxu0 0
      %1976 = vmatmul.mubr.bf16.gmra.mrb[0].mxu0 %v1880
      %v1977 = vpop.f32.mrb[0].mxu0
      %v1978 = vadd.f32 0.0, %v1977
      %v1979 = vpop.f32.mrb[0].mxu0
      %v1980 = vpop.f32.mrb[0].mxu0
      %v1981 = vadd.f32 0.0, %v1980
      %v1982 = vpop.f32.mrb[0].mxu0
      %1983 = vmatprep.mubr.bf16.mxu0 0
      %1984 = vmatmul.mubr.bf16.gmra.mrb[0].mxu0 %v1881
      %v1985 = vpop.f32.mrb[0].mxu0
      %v1986 = vadd.f32 0.0, %v1985
      %v1987 = vpop.f32.mrb[0].mxu0
      %v1988 = vpop.f32.mrb[0].mxu0
      %v1989 = vadd.f32 0.0, %v1988
      %v1990 = vpop.f32.mrb[0].mxu0
      %1991 = vmatprep.mubr.bf16.mxu0 0
      %1992 = vmatmul.mubr.bf16.gmra.mrb[0].mxu0 %v1882
      %v1993 = vpop.f32.mrb[0].mxu0
      %v1994 = vadd.f32 0.0, %v1993
      %v1995 = vpop.f32.mrb[0].mxu0
      %v1996 = vpop.f32.mrb[0].mxu0
      %v1997 = vadd.f32 0.0, %v1996
      %v1998 = vpop.f32.mrb[0].mxu0
      %1999 = vdwg.mxu0
      %v2000 = vadd.f32 %v1718, %v1970
      %v2001 = vadd.f32 %v1719, %v1973
      %v2002 = vadd.f32 %v1720, %v1978
      %v2003 = vadd.f32 %v1721, %v1981
      %v2004 = vadd.f32 %v1722, %v1986
      %v2005 = vadd.f32 %v1723, %v1989
      %v2006 = vadd.f32 %v1724, %v1994
      %v2007 = vadd.f32 %v1725, %v1997
      %v2008 = vld [vmem:[%s1555] sm:$0xe]
      %v2009 = vld [vmem:[%s1555 + $0x8] sm:$0xe]
      %v2010 = vld [vmem:[%s1555 + $0x10] sm:$0xe]
      %v2011 = vld [vmem:[%s1555 + $0x18] sm:$0xe]
      %v2012 = vld [vmem:[%s1555 + $0x20] sm:$0xe]
      %v2013 = vld [vmem:[%s1555 + $0x28] sm:$0xe]
      %v2014 = vld [vmem:[%s1555 + $0x30] sm:$0xe]
      %v2015 = vld [vmem:[%s1555 + $0x38] sm:$0xe]
      %v2032 = vrot.slane %v2008, 5
      %v2033 = vrot.slane %v2032, 4
      %v2034 = vrot.slane %v1727, 5
      %v2035 = vsel %vm705, %v2033, %v2034
      %v2036 = vrot.slane %v2009, 5
      %v2037 = vrot.slane %v2036, 4
      %v2038 = vrot.slane %v1729, 5
      %v2039 = vsel %vm705, %v2037, %v2038
      %v2040 = vrot.slane %v2010, 5
      %v2041 = vrot.slane %v2040, 4
      %v2042 = vrot.slane %v1731, 5
      %v2043 = vsel %vm705, %v2041, %v2042
      %v2044 = vrot.slane %v2011, 5
      %v2045 = vrot.slane %v2044, 4
      %v2046 = vrot.slane %v1733, 5
      %v2047 = vsel %vm705, %v2045, %v2046
      %v2048 = vrot.slane %v2012, 5
      %v2049 = vrot.slane %v2048, 4
      %v2050 = vrot.slane %v1735, 5
      %v2051 = vsel %vm705, %v2049, %v2050
      %v2052 = vrot.slane %v2013, 5
      %v2053 = vrot.slane %v2052, 4
      %v2054 = vrot.slane %v1737, 5
      %v2055 = vsel %vm705, %v2053, %v2054
      %v2056 = vrot.slane %v2014, 5
      %v2057 = vrot.slane %v2056, 4
      %v2058 = vrot.slane %v1739, 5
      %v2059 = vsel %vm705, %v2057, %v2058
      %v2060 = vrot.slane %v2015, 5
      %v2061 = vrot.slane %v2060, 4
      %v2062 = vrot.slane %v1741, 5
      %v2063 = vsel %vm705, %v2061, %v2062
      %s2064 = scalar_lea.vmem %s1, 512
      %v2065 = vld [vmem:[%s2064] sm:$0xf]
      %v2066 = vld [vmem:[%s2064 + $0x4] sm:$0xf]
      %v2067 = vld [vmem:[%s2064 + $0x8] sm:$0xf]
      %v2068 = vld [vmem:[%s2064 + $0xc] sm:$0xf]
      %v2069 = vld [vmem:[%s2064 + $0x10] sm:$0xf]
      %v2070 = vld [vmem:[%s2064 + $0x14] sm:$0xf]
      %v2071 = vld [vmem:[%s2064 + $0x18] sm:$0xf]
      %v2072 = vld [vmem:[%s2064 + $0x1c] sm:$0xf]
      %v2073 = vld [vmem:[%s2064 + $0x20] sm:$0xf]
      %v2074 = vld [vmem:[%s2064 + $0x24] sm:$0xf]
      %v2075 = vld [vmem:[%s2064 + $0x28] sm:$0xf]
      %v2076 = vld [vmem:[%s2064 + $0x2c] sm:$0xf]
      %v2077 = vld [vmem:[%s2064 + $0x30] sm:$0xf]
      %v2078 = vld [vmem:[%s2064 + $0x34] sm:$0xf]
      %v2079 = vld [vmem:[%s2064 + $0x38] sm:$0xf]
      %v2080 = vld [vmem:[%s2064 + $0x3c] sm:$0xf]
      %v2081 = vunpack.c.l.b16 %v2035
      %v2082 = vunpack.c.l.b16 %v2039
      %v2083 = vunpack.c.l.b16 %v2043
      %v2084 = vunpack.c.l.b16 %v2047
      %v2085 = vunpack.c.l.b16 %v2051
      %v2086 = vunpack.c.l.b16 %v2055
      %v2087 = vunpack.c.l.b16 %v2059
      %v2088 = vunpack.c.l.b16 %v2063
      %v2089 = vpack.c.b16 %v2082, %v2081
      %v2090 = vpack.c.b16 %v2084, %v2083
      %v2091 = vpack.c.b16 %v2086, %v2085
      %v2092 = vpack.c.b16 %v2088, %v2087
      %v2113 = vunpack.c.l.b16 %v2065
      %v2114 = vunpack.c.l.b16 %v2066
      %v2115 = vunpack.c.l.b16 %v2067
      %v2116 = vunpack.c.l.b16 %v2068
      %v2117 = vunpack.c.l.b16 %v2069
      %v2118 = vunpack.c.l.b16 %v2070
      %v2119 = vunpack.c.l.b16 %v2071
      %v2120 = vunpack.c.l.b16 %v2072
      %v2121 = vunpack.c.l.b16 %v2073
      %v2122 = vunpack.c.l.b16 %v2074
      %v2123 = vunpack.c.l.b16 %v2075
      %v2124 = vunpack.c.l.b16 %v2076
      %v2125 = vunpack.c.l.b16 %v2077
      %v2126 = vunpack.c.l.b16 %v2078
      %v2127 = vunpack.c.l.b16 %v2079
      %v2128 = vunpack.c.l.b16 %v2080
      %v2129 = vpack.c.b16 %v2114, %v2113
      %v2130 = vpack.c.b16 %v2116, %v2115
      %v2131 = vpack.c.b16 %v2118, %v2117
      %v2132 = vpack.c.b16 %v2120, %v2119
      %v2133 = vpack.c.b16 %v2122, %v2121
      %v2134 = vpack.c.b16 %v2124, %v2123
      %v2135 = vpack.c.b16 %v2126, %v2125
      %v2136 = vpack.c.b16 %v2128, %v2127
      %2145 = vmatprep.subr.bf16.mxu0 0
      %2146 = vmatpush1.bf16.msra.mxu0 %v2129
      %2147 = vmatprep.subr.bf16.mxu0 0
      %2148 = vmatpush1.bf16.msra.mxu0 %v2130
      %2149 = vmatprep.subr.bf16.mxu0 0
      %2150 = vmatpush1.bf16.msra.mxu0 %v2131
      %2151 = vmatprep.subr.bf16.mxu0 0
      %2152 = vmatpush1.bf16.msra.mxu0 %v2132
      %2153 = vmatprep.subr.bf16.mxu0 0
      %2154 = vmatpush1.bf16.msra.mxu0 %v2133
      %2155 = vmatprep.subr.bf16.mxu0 0
      %2156 = vmatpush1.bf16.msra.mxu0 %v2134
      %2157 = vmatprep.subr.bf16.mxu0 0
      %2158 = vmatpush1.bf16.msra.mxu0 %v2135
      %2159 = vmatprep.subr.bf16.mxu0 0
      %2160 = vmatpush1.bf16.msra.mxu0 %v2136
      %2161 = vmatprep.subr.bf16.mxu0 0
      %2162 = vmatpush1.bf16.msra.mxu0 0
      %2163 = vmatprep.subr.bf16.mxu0 0
      %2164 = vmatpush1.bf16.msra.mxu0 0
      %2165 = vmatprep.subr.bf16.mxu0 0
      %2166 = vmatpush1.bf16.msra.mxu0 0
      %2167 = vmatprep.subr.bf16.mxu0 0
      %2168 = vmatpush1.bf16.msra.mxu0 0
      %2169 = vmatprep.subr.bf16.mxu0 0
      %2170 = vmatpush1.bf16.msra.mxu0 0
      %2171 = vmatprep.subr.bf16.mxu0 0
      %2172 = vmatpush1.bf16.msra.mxu0 0
      %2173 = vmatprep.subr.bf16.mxu0 0
      %2174 = vmatpush1.bf16.msra.mxu0 0
      %2175 = vmatprep.subr.bf16.mxu0 0
      %2176 = vmatpush1.bf16.msra.mxu0 0
      %2177 = vmatprep.mubr.bf16.mxu0 0
      %2178 = vmatmul.mubr.bf16.gmra.mrb[0].mxu0 %v2089
      %v2179 = vpop.f32.mrb[0].mxu0
      %v2180 = vadd.f32 0.0, %v2179
      %v2181 = vpop.f32.mrb[0].mxu0
      %v2182 = vpop.f32.mrb[0].mxu0
      %v2183 = vadd.f32 0.0, %v2182
      %v2184 = vpop.f32.mrb[0].mxu0
      %2185 = vmatprep.mubr.bf16.mxu0 0
      %2186 = vmatmul.mubr.bf16.gmra.mrb[0].mxu0 %v2090
      %v2187 = vpop.f32.mrb[0].mxu0
      %v2188 = vadd.f32 0.0, %v2187
      %v2189 = vpop.f32.mrb[0].mxu0
      %v2190 = vpop.f32.mrb[0].mxu0
      %v2191 = vadd.f32 0.0, %v2190
      %v2192 = vpop.f32.mrb[0].mxu0
      %2193 = vmatprep.mubr.bf16.mxu0 0
      %2194 = vmatmul.mubr.bf16.gmra.mrb[0].mxu0 %v2091
      %v2195 = vpop.f32.mrb[0].mxu0
      %v2196 = vadd.f32 0.0, %v2195
      %v2197 = vpop.f32.mrb[0].mxu0
      %v2198 = vpop.f32.mrb[0].mxu0
      %v2199 = vadd.f32 0.0, %v2198
      %v2200 = vpop.f32.mrb[0].mxu0
      %2201 = vmatprep.mubr.bf16.mxu0 0
      %2202 = vmatmul.mubr.bf16.gmra.mrb[0].mxu0 %v2092
      %v2203 = vpop.f32.mrb[0].mxu0
      %v2204 = vadd.f32 0.0, %v2203
      %v2205 = vpop.f32.mrb[0].mxu0
      %v2206 = vpop.f32.mrb[0].mxu0
      %v2207 = vadd.f32 0.0, %v2206
      %v2208 = vpop.f32.mrb[0].mxu0
      %2209 = vdwg.mxu0
      %v2210 = vadd.f32 %v2000, %v2180
      %v2211 = vadd.f32 %v2001, %v2183
      %v2212 = vadd.f32 %v2002, %v2188
      %v2213 = vadd.f32 %v2003, %v2191
      %v2214 = vadd.f32 %v2004, %v2196
      %v2215 = vadd.f32 %v2005, %v2199
      %v2216 = vadd.f32 %v2006, %v2204
      %v2217 = vadd.f32 %v2007, %v2207
      %v2218 = vld [vmem:[%s2] sm:$0x1]
      %v2220 = vlaneseq
      %v2221 = vshrl.u32 %v2220, 7
      %v2222 = vsub.s32 0, %v2221
      %v2223 = vrot.slane %v2218, %v2222
      %v2225 = vmul.f32 %v2210, %v2223
      %v2226 = vmul.f32 %v2211, %v2223
      %v2227 = vmul.f32 %v2212, %v2223
      %v2228 = vmul.f32 %v2213, %v2223
      %v2229 = vmul.f32 %v2214, %v2223
      %v2230 = vmul.f32 %v2215, %v2223
      %v2231 = vmul.f32 %v2216, %v2223
      %v2232 = vmul.f32 %v2217, %v2223
      %v2233 = vld [vmem:[%s3] sm:$0x1]
      %v2235 = vlaneseq
      %v2236 = vshrl.u32 %v2235, 7
      %v2237 = vsub.s32 0, %v2236
      %v2238 = vrot.slane %v2233, %v2237
      %v2240 = vadd.f32 %v2225, %v2238
      %v2241 = vadd.f32 %v2226, %v2238
      %v2242 = vadd.f32 %v2227, %v2238
      %v2243 = vadd.f32 %v2228, %v2238
      %v2244 = vadd.f32 %v2229, %v2238
      %v2245 = vadd.f32 %v2230, %v2238
      %v2246 = vadd.f32 %v2231, %v2238
      %v2247 = vadd.f32 %v2232, %v2238
      %v2248 = vld [vmem:[%s240] sm:$0xf]
      %v2249 = vld [vmem:[%s240 + $0x4] sm:$0xf]
      %v2250 = vld [vmem:[%s240 + $0x8] sm:$0xf]
      %v2251 = vld [vmem:[%s240 + $0xc] sm:$0xf]
      %v2252 = vld [vmem:[%s240 + $0x10] sm:$0xf]
      %v2253 = vld [vmem:[%s240 + $0x14] sm:$0xf]
      %v2254 = vld [vmem:[%s240 + $0x18] sm:$0xf]
      %v2255 = vld [vmem:[%s240 + $0x1c] sm:$0xf]
      %v2256 = vunpack.c.l.bf16 %v2248
      %v2257 = vunpack.c.l.bf16 %v2249
      %v2258 = vunpack.c.l.bf16 %v2250
      %v2259 = vunpack.c.l.bf16 %v2251
      %v2260 = vunpack.c.l.bf16 %v2252
      %v2261 = vunpack.c.l.bf16 %v2253
      %v2262 = vunpack.c.l.bf16 %v2254
      %v2263 = vunpack.c.l.bf16 %v2255
      %v2264 = vadd.f32 %v2240, %v2256
      %v2265 = vadd.f32 %v2241, %v2257
      %v2266 = vadd.f32 %v2242, %v2258
      %v2267 = vadd.f32 %v2243, %v2259
      %v2268 = vadd.f32 %v2244, %v2260
      %v2269 = vadd.f32 %v2245, %v2261
      %v2270 = vadd.f32 %v2246, %v2262
      %v2271 = vadd.f32 %v2247, %v2263
      %v2272 = vpack.c.bf16 %v2265, %v2264
      %v2273 = vpack.c.bf16 %v2267, %v2266
      %v2274 = vpack.c.bf16 %v2269, %v2268
      %v2275 = vpack.c.bf16 %v2271, %v2270
      %v2280 = vunpack.c.l.b16 %v2272
      %v2281 = vunpack.c.h.b16 %v2272
      %v2282 = vunpack.c.l.b16 %v2273
      %v2283 = vunpack.c.h.b16 %v2273
      %v2284 = vunpack.c.l.b16 %v2274
      %v2285 = vunpack.c.h.b16 %v2274
      %v2286 = vunpack.c.l.b16 %v2275
      %v2287 = vunpack.c.h.b16 %v2275
      %v2288 = vpack.c.b16 %v2280, %v2280
      %v2289 = vpack.c.b16 %v2281, %v2281
      %v2290 = vpack.c.b16 %v2282, %v2282
      %v2291 = vpack.c.b16 %v2283, %v2283
      %v2292 = vpack.c.b16 %v2284, %v2284
      %v2293 = vpack.c.b16 %v2285, %v2285
      %v2294 = vpack.c.b16 %v2286, %v2286
      %v2295 = vpack.c.b16 %v2287, %v2287
      %2304 = vst [vmem:[%s246] sm:$0xf] %v2288
      %2305 = vst [vmem:[%s246 + $0x4] sm:$0xf] %v2289
      %2306 = vst [vmem:[%s246 + $0x8] sm:$0xf] %v2290
      %2307 = vst [vmem:[%s246 + $0xc] sm:$0xf] %v2291
      %2308 = vst [vmem:[%s246 + $0x10] sm:$0xf] %v2292
      %2309 = vst [vmem:[%s246 + $0x14] sm:$0xf] %v2293
      %2310 = vst [vmem:[%s246 + $0x18] sm:$0xf] %v2294
      %2311 = vst [vmem:[%s246 + $0x1c] sm:$0xf] %v2295
      %s2312 = smul.u32 8, %s16
      %p2313 = scmp.lt.s32.totalorder %s2312, 15
      %s2314 = scalar_select %p2313, %s2312, 15
      %s2315 = smul.addr %s2314, 4
      %s2316 = scalar_lea.vmem %s5, %s2315
      // Predicated region
      $region41: #{network_forward.10} parent=39 // pred_check
        %p2317 = pneg %p149
      $region42: #{network_forward.10} parent=39 // pred_check_branch
        %2319 = sbr.rel (%p2317) target = $region44
      $region43: #{network_forward.10} parent=39 // pred_region
        %s2320 = smul.u32 8, %s16
      $region44: #{network_forward.10} parent=39 // pred_fallthru
        _
    $region40: #{network_forward.10} parent=5 // pred_fallthru
      _
    %p2321 = scmp.le.s32.totalorder 2, %s11
    // Predicated region
    $region45: #{network_forward.10} parent=5 // pred_check
      %p2322 = pneg %p2321
    $region46: #{network_forward.10} parent=5 // pred_check_branch
      %2324 = sbr.rel (%p2322) target = $region48
    $region47: #{network_forward.10} parent=5 // pred_region
      %s2325 = ssub.s32 %s11, 2
      // Predicated region
      $region49: #{network_forward.10} parent=47 // pred_check
        %p2326 = pneg %p155
      $region50: #{network_forward.10} parent=47 // pred_check_branch
        %2328 = sbr.rel (%p2326) target = $region52
      $region51: #{network_forward.10} parent=47 // pred_region
        %s2329 = smul.u32 8, %s17
        %p2330 = scmp.lt.s32.totalorder %s2329, 15
        %s2331 = scalar_select %p2330, %s2329, 15
        %s2332 = smul.addr %s2331, 4
        %s2333 = scalar_lea.vmem %s5, %s2332
      $region52: #{network_forward.10} parent=47 // pred_fallthru
        _
    $region48: #{network_forward.10} parent=5 // pred_fallthru
      _
  $region6: #{network_forward.10} parent=0 // loop_footer
    %s15 = sadd.s32 1, %s11
  $region7: #{network_forward.10} parent=0 // loop_footer_branch
    %10 = sbr.rel target = $region3
  $region8: #{network_forward.10} parent=0 // loop_exit
    _

// kernel: network_forward.11
$region0: #{network_forward.11}
  #allocation0 [shape = 'u32[]', space=smem, size = 0x4, offset = 0x4, fixed_abs, tag = 'smem constant byte address 0x4 - core index']
  #allocation1 [shape = 'u32[144,128]{1,0:T(1,128)}', space=vmem, size = 0x12000, scoped, tag = 'internal scratch']
  %s0 = inlined_call_operand.vmem [shape: bf16[2,10,10,128], index: 0, kind: input, shape index: {}]
  %s1 = inlined_call_operand.vmem [shape: bf16[9,128,128], index: 1, kind: input, shape index: {}]
  %s2 = inlined_call_operand.vmem [shape: f32[1,128], index: 2, kind: input, shape index: {}]
  %s3 = inlined_call_operand.vmem [shape: f32[1,128], index: 3, kind: input, shape index: {}]
  %s4 = inlined_call_operand.vmem [shape: f32[128,7], index: 4, kind: input, shape index: {}]
  %s5 = inlined_call_operand.vmem [shape: f32[1,7], index: 5, kind: input, shape index: {}]
  %s6 = inlined_call_operand.vmem [shape: f32[128,7], index: 6, kind: output, shape index: {}]
  %s7 = sld [smem:[#allocation0]]
  $region57: #{network_forward.11} parent=0
    _
  %s9 = ssub.s32 1, %s7
  %s10 = scalar_select 0, %s9, %s7
  loop: start=0, step=1, limit=4
  $region2: #{network_forward.11} parent=0 // loop_pre_header
    _
  $region3: #{network_forward.11} parent=0 // loop_header
    %s12 = sphi 0, %s16
    %p13 = scmp.ge.s32.totalorder %s12, 4
    %s22 = sphi 0, %s24
    %s25 = sphi 0, %s22
    %s26 = sphi 0, %s25
    %s42 = sphi 0, %s26
    %s46 = sphi 0, %s46
    %s48 = sphi 0, %s46
    %s49 = sphi 0, %s48
    %s63 = sphi 0, %s49
    %s67 = sphi 0, %s67
    %s69 = sphi 0, %s67
    %s70 = sphi 0, %s69
    %s84 = sphi 0, %s70
    %s88 = sphi 0, %s88
    %s90 = sphi 0, %s88
    %s91 = sphi 0, %s90
    %s105 = sphi 0, %s91
    %s109 = sphi 0, %s109
    %s111 = sphi 0, %s109
    %s112 = sphi 0, %s111
    %s126 = sphi 0, %s112
    %s130 = sphi 0, %s130
    %s132 = sphi 0, %s130
    %s133 = sphi 0, %s132
    %s147 = sphi 0, %s133
    %s153 = sphi 0, %s155
    %s156 = sphi 0, %s153
    %s157 = sphi 0, %s156
    %s173 = sphi 0, %s157
  $region4: #{network_forward.11} parent=0 // loop_header_branch
    %15 = sbr.rel (%p13) target = $region8
  $region5: #{network_forward.11} parent=0 // loop_body
    %s17 = ssub.s32 %s12, 1
    %s18 = ssub.s32 %s12, 2
    %s19 = sadd.s32 %s12, 1
    %s20 = ssub.s32 %s12, %s19
    %p21 = scmp.eq.s32.totalorder %s20, 0
    %s23 = sadd.s32 %s22, 1
    %s24 = scalar_select %p21, %s22, %s23
    %p27 = pneg %p21
    %p28 = scmp.eq.s32.totalorder %s12, 1
    %p29 = por %p27, %p28
    %p30 = scmp.ne.s32.totalorder %s22, %s25
    %p31 = scmp.eq.s32.totalorder %s12, 0
    %p32 = por %p30, %p31
    %p33 = scmp.ne.s32.totalorder %s22, %s25
    %p34 = scmp.eq.s32.totalorder %s17, 1
    %p35 = por %p33, %p34
    %p36 = scmp.ne.s32.totalorder %s25, %s26
    %p37 = scmp.eq.s32.totalorder %s17, 0
    %p38 = por %p36, %p37
    %p39 = scmp.ne.s32.totalorder %s25, %s26
    %p40 = scmp.eq.s32.totalorder %s18, 1
    %p41 = por %p39, %p40
    %p43 = scmp.ne.s32.totalorder %s26, %s42
    %p44 = scmp.eq.s32.totalorder %s18, 0
    %p45 = por %p43, %p44
    %s47 = sadd.s32 %s46, 1
    %p50 = scmp.eq.s32.totalorder %s12, 1
    %p51 = scmp.ne.s32.totalorder %s46, %s48
    %p52 = scmp.eq.s32.totalorder %s12, 0
    %p53 = por %p51, %p52
    %p54 = scmp.ne.s32.totalorder %s46, %s48
    %p55 = scmp.eq.s32.totalorder %s17, 1
    %p56 = por %p54, %p55
    %p57 = scmp.ne.s32.totalorder %s48, %s49
    %p58 = scmp.eq.s32.totalorder %s17, 0
    %p59 = por %p57, %p58
    %p60 = scmp.ne.s32.totalorder %s48, %s49
    %p61 = scmp.eq.s32.totalorder %s18, 1
    %p62 = por %p60, %p61
    %p64 = scmp.ne.s32.totalorder %s49, %s63
    %p65 = scmp.eq.s32.totalorder %s18, 0
    %p66 = por %p64, %p65
    %s68 = sadd.s32 %s67, 1
    %p71 = scmp.eq.s32.totalorder %s12, 1
    %p72 = scmp.ne.s32.totalorder %s67, %s69
    %p73 = scmp.eq.s32.totalorder %s12, 0
    %p74 = por %p72, %p73
    %p75 = scmp.ne.s32.totalorder %s67, %s69
    %p76 = scmp.eq.s32.totalorder %s17, 1
    %p77 = por %p75, %p76
    %p78 = scmp.ne.s32.totalorder %s69, %s70
    %p79 = scmp.eq.s32.totalorder %s17, 0
    %p80 = por %p78, %p79
    %p81 = scmp.ne.s32.totalorder %s69, %s70
    %p82 = scmp.eq.s32.totalorder %s18, 1
    %p83 = por %p81, %p82
    %p85 = scmp.ne.s32.totalorder %s70, %s84
    %p86 = scmp.eq.s32.totalorder %s18, 0
    %p87 = por %p85, %p86
    %s89 = sadd.s32 %s88, 1
    %p92 = scmp.eq.s32.totalorder %s12, 1
    %p93 = scmp.ne.s32.totalorder %s88, %s90
    %p94 = scmp.eq.s32.totalorder %s12, 0
    %p95 = por %p93, %p94
    %p96 = scmp.ne.s32.totalorder %s88, %s90
    %p97 = scmp.eq.s32.totalorder %s17, 1
    %p98 = por %p96, %p97
    %p99 = scmp.ne.s32.totalorder %s90, %s91
    %p100 = scmp.eq.s32.totalorder %s17, 0
    %p101 = por %p99, %p100
    %p102 = scmp.ne.s32.totalorder %s90, %s91
    %p103 = scmp.eq.s32.totalorder %s18, 1
    %p104 = por %p102, %p103
    %p106 = scmp.ne.s32.totalorder %s91, %s105
    %p107 = scmp.eq.s32.totalorder %s18, 0
    %p108 = por %p106, %p107
    %s110 = sadd.s32 %s109, 1
    %p113 = scmp.eq.s32.totalorder %s12, 1
    %p114 = scmp.ne.s32.totalorder %s109, %s111
    %p115 = scmp.eq.s32.totalorder %s12, 0
    %p116 = por %p114, %p115
    %p117 = scmp.ne.s32.totalorder %s109, %s111
    %p118 = scmp.eq.s32.totalorder %s17, 1
    %p119 = por %p117, %p118
    %p120 = scmp.ne.s32.totalorder %s111, %s112
    %p121 = scmp.eq.s32.totalorder %s17, 0
    %p122 = por %p120, %p121
    %p123 = scmp.ne.s32.totalorder %s111, %s112
    %p124 = scmp.eq.s32.totalorder %s18, 1
    %p125 = por %p123, %p124
    %p127 = scmp.ne.s32.totalorder %s112, %s126
    %p128 = scmp.eq.s32.totalorder %s18, 0
    %p129 = por %p127, %p128
    %s131 = sadd.s32 %s130, 1
    %p134 = scmp.eq.s32.totalorder %s12, 1
    %p135 = scmp.ne.s32.totalorder %s130, %s132
    %p136 = scmp.eq.s32.totalorder %s12, 0
    %p137 = por %p135, %p136
    %p138 = scmp.ne.s32.totalorder %s130, %s132
    %p139 = scmp.eq.s32.totalorder %s17, 1
    %p140 = por %p138, %p139
    %p141 = scmp.ne.s32.totalorder %s132, %s133
    %p142 = scmp.eq.s32.totalorder %s17, 0
    %p143 = por %p141, %p142
    %p144 = scmp.ne.s32.totalorder %s132, %s133
    %p145 = scmp.eq.s32.totalorder %s18, 1
    %p146 = por %p144, %p145
    %p148 = scmp.ne.s32.totalorder %s133, %s147
    %p149 = scmp.eq.s32.totalorder %s18, 0
    %p150 = por %p148, %p149
    %s151 = ssub.s32 %s12, %s19
    %p152 = scmp.eq.s32.totalorder %s151, 0
    %s154 = sadd.s32 %s153, 1
    %s155 = scalar_select %p152, %s153, %s154
    %p158 = pneg %p152
    %p159 = scmp.eq.s32.totalorder %s12, 1
    %p160 = por %p158, %p159
    %p161 = scmp.ne.s32.totalorder %s153, %s156
    %p162 = scmp.eq.s32.totalorder %s12, 0
    %p163 = por %p161, %p162
    %p164 = scmp.ne.s32.totalorder %s153, %s156
    %p165 = scmp.eq.s32.totalorder %s17, 1
    %p166 = por %p164, %p165
    %p167 = scmp.ne.s32.totalorder %s156, %s157
    %p168 = scmp.eq.s32.totalorder %s17, 0
    %p169 = por %p167, %p168
    %p170 = scmp.ne.s32.totalorder %s156, %s157
    %p171 = scmp.eq.s32.totalorder %s18, 1
    %p172 = por %p170, %p171
    %p174 = scmp.ne.s32.totalorder %s157, %s173
    %p175 = scmp.eq.s32.totalorder %s18, 0
    %p176 = por %p174, %p175
    %p177 = scmp.le.s32.totalorder 1, %s12
    %p178 = scmp.lt.s32.totalorder %s12, 3
    %p179 = pnand %p177, %p178
    %p180 = pneg %p179
    // Predicated region
    $region9: #{network_forward.11} parent=5 // pred_check
      _
    $region10: #{network_forward.11} parent=5 // pred_check_branch
      %182 = sbr.rel (%p179) target = $region12
    $region11: #{network_forward.11} parent=5 // pred_region
      %s183 = ssub.s32 %s12, 1
      // Predicated region
      $region13: #{network_forward.11} parent=11 // pred_check
        %p184 = pneg %p59
      $region14: #{network_forward.11} parent=11 // pred_check_branch
        %186 = sbr.rel (%p184) target = $region16
      $region15: #{network_forward.11} parent=11 // pred_region
        _
      $region16: #{network_forward.11} parent=11 // pred_fallthru
        _
      // Predicated region
      $region17: #{network_forward.11} parent=11 // pred_check
        %p187 = pneg %p80
      $region18: #{network_forward.11} parent=11 // pred_check_branch
        %189 = sbr.rel (%p187) target = $region20
      $region19: #{network_forward.11} parent=11 // pred_region
        _
      $region20: #{network_forward.11} parent=11 // pred_fallthru
        _
      // Predicated region
      $region21: #{network_forward.11} parent=11 // pred_check
        %p190 = pneg %p101
      $region22: #{network_forward.11} parent=11 // pred_check_branch
        %192 = sbr.rel (%p190) target = $region24
      $region23: #{network_forward.11} parent=11 // pred_region
        _
      $region24: #{network_forward.11} parent=11 // pred_fallthru
        _
      // Predicated region
      $region25: #{network_forward.11} parent=11 // pred_check
        %p193 = pneg %p122
      $region26: #{network_forward.11} parent=11 // pred_check_branch
        %195 = sbr.rel (%p193) target = $region28
      $region27: #{network_forward.11} parent=11 // pred_region
        _
      $region28: #{network_forward.11} parent=11 // pred_fallthru
        _
      // Predicated region
      $region29: #{network_forward.11} parent=11 // pred_check
        %p196 = pneg %p143
      $region30: #{network_forward.11} parent=11 // pred_check_branch
        %198 = sbr.rel (%p196) target = $region32
      $region31: #{network_forward.11} parent=11 // pred_region
        _
      $region32: #{network_forward.11} parent=11 // pred_fallthru
        _
    $region12: #{network_forward.11} parent=5 // pred_fallthru
      _
    %p199 = scmp.lt.s32.totalorder %s12, 2
    // Predicated region
    $region33: #{network_forward.11} parent=5 // pred_check
      %p200 = pneg %p199
    $region34: #{network_forward.11} parent=5 // pred_check_branch
      %202 = sbr.rel (%p200) target = $region36
    $region35: #{network_forward.11} parent=5 // pred_region
      // Predicated region
      $region37: #{network_forward.11} parent=35 // pred_check
        %p203 = pneg %p32
      $region38: #{network_forward.11} parent=35 // pred_check_branch
        %205 = sbr.rel (%p203) target = $region40
      $region39: #{network_forward.11} parent=35 // pred_region
        %p206 = scmp.lt.s32.totalorder %s12, 1
        %s207 = scalar_select %p206, %s12, 1
        %s208 = smul.addr %s207, 20
        %s209 = smul.addr %s208, 4
        %s210 = scalar_lea.vmem %s0, %s209
      $region40: #{network_forward.11} parent=35 // pred_fallthru
        _
    $region36: #{network_forward.11} parent=5 // pred_fallthru
      _
    %p211 = scmp.le.s32.totalorder 1, %s12
    %p212 = scmp.lt.s32.totalorder %s12, 3
    %p213 = pnand %p211, %p212
    %p214 = pneg %p213
    // Predicated region
    $region41: #{network_forward.11} parent=5 // pred_check
      _
    $region42: #{network_forward.11} parent=5 // pred_check_branch
      %216 = sbr.rel (%p213) target = $region44
    $region43: #{network_forward.11} parent=5 // pred_region
      %s217 = ssub.s32 %s12, 1
      %p218 = scmp.lt.s32.totalorder %s17, 1
      %s219 = scalar_select %p218, %s17, 1
      %s220 = smul.addr %s219, 20
      %s221 = smul.addr %s220, 4
      %s222 = scalar_lea.vmem %s0, %s221
      %p223 = pneg %p38
      %p224 = pneg %p35
      %p225 = pneg %p59
      %p226 = pneg %p56
      %p227 = pneg %p80
      %p228 = pneg %p77
      %p229 = pneg %p101
      %p230 = pneg %p98
      %p231 = pneg %p122
      %p232 = pneg %p119
      %p233 = pneg %p143
      %p234 = pneg %p140
      %p235 = pneg %p169
      %p236 = pneg %p166
      %s237 = smul.u32 8, %s17
      %p238 = scmp.lt.s32.totalorder %s237, 15
      %s239 = scalar_select %p238, %s237, 15
      %s240 = smul.addr %s239, 8
      %s241 = scalar_lea.vmem %s6, %s240
      %p242 = scmp.lt.s32.totalorder %s17, 1
      %s243 = scalar_select %p242, %s17, 1
      %s244 = smul.addr %s243, 20
      %s245 = smul.addr %s244, 4
      %s246 = scalar_lea.vmem %s0, %s245
      %s247 = smul.u32 8, %s17
      %p248 = scmp.lt.s32.totalorder %s247, 15
      %s249 = scalar_select %p248, %s247, 15
      %s250 = smul.addr %s249, 8
      %s251 = scalar_lea.vmem %s6, %s250
      %s252 = smul.u32 8, %s17
      %v254 = vld [vmem:[%s246] sm:$0xf]
      %v255 = vld [vmem:[%s246 + $0x8] sm:$0xf]
      %v256 = vld [vmem:[%s246 + $0x10] sm:$0xf]
      %v257 = vld [vmem:[%s246 + $0x18] sm:$0xf]
      %v258 = vld [vmem:[%s246 + $0x20] sm:$0xf]
      %v259 = vld [vmem:[%s246 + $0x28] sm:$0xf]
      %v260 = vld [vmem:[%s246 + $0x30] sm:$0xf]
      %v261 = vld [vmem:[%s246 + $0x38] sm:$0xf]
      %v262 = vld [vmem:[%s1] sm:$0xf]
      %v263 = vld [vmem:[%s1 + $0x4] sm:$0xf]
      %v264 = vld [vmem:[%s1 + $0x8] sm:$0xf]
      %v265 = vld [vmem:[%s1 + $0xc] sm:$0xf]
      %v266 = vld [vmem:[%s1 + $0x10] sm:$0xf]
      %v267 = vld [vmem:[%s1 + $0x14] sm:$0xf]
      %v268 = vld [vmem:[%s1 + $0x18] sm:$0xf]
      %v269 = vld [vmem:[%s1 + $0x1c] sm:$0xf]
      %v270 = vld [vmem:[%s1 + $0x20] sm:$0xf]
      %v271 = vld [vmem:[%s1 + $0x24] sm:$0xf]
      %v272 = vld [vmem:[%s1 + $0x28] sm:$0xf]
      %v273 = vld [vmem:[%s1 + $0x2c] sm:$0xf]
      %v274 = vld [vmem:[%s1 + $0x30] sm:$0xf]
      %v275 = vld [vmem:[%s1 + $0x34] sm:$0xf]
      %v276 = vld [vmem:[%s1 + $0x38] sm:$0xf]
      %v277 = vld [vmem:[%s1 + $0x3c] sm:$0xf]
      %v278 = vld [vmem:[%s246 + $0x4] sm:$0x1]
      %v279 = vld [vmem:[%s246 + $0xc] sm:$0x1]
      %v280 = vld [vmem:[%s246 + $0x14] sm:$0x1]
      %v281 = vld [vmem:[%s246 + $0x1c] sm:$0x1]
      %v282 = vld [vmem:[%s246 + $0x24] sm:$0x1]
      %v283 = vld [vmem:[%s246 + $0x2c] sm:$0x1]
      %v284 = vld [vmem:[%s246 + $0x34] sm:$0x1]
      %v285 = vld [vmem:[%s246 + $0x3c] sm:$0x1]
      %vm286 = vsmask.f32 3328
      %vm287 = vsmask.f32 7440
      %vm288 = vmor %vm286, %vm287
      %v290 = vshrl.u32 %v254, 16
      %v292 = vrot.slane %v290, 4
      %v293 = vshll.u32 %v254, 16
      %v295 = vrot.slane %v293, 5
      %v296 = vor.u32 %v292, %v295
      %v297 = vrot.slane %v296, 4
      %v299 = vshll.u32 %v278, 16
      %v301 = vrot.slane %v299, 5
      %v302 = vsel %vm288, %v297, %v301
      %v304 = vshrl.u32 %v255, 16
      %v306 = vrot.slane %v304, 4
      %v307 = vshll.u32 %v255, 16
      %v309 = vrot.slane %v307, 5
      %v310 = vor.u32 %v306, %v309
      %v311 = vrot.slane %v310, 4
      %v313 = vshll.u32 %v279, 16
      %v315 = vrot.slane %v313, 5
      %v316 = vsel %vm288, %v311, %v315
      %v318 = vshrl.u32 %v256, 16
      %v320 = vrot.slane %v318, 4
      %v321 = vshll.u32 %v256, 16
      %v323 = vrot.slane %v321, 5
      %v324 = vor.u32 %v320, %v323
      %v325 = vrot.slane %v324, 4
      %v327 = vshll.u32 %v280, 16
      %v329 = vrot.slane %v327, 5
      %v330 = vsel %vm288, %v325, %v329
      %v332 = vshrl.u32 %v257, 16
      %v334 = vrot.slane %v332, 4
      %v335 = vshll.u32 %v257, 16
      %v337 = vrot.slane %v335, 5
      %v338 = vor.u32 %v334, %v337
      %v339 = vrot.slane %v338, 4
      %v341 = vshll.u32 %v281, 16
      %v343 = vrot.slane %v341, 5
      %v344 = vsel %vm288, %v339, %v343
      %v346 = vshrl.u32 %v258, 16
      %v348 = vrot.slane %v346, 4
      %v349 = vshll.u32 %v258, 16
      %v351 = vrot.slane %v349, 5
      %v352 = vor.u32 %v348, %v351
      %v353 = vrot.slane %v352, 4
      %v355 = vshll.u32 %v282, 16
      %v357 = vrot.slane %v355, 5
      %v358 = vsel %vm288, %v353, %v357
      %v360 = vshrl.u32 %v259, 16
      %v362 = vrot.slane %v360, 4
      %v363 = vshll.u32 %v259, 16
      %v365 = vrot.slane %v363, 5
      %v366 = vor.u32 %v362, %v365
      %v367 = vrot.slane %v366, 4
      %v369 = vshll.u32 %v283, 16
      %v371 = vrot.slane %v369, 5
      %v372 = vsel %vm288, %v367, %v371
      %v374 = vshrl.u32 %v260, 16
      %v376 = vrot.slane %v374, 4
      %v377 = vshll.u32 %v260, 16
      %v379 = vrot.slane %v377, 5
      %v380 = vor.u32 %v376, %v379
      %v381 = vrot.slane %v380, 4
      %v383 = vshll.u32 %v284, 16
      %v385 = vrot.slane %v383, 5
      %v386 = vsel %vm288, %v381, %v385
      %v388 = vshrl.u32 %v261, 16
      %v390 = vrot.slane %v388, 4
      %v391 = vshll.u32 %v261, 16
      %v393 = vrot.slane %v391, 5
      %v394 = vor.u32 %v390, %v393
      %v395 = vrot.slane %v394, 4
      %v397 = vshll.u32 %v285, 16
      %v399 = vrot.slane %v397, 5
      %v400 = vsel %vm288, %v395, %v399
      %s401 = scalar_lea.vmem %s1, 64
      %v402 = vld [vmem:[%s401] sm:$0xf]
      %v403 = vld [vmem:[%s401 + $0x4] sm:$0xf]
      %v404 = vld [vmem:[%s401 + $0x8] sm:$0xf]
      %v405 = vld [vmem:[%s401 + $0xc] sm:$0xf]
      %v406 = vld [vmem:[%s401 + $0x10] sm:$0xf]
      %v407 = vld [vmem:[%s401 + $0x14] sm:$0xf]
      %v408 = vld [vmem:[%s401 + $0x18] sm:$0xf]
      %v409 = vld [vmem:[%s401 + $0x1c] sm:$0xf]
      %v410 = vld [vmem:[%s401 + $0x20] sm:$0xf]
      %v411 = vld [vmem:[%s401 + $0x24] sm:$0xf]
      %v412 = vld [vmem:[%s401 + $0x28] sm:$0xf]
      %v413 = vld [vmem:[%s401 + $0x2c] sm:$0xf]
      %v414 = vld [vmem:[%s401 + $0x30] sm:$0xf]
      %v415 = vld [vmem:[%s401 + $0x34] sm:$0xf]
      %v416 = vld [vmem:[%s401 + $0x38] sm:$0xf]
      %v417 = vld [vmem:[%s401 + $0x3c] sm:$0xf]
      %v418 = vunpack.c.l.b16 %v302
      %v419 = vunpack.c.l.b16 %v316
      %v420 = vunpack.c.l.b16 %v330
      %v421 = vunpack.c.l.b16 %v344
      %v422 = vunpack.c.l.b16 %v358
      %v423 = vunpack.c.l.b16 %v372
      %v424 = vunpack.c.l.b16 %v386
      %v425 = vunpack.c.l.b16 %v400
      %v426 = vpack.c.b16 %v419, %v418
      %v427 = vpack.c.b16 %v421, %v420
      %v428 = vpack.c.b16 %v423, %v422
      %v429 = vpack.c.b16 %v425, %v424
      %v450 = vunpack.c.l.b16 %v402
      %v451 = vunpack.c.l.b16 %v403
      %v452 = vunpack.c.l.b16 %v404
      %v453 = vunpack.c.l.b16 %v405
      %v454 = vunpack.c.l.b16 %v406
      %v455 = vunpack.c.l.b16 %v407
      %v456 = vunpack.c.l.b16 %v408
      %v457 = vunpack.c.l.b16 %v409
      %v458 = vunpack.c.l.b16 %v410
      %v459 = vunpack.c.l.b16 %v411
      %v460 = vunpack.c.l.b16 %v412
      %v461 = vunpack.c.l.b16 %v413
      %v462 = vunpack.c.l.b16 %v414
      %v463 = vunpack.c.l.b16 %v415
      %v464 = vunpack.c.l.b16 %v416
      %v465 = vunpack.c.l.b16 %v417
      %v466 = vpack.c.b16 %v451, %v450
      %v467 = vpack.c.b16 %v453, %v452
      %v468 = vpack.c.b16 %v455, %v454
      %v469 = vpack.c.b16 %v457, %v456
      %v470 = vpack.c.b16 %v459, %v458
      %v471 = vpack.c.b16 %v461, %v460
      %v472 = vpack.c.b16 %v463, %v462
      %v473 = vpack.c.b16 %v465, %v464
      %482 = vmatprep.subr.bf16.mxu0 0
      %483 = vmatpush1.bf16.msra.mxu0 %v466
      %484 = vmatprep.subr.bf16.mxu0 0
      %485 = vmatpush1.bf16.msra.mxu0 %v467
      %486 = vmatprep.subr.bf16.mxu0 0
      %487 = vmatpush1.bf16.msra.mxu0 %v468
      %488 = vmatprep.subr.bf16.mxu0 0
      %489 = vmatpush1.bf16.msra.mxu0 %v469
      %490 = vmatprep.subr.bf16.mxu0 0
      %491 = vmatpush1.bf16.msra.mxu0 %v470
      %492 = vmatprep.subr.bf16.mxu0 0
      %493 = vmatpush1.bf16.msra.mxu0 %v471
      %494 = vmatprep.subr.bf16.mxu0 0
      %495 = vmatpush1.bf16.msra.mxu0 %v472
      %496 = vmatprep.subr.bf16.mxu0 0
      %497 = vmatpush1.bf16.msra.mxu0 %v473
      %498 = vmatprep.subr.bf16.mxu0 0
      %499 = vmatpush1.bf16.msra.mxu0 0
      %500 = vmatprep.subr.bf16.mxu0 0
      %501 = vmatpush1.bf16.msra.mxu0 0
      %502 = vmatprep.subr.bf16.mxu0 0
      %503 = vmatpush1.bf16.msra.mxu0 0
      %504 = vmatprep.subr.bf16.mxu0 0
      %505 = vmatpush1.bf16.msra.mxu0 0
      %506 = vmatprep.subr.bf16.mxu0 0
      %507 = vmatpush1.bf16.msra.mxu0 0
      %508 = vmatprep.subr.bf16.mxu0 0
      %509 = vmatpush1.bf16.msra.mxu0 0
      %510 = vmatprep.subr.bf16.mxu0 0
      %511 = vmatpush1.bf16.msra.mxu0 0
      %512 = vmatprep.subr.bf16.mxu0 0
      %513 = vmatpush1.bf16.msra.mxu0 0
      %514 = vmatprep.mubr.bf16.mxu0 0
      %515 = vmatmul.mubr.bf16.gmra.mrb[0].mxu0 %v426
      %v516 = vpop.f32.mrb[0].mxu0
      %v517 = vadd.f32 0.0, %v516
      %v518 = vpop.f32.mrb[0].mxu0
      %v519 = vpop.f32.mrb[0].mxu0
      %v520 = vadd.f32 0.0, %v519
      %v521 = vpop.f32.mrb[0].mxu0
      %522 = vmatprep.mubr.bf16.mxu0 0
      %523 = vmatmul.mubr.bf16.gmra.mrb[0].mxu0 %v427
      %v524 = vpop.f32.mrb[0].mxu0
      %v525 = vadd.f32 0.0, %v524
      %v526 = vpop.f32.mrb[0].mxu0
      %v527 = vpop.f32.mrb[0].mxu0
      %v528 = vadd.f32 0.0, %v527
      %v529 = vpop.f32.mrb[0].mxu0
      %530 = vmatprep.mubr.bf16.mxu0 0
      %531 = vmatmul.mubr.bf16.gmra.mrb[0].mxu0 %v428
      %v532 = vpop.f32.mrb[0].mxu0
      %v533 = vadd.f32 0.0, %v532
      %v534 = vpop.f32.mrb[0].mxu0
      %v535 = vpop.f32.mrb[0].mxu0
      %v536 = vadd.f32 0.0, %v535
      %v537 = vpop.f32.mrb[0].mxu0
      %538 = vmatprep.mubr.bf16.mxu0 0
      %539 = vmatmul.mubr.bf16.gmra.mrb[0].mxu0 %v429
      %v540 = vpop.f32.mrb[0].mxu0
      %v541 = vadd.f32 0.0, %v540
      %v542 = vpop.f32.mrb[0].mxu0
      %v543 = vpop.f32.mrb[0].mxu0
      %v544 = vadd.f32 0.0, %v543
      %v545 = vpop.f32.mrb[0].mxu0
      %546 = vdwg.mxu0
      %v555 = vunpack.c.l.b16 %v254
      %v556 = vunpack.c.l.b16 %v255
      %v557 = vunpack.c.l.b16 %v256
      %v558 = vunpack.c.l.b16 %v257
      %v559 = vunpack.c.l.b16 %v258
      %v560 = vunpack.c.l.b16 %v259
      %v561 = vunpack.c.l.b16 %v260
      %v562 = vunpack.c.l.b16 %v261
      %v563 = vpack.c.b16 %v556, %v555
      %v564 = vpack.c.b16 %v558, %v557
      %v565 = vpack.c.b16 %v560, %v559
      %v566 = vpack.c.b16 %v562, %v561
      %v587 = vunpack.c.l.b16 %v262
      %v588 = vunpack.c.l.b16 %v263
      %v589 = vunpack.c.l.b16 %v264
      %v590 = vunpack.c.l.b16 %v265
      %v591 = vunpack.c.l.b16 %v266
      %v592 = vunpack.c.l.b16 %v267
      %v593 = vunpack.c.l.b16 %v268
      %v594 = vunpack.c.l.b16 %v269
      %v595 = vunpack.c.l.b16 %v270
      %v596 = vunpack.c.l.b16 %v271
      %v597 = vunpack.c.l.b16 %v272
      %v598 = vunpack.c.l.b16 %v273
      %v599 = vunpack.c.l.b16 %v274
      %v600 = vunpack.c.l.b16 %v275
      %v601 = vunpack.c.l.b16 %v276
      %v602 = vunpack.c.l.b16 %v277
      %v603 = vpack.c.b16 %v588, %v587
      %v604 = vpack.c.b16 %v590, %v589
      %v605 = vpack.c.b16 %v592, %v591
      %v606 = vpack.c.b16 %v594, %v593
      %v607 = vpack.c.b16 %v596, %v595
      %v608 = vpack.c.b16 %v598, %v597
      %v609 = vpack.c.b16 %v600, %v599
      %v610 = vpack.c.b16 %v602, %v601
      %619 = vmatprep.subr.bf16.mxu0 0
      %620 = vmatpush1.bf16.msra.mxu0 %v603
      %621 = vmatprep.subr.bf16.mxu0 0
      %622 = vmatpush1.bf16.msra.mxu0 %v604
      %623 = vmatprep.subr.bf16.mxu0 0
      %624 = vmatpush1.bf16.msra.mxu0 %v605
      %625 = vmatprep.subr.bf16.mxu0 0
      %626 = vmatpush1.bf16.msra.mxu0 %v606
      %627 = vmatprep.subr.bf16.mxu0 0
      %628 = vmatpush1.bf16.msra.mxu0 %v607
      %629 = vmatprep.subr.bf16.mxu0 0
      %630 = vmatpush1.bf16.msra.mxu0 %v608
      %631 = vmatprep.subr.bf16.mxu0 0
      %632 = vmatpush1.bf16.msra.mxu0 %v609
      %633 = vmatprep.subr.bf16.mxu0 0
      %634 = vmatpush1.bf16.msra.mxu0 %v610
      %635 = vmatprep.subr.bf16.mxu0 0
      %636 = vmatpush1.bf16.msra.mxu0 0
      %637 = vmatprep.subr.bf16.mxu0 0
      %638 = vmatpush1.bf16.msra.mxu0 0
      %639 = vmatprep.subr.bf16.mxu0 0
      %640 = vmatpush1.bf16.msra.mxu0 0
      %641 = vmatprep.subr.bf16.mxu0 0
      %642 = vmatpush1.bf16.msra.mxu0 0
      %643 = vmatprep.subr.bf16.mxu0 0
      %644 = vmatpush1.bf16.msra.mxu0 0
      %645 = vmatprep.subr.bf16.mxu0 0
      %646 = vmatpush1.bf16.msra.mxu0 0
      %647 = vmatprep.subr.bf16.mxu0 0
      %648 = vmatpush1.bf16.msra.mxu0 0
      %649 = vmatprep.subr.bf16.mxu0 0
      %650 = vmatpush1.bf16.msra.mxu0 0
      %651 = vmatprep.mubr.bf16.mxu0 0
      %652 = vmatmul.mubr.bf16.gmra.mrb[0].mxu0 %v563
      %v653 = vpop.f32.mrb[0].mxu0
      %v654 = vadd.f32 %v517, %v653
      %v655 = vpop.f32.mrb[0].mxu0
      %v656 = vpop.f32.mrb[0].mxu0
      %v657 = vadd.f32 %v520, %v656
      %v658 = vpop.f32.mrb[0].mxu0
      %659 = vmatprep.mubr.bf16.mxu0 0
      %660 = vmatmul.mubr.bf16.gmra.mrb[0].mxu0 %v564
      %v661 = vpop.f32.mrb[0].mxu0
      %v662 = vadd.f32 %v525, %v661
      %v663 = vpop.f32.mrb[0].mxu0
      %v664 = vpop.f32.mrb[0].mxu0
      %v665 = vadd.f32 %v528, %v664
      %v666 = vpop.f32.mrb[0].mxu0
      %667 = vmatprep.mubr.bf16.mxu0 0
      %668 = vmatmul.mubr.bf16.gmra.mrb[0].mxu0 %v565
      %v669 = vpop.f32.mrb[0].mxu0
      %v670 = vadd.f32 %v533, %v669
      %v671 = vpop.f32.mrb[0].mxu0
      %v672 = vpop.f32.mrb[0].mxu0
      %v673 = vadd.f32 %v536, %v672
      %v674 = vpop.f32.mrb[0].mxu0
      %675 = vmatprep.mubr.bf16.mxu0 0
      %676 = vmatmul.mubr.bf16.gmra.mrb[0].mxu0 %v566
      %v677 = vpop.f32.mrb[0].mxu0
      %v678 = vadd.f32 %v541, %v677
      %v679 = vpop.f32.mrb[0].mxu0
      %v680 = vpop.f32.mrb[0].mxu0
      %v681 = vadd.f32 %v544, %v680
      %v682 = vpop.f32.mrb[0].mxu0
      %683 = vdwg.mxu0
      %v684 = vld [vmem:[%s246] sm:$0xe]
      %v685 = vld [vmem:[%s246 + $0x8] sm:$0xe]
      %v686 = vld [vmem:[%s246 + $0x10] sm:$0xe]
      %v687 = vld [vmem:[%s246 + $0x18] sm:$0xe]
      %v688 = vld [vmem:[%s246 + $0x20] sm:$0xe]
      %v689 = vld [vmem:[%s246 + $0x28] sm:$0xe]
      %v690 = vld [vmem:[%s246 + $0x30] sm:$0xe]
      %v691 = vld [vmem:[%s246 + $0x38] sm:$0xe]
      %vm708 = vcmask 1042432
      %vm709 = vcmask 1046532
      %vm710 = vmor %vm708, %vm709
      %v711 = vrot.slane %v684, 5
      %v712 = vrot.slane %v711, 4
      %v713 = vrot.slane %v278, 5
      %v714 = vsel %vm710, %v712, %v713
      %v715 = vrot.slane %v685, 5
      %v716 = vrot.slane %v715, 4
      %v717 = vrot.slane %v279, 5
      %v718 = vsel %vm710, %v716, %v717
      %v719 = vrot.slane %v686, 5
      %v720 = vrot.slane %v719, 4
      %v721 = vrot.slane %v280, 5
      %v722 = vsel %vm710, %v720, %v721
      %v723 = vrot.slane %v687, 5
      %v724 = vrot.slane %v723, 4
      %v725 = vrot.slane %v281, 5
      %v726 = vsel %vm710, %v724, %v725
      %v727 = vrot.slane %v688, 5
      %v728 = vrot.slane %v727, 4
      %v729 = vrot.slane %v282, 5
      %v730 = vsel %vm710, %v728, %v729
      %v731 = vrot.slane %v689, 5
      %v732 = vrot.slane %v731, 4
      %v733 = vrot.slane %v283, 5
      %v734 = vsel %vm710, %v732, %v733
      %v735 = vrot.slane %v690, 5
      %v736 = vrot.slane %v735, 4
      %v737 = vrot.slane %v284, 5
      %v738 = vsel %vm710, %v736, %v737
      %v739 = vrot.slane %v691, 5
      %v740 = vrot.slane %v739, 4
      %v741 = vrot.slane %v285, 5
      %v742 = vsel %vm710, %v740, %v741
      %s743 = scalar_lea.vmem %s1, 128
      %v744 = vld [vmem:[%s743] sm:$0xf]
      %v745 = vld [vmem:[%s743 + $0x4] sm:$0xf]
      %v746 = vld [vmem:[%s743 + $0x8] sm:$0xf]
      %v747 = vld [vmem:[%s743 + $0xc] sm:$0xf]
      %v748 = vld [vmem:[%s743 + $0x10] sm:$0xf]
      %v749 = vld [vmem:[%s743 + $0x14] sm:$0xf]
      %v750 = vld [vmem:[%s743 + $0x18] sm:$0xf]
      %v751 = vld [vmem:[%s743 + $0x1c] sm:$0xf]
      %v752 = vld [vmem:[%s743 + $0x20] sm:$0xf]
      %v753 = vld [vmem:[%s743 + $0x24] sm:$0xf]
      %v754 = vld [vmem:[%s743 + $0x28] sm:$0xf]
      %v755 = vld [vmem:[%s743 + $0x2c] sm:$0xf]
      %v756 = vld [vmem:[%s743 + $0x30] sm:$0xf]
      %v757 = vld [vmem:[%s743 + $0x34] sm:$0xf]
      %v758 = vld [vmem:[%s743 + $0x38] sm:$0xf]
      %v759 = vld [vmem:[%s743 + $0x3c] sm:$0xf]
      %v760 = vunpack.c.l.b16 %v714
      %v761 = vunpack.c.l.b16 %v718
      %v762 = vunpack.c.l.b16 %v722
      %v763 = vunpack.c.l.b16 %v726
      %v764 = vunpack.c.l.b16 %v730
      %v765 = vunpack.c.l.b16 %v734
      %v766 = vunpack.c.l.b16 %v738
      %v767 = vunpack.c.l.b16 %v742
      %v768 = vpack.c.b16 %v761, %v760
      %v769 = vpack.c.b16 %v763, %v762
      %v770 = vpack.c.b16 %v765, %v764
      %v771 = vpack.c.b16 %v767, %v766
      %v792 = vunpack.c.l.b16 %v744
      %v793 = vunpack.c.l.b16 %v745
      %v794 = vunpack.c.l.b16 %v746
      %v795 = vunpack.c.l.b16 %v747
      %v796 = vunpack.c.l.b16 %v748
      %v797 = vunpack.c.l.b16 %v749
      %v798 = vunpack.c.l.b16 %v750
      %v799 = vunpack.c.l.b16 %v751
      %v800 = vunpack.c.l.b16 %v752
      %v801 = vunpack.c.l.b16 %v753
      %v802 = vunpack.c.l.b16 %v754
      %v803 = vunpack.c.l.b16 %v755
      %v804 = vunpack.c.l.b16 %v756
      %v805 = vunpack.c.l.b16 %v757
      %v806 = vunpack.c.l.b16 %v758
      %v807 = vunpack.c.l.b16 %v759
      %v808 = vpack.c.b16 %v793, %v792
      %v809 = vpack.c.b16 %v795, %v794
      %v810 = vpack.c.b16 %v797, %v796
      %v811 = vpack.c.b16 %v799, %v798
      %v812 = vpack.c.b16 %v801, %v800
      %v813 = vpack.c.b16 %v803, %v802
      %v814 = vpack.c.b16 %v805, %v804
      %v815 = vpack.c.b16 %v807, %v806
      %824 = vmatprep.subr.bf16.mxu0 0
      %825 = vmatpush1.bf16.msra.mxu0 %v808
      %826 = vmatprep.subr.bf16.mxu0 0
      %827 = vmatpush1.bf16.msra.mxu0 %v809
      %828 = vmatprep.subr.bf16.mxu0 0
      %829 = vmatpush1.bf16.msra.mxu0 %v810
      %830 = vmatprep.subr.bf16.mxu0 0
      %831 = vmatpush1.bf16.msra.mxu0 %v811
      %832 = vmatprep.subr.bf16.mxu0 0
      %833 = vmatpush1.bf16.msra.mxu0 %v812
      %834 = vmatprep.subr.bf16.mxu0 0
      %835 = vmatpush1.bf16.msra.mxu0 %v813
      %836 = vmatprep.subr.bf16.mxu0 0
      %837 = vmatpush1.bf16.msra.mxu0 %v814
      %838 = vmatprep.subr.bf16.mxu0 0
      %839 = vmatpush1.bf16.msra.mxu0 %v815
      %840 = vmatprep.subr.bf16.mxu0 0
      %841 = vmatpush1.bf16.msra.mxu0 0
      %842 = vmatprep.subr.bf16.mxu0 0
      %843 = vmatpush1.bf16.msra.mxu0 0
      %844 = vmatprep.subr.bf16.mxu0 0
      %845 = vmatpush1.bf16.msra.mxu0 0
      %846 = vmatprep.subr.bf16.mxu0 0
      %847 = vmatpush1.bf16.msra.mxu0 0
      %848 = vmatprep.subr.bf16.mxu0 0
      %849 = vmatpush1.bf16.msra.mxu0 0
      %850 = vmatprep.subr.bf16.mxu0 0
      %851 = vmatpush1.bf16.msra.mxu0 0
      %852 = vmatprep.subr.bf16.mxu0 0
      %853 = vmatpush1.bf16.msra.mxu0 0
      %854 = vmatprep.subr.bf16.mxu0 0
      %855 = vmatpush1.bf16.msra.mxu0 0
      %856 = vmatprep.mubr.bf16.mxu0 0
      %857 = vmatmul.mubr.bf16.gmra.mrb[0].mxu0 %v768
      %v858 = vpop.f32.mrb[0].mxu0
      %v859 = vadd.f32 0.0, %v858
      %v860 = vpop.f32.mrb[0].mxu0
      %v861 = vpop.f32.mrb[0].mxu0
      %v862 = vadd.f32 0.0, %v861
      %v863 = vpop.f32.mrb[0].mxu0
      %864 = vmatprep.mubr.bf16.mxu0 0
      %865 = vmatmul.mubr.bf16.gmra.mrb[0].mxu0 %v769
      %v866 = vpop.f32.mrb[0].mxu0
      %v867 = vadd.f32 0.0, %v866
      %v868 = vpop.f32.mrb[0].mxu0
      %v869 = vpop.f32.mrb[0].mxu0
      %v870 = vadd.f32 0.0, %v869
      %v871 = vpop.f32.mrb[0].mxu0
      %872 = vmatprep.mubr.bf16.mxu0 0
      %873 = vmatmul.mubr.bf16.gmra.mrb[0].mxu0 %v770
      %v874 = vpop.f32.mrb[0].mxu0
      %v875 = vadd.f32 0.0, %v874
      %v876 = vpop.f32.mrb[0].mxu0
      %v877 = vpop.f32.mrb[0].mxu0
      %v878 = vadd.f32 0.0, %v877
      %v879 = vpop.f32.mrb[0].mxu0
      %880 = vmatprep.mubr.bf16.mxu0 0
      %881 = vmatmul.mubr.bf16.gmra.mrb[0].mxu0 %v771
      %v882 = vpop.f32.mrb[0].mxu0
      %v883 = vadd.f32 0.0, %v882
      %v884 = vpop.f32.mrb[0].mxu0
      %v885 = vpop.f32.mrb[0].mxu0
      %v886 = vadd.f32 0.0, %v885
      %v887 = vpop.f32.mrb[0].mxu0
      %888 = vdwg.mxu0
      %v889 = vadd.f32 %v654, %v859
      %v890 = vadd.f32 %v657, %v862
      %v891 = vadd.f32 %v662, %v867
      %v892 = vadd.f32 %v665, %v870
      %v893 = vadd.f32 %v670, %v875
      %v894 = vadd.f32 %v673, %v878
      %v895 = vadd.f32 %v678, %v883
      %v896 = vadd.f32 %v681, %v886
      %s897 = scalar_lea.vmem %s246, 8
      %v898 = vld [vmem:[%s897] sm:$0xf]
      %v899 = vld [vmem:[%s897 + $0x8] sm:$0xf]
      %v900 = vld [vmem:[%s897 + $0x10] sm:$0xf]
      %v901 = vld [vmem:[%s897 + $0x18] sm:$0xf]
      %v902 = vld [vmem:[%s897 + $0x20] sm:$0xf]
      %v903 = vld [vmem:[%s897 + $0x28] sm:$0xf]
      %v904 = vld [vmem:[%s897 + $0x30] sm:$0xf]
      %v905 = vld [vmem:[%s897 + $0x38] sm:$0xf]
      %s906 = scalar_lea.vmem %s1, 192
      %v907 = vld [vmem:[%s906] sm:$0xf]
      %v908 = vld [vmem:[%s906 + $0x4] sm:$0xf]
      %v909 = vld [vmem:[%s906 + $0x8] sm:$0xf]
      %v910 = vld [vmem:[%s906 + $0xc] sm:$0xf]
      %v911 = vld [vmem:[%s906 + $0x10] sm:$0xf]
      %v912 = vld [vmem:[%s906 + $0x14] sm:$0xf]
      %v913 = vld [vmem:[%s906 + $0x18] sm:$0xf]
      %v914 = vld [vmem:[%s906 + $0x1c] sm:$0xf]
      %v915 = vld [vmem:[%s906 + $0x20] sm:$0xf]
      %v916 = vld [vmem:[%s906 + $0x24] sm:$0xf]
      %v917 = vld [vmem:[%s906 + $0x28] sm:$0xf]
      %v918 = vld [vmem:[%s906 + $0x2c] sm:$0xf]
      %v919 = vld [vmem:[%s906 + $0x30] sm:$0xf]
      %v920 = vld [vmem:[%s906 + $0x34] sm:$0xf]
      %v921 = vld [vmem:[%s906 + $0x38] sm:$0xf]
      %v922 = vld [vmem:[%s906 + $0x3c] sm:$0xf]
      %v931 = vunpack.c.l.b16 %v898
      %v932 = vunpack.c.l.b16 %v899
      %v933 = vunpack.c.l.b16 %v900
      %v934 = vunpack.c.l.b16 %v901
      %v935 = vunpack.c.l.b16 %v902
      %v936 = vunpack.c.l.b16 %v903
      %v937 = vunpack.c.l.b16 %v904
      %v938 = vunpack.c.l.b16 %v905
      %v939 = vpack.c.b16 %v932, %v931
      %v940 = vpack.c.b16 %v934, %v933
      %v941 = vpack.c.b16 %v936, %v935
      %v942 = vpack.c.b16 %v938, %v937
      %v963 = vunpack.c.l.b16 %v907
      %v964 = vunpack.c.l.b16 %v908
      %v965 = vunpack.c.l.b16 %v909
      %v966 = vunpack.c.l.b16 %v910
      %v967 = vunpack.c.l.b16 %v911
      %v968 = vunpack.c.l.b16 %v912
      %v969 = vunpack.c.l.b16 %v913
      %v970 = vunpack.c.l.b16 %v914
      %v971 = vunpack.c.l.b16 %v915
      %v972 = vunpack.c.l.b16 %v916
      %v973 = vunpack.c.l.b16 %v917
      %v974 = vunpack.c.l.b16 %v918
      %v975 = vunpack.c.l.b16 %v919
      %v976 = vunpack.c.l.b16 %v920
      %v977 = vunpack.c.l.b16 %v921
      %v978 = vunpack.c.l.b16 %v922
      %v979 = vpack.c.b16 %v964, %v963
      %v980 = vpack.c.b16 %v966, %v965
      %v981 = vpack.c.b16 %v968, %v967
      %v982 = vpack.c.b16 %v970, %v969
      %v983 = vpack.c.b16 %v972, %v971
      %v984 = vpack.c.b16 %v974, %v973
      %v985 = vpack.c.b16 %v976, %v975
      %v986 = vpack.c.b16 %v978, %v977
      %995 = vmatprep.subr.bf16.mxu0 0
      %996 = vmatpush1.bf16.msra.mxu0 %v979
      %997 = vmatprep.subr.bf16.mxu0 0
      %998 = vmatpush1.bf16.msra.mxu0 %v980
      %999 = vmatprep.subr.bf16.mxu0 0
      %1000 = vmatpush1.bf16.msra.mxu0 %v981
      %1001 = vmatprep.subr.bf16.mxu0 0
      %1002 = vmatpush1.bf16.msra.mxu0 %v982
      %1003 = vmatprep.subr.bf16.mxu0 0
      %1004 = vmatpush1.bf16.msra.mxu0 %v983
      %1005 = vmatprep.subr.bf16.mxu0 0
      %1006 = vmatpush1.bf16.msra.mxu0 %v984
      %1007 = vmatprep.subr.bf16.mxu0 0
      %1008 = vmatpush1.bf16.msra.mxu0 %v985
      %1009 = vmatprep.subr.bf16.mxu0 0
      %1010 = vmatpush1.bf16.msra.mxu0 %v986
      %1011 = vmatprep.subr.bf16.mxu0 0
      %1012 = vmatpush1.bf16.msra.mxu0 0
      %1013 = vmatprep.subr.bf16.mxu0 0
      %1014 = vmatpush1.bf16.msra.mxu0 0
      %1015 = vmatprep.subr.bf16.mxu0 0
      %1016 = vmatpush1.bf16.msra.mxu0 0
      %1017 = vmatprep.subr.bf16.mxu0 0
      %1018 = vmatpush1.bf16.msra.mxu0 0
      %1019 = vmatprep.subr.bf16.mxu0 0
      %1020 = vmatpush1.bf16.msra.mxu0 0
      %1021 = vmatprep.subr.bf16.mxu0 0
      %1022 = vmatpush1.bf16.msra.mxu0 0
      %1023 = vmatprep.subr.bf16.mxu0 0
      %1024 = vmatpush1.bf16.msra.mxu0 0
      %1025 = vmatprep.subr.bf16.mxu0 0
      %1026 = vmatpush1.bf16.msra.mxu0 0
      %1027 = vmatprep.mubr.bf16.mxu0 0
      %1028 = vmatmul.mubr.bf16.gmra.mrb[0].mxu0 %v939
      %v1029 = vpop.f32.mrb[0].mxu0
      %v1030 = vadd.f32 0.0, %v1029
      %v1031 = vpop.f32.mrb[0].mxu0
      %v1032 = vpop.f32.mrb[0].mxu0
      %v1033 = vadd.f32 0.0, %v1032
      %v1034 = vpop.f32.mrb[0].mxu0
      %1035 = vmatprep.mubr.bf16.mxu0 0
      %1036 = vmatmul.mubr.bf16.gmra.mrb[0].mxu0 %v940
      %v1037 = vpop.f32.mrb[0].mxu0
      %v1038 = vadd.f32 0.0, %v1037
      %v1039 = vpop.f32.mrb[0].mxu0
      %v1040 = vpop.f32.mrb[0].mxu0
      %v1041 = vadd.f32 0.0, %v1040
      %v1042 = vpop.f32.mrb[0].mxu0
      %1043 = vmatprep.mubr.bf16.mxu0 0
      %1044 = vmatmul.mubr.bf16.gmra.mrb[0].mxu0 %v941
      %v1045 = vpop.f32.mrb[0].mxu0
      %v1046 = vadd.f32 0.0, %v1045
      %v1047 = vpop.f32.mrb[0].mxu0
      %v1048 = vpop.f32.mrb[0].mxu0
      %v1049 = vadd.f32 0.0, %v1048
      %v1050 = vpop.f32.mrb[0].mxu0
      %1051 = vmatprep.mubr.bf16.mxu0 0
      %1052 = vmatmul.mubr.bf16.gmra.mrb[0].mxu0 %v942
      %v1053 = vpop.f32.mrb[0].mxu0
      %v1054 = vadd.f32 0.0, %v1053
      %v1055 = vpop.f32.mrb[0].mxu0
      %v1056 = vpop.f32.mrb[0].mxu0
      %v1057 = vadd.f32 0.0, %v1056
      %v1058 = vpop.f32.mrb[0].mxu0
      %1059 = vdwg.mxu0
      %v1060 = vadd.f32 %v889, %v1030
      %v1061 = vadd.f32 %v890, %v1033
      %v1062 = vadd.f32 %v891, %v1038
      %v1063 = vadd.f32 %v892, %v1041
      %v1064 = vadd.f32 %v893, %v1046
      %v1065 = vadd.f32 %v894, %v1049
      %v1066 = vadd.f32 %v895, %v1054
      %v1067 = vadd.f32 %v896, %v1057
      %v1068 = vld [vmem:[%s897] sm:$0xf]
      %v1069 = vld [vmem:[%s897 + $0x4] sm:$0x1]
      %v1070 = vld [vmem:[%s897 + $0x8] sm:$0xf]
      %v1071 = vld [vmem:[%s897 + $0xc] sm:$0x1]
      %v1072 = vld [vmem:[%s897 + $0x10] sm:$0xf]
      %v1073 = vld [vmem:[%s897 + $0x14] sm:$0x1]
      %v1074 = vld [vmem:[%s897 + $0x18] sm:$0xf]
      %v1075 = vld [vmem:[%s897 + $0x1c] sm:$0x1]
      %v1076 = vld [vmem:[%s897 + $0x20] sm:$0xf]
      %v1077 = vld [vmem:[%s897 + $0x24] sm:$0x1]
      %v1078 = vld [vmem:[%s897 + $0x28] sm:$0xf]
      %v1079 = vld [vmem:[%s897 + $0x2c] sm:$0x1]
      %v1080 = vld [vmem:[%s897 + $0x30] sm:$0xf]
      %v1081 = vld [vmem:[%s897 + $0x34] sm:$0x1]
      %v1082 = vld [vmem:[%s897 + $0x38] sm:$0xf]
      %v1083 = vld [vmem:[%s897 + $0x3c] sm:$0x1]
      %v1085 = vshrl.u32 %v1068, 16
      %v1087 = vrot.slane %v1085, 4
      %v1088 = vshll.u32 %v1068, 16
      %v1090 = vrot.slane %v1088, 5
      %v1091 = vor.u32 %v1087, %v1090
      %v1092 = vrot.slane %v1091, 4
      %v1094 = vshll.u32 %v1069, 16
      %v1096 = vrot.slane %v1094, 5
      %v1097 = vsel %vm288, %v1092, %v1096
      %v1099 = vshrl.u32 %v1070, 16
      %v1101 = vrot.slane %v1099, 4
      %v1102 = vshll.u32 %v1070, 16
      %v1104 = vrot.slane %v1102, 5
      %v1105 = vor.u32 %v1101, %v1104
      %v1106 = vrot.slane %v1105, 4
      %v1108 = vshll.u32 %v1071, 16
      %v1110 = vrot.slane %v1108, 5
      %v1111 = vsel %vm288, %v1106, %v1110
      %v1113 = vshrl.u32 %v1072, 16
      %v1115 = vrot.slane %v1113, 4
      %v1116 = vshll.u32 %v1072, 16
      %v1118 = vrot.slane %v1116, 5
      %v1119 = vor.u32 %v1115, %v1118
      %v1120 = vrot.slane %v1119, 4
      %v1122 = vshll.u32 %v1073, 16
      %v1124 = vrot.slane %v1122, 5
      %v1125 = vsel %vm288, %v1120, %v1124
      %v1127 = vshrl.u32 %v1074, 16
      %v1129 = vrot.slane %v1127, 4
      %v1130 = vshll.u32 %v1074, 16
      %v1132 = vrot.slane %v1130, 5
      %v1133 = vor.u32 %v1129, %v1132
      %v1134 = vrot.slane %v1133, 4
      %v1136 = vshll.u32 %v1075, 16
      %v1138 = vrot.slane %v1136, 5
      %v1139 = vsel %vm288, %v1134, %v1138
      %v1141 = vshrl.u32 %v1076, 16
      %v1143 = vrot.slane %v1141, 4
      %v1144 = vshll.u32 %v1076, 16
      %v1146 = vrot.slane %v1144, 5
      %v1147 = vor.u32 %v1143, %v1146
      %v1148 = vrot.slane %v1147, 4
      %v1150 = vshll.u32 %v1077, 16
      %v1152 = vrot.slane %v1150, 5
      %v1153 = vsel %vm288, %v1148, %v1152
      %v1155 = vshrl.u32 %v1078, 16
      %v1157 = vrot.slane %v1155, 4
      %v1158 = vshll.u32 %v1078, 16
      %v1160 = vrot.slane %v1158, 5
      %v1161 = vor.u32 %v1157, %v1160
      %v1162 = vrot.slane %v1161, 4
      %v1164 = vshll.u32 %v1079, 16
      %v1166 = vrot.slane %v1164, 5
      %v1167 = vsel %vm288, %v1162, %v1166
      %v1169 = vshrl.u32 %v1080, 16
      %v1171 = vrot.slane %v1169, 4
      %v1172 = vshll.u32 %v1080, 16
      %v1174 = vrot.slane %v1172, 5
      %v1175 = vor.u32 %v1171, %v1174
      %v1176 = vrot.slane %v1175, 4
      %v1178 = vshll.u32 %v1081, 16
      %v1180 = vrot.slane %v1178, 5
      %v1181 = vsel %vm288, %v1176, %v1180
      %v1183 = vshrl.u32 %v1082, 16
      %v1185 = vrot.slane %v1183, 4
      %v1186 = vshll.u32 %v1082, 16
      %v1188 = vrot.slane %v1186, 5
      %v1189 = vor.u32 %v1185, %v1188
      %v1190 = vrot.slane %v1189, 4
      %v1192 = vshll.u32 %v1083, 16
      %v1194 = vrot.slane %v1192, 5
      %v1195 = vsel %vm288, %v1190, %v1194
      %s1196 = scalar_lea.vmem %s1, 256
      %v1197 = vld [vmem:[%s1196] sm:$0xf]
      %v1198 = vld [vmem:[%s1196 + $0x4] sm:$0xf]
      %v1199 = vld [vmem:[%s1196 + $0x8] sm:$0xf]
      %v1200 = vld [vmem:[%s1196 + $0xc] sm:$0xf]
      %v1201 = vld [vmem:[%s1196 + $0x10] sm:$0xf]
      %v1202 = vld [vmem:[%s1196 + $0x14] sm:$0xf]
      %v1203 = vld [vmem:[%s1196 + $0x18] sm:$0xf]
      %v1204 = vld [vmem:[%s1196 + $0x1c] sm:$0xf]
      %v1205 = vld [vmem:[%s1196 + $0x20] sm:$0xf]
      %v1206 = vld [vmem:[%s1196 + $0x24] sm:$0xf]
      %v1207 = vld [vmem:[%s1196 + $0x28] sm:$0xf]
      %v1208 = vld [vmem:[%s1196 + $0x2c] sm:$0xf]
      %v1209 = vld [vmem:[%s1196 + $0x30] sm:$0xf]
      %v1210 = vld [vmem:[%s1196 + $0x34] sm:$0xf]
      %v1211 = vld [vmem:[%s1196 + $0x38] sm:$0xf]
      %v1212 = vld [vmem:[%s1196 + $0x3c] sm:$0xf]
      %v1213 = vunpack.c.l.b16 %v1097
      %v1214 = vunpack.c.l.b16 %v1111
      %v1215 = vunpack.c.l.b16 %v1125
      %v1216 = vunpack.c.l.b16 %v1139
      %v1217 = vunpack.c.l.b16 %v1153
      %v1218 = vunpack.c.l.b16 %v1167
      %v1219 = vunpack.c.l.b16 %v1181
      %v1220 = vunpack.c.l.b16 %v1195
      %v1221 = vpack.c.b16 %v1214, %v1213
      %v1222 = vpack.c.b16 %v1216, %v1215
      %v1223 = vpack.c.b16 %v1218, %v1217
      %v1224 = vpack.c.b16 %v1220, %v1219
      %v1245 = vunpack.c.l.b16 %v1197
      %v1246 = vunpack.c.l.b16 %v1198
      %v1247 = vunpack.c.l.b16 %v1199
      %v1248 = vunpack.c.l.b16 %v1200
      %v1249 = vunpack.c.l.b16 %v1201
      %v1250 = vunpack.c.l.b16 %v1202
      %v1251 = vunpack.c.l.b16 %v1203
      %v1252 = vunpack.c.l.b16 %v1204
      %v1253 = vunpack.c.l.b16 %v1205
      %v1254 = vunpack.c.l.b16 %v1206
      %v1255 = vunpack.c.l.b16 %v1207
      %v1256 = vunpack.c.l.b16 %v1208
      %v1257 = vunpack.c.l.b16 %v1209
      %v1258 = vunpack.c.l.b16 %v1210
      %v1259 = vunpack.c.l.b16 %v1211
      %v1260 = vunpack.c.l.b16 %v1212
      %v1261 = vpack.c.b16 %v1246, %v1245
      %v1262 = vpack.c.b16 %v1248, %v1247
      %v1263 = vpack.c.b16 %v1250, %v1249
      %v1264 = vpack.c.b16 %v1252, %v1251
      %v1265 = vpack.c.b16 %v1254, %v1253
      %v1266 = vpack.c.b16 %v1256, %v1255
      %v1267 = vpack.c.b16 %v1258, %v1257
      %v1268 = vpack.c.b16 %v1260, %v1259
      %1277 = vmatprep.subr.bf16.mxu0 0
      %1278 = vmatpush1.bf16.msra.mxu0 %v1261
      %1279 = vmatprep.subr.bf16.mxu0 0
      %1280 = vmatpush1.bf16.msra.mxu0 %v1262
      %1281 = vmatprep.subr.bf16.mxu0 0
      %1282 = vmatpush1.bf16.msra.mxu0 %v1263
      %1283 = vmatprep.subr.bf16.mxu0 0
      %1284 = vmatpush1.bf16.msra.mxu0 %v1264
      %1285 = vmatprep.subr.bf16.mxu0 0
      %1286 = vmatpush1.bf16.msra.mxu0 %v1265
      %1287 = vmatprep.subr.bf16.mxu0 0
      %1288 = vmatpush1.bf16.msra.mxu0 %v1266
      %1289 = vmatprep.subr.bf16.mxu0 0
      %1290 = vmatpush1.bf16.msra.mxu0 %v1267
      %1291 = vmatprep.subr.bf16.mxu0 0
      %1292 = vmatpush1.bf16.msra.mxu0 %v1268
      %1293 = vmatprep.subr.bf16.mxu0 0
      %1294 = vmatpush1.bf16.msra.mxu0 0
      %1295 = vmatprep.subr.bf16.mxu0 0
      %1296 = vmatpush1.bf16.msra.mxu0 0
      %1297 = vmatprep.subr.bf16.mxu0 0
      %1298 = vmatpush1.bf16.msra.mxu0 0
      %1299 = vmatprep.subr.bf16.mxu0 0
      %1300 = vmatpush1.bf16.msra.mxu0 0
      %1301 = vmatprep.subr.bf16.mxu0 0
      %1302 = vmatpush1.bf16.msra.mxu0 0
      %1303 = vmatprep.subr.bf16.mxu0 0
      %1304 = vmatpush1.bf16.msra.mxu0 0
      %1305 = vmatprep.subr.bf16.mxu0 0
      %1306 = vmatpush1.bf16.msra.mxu0 0
      %1307 = vmatprep.subr.bf16.mxu0 0
      %1308 = vmatpush1.bf16.msra.mxu0 0
      %1309 = vmatprep.mubr.bf16.mxu0 0
      %1310 = vmatmul.mubr.bf16.gmra.mrb[0].mxu0 %v1221
      %v1311 = vpop.f32.mrb[0].mxu0
      %v1312 = vadd.f32 0.0, %v1311
      %v1313 = vpop.f32.mrb[0].mxu0
      %v1314 = vpop.f32.mrb[0].mxu0
      %v1315 = vadd.f32 0.0, %v1314
      %v1316 = vpop.f32.mrb[0].mxu0
      %1317 = vmatprep.mubr.bf16.mxu0 0
      %1318 = vmatmul.mubr.bf16.gmra.mrb[0].mxu0 %v1222
      %v1319 = vpop.f32.mrb[0].mxu0
      %v1320 = vadd.f32 0.0, %v1319
      %v1321 = vpop.f32.mrb[0].mxu0
      %v1322 = vpop.f32.mrb[0].mxu0
      %v1323 = vadd.f32 0.0, %v1322
      %v1324 = vpop.f32.mrb[0].mxu0
      %1325 = vmatprep.mubr.bf16.mxu0 0
      %1326 = vmatmul.mubr.bf16.gmra.mrb[0].mxu0 %v1223
      %v1327 = vpop.f32.mrb[0].mxu0
      %v1328 = vadd.f32 0.0, %v1327
      %v1329 = vpop.f32.mrb[0].mxu0
      %v1330 = vpop.f32.mrb[0].mxu0
      %v1331 = vadd.f32 0.0, %v1330
      %v1332 = vpop.f32.mrb[0].mxu0
      %1333 = vmatprep.mubr.bf16.mxu0 0
      %1334 = vmatmul.mubr.bf16.gmra.mrb[0].mxu0 %v1224
      %v1335 = vpop.f32.mrb[0].mxu0
      %v1336 = vadd.f32 0.0, %v1335
      %v1337 = vpop.f32.mrb[0].mxu0
      %v1338 = vpop.f32.mrb[0].mxu0
      %v1339 = vadd.f32 0.0, %v1338
      %v1340 = vpop.f32.mrb[0].mxu0
      %1341 = vdwg.mxu0
      %v1342 = vadd.f32 %v1060, %v1312
      %v1343 = vadd.f32 %v1061, %v1315
      %v1344 = vadd.f32 %v1062, %v1320
      %v1345 = vadd.f32 %v1063, %v1323
      %v1346 = vadd.f32 %v1064, %v1328
      %v1347 = vadd.f32 %v1065, %v1331
      %v1348 = vadd.f32 %v1066, %v1336
      %v1349 = vadd.f32 %v1067, %v1339
      %v1350 = vld [vmem:[%s897] sm:$0xe]
      %v1351 = vld [vmem:[%s897 + $0x8] sm:$0xe]
      %v1352 = vld [vmem:[%s897 + $0x10] sm:$0xe]
      %v1353 = vld [vmem:[%s897 + $0x18] sm:$0xe]
      %v1354 = vld [vmem:[%s897 + $0x20] sm:$0xe]
      %v1355 = vld [vmem:[%s897 + $0x28] sm:$0xe]
      %v1356 = vld [vmem:[%s897 + $0x30] sm:$0xe]
      %v1357 = vld [vmem:[%s897 + $0x38] sm:$0xe]
      %v1374 = vrot.slane %v1350, 5
      %v1375 = vrot.slane %v1374, 4
      %v1376 = vrot.slane %v1069, 5
      %v1377 = vsel %vm710, %v1375, %v1376
      %v1378 = vrot.slane %v1351, 5
      %v1379 = vrot.slane %v1378, 4
      %v1380 = vrot.slane %v1071, 5
      %v1381 = vsel %vm710, %v1379, %v1380
      %v1382 = vrot.slane %v1352, 5
      %v1383 = vrot.slane %v1382, 4
      %v1384 = vrot.slane %v1073, 5
      %v1385 = vsel %vm710, %v1383, %v1384
      %v1386 = vrot.slane %v1353, 5
      %v1387 = vrot.slane %v1386, 4
      %v1388 = vrot.slane %v1075, 5
      %v1389 = vsel %vm710, %v1387, %v1388
      %v1390 = vrot.slane %v1354, 5
      %v1391 = vrot.slane %v1390, 4
      %v1392 = vrot.slane %v1077, 5
      %v1393 = vsel %vm710, %v1391, %v1392
      %v1394 = vrot.slane %v1355, 5
      %v1395 = vrot.slane %v1394, 4
      %v1396 = vrot.slane %v1079, 5
      %v1397 = vsel %vm710, %v1395, %v1396
      %v1398 = vrot.slane %v1356, 5
      %v1399 = vrot.slane %v1398, 4
      %v1400 = vrot.slane %v1081, 5
      %v1401 = vsel %vm710, %v1399, %v1400
      %v1402 = vrot.slane %v1357, 5
      %v1403 = vrot.slane %v1402, 4
      %v1404 = vrot.slane %v1083, 5
      %v1405 = vsel %vm710, %v1403, %v1404
      %s1406 = scalar_lea.vmem %s1, 320
      %v1407 = vld [vmem:[%s1406] sm:$0xf]
      %v1408 = vld [vmem:[%s1406 + $0x4] sm:$0xf]
      %v1409 = vld [vmem:[%s1406 + $0x8] sm:$0xf]
      %v1410 = vld [vmem:[%s1406 + $0xc] sm:$0xf]
      %v1411 = vld [vmem:[%s1406 + $0x10] sm:$0xf]
      %v1412 = vld [vmem:[%s1406 + $0x14] sm:$0xf]
      %v1413 = vld [vmem:[%s1406 + $0x18] sm:$0xf]
      %v1414 = vld [vmem:[%s1406 + $0x1c] sm:$0xf]
      %v1415 = vld [vmem:[%s1406 + $0x20] sm:$0xf]
      %v1416 = vld [vmem:[%s1406 + $0x24] sm:$0xf]
      %v1417 = vld [vmem:[%s1406 + $0x28] sm:$0xf]
      %v1418 = vld [vmem:[%s1406 + $0x2c] sm:$0xf]
      %v1419 = vld [vmem:[%s1406 + $0x30] sm:$0xf]
      %v1420 = vld [vmem:[%s1406 + $0x34] sm:$0xf]
      %v1421 = vld [vmem:[%s1406 + $0x38] sm:$0xf]
      %v1422 = vld [vmem:[%s1406 + $0x3c] sm:$0xf]
      %v1423 = vunpack.c.l.b16 %v1377
      %v1424 = vunpack.c.l.b16 %v1381
      %v1425 = vunpack.c.l.b16 %v1385
      %v1426 = vunpack.c.l.b16 %v1389
      %v1427 = vunpack.c.l.b16 %v1393
      %v1428 = vunpack.c.l.b16 %v1397
      %v1429 = vunpack.c.l.b16 %v1401
      %v1430 = vunpack.c.l.b16 %v1405
      %v1431 = vpack.c.b16 %v1424, %v1423
      %v1432 = vpack.c.b16 %v1426, %v1425
      %v1433 = vpack.c.b16 %v1428, %v1427
      %v1434 = vpack.c.b16 %v1430, %v1429
      %v1455 = vunpack.c.l.b16 %v1407
      %v1456 = vunpack.c.l.b16 %v1408
      %v1457 = vunpack.c.l.b16 %v1409
      %v1458 = vunpack.c.l.b16 %v1410
      %v1459 = vunpack.c.l.b16 %v1411
      %v1460 = vunpack.c.l.b16 %v1412
      %v1461 = vunpack.c.l.b16 %v1413
      %v1462 = vunpack.c.l.b16 %v1414
      %v1463 = vunpack.c.l.b16 %v1415
      %v1464 = vunpack.c.l.b16 %v1416
      %v1465 = vunpack.c.l.b16 %v1417
      %v1466 = vunpack.c.l.b16 %v1418
      %v1467 = vunpack.c.l.b16 %v1419
      %v1468 = vunpack.c.l.b16 %v1420
      %v1469 = vunpack.c.l.b16 %v1421
      %v1470 = vunpack.c.l.b16 %v1422
      %v1471 = vpack.c.b16 %v1456, %v1455
      %v1472 = vpack.c.b16 %v1458, %v1457
      %v1473 = vpack.c.b16 %v1460, %v1459
      %v1474 = vpack.c.b16 %v1462, %v1461
      %v1475 = vpack.c.b16 %v1464, %v1463
      %v1476 = vpack.c.b16 %v1466, %v1465
      %v1477 = vpack.c.b16 %v1468, %v1467
      %v1478 = vpack.c.b16 %v1470, %v1469
      %1487 = vmatprep.subr.bf16.mxu0 0
      %1488 = vmatpush1.bf16.msra.mxu0 %v1471
      %1489 = vmatprep.subr.bf16.mxu0 0
      %1490 = vmatpush1.bf16.msra.mxu0 %v1472
      %1491 = vmatprep.subr.bf16.mxu0 0
      %1492 = vmatpush1.bf16.msra.mxu0 %v1473
      %1493 = vmatprep.subr.bf16.mxu0 0
      %1494 = vmatpush1.bf16.msra.mxu0 %v1474
      %1495 = vmatprep.subr.bf16.mxu0 0
      %1496 = vmatpush1.bf16.msra.mxu0 %v1475
      %1497 = vmatprep.subr.bf16.mxu0 0
      %1498 = vmatpush1.bf16.msra.mxu0 %v1476
      %1499 = vmatprep.subr.bf16.mxu0 0
      %1500 = vmatpush1.bf16.msra.mxu0 %v1477
      %1501 = vmatprep.subr.bf16.mxu0 0
      %1502 = vmatpush1.bf16.msra.mxu0 %v1478
      %1503 = vmatprep.subr.bf16.mxu0 0
      %1504 = vmatpush1.bf16.msra.mxu0 0
      %1505 = vmatprep.subr.bf16.mxu0 0
      %1506 = vmatpush1.bf16.msra.mxu0 0
      %1507 = vmatprep.subr.bf16.mxu0 0
      %1508 = vmatpush1.bf16.msra.mxu0 0
      %1509 = vmatprep.subr.bf16.mxu0 0
      %1510 = vmatpush1.bf16.msra.mxu0 0
      %1511 = vmatprep.subr.bf16.mxu0 0
      %1512 = vmatpush1.bf16.msra.mxu0 0
      %1513 = vmatprep.subr.bf16.mxu0 0
      %1514 = vmatpush1.bf16.msra.mxu0 0
      %1515 = vmatprep.subr.bf16.mxu0 0
      %1516 = vmatpush1.bf16.msra.mxu0 0
      %1517 = vmatprep.subr.bf16.mxu0 0
      %1518 = vmatpush1.bf16.msra.mxu0 0
      %1519 = vmatprep.mubr.bf16.mxu0 0
      %1520 = vmatmul.mubr.bf16.gmra.mrb[0].mxu0 %v1431
      %v1521 = vpop.f32.mrb[0].mxu0
      %v1522 = vadd.f32 0.0, %v1521
      %v1523 = vpop.f32.mrb[0].mxu0
      %v1524 = vpop.f32.mrb[0].mxu0
      %v1525 = vadd.f32 0.0, %v1524
      %v1526 = vpop.f32.mrb[0].mxu0
      %1527 = vmatprep.mubr.bf16.mxu0 0
      %1528 = vmatmul.mubr.bf16.gmra.mrb[0].mxu0 %v1432
      %v1529 = vpop.f32.mrb[0].mxu0
      %v1530 = vadd.f32 0.0, %v1529
      %v1531 = vpop.f32.mrb[0].mxu0
      %v1532 = vpop.f32.mrb[0].mxu0
      %v1533 = vadd.f32 0.0, %v1532
      %v1534 = vpop.f32.mrb[0].mxu0
      %1535 = vmatprep.mubr.bf16.mxu0 0
      %1536 = vmatmul.mubr.bf16.gmra.mrb[0].mxu0 %v1433
      %v1537 = vpop.f32.mrb[0].mxu0
      %v1538 = vadd.f32 0.0, %v1537
      %v1539 = vpop.f32.mrb[0].mxu0
      %v1540 = vpop.f32.mrb[0].mxu0
      %v1541 = vadd.f32 0.0, %v1540
      %v1542 = vpop.f32.mrb[0].mxu0
      %1543 = vmatprep.mubr.bf16.mxu0 0
      %1544 = vmatmul.mubr.bf16.gmra.mrb[0].mxu0 %v1434
      %v1545 = vpop.f32.mrb[0].mxu0
      %v1546 = vadd.f32 0.0, %v1545
      %v1547 = vpop.f32.mrb[0].mxu0
      %v1548 = vpop.f32.mrb[0].mxu0
      %v1549 = vadd.f32 0.0, %v1548
      %v1550 = vpop.f32.mrb[0].mxu0
      %1551 = vdwg.mxu0
      %v1552 = vadd.f32 %v1342, %v1522
      %v1553 = vadd.f32 %v1343, %v1525
      %v1554 = vadd.f32 %v1344, %v1530
      %v1555 = vadd.f32 %v1345, %v1533
      %v1556 = vadd.f32 %v1346, %v1538
      %v1557 = vadd.f32 %v1347, %v1541
      %v1558 = vadd.f32 %v1348, %v1546
      %v1559 = vadd.f32 %v1349, %v1549
      %s1560 = scalar_lea.vmem %s246, 16
      %v1561 = vld [vmem:[%s1560] sm:$0xf]
      %v1562 = vld [vmem:[%s1560 + $0x8] sm:$0xf]
      %v1563 = vld [vmem:[%s1560 + $0x10] sm:$0xf]
      %v1564 = vld [vmem:[%s1560 + $0x18] sm:$0xf]
      %v1565 = vld [vmem:[%s1560 + $0x20] sm:$0xf]
      %v1566 = vld [vmem:[%s1560 + $0x28] sm:$0xf]
      %v1567 = vld [vmem:[%s1560 + $0x30] sm:$0xf]
      %v1568 = vld [vmem:[%s1560 + $0x38] sm:$0xf]
      %s1569 = scalar_lea.vmem %s1, 384
      %v1570 = vld [vmem:[%s1569] sm:$0xf]
      %v1571 = vld [vmem:[%s1569 + $0x4] sm:$0xf]
      %v1572 = vld [vmem:[%s1569 + $0x8] sm:$0xf]
      %v1573 = vld [vmem:[%s1569 + $0xc] sm:$0xf]
      %v1574 = vld [vmem:[%s1569 + $0x10] sm:$0xf]
      %v1575 = vld [vmem:[%s1569 + $0x14] sm:$0xf]
      %v1576 = vld [vmem:[%s1569 + $0x18] sm:$0xf]
      %v1577 = vld [vmem:[%s1569 + $0x1c] sm:$0xf]
      %v1578 = vld [vmem:[%s1569 + $0x20] sm:$0xf]
      %v1579 = vld [vmem:[%s1569 + $0x24] sm:$0xf]
      %v1580 = vld [vmem:[%s1569 + $0x28] sm:$0xf]
      %v1581 = vld [vmem:[%s1569 + $0x2c] sm:$0xf]
      %v1582 = vld [vmem:[%s1569 + $0x30] sm:$0xf]
      %v1583 = vld [vmem:[%s1569 + $0x34] sm:$0xf]
      %v1584 = vld [vmem:[%s1569 + $0x38] sm:$0xf]
      %v1585 = vld [vmem:[%s1569 + $0x3c] sm:$0xf]
      %v1594 = vunpack.c.l.b16 %v1561
      %v1595 = vunpack.c.l.b16 %v1562
      %v1596 = vunpack.c.l.b16 %v1563
      %v1597 = vunpack.c.l.b16 %v1564
      %v1598 = vunpack.c.l.b16 %v1565
      %v1599 = vunpack.c.l.b16 %v1566
      %v1600 = vunpack.c.l.b16 %v1567
      %v1601 = vunpack.c.l.b16 %v1568
      %v1602 = vpack.c.b16 %v1595, %v1594
      %v1603 = vpack.c.b16 %v1597, %v1596
      %v1604 = vpack.c.b16 %v1599, %v1598
      %v1605 = vpack.c.b16 %v1601, %v1600
      %v1626 = vunpack.c.l.b16 %v1570
      %v1627 = vunpack.c.l.b16 %v1571
      %v1628 = vunpack.c.l.b16 %v1572
      %v1629 = vunpack.c.l.b16 %v1573
      %v1630 = vunpack.c.l.b16 %v1574
      %v1631 = vunpack.c.l.b16 %v1575
      %v1632 = vunpack.c.l.b16 %v1576
      %v1633 = vunpack.c.l.b16 %v1577
      %v1634 = vunpack.c.l.b16 %v1578
      %v1635 = vunpack.c.l.b16 %v1579
      %v1636 = vunpack.c.l.b16 %v1580
      %v1637 = vunpack.c.l.b16 %v1581
      %v1638 = vunpack.c.l.b16 %v1582
      %v1639 = vunpack.c.l.b16 %v1583
      %v1640 = vunpack.c.l.b16 %v1584
      %v1641 = vunpack.c.l.b16 %v1585
      %v1642 = vpack.c.b16 %v1627, %v1626
      %v1643 = vpack.c.b16 %v1629, %v1628
      %v1644 = vpack.c.b16 %v1631, %v1630
      %v1645 = vpack.c.b16 %v1633, %v1632
      %v1646 = vpack.c.b16 %v1635, %v1634
      %v1647 = vpack.c.b16 %v1637, %v1636
      %v1648 = vpack.c.b16 %v1639, %v1638
      %v1649 = vpack.c.b16 %v1641, %v1640
      %1658 = vmatprep.subr.bf16.mxu0 0
      %1659 = vmatpush1.bf16.msra.mxu0 %v1642
      %1660 = vmatprep.subr.bf16.mxu0 0
      %1661 = vmatpush1.bf16.msra.mxu0 %v1643
      %1662 = vmatprep.subr.bf16.mxu0 0
      %1663 = vmatpush1.bf16.msra.mxu0 %v1644
      %1664 = vmatprep.subr.bf16.mxu0 0
      %1665 = vmatpush1.bf16.msra.mxu0 %v1645
      %1666 = vmatprep.subr.bf16.mxu0 0
      %1667 = vmatpush1.bf16.msra.mxu0 %v1646
      %1668 = vmatprep.subr.bf16.mxu0 0
      %1669 = vmatpush1.bf16.msra.mxu0 %v1647
      %1670 = vmatprep.subr.bf16.mxu0 0
      %1671 = vmatpush1.bf16.msra.mxu0 %v1648
      %1672 = vmatprep.subr.bf16.mxu0 0
      %1673 = vmatpush1.bf16.msra.mxu0 %v1649
      %1674 = vmatprep.subr.bf16.mxu0 0
      %1675 = vmatpush1.bf16.msra.mxu0 0
      %1676 = vmatprep.subr.bf16.mxu0 0
      %1677 = vmatpush1.bf16.msra.mxu0 0
      %1678 = vmatprep.subr.bf16.mxu0 0
      %1679 = vmatpush1.bf16.msra.mxu0 0
      %1680 = vmatprep.subr.bf16.mxu0 0
      %1681 = vmatpush1.bf16.msra.mxu0 0
      %1682 = vmatprep.subr.bf16.mxu0 0
      %1683 = vmatpush1.bf16.msra.mxu0 0
      %1684 = vmatprep.subr.bf16.mxu0 0
      %1685 = vmatpush1.bf16.msra.mxu0 0
      %1686 = vmatprep.subr.bf16.mxu0 0
      %1687 = vmatpush1.bf16.msra.mxu0 0
      %1688 = vmatprep.subr.bf16.mxu0 0
      %1689 = vmatpush1.bf16.msra.mxu0 0
      %1690 = vmatprep.mubr.bf16.mxu0 0
      %1691 = vmatmul.mubr.bf16.gmra.mrb[0].mxu0 %v1602
      %v1692 = vpop.f32.mrb[0].mxu0
      %v1693 = vadd.f32 0.0, %v1692
      %v1694 = vpop.f32.mrb[0].mxu0
      %v1695 = vpop.f32.mrb[0].mxu0
      %v1696 = vadd.f32 0.0, %v1695
      %v1697 = vpop.f32.mrb[0].mxu0
      %1698 = vmatprep.mubr.bf16.mxu0 0
      %1699 = vmatmul.mubr.bf16.gmra.mrb[0].mxu0 %v1603
      %v1700 = vpop.f32.mrb[0].mxu0
      %v1701 = vadd.f32 0.0, %v1700
      %v1702 = vpop.f32.mrb[0].mxu0
      %v1703 = vpop.f32.mrb[0].mxu0
      %v1704 = vadd.f32 0.0, %v1703
      %v1705 = vpop.f32.mrb[0].mxu0
      %1706 = vmatprep.mubr.bf16.mxu0 0
      %1707 = vmatmul.mubr.bf16.gmra.mrb[0].mxu0 %v1604
      %v1708 = vpop.f32.mrb[0].mxu0
      %v1709 = vadd.f32 0.0, %v1708
      %v1710 = vpop.f32.mrb[0].mxu0
      %v1711 = vpop.f32.mrb[0].mxu0
      %v1712 = vadd.f32 0.0, %v1711
      %v1713 = vpop.f32.mrb[0].mxu0
      %1714 = vmatprep.mubr.bf16.mxu0 0
      %1715 = vmatmul.mubr.bf16.gmra.mrb[0].mxu0 %v1605
      %v1716 = vpop.f32.mrb[0].mxu0
      %v1717 = vadd.f32 0.0, %v1716
      %v1718 = vpop.f32.mrb[0].mxu0
      %v1719 = vpop.f32.mrb[0].mxu0
      %v1720 = vadd.f32 0.0, %v1719
      %v1721 = vpop.f32.mrb[0].mxu0
      %1722 = vdwg.mxu0
      %v1723 = vadd.f32 %v1552, %v1693
      %v1724 = vadd.f32 %v1553, %v1696
      %v1725 = vadd.f32 %v1554, %v1701
      %v1726 = vadd.f32 %v1555, %v1704
      %v1727 = vadd.f32 %v1556, %v1709
      %v1728 = vadd.f32 %v1557, %v1712
      %v1729 = vadd.f32 %v1558, %v1717
      %v1730 = vadd.f32 %v1559, %v1720
      %v1731 = vld [vmem:[%s1560] sm:$0xf]
      %v1732 = vld [vmem:[%s1560 + $0x4] sm:$0x1]
      %v1733 = vld [vmem:[%s1560 + $0x8] sm:$0xf]
      %v1734 = vld [vmem:[%s1560 + $0xc] sm:$0x1]
      %v1735 = vld [vmem:[%s1560 + $0x10] sm:$0xf]
      %v1736 = vld [vmem:[%s1560 + $0x14] sm:$0x1]
      %v1737 = vld [vmem:[%s1560 + $0x18] sm:$0xf]
      %v1738 = vld [vmem:[%s1560 + $0x1c] sm:$0x1]
      %v1739 = vld [vmem:[%s1560 + $0x20] sm:$0xf]
      %v1740 = vld [vmem:[%s1560 + $0x24] sm:$0x1]
      %v1741 = vld [vmem:[%s1560 + $0x28] sm:$0xf]
      %v1742 = vld [vmem:[%s1560 + $0x2c] sm:$0x1]
      %v1743 = vld [vmem:[%s1560 + $0x30] sm:$0xf]
      %v1744 = vld [vmem:[%s1560 + $0x34] sm:$0x1]
      %v1745 = vld [vmem:[%s1560 + $0x38] sm:$0xf]
      %v1746 = vld [vmem:[%s1560 + $0x3c] sm:$0x1]
      %v1748 = vshrl.u32 %v1731, 16
      %v1750 = vrot.slane %v1748, 4
      %v1751 = vshll.u32 %v1731, 16
      %v1753 = vrot.slane %v1751, 5
      %v1754 = vor.u32 %v1750, %v1753
      %v1755 = vrot.slane %v1754, 4
      %v1757 = vshll.u32 %v1732, 16
      %v1759 = vrot.slane %v1757, 5
      %v1760 = vsel %vm288, %v1755, %v1759
      %v1762 = vshrl.u32 %v1733, 16
      %v1764 = vrot.slane %v1762, 4
      %v1765 = vshll.u32 %v1733, 16
      %v1767 = vrot.slane %v1765, 5
      %v1768 = vor.u32 %v1764, %v1767
      %v1769 = vrot.slane %v1768, 4
      %v1771 = vshll.u32 %v1734, 16
      %v1773 = vrot.slane %v1771, 5
      %v1774 = vsel %vm288, %v1769, %v1773
      %v1776 = vshrl.u32 %v1735, 16
      %v1778 = vrot.slane %v1776, 4
      %v1779 = vshll.u32 %v1735, 16
      %v1781 = vrot.slane %v1779, 5
      %v1782 = vor.u32 %v1778, %v1781
      %v1783 = vrot.slane %v1782, 4
      %v1785 = vshll.u32 %v1736, 16
      %v1787 = vrot.slane %v1785, 5
      %v1788 = vsel %vm288, %v1783, %v1787
      %v1790 = vshrl.u32 %v1737, 16
      %v1792 = vrot.slane %v1790, 4
      %v1793 = vshll.u32 %v1737, 16
      %v1795 = vrot.slane %v1793, 5
      %v1796 = vor.u32 %v1792, %v1795
      %v1797 = vrot.slane %v1796, 4
      %v1799 = vshll.u32 %v1738, 16
      %v1801 = vrot.slane %v1799, 5
      %v1802 = vsel %vm288, %v1797, %v1801
      %v1804 = vshrl.u32 %v1739, 16
      %v1806 = vrot.slane %v1804, 4
      %v1807 = vshll.u32 %v1739, 16
      %v1809 = vrot.slane %v1807, 5
      %v1810 = vor.u32 %v1806, %v1809
      %v1811 = vrot.slane %v1810, 4
      %v1813 = vshll.u32 %v1740, 16
      %v1815 = vrot.slane %v1813, 5
      %v1816 = vsel %vm288, %v1811, %v1815
      %v1818 = vshrl.u32 %v1741, 16
      %v1820 = vrot.slane %v1818, 4
      %v1821 = vshll.u32 %v1741, 16
      %v1823 = vrot.slane %v1821, 5
      %v1824 = vor.u32 %v1820, %v1823
      %v1825 = vrot.slane %v1824, 4
      %v1827 = vshll.u32 %v1742, 16
      %v1829 = vrot.slane %v1827, 5
      %v1830 = vsel %vm288, %v1825, %v1829
      %v1832 = vshrl.u32 %v1743, 16
      %v1834 = vrot.slane %v1832, 4
      %v1835 = vshll.u32 %v1743, 16
      %v1837 = vrot.slane %v1835, 5
      %v1838 = vor.u32 %v1834, %v1837
      %v1839 = vrot.slane %v1838, 4
      %v1841 = vshll.u32 %v1744, 16
      %v1843 = vrot.slane %v1841, 5
      %v1844 = vsel %vm288, %v1839, %v1843
      %v1846 = vshrl.u32 %v1745, 16
      %v1848 = vrot.slane %v1846, 4
      %v1849 = vshll.u32 %v1745, 16
      %v1851 = vrot.slane %v1849, 5
      %v1852 = vor.u32 %v1848, %v1851
      %v1853 = vrot.slane %v1852, 4
      %v1855 = vshll.u32 %v1746, 16
      %v1857 = vrot.slane %v1855, 5
      %v1858 = vsel %vm288, %v1853, %v1857
      %s1859 = scalar_lea.vmem %s1, 448
      %v1860 = vld [vmem:[%s1859] sm:$0xf]
      %v1861 = vld [vmem:[%s1859 + $0x4] sm:$0xf]
      %v1862 = vld [vmem:[%s1859 + $0x8] sm:$0xf]
      %v1863 = vld [vmem:[%s1859 + $0xc] sm:$0xf]
      %v1864 = vld [vmem:[%s1859 + $0x10] sm:$0xf]
      %v1865 = vld [vmem:[%s1859 + $0x14] sm:$0xf]
      %v1866 = vld [vmem:[%s1859 + $0x18] sm:$0xf]
      %v1867 = vld [vmem:[%s1859 + $0x1c] sm:$0xf]
      %v1868 = vld [vmem:[%s1859 + $0x20] sm:$0xf]
      %v1869 = vld [vmem:[%s1859 + $0x24] sm:$0xf]
      %v1870 = vld [vmem:[%s1859 + $0x28] sm:$0xf]
      %v1871 = vld [vmem:[%s1859 + $0x2c] sm:$0xf]
      %v1872 = vld [vmem:[%s1859 + $0x30] sm:$0xf]
      %v1873 = vld [vmem:[%s1859 + $0x34] sm:$0xf]
      %v1874 = vld [vmem:[%s1859 + $0x38] sm:$0xf]
      %v1875 = vld [vmem:[%s1859 + $0x3c] sm:$0xf]
      %v1876 = vunpack.c.l.b16 %v1760
      %v1877 = vunpack.c.l.b16 %v1774
      %v1878 = vunpack.c.l.b16 %v1788
      %v1879 = vunpack.c.l.b16 %v1802
      %v1880 = vunpack.c.l.b16 %v1816
      %v1881 = vunpack.c.l.b16 %v1830
      %v1882 = vunpack.c.l.b16 %v1844
      %v1883 = vunpack.c.l.b16 %v1858
      %v1884 = vpack.c.b16 %v1877, %v1876
      %v1885 = vpack.c.b16 %v1879, %v1878
      %v1886 = vpack.c.b16 %v1881, %v1880
      %v1887 = vpack.c.b16 %v1883, %v1882
      %v1908 = vunpack.c.l.b16 %v1860
      %v1909 = vunpack.c.l.b16 %v1861
      %v1910 = vunpack.c.l.b16 %v1862
      %v1911 = vunpack.c.l.b16 %v1863
      %v1912 = vunpack.c.l.b16 %v1864
      %v1913 = vunpack.c.l.b16 %v1865
      %v1914 = vunpack.c.l.b16 %v1866
      %v1915 = vunpack.c.l.b16 %v1867
      %v1916 = vunpack.c.l.b16 %v1868
      %v1917 = vunpack.c.l.b16 %v1869
      %v1918 = vunpack.c.l.b16 %v1870
      %v1919 = vunpack.c.l.b16 %v1871
      %v1920 = vunpack.c.l.b16 %v1872
      %v1921 = vunpack.c.l.b16 %v1873
      %v1922 = vunpack.c.l.b16 %v1874
      %v1923 = vunpack.c.l.b16 %v1875
      %v1924 = vpack.c.b16 %v1909, %v1908
      %v1925 = vpack.c.b16 %v1911, %v1910
      %v1926 = vpack.c.b16 %v1913, %v1912
      %v1927 = vpack.c.b16 %v1915, %v1914
      %v1928 = vpack.c.b16 %v1917, %v1916
      %v1929 = vpack.c.b16 %v1919, %v1918
      %v1930 = vpack.c.b16 %v1921, %v1920
      %v1931 = vpack.c.b16 %v1923, %v1922
      %1940 = vmatprep.subr.bf16.mxu0 0
      %1941 = vmatpush1.bf16.msra.mxu0 %v1924
      %1942 = vmatprep.subr.bf16.mxu0 0
      %1943 = vmatpush1.bf16.msra.mxu0 %v1925
      %1944 = vmatprep.subr.bf16.mxu0 0
      %1945 = vmatpush1.bf16.msra.mxu0 %v1926
      %1946 = vmatprep.subr.bf16.mxu0 0
      %1947 = vmatpush1.bf16.msra.mxu0 %v1927
      %1948 = vmatprep.subr.bf16.mxu0 0
      %1949 = vmatpush1.bf16.msra.mxu0 %v1928
      %1950 = vmatprep.subr.bf16.mxu0 0
      %1951 = vmatpush1.bf16.msra.mxu0 %v1929
      %1952 = vmatprep.subr.bf16.mxu0 0
      %1953 = vmatpush1.bf16.msra.mxu0 %v1930
      %1954 = vmatprep.subr.bf16.mxu0 0
      %1955 = vmatpush1.bf16.msra.mxu0 %v1931
      %1956 = vmatprep.subr.bf16.mxu0 0
      %1957 = vmatpush1.bf16.msra.mxu0 0
      %1958 = vmatprep.subr.bf16.mxu0 0
      %1959 = vmatpush1.bf16.msra.mxu0 0
      %1960 = vmatprep.subr.bf16.mxu0 0
      %1961 = vmatpush1.bf16.msra.mxu0 0
      %1962 = vmatprep.subr.bf16.mxu0 0
      %1963 = vmatpush1.bf16.msra.mxu0 0
      %1964 = vmatprep.subr.bf16.mxu0 0
      %1965 = vmatpush1.bf16.msra.mxu0 0
      %1966 = vmatprep.subr.bf16.mxu0 0
      %1967 = vmatpush1.bf16.msra.mxu0 0
      %1968 = vmatprep.subr.bf16.mxu0 0
      %1969 = vmatpush1.bf16.msra.mxu0 0
      %1970 = vmatprep.subr.bf16.mxu0 0
      %1971 = vmatpush1.bf16.msra.mxu0 0
      %1972 = vmatprep.mubr.bf16.mxu0 0
      %1973 = vmatmul.mubr.bf16.gmra.mrb[0].mxu0 %v1884
      %v1974 = vpop.f32.mrb[0].mxu0
      %v1975 = vadd.f32 0.0, %v1974
      %v1976 = vpop.f32.mrb[0].mxu0
      %v1977 = vpop.f32.mrb[0].mxu0
      %v1978 = vadd.f32 0.0, %v1977
      %v1979 = vpop.f32.mrb[0].mxu0
      %1980 = vmatprep.mubr.bf16.mxu0 0
      %1981 = vmatmul.mubr.bf16.gmra.mrb[0].mxu0 %v1885
      %v1982 = vpop.f32.mrb[0].mxu0
      %v1983 = vadd.f32 0.0, %v1982
      %v1984 = vpop.f32.mrb[0].mxu0
      %v1985 = vpop.f32.mrb[0].mxu0
      %v1986 = vadd.f32 0.0, %v1985
      %v1987 = vpop.f32.mrb[0].mxu0
      %1988 = vmatprep.mubr.bf16.mxu0 0
      %1989 = vmatmul.mubr.bf16.gmra.mrb[0].mxu0 %v1886
      %v1990 = vpop.f32.mrb[0].mxu0
      %v1991 = vadd.f32 0.0, %v1990
      %v1992 = vpop.f32.mrb[0].mxu0
      %v1993 = vpop.f32.mrb[0].mxu0
      %v1994 = vadd.f32 0.0, %v1993
      %v1995 = vpop.f32.mrb[0].mxu0
      %1996 = vmatprep.mubr.bf16.mxu0 0
      %1997 = vmatmul.mubr.bf16.gmra.mrb[0].mxu0 %v1887
      %v1998 = vpop.f32.mrb[0].mxu0
      %v1999 = vadd.f32 0.0, %v1998
      %v2000 = vpop.f32.mrb[0].mxu0
      %v2001 = vpop.f32.mrb[0].mxu0
      %v2002 = vadd.f32 0.0, %v2001
      %v2003 = vpop.f32.mrb[0].mxu0
      %2004 = vdwg.mxu0
      %v2005 = vadd.f32 %v1723, %v1975
      %v2006 = vadd.f32 %v1724, %v1978
      %v2007 = vadd.f32 %v1725, %v1983
      %v2008 = vadd.f32 %v1726, %v1986
      %v2009 = vadd.f32 %v1727, %v1991
      %v2010 = vadd.f32 %v1728, %v1994
      %v2011 = vadd.f32 %v1729, %v1999
      %v2012 = vadd.f32 %v1730, %v2002
      %v2013 = vld [vmem:[%s1560] sm:$0xe]
      %v2014 = vld [vmem:[%s1560 + $0x8] sm:$0xe]
      %v2015 = vld [vmem:[%s1560 + $0x10] sm:$0xe]
      %v2016 = vld [vmem:[%s1560 + $0x18] sm:$0xe]
      %v2017 = vld [vmem:[%s1560 + $0x20] sm:$0xe]
      %v2018 = vld [vmem:[%s1560 + $0x28] sm:$0xe]
      %v2019 = vld [vmem:[%s1560 + $0x30] sm:$0xe]
      %v2020 = vld [vmem:[%s1560 + $0x38] sm:$0xe]
      %v2037 = vrot.slane %v2013, 5
      %v2038 = vrot.slane %v2037, 4
      %v2039 = vrot.slane %v1732, 5
      %v2040 = vsel %vm710, %v2038, %v2039
      %v2041 = vrot.slane %v2014, 5
      %v2042 = vrot.slane %v2041, 4
      %v2043 = vrot.slane %v1734, 5
      %v2044 = vsel %vm710, %v2042, %v2043
      %v2045 = vrot.slane %v2015, 5
      %v2046 = vrot.slane %v2045, 4
      %v2047 = vrot.slane %v1736, 5
      %v2048 = vsel %vm710, %v2046, %v2047
      %v2049 = vrot.slane %v2016, 5
      %v2050 = vrot.slane %v2049, 4
      %v2051 = vrot.slane %v1738, 5
      %v2052 = vsel %vm710, %v2050, %v2051
      %v2053 = vrot.slane %v2017, 5
      %v2054 = vrot.slane %v2053, 4
      %v2055 = vrot.slane %v1740, 5
      %v2056 = vsel %vm710, %v2054, %v2055
      %v2057 = vrot.slane %v2018, 5
      %v2058 = vrot.slane %v2057, 4
      %v2059 = vrot.slane %v1742, 5
      %v2060 = vsel %vm710, %v2058, %v2059
      %v2061 = vrot.slane %v2019, 5
      %v2062 = vrot.slane %v2061, 4
      %v2063 = vrot.slane %v1744, 5
      %v2064 = vsel %vm710, %v2062, %v2063
      %v2065 = vrot.slane %v2020, 5
      %v2066 = vrot.slane %v2065, 4
      %v2067 = vrot.slane %v1746, 5
      %v2068 = vsel %vm710, %v2066, %v2067
      %s2069 = scalar_lea.vmem %s1, 512
      %v2070 = vld [vmem:[%s2069] sm:$0xf]
      %v2071 = vld [vmem:[%s2069 + $0x4] sm:$0xf]
      %v2072 = vld [vmem:[%s2069 + $0x8] sm:$0xf]
      %v2073 = vld [vmem:[%s2069 + $0xc] sm:$0xf]
      %v2074 = vld [vmem:[%s2069 + $0x10] sm:$0xf]
      %v2075 = vld [vmem:[%s2069 + $0x14] sm:$0xf]
      %v2076 = vld [vmem:[%s2069 + $0x18] sm:$0xf]
      %v2077 = vld [vmem:[%s2069 + $0x1c] sm:$0xf]
      %v2078 = vld [vmem:[%s2069 + $0x20] sm:$0xf]
      %v2079 = vld [vmem:[%s2069 + $0x24] sm:$0xf]
      %v2080 = vld [vmem:[%s2069 + $0x28] sm:$0xf]
      %v2081 = vld [vmem:[%s2069 + $0x2c] sm:$0xf]
      %v2082 = vld [vmem:[%s2069 + $0x30] sm:$0xf]
      %v2083 = vld [vmem:[%s2069 + $0x34] sm:$0xf]
      %v2084 = vld [vmem:[%s2069 + $0x38] sm:$0xf]
      %v2085 = vld [vmem:[%s2069 + $0x3c] sm:$0xf]
      %v2086 = vunpack.c.l.b16 %v2040
      %v2087 = vunpack.c.l.b16 %v2044
      %v2088 = vunpack.c.l.b16 %v2048
      %v2089 = vunpack.c.l.b16 %v2052
      %v2090 = vunpack.c.l.b16 %v2056
      %v2091 = vunpack.c.l.b16 %v2060
      %v2092 = vunpack.c.l.b16 %v2064
      %v2093 = vunpack.c.l.b16 %v2068
      %v2094 = vpack.c.b16 %v2087, %v2086
      %v2095 = vpack.c.b16 %v2089, %v2088
      %v2096 = vpack.c.b16 %v2091, %v2090
      %v2097 = vpack.c.b16 %v2093, %v2092
      %v2118 = vunpack.c.l.b16 %v2070
      %v2119 = vunpack.c.l.b16 %v2071
      %v2120 = vunpack.c.l.b16 %v2072
      %v2121 = vunpack.c.l.b16 %v2073
      %v2122 = vunpack.c.l.b16 %v2074
      %v2123 = vunpack.c.l.b16 %v2075
      %v2124 = vunpack.c.l.b16 %v2076
      %v2125 = vunpack.c.l.b16 %v2077
      %v2126 = vunpack.c.l.b16 %v2078
      %v2127 = vunpack.c.l.b16 %v2079
      %v2128 = vunpack.c.l.b16 %v2080
      %v2129 = vunpack.c.l.b16 %v2081
      %v2130 = vunpack.c.l.b16 %v2082
      %v2131 = vunpack.c.l.b16 %v2083
      %v2132 = vunpack.c.l.b16 %v2084
      %v2133 = vunpack.c.l.b16 %v2085
      %v2134 = vpack.c.b16 %v2119, %v2118
      %v2135 = vpack.c.b16 %v2121, %v2120
      %v2136 = vpack.c.b16 %v2123, %v2122
      %v2137 = vpack.c.b16 %v2125, %v2124
      %v2138 = vpack.c.b16 %v2127, %v2126
      %v2139 = vpack.c.b16 %v2129, %v2128
      %v2140 = vpack.c.b16 %v2131, %v2130
      %v2141 = vpack.c.b16 %v2133, %v2132
      %2150 = vmatprep.subr.bf16.mxu0 0
      %2151 = vmatpush1.bf16.msra.mxu0 %v2134
      %2152 = vmatprep.subr.bf16.mxu0 0
      %2153 = vmatpush1.bf16.msra.mxu0 %v2135
      %2154 = vmatprep.subr.bf16.mxu0 0
      %2155 = vmatpush1.bf16.msra.mxu0 %v2136
      %2156 = vmatprep.subr.bf16.mxu0 0
      %2157 = vmatpush1.bf16.msra.mxu0 %v2137
      %2158 = vmatprep.subr.bf16.mxu0 0
      %2159 = vmatpush1.bf16.msra.mxu0 %v2138
      %2160 = vmatprep.subr.bf16.mxu0 0
      %2161 = vmatpush1.bf16.msra.mxu0 %v2139
      %2162 = vmatprep.subr.bf16.mxu0 0
      %2163 = vmatpush1.bf16.msra.mxu0 %v2140
      %2164 = vmatprep.subr.bf16.mxu0 0
      %2165 = vmatpush1.bf16.msra.mxu0 %v2141
      %2166 = vmatprep.subr.bf16.mxu0 0
      %2167 = vmatpush1.bf16.msra.mxu0 0
      %2168 = vmatprep.subr.bf16.mxu0 0
      %2169 = vmatpush1.bf16.msra.mxu0 0
      %2170 = vmatprep.subr.bf16.mxu0 0
      %2171 = vmatpush1.bf16.msra.mxu0 0
      %2172 = vmatprep.subr.bf16.mxu0 0
      %2173 = vmatpush1.bf16.msra.mxu0 0
      %2174 = vmatprep.subr.bf16.mxu0 0
      %2175 = vmatpush1.bf16.msra.mxu0 0
      %2176 = vmatprep.subr.bf16.mxu0 0
      %2177 = vmatpush1.bf16.msra.mxu0 0
      %2178 = vmatprep.subr.bf16.mxu0 0
      %2179 = vmatpush1.bf16.msra.mxu0 0
      %2180 = vmatprep.subr.bf16.mxu0 0
      %2181 = vmatpush1.bf16.msra.mxu0 0
      %2182 = vmatprep.mubr.bf16.mxu0 0
      %2183 = vmatmul.mubr.bf16.gmra.mrb[0].mxu0 %v2094
      %v2184 = vpop.f32.mrb[0].mxu0
      %v2185 = vadd.f32 0.0, %v2184
      %v2186 = vpop.f32.mrb[0].mxu0
      %v2187 = vpop.f32.mrb[0].mxu0
      %v2188 = vadd.f32 0.0, %v2187
      %v2189 = vpop.f32.mrb[0].mxu0
      %2190 = vmatprep.mubr.bf16.mxu0 0
      %2191 = vmatmul.mubr.bf16.gmra.mrb[0].mxu0 %v2095
      %v2192 = vpop.f32.mrb[0].mxu0
      %v2193 = vadd.f32 0.0, %v2192
      %v2194 = vpop.f32.mrb[0].mxu0
      %v2195 = vpop.f32.mrb[0].mxu0
      %v2196 = vadd.f32 0.0, %v2195
      %v2197 = vpop.f32.mrb[0].mxu0
      %2198 = vmatprep.mubr.bf16.mxu0 0
      %2199 = vmatmul.mubr.bf16.gmra.mrb[0].mxu0 %v2096
      %v2200 = vpop.f32.mrb[0].mxu0
      %v2201 = vadd.f32 0.0, %v2200
      %v2202 = vpop.f32.mrb[0].mxu0
      %v2203 = vpop.f32.mrb[0].mxu0
      %v2204 = vadd.f32 0.0, %v2203
      %v2205 = vpop.f32.mrb[0].mxu0
      %2206 = vmatprep.mubr.bf16.mxu0 0
      %2207 = vmatmul.mubr.bf16.gmra.mrb[0].mxu0 %v2097
      %v2208 = vpop.f32.mrb[0].mxu0
      %v2209 = vadd.f32 0.0, %v2208
      %v2210 = vpop.f32.mrb[0].mxu0
      %v2211 = vpop.f32.mrb[0].mxu0
      %v2212 = vadd.f32 0.0, %v2211
      %v2213 = vpop.f32.mrb[0].mxu0
      %2214 = vdwg.mxu0
      %v2215 = vadd.f32 %v2005, %v2185
      %v2216 = vadd.f32 %v2006, %v2188
      %v2217 = vadd.f32 %v2007, %v2193
      %v2218 = vadd.f32 %v2008, %v2196
      %v2219 = vadd.f32 %v2009, %v2201
      %v2220 = vadd.f32 %v2010, %v2204
      %v2221 = vadd.f32 %v2011, %v2209
      %v2222 = vadd.f32 %v2012, %v2212
      %v2223 = vld [vmem:[%s2] sm:$0x1]
      %v2225 = vlaneseq
      %v2226 = vshrl.u32 %v2225, 7
      %v2227 = vsub.s32 0, %v2226
      %v2228 = vrot.slane %v2223, %v2227
      %v2230 = vmul.f32 %v2215, %v2228
      %v2231 = vmul.f32 %v2216, %v2228
      %v2232 = vmul.f32 %v2217, %v2228
      %v2233 = vmul.f32 %v2218, %v2228
      %v2234 = vmul.f32 %v2219, %v2228
      %v2235 = vmul.f32 %v2220, %v2228
      %v2236 = vmul.f32 %v2221, %v2228
      %v2237 = vmul.f32 %v2222, %v2228
      %v2238 = vld [vmem:[%s3] sm:$0x1]
      %v2240 = vlaneseq
      %v2241 = vshrl.u32 %v2240, 7
      %v2242 = vsub.s32 0, %v2241
      %v2243 = vrot.slane %v2238, %v2242
      %v2245 = vadd.f32 %v2230, %v2243
      %v2246 = vadd.f32 %v2231, %v2243
      %v2247 = vadd.f32 %v2232, %v2243
      %v2248 = vadd.f32 %v2233, %v2243
      %v2249 = vadd.f32 %v2234, %v2243
      %v2250 = vadd.f32 %v2235, %v2243
      %v2251 = vadd.f32 %v2236, %v2243
      %v2252 = vadd.f32 %v2237, %v2243
      %v2253 = vmax.f32 %v2245, 0.0
      %v2254 = vmax.f32 %v2246, 0.0
      %v2255 = vmax.f32 %v2247, 0.0
      %v2256 = vmax.f32 %v2248, 0.0
      %v2257 = vmax.f32 %v2249, 0.0
      %v2258 = vmax.f32 %v2250, 0.0
      %v2259 = vmax.f32 %v2251, 0.0
      %v2260 = vmax.f32 %v2252, 0.0
      %v2261 = vld [vmem:[%s4] sm:$0xff]
      %v2262 = vld [vmem:[%s4 + $0x8] sm:$0xff]
      %v2263 = vld [vmem:[%s4 + $0x10] sm:$0xff]
      %v2264 = vld [vmem:[%s4 + $0x18] sm:$0xff]
      %v2265 = vld [vmem:[%s4 + $0x20] sm:$0xff]
      %v2266 = vld [vmem:[%s4 + $0x28] sm:$0xff]
      %v2267 = vld [vmem:[%s4 + $0x30] sm:$0xff]
      %v2268 = vld [vmem:[%s4 + $0x38] sm:$0xff]
      %v2269 = vld [vmem:[%s4 + $0x40] sm:$0xff]
      %v2270 = vld [vmem:[%s4 + $0x48] sm:$0xff]
      %v2271 = vld [vmem:[%s4 + $0x50] sm:$0xff]
      %v2272 = vld [vmem:[%s4 + $0x58] sm:$0xff]
      %v2273 = vld [vmem:[%s4 + $0x60] sm:$0xff]
      %v2274 = vld [vmem:[%s4 + $0x68] sm:$0xff]
      %v2275 = vld [vmem:[%s4 + $0x70] sm:$0xff]
      %v2276 = vld [vmem:[%s4 + $0x78] sm:$0xff]
      %v2277 = vld [vmem:[%s5] sm:$0x1]
      %v2279 = vlaneseq
      %v2280 = vshrl.u32 %v2279, 7
      %v2281 = vsub.s32 0, %v2280
      %v2282 = vrot.slane %v2277, %v2281
      %2284 = vmatprep.subr.mxu0 0.0
      %2285 = vmatpush1.msra.mxu0 %v2261
      %2286 = vmatprep.subr.mxu0 0.0
      %2287 = vmatpush1.msra.mxu0 %v2262
      %2288 = vmatprep.subr.mxu0 0.0
      %2289 = vmatpush1.msra.mxu0 %v2263
      %2290 = vmatprep.subr.mxu0 0.0
      %2291 = vmatpush1.msra.mxu0 %v2264
      %2292 = vmatprep.subr.mxu0 0.0
      %2293 = vmatpush1.msra.mxu0 %v2265
      %2294 = vmatprep.subr.mxu0 0.0
      %2295 = vmatpush1.msra.mxu0 %v2266
      %2296 = vmatprep.subr.mxu0 0.0
      %2297 = vmatpush1.msra.mxu0 %v2267
      %2298 = vmatprep.subr.mxu0 0.0
      %2299 = vmatpush1.msra.mxu0 %v2268
      %2300 = vmatprep.subr.mxu0 0.0
      %2301 = vmatpush1.msra.mxu0 %v2269
      %2302 = vmatprep.subr.mxu0 0.0
      %2303 = vmatpush1.msra.mxu0 %v2270
      %2304 = vmatprep.subr.mxu0 0.0
      %2305 = vmatpush1.msra.mxu0 %v2271
      %2306 = vmatprep.subr.mxu0 0.0
      %2307 = vmatpush1.msra.mxu0 %v2272
      %2308 = vmatprep.subr.mxu0 0.0
      %2309 = vmatpush1.msra.mxu0 %v2273
      %2310 = vmatprep.subr.mxu0 0.0
      %2311 = vmatpush1.msra.mxu0 %v2274
      %2312 = vmatprep.subr.mxu0 0.0
      %2313 = vmatpush1.msra.mxu0 %v2275
      %2314 = vmatprep.subr.mxu0 0.0
      %2315 = vmatpush1.msra.mxu0 %v2276
      %2316 = vmatprep.subr.mxu0 0.0
      %2317 = vmatpush1.msra.mxu0 0.0
      %2318 = vmatprep.subr.mxu0 0.0
      %2319 = vmatpush1.msra.mxu0 0.0
      %2320 = vmatprep.subr.mxu0 0.0
      %2321 = vmatpush1.msra.mxu0 0.0
      %2322 = vmatprep.subr.mxu0 0.0
      %2323 = vmatpush1.msra.mxu0 0.0
      %2324 = vmatprep.subr.mxu0 0.0
      %2325 = vmatpush1.msra.mxu0 0.0
      %2326 = vmatprep.subr.mxu0 0.0
      %2327 = vmatpush1.msra.mxu0 0.0
      %2328 = vmatprep.subr.mxu0 0.0
      %2329 = vmatpush1.msra.mxu0 0.0
      %2330 = vmatprep.subr.mxu0 0.0
      %2331 = vmatpush1.msra.mxu0 0.0
      %2332 = vmatprep.subr.mxu0 0.0
      %2333 = vmatpush1.msra.mxu0 0.0
      %2334 = vmatprep.subr.mxu0 0.0
      %2335 = vmatpush1.msra.mxu0 0.0
      %2336 = vmatprep.subr.mxu0 0.0
      %2337 = vmatpush1.msra.mxu0 0.0
      %2338 = vmatprep.subr.mxu0 0.0
      %2339 = vmatpush1.msra.mxu0 0.0
      %2340 = vmatprep.subr.mxu0 0.0
      %2341 = vmatpush1.msra.mxu0 0.0
      %2342 = vmatprep.subr.mxu0 0.0
      %2343 = vmatpush1.msra.mxu0 0.0
      %2344 = vmatprep.subr.mxu0 0.0
      %2345 = vmatpush1.msra.mxu0 0.0
      %2346 = vmatprep.subr.mxu0 0.0
      %2347 = vmatpush1.msra.mxu0 0.0
      %2348 = vmatprep.mubr.f32.mxu0 0.0
      %2349 = vmatmul.mubr.f32.gmra.mrb[0].mxu0 %v2253
      %v2350 = vpop.f32.mrb[0].mxu0
      %v2351 = vadd.f32 %v2282, %v2350
      %v2352 = vpop.f32.mrb[0].mxu0
      %2353 = vmatprep.mubr.f32.mxu0 0.0
      %2354 = vmatmul.mubr.f32.gmra.mrb[0].mxu0 %v2254
      %v2355 = vpop.f32.mrb[0].mxu0
      %v2356 = vadd.f32 %v2282, %v2355
      %v2357 = vpop.f32.mrb[0].mxu0
      %2358 = vmatprep.mubr.f32.mxu0 0.0
      %2359 = vmatmul.mubr.f32.gmra.mrb[0].mxu0 %v2255
      %v2360 = vpop.f32.mrb[0].mxu0
      %v2361 = vadd.f32 %v2282, %v2360
      %v2362 = vpop.f32.mrb[0].mxu0
      %2363 = vmatprep.mubr.f32.mxu0 0.0
      %2364 = vmatmul.mubr.f32.gmra.mrb[0].mxu0 %v2256
      %v2365 = vpop.f32.mrb[0].mxu0
      %v2366 = vadd.f32 %v2282, %v2365
      %v2367 = vpop.f32.mrb[0].mxu0
      %2368 = vmatprep.mubr.f32.mxu0 0.0
      %2369 = vmatmul.mubr.f32.gmra.mrb[0].mxu0 %v2257
      %v2370 = vpop.f32.mrb[0].mxu0
      %v2371 = vadd.f32 %v2282, %v2370
      %v2372 = vpop.f32.mrb[0].mxu0
      %2373 = vmatprep.mubr.f32.mxu0 0.0
      %2374 = vmatmul.mubr.f32.gmra.mrb[0].mxu0 %v2258
      %v2375 = vpop.f32.mrb[0].mxu0
      %v2376 = vadd.f32 %v2282, %v2375
      %v2377 = vpop.f32.mrb[0].mxu0
      %2378 = vmatprep.mubr.f32.mxu0 0.0
      %2379 = vmatmul.mubr.f32.gmra.mrb[0].mxu0 %v2259
      %v2380 = vpop.f32.mrb[0].mxu0
      %v2381 = vadd.f32 %v2282, %v2380
      %v2382 = vpop.f32.mrb[0].mxu0
      %2383 = vmatprep.mubr.f32.mxu0 0.0
      %2384 = vmatmul.mubr.f32.gmra.mrb[0].mxu0 %v2260
      %v2385 = vpop.f32.mrb[0].mxu0
      %v2386 = vadd.f32 %v2282, %v2385
      %v2387 = vpop.f32.mrb[0].mxu0
      %2388 = vdwg.mxu0
      %vm2389 = vcmask 56320
      %2390 = vst.msk [vmem:[%s251] sm:$0xff] %vm2389, %v2351
      %2391 = vst.msk [vmem:[%s251 + $0x8] sm:$0xff] %vm2389, %v2356
      %2392 = vst.msk [vmem:[%s251 + $0x10] sm:$0xff] %vm2389, %v2361
      %2393 = vst.msk [vmem:[%s251 + $0x18] sm:$0xff] %vm2389, %v2366
      %2394 = vst.msk [vmem:[%s251 + $0x20] sm:$0xff] %vm2389, %v2371
      %2395 = vst.msk [vmem:[%s251 + $0x28] sm:$0xff] %vm2389, %v2376
      %2396 = vst.msk [vmem:[%s251 + $0x30] sm:$0xff] %vm2389, %v2381
      %2397 = vst.msk [vmem:[%s251 + $0x38] sm:$0xff] %vm2389, %v2386
      %s2398 = smul.u32 8, %s17
      %p2399 = scmp.lt.s32.totalorder %s2398, 15
      %s2400 = scalar_select %p2399, %s2398, 15
      %s2401 = smul.addr %s2400, 8
      %s2402 = scalar_lea.vmem %s6, %s2401
      // Predicated region
      $region45: #{network_forward.11} parent=43 // pred_check
        %p2403 = pneg %p166
      $region46: #{network_forward.11} parent=43 // pred_check_branch
        %2405 = sbr.rel (%p2403) target = $region48
      $region47: #{network_forward.11} parent=43 // pred_region
        %s2406 = smul.u32 8, %s17
      $region48: #{network_forward.11} parent=43 // pred_fallthru
        _
    $region44: #{network_forward.11} parent=5 // pred_fallthru
      _
    %p2407 = scmp.le.s32.totalorder 2, %s12
    // Predicated region
    $region49: #{network_forward.11} parent=5 // pred_check
      %p2408 = pneg %p2407
    $region50: #{network_forward.11} parent=5 // pred_check_branch
      %2410 = sbr.rel (%p2408) target = $region52
    $region51: #{network_forward.11} parent=5 // pred_region
      %s2411 = ssub.s32 %s12, 2
      // Predicated region
      $region53: #{network_forward.11} parent=51 // pred_check
        %p2412 = pneg %p172
      $region54: #{network_forward.11} parent=51 // pred_check_branch
        %2414 = sbr.rel (%p2412) target = $region56
      $region55: #{network_forward.11} parent=51 // pred_region
        %s2415 = smul.u32 8, %s18
        %p2416 = scmp.lt.s32.totalorder %s2415, 15
        %s2417 = scalar_select %p2416, %s2415, 15
        %s2418 = smul.addr %s2417, 8
        %s2419 = scalar_lea.vmem %s6, %s2418
      $region56: #{network_forward.11} parent=51 // pred_fallthru
        _
    $region52: #{network_forward.11} parent=5 // pred_fallthru
      _
  $region6: #{network_forward.11} parent=0 // loop_footer
    %s16 = sadd.s32 1, %s12
  $region7: #{network_forward.11} parent=0 // loop_footer_branch
    %11 = sbr.rel target = $region3
  $region8: #{network_forward.11} parent=0 // loop_exit
    _

</llo_original>
